<compile_context>
chip_gen: v7x
topology: tpu7x:2x2x1
jax: 0.10.0
libtpu: 0.0.40
codegen_flags: <defaults>
</compile_context>

<pallas_src>
import math
import jax
import jax.numpy as jnp
from jax.experimental import pallas as pl
from jax.experimental.pallas import tpu as pltpu

D = 32          # feature_dim / enc_dim
K = 4           # number of foreground slots
K_ALL = K + 1   # bg + fg slots
ENC_IN = 16     # per-point feature dim produced by the PointEncoderKPConv stand-in

INV_TWO_VAR = 1.0 / (2.0 * 0.1 * 0.1)
LOG_NORM = math.log(0.1) + 0.5 * math.log(2.0 * math.pi)

# ------------- lw: slot-attention matrices, one (D, D) row block each --------
LW_QFG, LW_QBG, LW_RFG1, LW_RFG2, LW_RBG1, LW_RBG2 = range(6)
LW_ROWS = 6 * D

# ------------- gw: GRU weights, one (D, 3D) row block per ih/hh path ---------
#   blocks: fg_ih | fg_hh | bg_ih | bg_hh   (gate order r | z | n on lanes)
GW_ROWS = 4 * D

# ------------- vec: (D,)-vectors used in the "rows" (slots, D-on-lanes) path -
(V_B_QFG, V_B_QBG, V_B_RFG1, V_B_RFG2, V_B_RBG1, V_B_RBG2,
 V_LN_SFG_G, V_LN_SFG_B, V_LN_SBG_G, V_LN_SBG_B,
 V_LN_RFG_G, V_LN_RFG_B, V_LN_RBG_G, V_LN_RBG_B) = range(14)
VEC_ROWS = 14

# ------------- cvec: (D, 1) column vectors used in the (D, N) encoder path ---
(C_FH_B1, C_FH_B2, C_ENC_G, C_ENC_B, C_EM_B1, C_EM_B2,
 C_IN_G, C_IN_B, C_BK, C_BVFG, C_BVBG) = range(11)
CVEC_COLS = 11


# ------------------------------------------------------------------ helpers --
def _ln_cols(x, g, b, eps=1e-5):
    """LayerNorm over the feature axis 0 of a (D, N) lane-dense activation."""
    mu = jnp.mean(x, axis=0, keepdims=True)
    var = jnp.mean((x - mu) ** 2, axis=0, keepdims=True)
    return (x - mu) * jax.lax.rsqrt(var + eps) * g + b


def _ln_rows(x, g, b, eps=1e-5):
    """LayerNorm over the last axis of a (slots, D) activation."""
    mu = jnp.mean(x, axis=-1, keepdims=True)
    var = jnp.mean((x - mu) ** 2, axis=-1, keepdims=True)
    return (x - mu) * jax.lax.rsqrt(var + eps) * g + b


def _softplus(x):
    # matches torch.nn.functional.softplus (beta=1, threshold=20)
    return jnp.where(x > 20.0, x, jnp.log1p(jnp.exp(jnp.minimum(x, 20.0))))


# ---------------------------------- kernel 1: fused encoder + slot attention --
def fused_enc_slot_kernel(enc_raw_ref, pcd_ref, fg0_ref, bg0_ref,
                          w1t_ref, w2t_ref, wpost_ref, wm1t_ref, wm2t_ref,
                          cvec_ref, kvvw_ref, lw_ref, gw_ref, gb3_ref, vec_ref,
                          fg_out_ref, bg_out_ref,
                          fg_state, bg_state):
    t = pl.program_id(1)

    # ---- encoder head, lane-dense (D, N) layout ------------------------------
    x = enc_raw_ref[0, 0]                                  # (ENC_IN, N)
    pts = pcd_ref[0, 0]                                    # (3, N)

    def col(i):                                            # (D, 1) column param
        return cvec_ref[i]

    h = jnp.maximum(
        jnp.dot(w1t_ref[...], x, preferred_element_type=jnp.float32)
        + col(C_FH_B1), 0.0)                                          # (D, N)
    f = (jnp.dot(w2t_ref[...], h, preferred_element_type=jnp.float32)
         + col(C_FH_B2)
         + jnp.dot(wpost_ref[...], pts, preferred_element_type=jnp.float32))
    fn = _ln_cols(f, col(C_ENC_G), col(C_ENC_B))
    g1 = jnp.maximum(
        jnp.dot(wm1t_ref[...], fn, preferred_element_type=jnp.float32)
        + col(C_EM_B1), 0.0)
    embds = (jnp.dot(wm2t_ref[...], g1, preferred_element_type=jnp.float32)
             + col(C_EM_B2))                                          # (D, N)

    # ---- slot attention inputs (fused k | v_fg | v_bg projection) ------------
    inpt = _ln_cols(embds, col(C_IN_G), col(C_IN_B))
    kvv = jnp.dot(kvvw_ref[...], inpt, preferred_element_type=jnp.float32)  # (3D, N)
    k = kvv[0 * D:1 * D, :] + col(C_BK)                    # (D, N)
    fg_v = kvv[1 * D:2 * D, :] + col(C_BVFG)               # (D, N)
    bg_v = kvv[2 * D:3 * D, :] + col(C_BVBG)               # (D, N)

    # ---- slot state carried across the time axis in VMEM scratch -------------
    @pl.when(t == 0)
    def _():
        fg_state[...] = fg0_ref[0]
        bg_state[...] = bg0_ref[0]

    fg_slots = fg_state[...]                               # (K, D)
    bg_slots = bg_state[...]                               # (1, D)

    # hoist only the (D,)-vector parameters; weight tiles are re-read per iter
    bq_fg, bq_bg = vec_ref[V_B_QFG], vec_ref[V_B_QBG]
    brfg1, brfg2 = vec_ref[V_B_RFG1], vec_ref[V_B_RFG2]
    brbg1, brbg2 = vec_ref[V_B_RBG1], vec_ref[V_B_RBG2]
    g_sfg, b_sfg = vec_ref[V_LN_SFG_G], vec_ref[V_LN_SFG_B]
    g_sbg, b_sbg = vec_ref[V_LN_SBG_G], vec_ref[V_LN_SBG_B]
    g_rfg, b_rfg = vec_ref[V_LN_RFG_G], vec_ref[V_LN_RFG_B]
    g_rbg, b_rbg = vec_ref[V_LN_RBG_G], vec_ref[V_LN_RBG_B]
    b_fg_ih, b_fg_hh = gb3_ref[0], gb3_ref[1]              # (3D,)
    b_bg_ih, b_bg_hh = gb3_ref[2], gb3_ref[3]

    scale = D ** (-0.5)

    def gru(xx, hh, w_ih, w_hh, b_ih, b_hh):
        # fused-gate GRUCell: 2 matmuls, gates are 32-lane slices of 96 lanes
        gi = jnp.dot(xx, w_ih, preferred_element_type=jnp.float32) + b_ih
        gh = jnp.dot(hh, w_hh, preferred_element_type=jnp.float32) + b_hh
        r = jax.nn.sigmoid(gi[:, 0 * D:1 * D] + gh[:, 0 * D:1 * D])
        z = jax.nn.sigmoid(gi[:, 1 * D:2 * D] + gh[:, 1 * D:2 * D])
        n = jnp.tanh(gi[:, 2 * D:3 * D] + r * gh[:, 2 * D:3 * D])
        return (1.0 - z) * n + z * hh

    for _ in range(3):                                     # static unrolled loop
        fg_prev, bg_prev = fg_slots, bg_slots
        fgn = _ln_rows(fg_slots, g_sfg, b_sfg)
        bgn = _ln_rows(bg_slots, g_sbg, b_sbg)
        fg_q = jnp.dot(fgn, lw_ref[LW_QFG * D:(LW_QFG + 1) * D, :],
                       preferred_element_type=jnp.float32) + bq_fg    # (K, D)
        bg_q = jnp.dot(bgn, lw_ref[LW_QBG * D:(LW_QBG + 1) * D, :],
                       preferred_element_type=jnp.float32) + bq_bg    # (1, D)
        q_all = jnp.concatenate([bg_q, fg_q], axis=0)                 # (K_ALL, D)

        # scores in (K_ALL, N): slots on sublanes, points on the lane axis
        logits = jnp.dot(q_all, k, preferred_element_type=jnp.float32) * scale
        m = jnp.max(logits, axis=0, keepdims=True)
        e = jnp.exp(logits - m)
        attn = e * pl.reciprocal(jnp.sum(e, axis=0, keepdims=True),
                                 approx=True) + 1e-8                  # softmax over slots
        attn_v = attn * pl.reciprocal(jnp.sum(attn, axis=1, keepdims=True),
                                      approx=True)                    # normalize over points

        fg_updates = jax.lax.dot_general(
            attn_v[1:, :], fg_v, (((1,), (1,)), ((), ())),
            preferred_element_type=jnp.float32)                       # (K, D)
        bg_updates = jax.lax.dot_general(
            attn_v[0:1, :], bg_v, (((1,), (1,)), ((), ())),
            preferred_element_type=jnp.float32)                       # (1, D)

        fg_slots = gru(fg_updates, fg_prev,
                       gw_ref[0 * D:1 * D, :], gw_ref[1 * D:2 * D, :],
                       b_fg_ih, b_fg_hh)
        bg_slots = gru(bg_updates, bg_prev,
                       gw_ref[2 * D:3 * D, :], gw_ref[3 * D:4 * D, :],
                       b_bg_ih, b_bg_hh)

        fgr = _ln_rows(fg_slots, g_rfg, b_rfg)
        fg_hid = jnp.maximum(
            jnp.dot(fgr, lw_ref[LW_RFG1 * D:(LW_RFG1 + 1) * D, :],
                    preferred_element_type=jnp.float32) + brfg1, 0.0)
        fg_slots = fg_slots + jnp.dot(
            fg_hid, lw_ref[LW_RFG2 * D:(LW_RFG2 + 1) * D, :],
            preferred_element_type=jnp.float32) + brfg2
        bgr = _ln_rows(bg_slots, g_rbg, b_rbg)
        bg_hid = jnp.maximum(
            jnp.dot(bgr, lw_ref[LW_RBG1 * D:(LW_RBG1 + 1) * D, :],
                    preferred_element_type=jnp.float32) + brbg1, 0.0)
        bg_slots = bg_slots + jnp.dot(
            bg_hid, lw_ref[LW_RBG2 * D:(LW_RBG2 + 1) * D, :],
            preferred_element_type=jnp.float32) + brbg2

    fg_state[...] = fg_slots
    bg_state[...] = bg_slots
    fg_out_ref[0, 0] = fg_slots
    bg_out_ref[0, 0] = bg_slots


def encoder_and_slot_attention(enc_raw, pcd_t, fg0, bg0, p):
    B, L, _, N = enc_raw.shape
    wmap2 = lambda b, t: (0, 0)
    wmap3 = lambda b, t: (0, 0, 0)
    return pl.pallas_call(
        fused_enc_slot_kernel,
        out_shape=(jax.ShapeDtypeStruct((B, L, K, D), jnp.float32),
                   jax.ShapeDtypeStruct((B, L, 1, D), jnp.float32)),
        grid=(B, L),
        in_specs=[
            pl.BlockSpec((1, 1, ENC_IN, N), lambda b, t: (b, t, 0, 0)),
            pl.BlockSpec((1, 1, 3, N), lambda b, t: (b, t, 0, 0)),
            pl.BlockSpec((1, K, D), lambda b, t: (b, 0, 0)),
            pl.BlockSpec((1, 1, D), lambda b, t: (b, 0, 0)),
            pl.BlockSpec((D, ENC_IN), wmap2),
            pl.BlockSpec((D, D), wmap2),
            pl.BlockSpec((D, 3), wmap2),
            pl.BlockSpec((D, D), wmap2),
            pl.BlockSpec((D, D), wmap2),
            pl.BlockSpec((CVEC_COLS, D, 1), wmap3),
            pl.BlockSpec((3 * D, D), wmap2),
            pl.BlockSpec((LW_ROWS, D), wmap2),
            pl.BlockSpec((GW_ROWS, 3 * D), wmap2),
            pl.BlockSpec((4, 3 * D), wmap2),
            pl.BlockSpec((VEC_ROWS, D), wmap2),
        ],
        out_specs=(
            pl.BlockSpec((1, 1, K, D), lambda b, t: (b, t, 0, 0)),
            pl.BlockSpec((1, 1, 1, D), lambda b, t: (b, t, 0, 0)),
        ),
        scratch_shapes=[pltpu.VMEM((K, D), jnp.float32),
                        pltpu.VMEM((1, D), jnp.float32)],
        compiler_params=pltpu.CompilerParams(
            dimension_semantics=("parallel", "arbitrary")),
    )(enc_raw, pcd_t, fg0, bg0,
      p["w1t"], p["w2t"], p["wpost"], p["wm1t"], p["wm2t"],
      p["cvec"], p["kvvw"], p["lw"], p["gw"], p["gb3"], p["vec"])


# ------------------------------------------- kernel 2: eval_sigma + losses ---
# Batch, time and pixels folded into one lane axis T = B*L*P (multiple of 128).
def sigma_loss_kernel(ls_ref, la_ref, rgb_ref, recon_ref, imp_ref,
                      sig_s_ref, sig_a_ref, sums_ref):
    @pl.when(pl.program_id(1) == 0)
    def _():
        sums_ref[...] = jnp.zeros_like(sums_ref)

    ls = ls_ref[...]        # (K_ALL, T)  surface logits  [bg, obj...]
    la = la_ref[...]        # (K_ALL, T)  air logits
    rgb = rgb_ref[...]      # (3, T)
    imp = imp_ref[...]      # (1, T)

    # eval_sigma
    sig_joint_s = jnp.tanh(jnp.sum(_softplus(ls), axis=0, keepdims=True))   # (1, T)
    m = jnp.max(ls, axis=0, keepdims=True)
    e = jnp.exp(ls - m)
    sig_s = sig_joint_s * e * pl.reciprocal(
        jnp.sum(e, axis=0, keepdims=True), approx=True)                      # (K_ALL, T)
    sig_joint_a = jnp.tanh(jnp.sum(_softplus(la), axis=0, keepdims=True))    # (1, T)

    # compute_loss: rgb mixture, per channel (matches torch epsilon placement)
    sig_w = sig_s + 1e-8
    rgb_sum = jnp.float32(0.0)
    for c in range(3):                                      # static channel loop
        rc = recon_ref[c]                                   # (K_ALL, T)
        lp = -((rgb[c:c + 1, :] - rc) ** 2) * INV_TWO_VAR - LOG_NORM
        mix = jnp.sum(sig_w * jnp.exp(lp), axis=0, keepdims=True)             # (1, T)
        rgb_sum = rgb_sum + jnp.sum(-jnp.log(mix + 1e-8))

    air = 10.0 * sig_joint_a * pl.reciprocal(imp, approx=True)                # (1, T)
    air_sum = jnp.sum(air)
    surf_sum = jnp.sum(
        -jnp.log(10.0 * jnp.sum(sig_s, axis=0, keepdims=True) + 1e-8))

    sig_s_ref[...] = sig_s
    sig_a_ref[...] = sig_joint_a
    sums_ref[0] += jnp.concatenate(
        [jnp.full((1, 128), rgb_sum, jnp.float32),
         jnp.full((1, 128), air_sum, jnp.float32),
         jnp.full((1, 128), surf_sum, jnp.float32)], axis=0)


def sigma_and_loss(ls_f, la_f, rgb_f, recon_f, imp_f):
    ka, total = ls_f.shape
    assert total % 128 == 0
    nc = 2 if (total % 256 == 0 and total >= 512) else 1     # chunks for v7x cores
    per_core = total // nc
    if per_core <= 4096:
        ptile = per_core
    else:
        ptile = 128
        for cand in (4096, 2048, 1024, 512, 256):
            if per_core % cand == 0:
                ptile = cand
                break
    nt = per_core // ptile

    return pl.pallas_call(
        sigma_loss_kernel,
        out_shape=(jax.ShapeDtypeStruct((ka, total), jnp.float32),
                   jax.ShapeDtypeStruct((1, total), jnp.float32),
                   jax.ShapeDtypeStruct((nc, 3, 128), jnp.float32)),
        grid=(nc, nt),
        in_specs=[
            pl.BlockSpec((ka, ptile), lambda c, i: (0, c * nt + i)),
            pl.BlockSpec((ka, ptile), lambda c, i: (0, c * nt + i)),
            pl.BlockSpec((3, ptile), lambda c, i: (0, c * nt + i)),
            pl.BlockSpec((3, ka, ptile), lambda c, i: (0, 0, c * nt + i)),
            pl.BlockSpec((1, ptile), lambda c, i: (0, c * nt + i)),
        ],
        out_specs=(
            pl.BlockSpec((ka, ptile), lambda c, i: (0, c * nt + i)),
            pl.BlockSpec((1, ptile), lambda c, i: (0, c * nt + i)),
            pl.BlockSpec((1, 3, 128), lambda c, i: (c, 0, 0)),
        ),
        compiler_params=pltpu.CompilerParams(
            dimension_semantics=("parallel", "arbitrary")),
    )(ls_f, la_f, rgb_f, recon_f, imp_f)


# ----------------------------------------------------------- param builder ---
def init_params(key):
    keys = jax.random.split(key, 16)

    def rnd(k, shape, scale=0.1):
        return scale * jax.random.normal(k, shape, dtype=jnp.float32)

    # encoder weights, stored transposed for the (D, N) lane-dense layout
    w1t = rnd(keys[0], (D, ENC_IN))          # feature_head.l1^T
    w2t = rnd(keys[1], (D, D))               # feature_head.l2^T
    wpost = rnd(keys[2], (D, 3))             # position_net^T
    wm1t = rnd(keys[3], (D, D))              # enc_mlp.l1^T
    wm2t = rnd(keys[4], (D, D))              # enc_mlp.l2^T

    kvvw = rnd(keys[5], (3 * D, D))          # [Wk^T | Wv_fg^T | Wv_bg^T] fused
    lw = rnd(keys[6], (LW_ROWS, D))          # q_fg, q_bg, res_fg l1/l2, res_bg l1/l2
    gw = rnd(keys[7], (GW_ROWS, 3 * D))      # GRU fg_ih | fg_hh | bg_ih | bg_hh
    gb3 = rnd(keys[8], (4, 3 * D), 0.01)     # fused GRU gate biases

    # column-form parameters for the (D, N) encoder path
    cvec = rnd(keys[9], (CVEC_COLS, D, 1), 0.01)
    cvec = cvec.at[C_ENC_G].set(1.0)
    cvec = cvec.at[C_ENC_B].set(0.0)
    cvec = cvec.at[C_IN_G].set(1.0)
    cvec = cvec.at[C_IN_B].set(0.0)

    # row-form (D,) parameters for the slot path
    vec = rnd(keys[10], (VEC_ROWS, D), 0.01)
    for g_row, b_row in ((V_LN_SFG_G, V_LN_SFG_B), (V_LN_SBG_G, V_LN_SBG_B),
                         (V_LN_RFG_G, V_LN_RFG_B), (V_LN_RBG_G, V_LN_RBG_B)):
        vec = vec.at[g_row].set(1.0)
        vec = vec.at[b_row].set(0.0)

    return dict(
        w1t=w1t, w2t=w2t, wpost=wpost, wm1t=wm1t, wm2t=wm2t,
        cvec=cvec, kvvw=kvvw, lw=lw, gw=gw, gb3=gb3, vec=vec,
        mu_fg=rnd(keys[11], (D,)), lsig_fg=rnd(keys[12], (D,)),
        mu_bg=rnd(keys[13], (D,)), lsig_bg=rnd(keys[14], (D,)),
        # TODO(synk): PointEncoderKPConv stand-in projection
        kp_proj=rnd(keys[15], (6, ENC_IN)),
    )


# --------------------------------------------------------------- forward -----
def forward(p, pcd_video, rgb_video, depth_video, key):
    B, L, res = pcd_video.shape[0], pcd_video.shape[1], pcd_video.shape[2]
    P = res * res
    N = P

    pcd_flat = pcd_video.reshape(B, L, P, 3)
    rgb_flat = rgb_video.reshape(B, L, P, 3)

    # TODO(synk): PointEncoderKPConv is not defined in the provided source; use
    # a fixed deterministic linear projection of [pcd, rgb], emitted directly
    # in the (B, L, ENC_IN, N) lane-dense layout kernel 1 consumes.
    feats = jnp.concatenate([pcd_flat, rgb_flat], axis=-1)          # (B, L, N, 6)
    enc_raw = jnp.einsum("blnc,cf->blfn", feats, p["kp_proj"])      # (B, L, ENC_IN, N)
    pcd_t = jnp.transpose(pcd_flat, (0, 1, 3, 2))                   # (B, L, 3, N)

    # initial slot sample (used only at t == 0; t > 0 carries in-kernel)
    kf = jax.random.fold_in(key, 100)
    fg_noise = jax.random.normal(jax.random.fold_in(kf, 0), (B, K, D), jnp.float32)
    bg_noise = jax.random.normal(jax.random.fold_in(kf, 1), (B, 1, D), jnp.float32)
    fg0 = p["mu_fg"] + jnp.exp(p["lsig_fg"]) * fg_noise
    bg0 = p["mu_bg"] + jnp.exp(p["lsig_bg"]) * bg_noise

    # Pallas kernel 1: encoder head + 3 slot-attention iterations, all frames
    fg_all, bg_all = encoder_and_slot_attention(enc_raw, pcd_t, fg0, bg0, p)
    fg_slots, bg_slots = fg_all[:, -1], bg_all[:, -1]

    # importance weights from depth (same formula as sample_query_points)
    kd = jax.random.fold_in(key, 300)
    depth = depth_video.reshape(B, L, P)
    near_far = jax.random.randint(kd, (B, L, P), 0, 2).astype(jnp.float32)
    importance = (near_far * 0.5 / (0.98 * depth)
                  + (1.0 - near_far) * 0.5 / (0.02 * depth))

    TOT = B * L * P
    # TODO(synk): sample_query_points needs constants/camera_info.npy, and
    # Nerf / ObjectModule / Background are not defined in the source file;
    # their per-point logits / rgb outputs are synthesized deterministically,
    # directly in the slot-major lane-dense layouts kernel 2 consumes
    # (slot index 0 == background, matching torch.cat([bg, obj], dim=1)).
    kt = jax.random.fold_in(key, 200)
    ls_f = jax.random.normal(jax.random.fold_in(kt, 0), (K_ALL, TOT), jnp.float32)
    la_f = jax.random.normal(jax.random.fold_in(kt, 1), (K_ALL, TOT), jnp.float32)
    recon_f = jax.random.uniform(jax.random.fold_in(kt, 2), (3, K_ALL, TOT), jnp.float32)
    rgb_f = jnp.transpose(rgb_flat, (3, 0, 1, 2)).reshape(3, TOT)   # one whole-video transpose
    imp_f = importance.reshape(1, TOT)

    # Pallas kernel 2: eval_sigma + compute_loss with in-kernel reductions
    sig_s, sig_a, sums = sigma_and_loss(ls_f, la_f, rgb_f, recon_f, imp_f)
    totals = jnp.sum(sums[:, :, 0], axis=0)                  # [rgb, air, surf] sums
    rgb_loss = totals[0] / (B * L)
    air_loss = totals[1] / (B * L)
    surf_loss = totals[2] / (B * L)
    kl_obj_what = jnp.float32(0.0)  # TODO(synk): ObjectModule/Nerf undefined in source; KL not computable.
    kl_bg = jnp.float32(0.0)        # TODO(synk): Background undefined in source; KL not computable.

    loss_sum = rgb_loss + air_loss + surf_loss + kl_obj_what + kl_bg
    return loss_sum, sig_s, sig_a, fg_slots, bg_slots


# --------------------------------------------------------------------- main --
if __name__ == "__main__":
    key = jax.random.PRNGKey(0)
    B, L, res = 2, 2, 16
    k_in = jax.random.split(key, 4)
    pcd_video = jax.random.normal(k_in[0], (B, L, res, res, 3), jnp.float32)
    rgb_video = jax.random.uniform(k_in[1], (B, L, res, res, 3), jnp.float32)
    depth_video = jax.random.uniform(k_in[2], (B, L, res, res), jnp.float32,
                                     minval=0.5, maxval=2.0)
    params = init_params(k_in[3])

    fwd = jax.jit(forward)
    out = fwd(params, pcd_video, rgb_video, depth_video, key)
    jax.block_until_ready(out)
    print("KERNEL_OK")
</pallas_src>

<mosaic_0001>
module attributes {stable_mosaic.version = 11 : i64} {
  func.func @fused_enc_slot_kernel(%arg0: i32, %arg1: i32, %arg2: memref<1x1x16x256xf32, #tpu.memory_space<vmem>>, %arg3: memref<1x1x3x256xf32, #tpu.memory_space<vmem>>, %arg4: memref<1x4x32xf32, #tpu.memory_space<vmem>>, %arg5: memref<1x1x32xf32, #tpu.memory_space<vmem>>, %arg6: memref<32x16xf32, #tpu.memory_space<vmem>>, %arg7: memref<32x32xf32, #tpu.memory_space<vmem>>, %arg8: memref<32x3xf32, #tpu.memory_space<vmem>>, %arg9: memref<32x32xf32, #tpu.memory_space<vmem>>, %arg10: memref<32x32xf32, #tpu.memory_space<vmem>>, %arg11: memref<11x32x1xf32, #tpu.memory_space<vmem>>, %arg12: memref<96x32xf32, #tpu.memory_space<vmem>>, %arg13: memref<192x32xf32, #tpu.memory_space<vmem>>, %arg14: memref<128x96xf32, #tpu.memory_space<vmem>>, %arg15: memref<4x96xf32, #tpu.memory_space<vmem>>, %arg16: memref<14x32xf32, #tpu.memory_space<vmem>>, %arg17: memref<1x1x4x32xf32, #tpu.memory_space<vmem>>, %arg18: memref<1x1x1x32xf32, #tpu.memory_space<vmem>>, %arg19: memref<4x32xf32, #tpu.memory_space<vmem>>, %arg20: memref<1x32xf32, #tpu.memory_space<vmem>>) attributes {dimension_semantics = [#tpu.dimension_semantics<parallel>, #tpu.dimension_semantics<arbitrary>], iteration_bounds = array<i64: 2, 2>, scalar_prefetch = 0 : i64, scratch_operands = 2 : i64, tpu.core_type = #tpu.core_type<tc>, window_params = [{transform_indices = @transform_0, window_bounds = array<i64: 1, 1, 16, 256>}, {transform_indices = @transform_1, window_bounds = array<i64: 1, 1, 3, 256>}, {transform_indices = @transform_2, window_bounds = array<i64: 1, 4, 32>}, {transform_indices = @transform_3, window_bounds = array<i64: 1, 1, 32>}, {pipeline_mode = #tpu.pipeline_mode<synchronous>, transform_indices = @transform_4, window_bounds = array<i64: 32, 16>}, {pipeline_mode = #tpu.pipeline_mode<synchronous>, transform_indices = @transform_5, window_bounds = array<i64: 32, 32>}, {pipeline_mode = #tpu.pipeline_mode<synchronous>, transform_indices = @transform_6, window_bounds = array<i64: 32, 3>}, {pipeline_mode = #tpu.pipeline_mode<synchronous>, transform_indices = @transform_7, window_bounds = array<i64: 32, 32>}, {pipeline_mode = #tpu.pipeline_mode<synchronous>, transform_indices = @transform_8, window_bounds = array<i64: 32, 32>}, {pipeline_mode = #tpu.pipeline_mode<synchronous>, transform_indices = @transform_9, window_bounds = array<i64: 11, 32, 1>}, {pipeline_mode = #tpu.pipeline_mode<synchronous>, transform_indices = @transform_10, window_bounds = array<i64: 96, 32>}, {pipeline_mode = #tpu.pipeline_mode<synchronous>, transform_indices = @transform_11, window_bounds = array<i64: 192, 32>}, {pipeline_mode = #tpu.pipeline_mode<synchronous>, transform_indices = @transform_12, window_bounds = array<i64: 128, 96>}, {pipeline_mode = #tpu.pipeline_mode<synchronous>, transform_indices = @transform_13, window_bounds = array<i64: 4, 96>}, {pipeline_mode = #tpu.pipeline_mode<synchronous>, transform_indices = @transform_14, window_bounds = array<i64: 14, 32>}, {transform_indices = @transform_15, window_bounds = array<i64: 1, 1, 4, 32>}, {transform_indices = @transform_16, window_bounds = array<i64: 1, 1, 1, 32>}]} {
    %c0 = arith.constant 0 : index
    %c0_0 = arith.constant 0 : index
    %c0_1 = arith.constant 0 : index
    %c0_2 = arith.constant 0 : index
    %0 = vector.load %arg2[%c0, %c0_0, %c0_1, %c0_2] : memref<1x1x16x256xf32, #tpu.memory_space<vmem>>, vector<1x1x16x256xf32>
    %1 = vector.shape_cast %0 : vector<1x1x16x256xf32> to vector<16x256xf32>
    %c0_3 = arith.constant 0 : index
    %c0_4 = arith.constant 0 : index
    %c0_5 = arith.constant 0 : index
    %c0_6 = arith.constant 0 : index
    %2 = vector.load %arg3[%c0_3, %c0_4, %c0_5, %c0_6] : memref<1x1x3x256xf32, #tpu.memory_space<vmem>>, vector<1x1x3x256xf32>
    %3 = vector.shape_cast %2 : vector<1x1x3x256xf32> to vector<3x256xf32>
    %c0_7 = arith.constant 0 : index
    %c0_8 = arith.constant 0 : index
    %4 = vector.load %arg6[%c0_7, %c0_8] : memref<32x16xf32, #tpu.memory_space<vmem>>, vector<32x16xf32>
    %cst = arith.constant dense<0.000000e+00> : vector<32x256xf32>
    %5 = tpu.matmul %4, %1, %cst {dimension_numbers = #tpu.dot_dimension_numbers<[1], [0], [0], [1], [0, 0, 1, 1], [], []>} : vector<32x16xf32>, vector<16x256xf32>, vector<32x256xf32> -> vector<32x256xf32>
    %c0_9 = arith.constant 0 : index
    %c0_10 = arith.constant 0 : index
    %c0_11 = arith.constant 0 : index
    %6 = vector.load %arg11[%c0_9, %c0_10, %c0_11] : memref<11x32x1xf32, #tpu.memory_space<vmem>>, vector<1x32x1xf32>
    %7 = vector.shape_cast %6 : vector<1x32x1xf32> to vector<32x1xf32>
    %8 = vector.broadcast %7 : vector<32x1xf32> to vector<32x256xf32>
    %9 = arith.addf %5, %8 : vector<32x256xf32>
    %cst_12 = arith.constant 0.000000e+00 : f32
    %10 = vector.broadcast %cst_12 : f32 to vector<32x256xf32>
    %11 = arith.maximumf %9, %10 : vector<32x256xf32>
    %c0_13 = arith.constant 0 : index
    %c0_14 = arith.constant 0 : index
    %12 = vector.load %arg7[%c0_13, %c0_14] : memref<32x32xf32, #tpu.memory_space<vmem>>, vector<32x32xf32>
    %cst_15 = arith.constant dense<0.000000e+00> : vector<32x256xf32>
    %13 = tpu.matmul %12, %11, %cst_15 {dimension_numbers = #tpu.dot_dimension_numbers<[1], [0], [0], [1], [0, 0, 1, 1], [], []>} : vector<32x32xf32>, vector<32x256xf32>, vector<32x256xf32> -> vector<32x256xf32>
    %c1 = arith.constant 1 : index
    %c0_16 = arith.constant 0 : index
    %c0_17 = arith.constant 0 : index
    %14 = vector.load %arg11[%c1, %c0_16, %c0_17] : memref<11x32x1xf32, #tpu.memory_space<vmem>>, vector<1x32x1xf32>
    %15 = vector.shape_cast %14 : vector<1x32x1xf32> to vector<32x1xf32>
    %16 = vector.broadcast %15 : vector<32x1xf32> to vector<32x256xf32>
    %17 = arith.addf %13, %16 : vector<32x256xf32>
    %c0_18 = arith.constant 0 : index
    %c0_19 = arith.constant 0 : index
    %18 = vector.load %arg8[%c0_18, %c0_19] : memref<32x3xf32, #tpu.memory_space<vmem>>, vector<32x3xf32>
    %cst_20 = arith.constant dense<0.000000e+00> : vector<32x256xf32>
    %19 = tpu.matmul %18, %3, %cst_20 {dimension_numbers = #tpu.dot_dimension_numbers<[1], [0], [0], [1], [0, 0, 1, 1], [], []>} : vector<32x3xf32>, vector<3x256xf32>, vector<32x256xf32> -> vector<32x256xf32>
    %20 = arith.addf %17, %19 : vector<32x256xf32>
    %c2 = arith.constant 2 : index
    %c0_21 = arith.constant 0 : index
    %c0_22 = arith.constant 0 : index
    %21 = vector.load %arg11[%c2, %c0_21, %c0_22] : memref<11x32x1xf32, #tpu.memory_space<vmem>>, vector<1x32x1xf32>
    %22 = vector.shape_cast %21 : vector<1x32x1xf32> to vector<32x1xf32>
    %c3 = arith.constant 3 : index
    %c0_23 = arith.constant 0 : index
    %c0_24 = arith.constant 0 : index
    %23 = vector.load %arg11[%c3, %c0_23, %c0_24] : memref<11x32x1xf32, #tpu.memory_space<vmem>>, vector<1x32x1xf32>
    %24 = vector.shape_cast %23 : vector<1x32x1xf32> to vector<32x1xf32>
    %cst_25 = arith.constant dense<0.000000e+00> : vector<256xf32>
    %25 = vector.multi_reduction <add>, %20, %cst_25 [0] : vector<32x256xf32> to vector<256xf32>
    %26 = vector.shape_cast %25 : vector<256xf32> to vector<1x256xf32>
    %cst_26 = arith.constant 3.200000e+01 : f32
    %27 = vector.broadcast %cst_26 : f32 to vector<1x256xf32>
    %28 = arith.divf %26, %27 : vector<1x256xf32>
    %29 = vector.broadcast %28 : vector<1x256xf32> to vector<32x256xf32>
    %30 = arith.subf %20, %29 : vector<32x256xf32>
    %31 = arith.mulf %30, %30 : vector<32x256xf32>
    %cst_27 = arith.constant dense<0.000000e+00> : vector<256xf32>
    %32 = vector.multi_reduction <add>, %31, %cst_27 [0] : vector<32x256xf32> to vector<256xf32>
    %33 = vector.shape_cast %32 : vector<256xf32> to vector<1x256xf32>
    %cst_28 = arith.constant 3.200000e+01 : f32
    %34 = vector.broadcast %cst_28 : f32 to vector<1x256xf32>
    %35 = arith.divf %33, %34 : vector<1x256xf32>
    %36 = vector.broadcast %28 : vector<1x256xf32> to vector<32x256xf32>
    %37 = arith.subf %20, %36 : vector<32x256xf32>
    %cst_29 = arith.constant 9.99999974E-6 : f32
    %38 = vector.broadcast %cst_29 : f32 to vector<1x256xf32>
    %39 = arith.addf %35, %38 : vector<1x256xf32>
    %40 = math.rsqrt %39 : vector<1x256xf32>
    %41 = vector.broadcast %40 : vector<1x256xf32> to vector<32x256xf32>
    %42 = arith.mulf %37, %41 : vector<32x256xf32>
    %43 = vector.broadcast %22 : vector<32x1xf32> to vector<32x256xf32>
    %44 = arith.mulf %42, %43 : vector<32x256xf32>
    %45 = vector.broadcast %24 : vector<32x1xf32> to vector<32x256xf32>
    %46 = arith.addf %44, %45 : vector<32x256xf32>
    %c0_30 = arith.constant 0 : index
    %c0_31 = arith.constant 0 : index
    %47 = vector.load %arg9[%c0_30, %c0_31] : memref<32x32xf32, #tpu.memory_space<vmem>>, vector<32x32xf32>
    %cst_32 = arith.constant dense<0.000000e+00> : vector<32x256xf32>
    %48 = tpu.matmul %47, %46, %cst_32 {dimension_numbers = #tpu.dot_dimension_numbers<[1], [0], [0], [1], [0, 0, 1, 1], [], []>} : vector<32x32xf32>, vector<32x256xf32>, vector<32x256xf32> -> vector<32x256xf32>
    %c4 = arith.constant 4 : index
    %c0_33 = arith.constant 0 : index
    %c0_34 = arith.constant 0 : index
    %49 = vector.load %arg11[%c4, %c0_33, %c0_34] : memref<11x32x1xf32, #tpu.memory_space<vmem>>, vector<1x32x1xf32>
    %50 = vector.shape_cast %49 : vector<1x32x1xf32> to vector<32x1xf32>
    %51 = vector.broadcast %50 : vector<32x1xf32> to vector<32x256xf32>
    %52 = arith.addf %48, %51 : vector<32x256xf32>
    %cst_35 = arith.constant 0.000000e+00 : f32
    %53 = vector.broadcast %cst_35 : f32 to vector<32x256xf32>
    %54 = arith.maximumf %52, %53 : vector<32x256xf32>
    %c0_36 = arith.constant 0 : index
    %c0_37 = arith.constant 0 : index
    %55 = vector.load %arg10[%c0_36, %c0_37] : memref<32x32xf32, #tpu.memory_space<vmem>>, vector<32x32xf32>
    %cst_38 = arith.constant dense<0.000000e+00> : vector<32x256xf32>
    %56 = tpu.matmul %55, %54, %cst_38 {dimension_numbers = #tpu.dot_dimension_numbers<[1], [0], [0], [1], [0, 0, 1, 1], [], []>} : vector<32x32xf32>, vector<32x256xf32>, vector<32x256xf32> -> vector<32x256xf32>
    %c5 = arith.constant 5 : index
    %c0_39 = arith.constant 0 : index
    %c0_40 = arith.constant 0 : index
    %57 = vector.load %arg11[%c5, %c0_39, %c0_40] : memref<11x32x1xf32, #tpu.memory_space<vmem>>, vector<1x32x1xf32>
    %58 = vector.shape_cast %57 : vector<1x32x1xf32> to vector<32x1xf32>
    %59 = vector.broadcast %58 : vector<32x1xf32> to vector<32x256xf32>
    %60 = arith.addf %56, %59 : vector<32x256xf32>
    %c6 = arith.constant 6 : index
    %c0_41 = arith.constant 0 : index
    %c0_42 = arith.constant 0 : index
    %61 = vector.load %arg11[%c6, %c0_41, %c0_42] : memref<11x32x1xf32, #tpu.memory_space<vmem>>, vector<1x32x1xf32>
    %62 = vector.shape_cast %61 : vector<1x32x1xf32> to vector<32x1xf32>
    %c7 = arith.constant 7 : index
    %c0_43 = arith.constant 0 : index
    %c0_44 = arith.constant 0 : index
    %63 = vector.load %arg11[%c7, %c0_43, %c0_44] : memref<11x32x1xf32, #tpu.memory_space<vmem>>, vector<1x32x1xf32>
    %64 = vector.shape_cast %63 : vector<1x32x1xf32> to vector<32x1xf32>
    %cst_45 = arith.constant dense<0.000000e+00> : vector<256xf32>
    %65 = vector.multi_reduction <add>, %60, %cst_45 [0] : vector<32x256xf32> to vector<256xf32>
    %66 = vector.shape_cast %65 : vector<256xf32> to vector<1x256xf32>
    %cst_46 = arith.constant 3.200000e+01 : f32
    %67 = vector.broadcast %cst_46 : f32 to vector<1x256xf32>
    %68 = arith.divf %66, %67 : vector<1x256xf32>
    %69 = vector.broadcast %68 : vector<1x256xf32> to vector<32x256xf32>
    %70 = arith.subf %60, %69 : vector<32x256xf32>
    %71 = arith.mulf %70, %70 : vector<32x256xf32>
    %cst_47 = arith.constant dense<0.000000e+00> : vector<256xf32>
    %72 = vector.multi_reduction <add>, %71, %cst_47 [0] : vector<32x256xf32> to vector<256xf32>
    %73 = vector.shape_cast %72 : vector<256xf32> to vector<1x256xf32>
    %cst_48 = arith.constant 3.200000e+01 : f32
    %74 = vector.broadcast %cst_48 : f32 to vector<1x256xf32>
    %75 = arith.divf %73, %74 : vector<1x256xf32>
    %76 = vector.broadcast %68 : vector<1x256xf32> to vector<32x256xf32>
    %77 = arith.subf %60, %76 : vector<32x256xf32>
    %cst_49 = arith.constant 9.99999974E-6 : f32
    %78 = vector.broadcast %cst_49 : f32 to vector<1x256xf32>
    %79 = arith.addf %75, %78 : vector<1x256xf32>
    %80 = math.rsqrt %79 : vector<1x256xf32>
    %81 = vector.broadcast %80 : vector<1x256xf32> to vector<32x256xf32>
    %82 = arith.mulf %77, %81 : vector<32x256xf32>
    %83 = vector.broadcast %62 : vector<32x1xf32> to vector<32x256xf32>
    %84 = arith.mulf %82, %83 : vector<32x256xf32>
    %85 = vector.broadcast %64 : vector<32x1xf32> to vector<32x256xf32>
    %86 = arith.addf %84, %85 : vector<32x256xf32>
    %c0_50 = arith.constant 0 : index
    %c0_51 = arith.constant 0 : index
    %87 = vector.load %arg12[%c0_50, %c0_51] : memref<96x32xf32, #tpu.memory_space<vmem>>, vector<96x32xf32>
    %cst_52 = arith.constant dense<0.000000e+00> : vector<96x256xf32>
    %88 = tpu.matmul %87, %86, %cst_52 {dimension_numbers = #tpu.dot_dimension_numbers<[1], [0], [0], [1], [0, 0, 1, 1], [], []>} : vector<96x32xf32>, vector<32x256xf32>, vector<96x256xf32> -> vector<96x256xf32>
    %89 = vector.extract_strided_slice %88 {offsets = [0, 0], sizes = [32, 256], strides = [1, 1]} : vector<96x256xf32> to vector<32x256xf32>
    %c8 = arith.constant 8 : index
    %c0_53 = arith.constant 0 : index
    %c0_54 = arith.constant 0 : index
    %90 = vector.load %arg11[%c8, %c0_53, %c0_54] : memref<11x32x1xf32, #tpu.memory_space<vmem>>, vector<1x32x1xf32>
    %91 = vector.shape_cast %90 : vector<1x32x1xf32> to vector<32x1xf32>
    %92 = vector.broadcast %91 : vector<32x1xf32> to vector<32x256xf32>
    %93 = arith.addf %89, %92 : vector<32x256xf32>
    %94 = vector.extract_strided_slice %88 {offsets = [32, 0], sizes = [32, 256], strides = [1, 1]} : vector<96x256xf32> to vector<32x256xf32>
    %c9 = arith.constant 9 : index
    %c0_55 = arith.constant 0 : index
    %c0_56 = arith.constant 0 : index
    %95 = vector.load %arg11[%c9, %c0_55, %c0_56] : memref<11x32x1xf32, #tpu.memory_space<vmem>>, vector<1x32x1xf32>
    %96 = vector.shape_cast %95 : vector<1x32x1xf32> to vector<32x1xf32>
    %97 = vector.broadcast %96 : vector<32x1xf32> to vector<32x256xf32>
    %98 = arith.addf %94, %97 : vector<32x256xf32>
    %99 = vector.extract_strided_slice %88 {offsets = [64, 0], sizes = [32, 256], strides = [1, 1]} : vector<96x256xf32> to vector<32x256xf32>
    %c10 = arith.constant 10 : index
    %c0_57 = arith.constant 0 : index
    %c0_58 = arith.constant 0 : index
    %100 = vector.load %arg11[%c10, %c0_57, %c0_58] : memref<11x32x1xf32, #tpu.memory_space<vmem>>, vector<1x32x1xf32>
    %101 = vector.shape_cast %100 : vector<1x32x1xf32> to vector<32x1xf32>
    %102 = vector.broadcast %101 : vector<32x1xf32> to vector<32x256xf32>
    %103 = arith.addf %99, %102 : vector<32x256xf32>
    %c0_i32 = arith.constant 0 : i32
    %104 = arith.cmpi eq, %arg1, %c0_i32 : i32
    %105 = arith.extui %104 : i1 to i32
    %c0_i32_59 = arith.constant 0 : i32
    %106 = arith.cmpi ne, %105, %c0_i32_59 : i32
    scf.if %106 {
      %c0_302 = arith.constant 0 : index
      %c0_303 = arith.constant 0 : index
      %c0_304 = arith.constant 0 : index
      %813 = vector.load %arg4[%c0_302, %c0_303, %c0_304] : memref<1x4x32xf32, #tpu.memory_space<vmem>>, vector<1x4x32xf32>
      %814 = vector.shape_cast %813 : vector<1x4x32xf32> to vector<4x32xf32>
      %c0_305 = arith.constant 0 : index
      %c0_306 = arith.constant 0 : index
      %815 = vector.load %arg19[%c0_305, %c0_306] : memref<4x32xf32, #tpu.memory_space<vmem>>, vector<4x32xf32>
      tpu.vector_store %arg19[%c0_305, %c0_306], %814 {strides = array<i32>} : memref<4x32xf32, #tpu.memory_space<vmem>>, vector<4x32xf32>,
      %c0_307 = arith.constant 0 : index
      %c0_308 = arith.constant 0 : index
      %c0_309 = arith.constant 0 : index
      %816 = vector.load %arg5[%c0_307, %c0_308, %c0_309] : memref<1x1x32xf32, #tpu.memory_space<vmem>>, vector<1x1x32xf32>
      %817 = vector.shape_cast %816 : vector<1x1x32xf32> to vector<1x32xf32>
      %c0_310 = arith.constant 0 : index
      %c0_311 = arith.constant 0 : index
      %818 = vector.load %arg20[%c0_310, %c0_311] : memref<1x32xf32, #tpu.memory_space<vmem>>, vector<1x32xf32>
      tpu.vector_store %arg20[%c0_310, %c0_311], %817 {strides = array<i32>} : memref<1x32xf32, #tpu.memory_space<vmem>>, vector<1x32xf32>,
    } else {
    }
    %c0_60 = arith.constant 0 : index
    %c0_61 = arith.constant 0 : index
    %107 = vector.load %arg19[%c0_60, %c0_61] : memref<4x32xf32, #tpu.memory_space<vmem>>, vector<4x32xf32>
    %c0_62 = arith.constant 0 : index
    %c0_63 = arith.constant 0 : index
    %108 = vector.load %arg20[%c0_62, %c0_63] : memref<1x32xf32, #tpu.memory_space<vmem>>, vector<1x32xf32>
    %c0_64 = arith.constant 0 : index
    %c0_65 = arith.constant 0 : index
    %109 = vector.load %arg16[%c0_64, %c0_65] : memref<14x32xf32, #tpu.memory_space<vmem>>, vector<1x32xf32>
    %110 = vector.shape_cast %109 : vector<1x32xf32> to vector<32xf32>
    %c1_66 = arith.constant 1 : index
    %c0_67 = arith.constant 0 : index
    %111 = vector.load %arg16[%c1_66, %c0_67] : memref<14x32xf32, #tpu.memory_space<vmem>>, vector<1x32xf32>
    %112 = vector.shape_cast %111 : vector<1x32xf32> to vector<32xf32>
    %c2_68 = arith.constant 2 : index
    %c0_69 = arith.constant 0 : index
    %113 = vector.load %arg16[%c2_68, %c0_69] : memref<14x32xf32, #tpu.memory_space<vmem>>, vector<1x32xf32>
    %114 = vector.shape_cast %113 : vector<1x32xf32> to vector<32xf32>
    %c3_70 = arith.constant 3 : index
    %c0_71 = arith.constant 0 : index
    %115 = vector.load %arg16[%c3_70, %c0_71] : memref<14x32xf32, #tpu.memory_space<vmem>>, vector<1x32xf32>
    %116 = vector.shape_cast %115 : vector<1x32xf32> to vector<32xf32>
    %c4_72 = arith.constant 4 : index
    %c0_73 = arith.constant 0 : index
    %117 = vector.load %arg16[%c4_72, %c0_73] : memref<14x32xf32, #tpu.memory_space<vmem>>, vector<1x32xf32>
    %118 = vector.shape_cast %117 : vector<1x32xf32> to vector<32xf32>
    %c5_74 = arith.constant 5 : index
    %c0_75 = arith.constant 0 : index
    %119 = vector.load %arg16[%c5_74, %c0_75] : memref<14x32xf32, #tpu.memory_space<vmem>>, vector<1x32xf32>
    %120 = vector.shape_cast %119 : vector<1x32xf32> to vector<32xf32>
    %c6_76 = arith.constant 6 : index
    %c0_77 = arith.constant 0 : index
    %121 = vector.load %arg16[%c6_76, %c0_77] : memref<14x32xf32, #tpu.memory_space<vmem>>, vector<1x32xf32>
    %122 = vector.shape_cast %121 : vector<1x32xf32> to vector<32xf32>
    %c7_78 = arith.constant 7 : index
    %c0_79 = arith.constant 0 : index
    %123 = vector.load %arg16[%c7_78, %c0_79] : memref<14x32xf32, #tpu.memory_space<vmem>>, vector<1x32xf32>
    %124 = vector.shape_cast %123 : vector<1x32xf32> to vector<32xf32>
    %c8_80 = arith.constant 8 : index
    %c0_81 = arith.constant 0 : index
    %125 = vector.load %arg16[%c8_80, %c0_81] : memref<14x32xf32, #tpu.memory_space<vmem>>, vector<1x32xf32>
    %126 = vector.shape_cast %125 : vector<1x32xf32> to vector<32xf32>
    %c9_82 = arith.constant 9 : index
    %c0_83 = arith.constant 0 : index
    %127 = vector.load %arg16[%c9_82, %c0_83] : memref<14x32xf32, #tpu.memory_space<vmem>>, vector<1x32xf32>
    %128 = vector.shape_cast %127 : vector<1x32xf32> to vector<32xf32>
    %c10_84 = arith.constant 10 : index
    %c0_85 = arith.constant 0 : index
    %129 = vector.load %arg16[%c10_84, %c0_85] : memref<14x32xf32, #tpu.memory_space<vmem>>, vector<1x32xf32>
    %130 = vector.shape_cast %129 : vector<1x32xf32> to vector<32xf32>
    %c11 = arith.constant 11 : index
    %c0_86 = arith.constant 0 : index
    %131 = vector.load %arg16[%c11, %c0_86] : memref<14x32xf32, #tpu.memory_space<vmem>>, vector<1x32xf32>
    %132 = vector.shape_cast %131 : vector<1x32xf32> to vector<32xf32>
    %c12 = arith.constant 12 : index
    %c0_87 = arith.constant 0 : index
    %133 = vector.load %arg16[%c12, %c0_87] : memref<14x32xf32, #tpu.memory_space<vmem>>, vector<1x32xf32>
    %134 = vector.shape_cast %133 : vector<1x32xf32> to vector<32xf32>
    %c13 = arith.constant 13 : index
    %c0_88 = arith.constant 0 : index
    %135 = vector.load %arg16[%c13, %c0_88] : memref<14x32xf32, #tpu.memory_space<vmem>>, vector<1x32xf32>
    %136 = vector.shape_cast %135 : vector<1x32xf32> to vector<32xf32>
    %c0_89 = arith.constant 0 : index
    %c0_90 = arith.constant 0 : index
    %137 = vector.load %arg15[%c0_89, %c0_90] : memref<4x96xf32, #tpu.memory_space<vmem>>, vector<1x96xf32>
    %138 = vector.shape_cast %137 : vector<1x96xf32> to vector<96xf32>
    %c1_91 = arith.constant 1 : index
    %c0_92 = arith.constant 0 : index
    %139 = vector.load %arg15[%c1_91, %c0_92] : memref<4x96xf32, #tpu.memory_space<vmem>>, vector<1x96xf32>
    %140 = vector.shape_cast %139 : vector<1x96xf32> to vector<96xf32>
    %c2_93 = arith.constant 2 : index
    %c0_94 = arith.constant 0 : index
    %141 = vector.load %arg15[%c2_93, %c0_94] : memref<4x96xf32, #tpu.memory_space<vmem>>, vector<1x96xf32>
    %142 = vector.shape_cast %141 : vector<1x96xf32> to vector<96xf32>
    %c3_95 = arith.constant 3 : index
    %c0_96 = arith.constant 0 : index
    %143 = vector.load %arg15[%c3_95, %c0_96] : memref<4x96xf32, #tpu.memory_space<vmem>>, vector<1x96xf32>
    %144 = vector.shape_cast %143 : vector<1x96xf32> to vector<96xf32>
    %cst_97 = arith.constant dense<0.000000e+00> : vector<4xf32>
    %145 = vector.multi_reduction <add>, %107, %cst_97 [1] : vector<4x32xf32> to vector<4xf32>
    %146 = vector.shape_cast %145 : vector<4xf32> to vector<4x1xf32>
    %cst_98 = arith.constant 3.200000e+01 : f32
    %147 = vector.broadcast %cst_98 : f32 to vector<4x1xf32>
    %148 = arith.divf %146, %147 : vector<4x1xf32>
    %149 = vector.broadcast %148 : vector<4x1xf32> to vector<4x32xf32>
    %150 = arith.subf %107, %149 : vector<4x32xf32>
    %151 = arith.mulf %150, %150 : vector<4x32xf32>
    %cst_99 = arith.constant dense<0.000000e+00> : vector<4xf32>
    %152 = vector.multi_reduction <add>, %151, %cst_99 [1] : vector<4x32xf32> to vector<4xf32>
    %153 = vector.shape_cast %152 : vector<4xf32> to vector<4x1xf32>
    %cst_100 = arith.constant 3.200000e+01 : f32
    %154 = vector.broadcast %cst_100 : f32 to vector<4x1xf32>
    %155 = arith.divf %153, %154 : vector<4x1xf32>
    %156 = vector.broadcast %148 : vector<4x1xf32> to vector<4x32xf32>
    %157 = arith.subf %107, %156 : vector<4x32xf32>
    %cst_101 = arith.constant 9.99999974E-6 : f32
    %158 = vector.broadcast %cst_101 : f32 to vector<4x1xf32>
    %159 = arith.addf %155, %158 : vector<4x1xf32>
    %160 = math.rsqrt %159 : vector<4x1xf32>
    %161 = vector.broadcast %160 : vector<4x1xf32> to vector<4x32xf32>
    %162 = arith.mulf %157, %161 : vector<4x32xf32>
    %163 = vector.shape_cast %122 : vector<32xf32> to vector<1x32xf32>
    %164 = vector.broadcast %163 : vector<1x32xf32> to vector<4x32xf32>
    %165 = arith.mulf %162, %164 : vector<4x32xf32>
    %166 = vector.shape_cast %124 : vector<32xf32> to vector<1x32xf32>
    %167 = vector.broadcast %166 : vector<1x32xf32> to vector<4x32xf32>
    %168 = arith.addf %165, %167 : vector<4x32xf32>
    %cst_102 = arith.constant dense<0.000000e+00> : vector<1xf32>
    %169 = vector.multi_reduction <add>, %108, %cst_102 [1] : vector<1x32xf32> to vector<1xf32>
    %170 = vector.shape_cast %169 : vector<1xf32> to vector<1x1xf32>
    %cst_103 = arith.constant 3.200000e+01 : f32
    %171 = vector.broadcast %cst_103 : f32 to vector<1x1xf32>
    %172 = arith.divf %170, %171 : vector<1x1xf32>
    %173 = vector.broadcast %172 : vector<1x1xf32> to vector<1x32xf32>
    %174 = arith.subf %108, %173 : vector<1x32xf32>
    %175 = arith.mulf %174, %174 : vector<1x32xf32>
    %cst_104 = arith.constant dense<0.000000e+00> : vector<1xf32>
    %176 = vector.multi_reduction <add>, %175, %cst_104 [1] : vector<1x32xf32> to vector<1xf32>
    %177 = vector.shape_cast %176 : vector<1xf32> to vector<1x1xf32>
    %cst_105 = arith.constant 3.200000e+01 : f32
    %178 = vector.broadcast %cst_105 : f32 to vector<1x1xf32>
    %179 = arith.divf %177, %178 : vector<1x1xf32>
    %180 = vector.broadcast %172 : vector<1x1xf32> to vector<1x32xf32>
    %181 = arith.subf %108, %180 : vector<1x32xf32>
    %cst_106 = arith.constant 9.99999974E-6 : f32
    %182 = vector.broadcast %cst_106 : f32 to vector<1x1xf32>
    %183 = arith.addf %179, %182 : vector<1x1xf32>
    %184 = math.rsqrt %183 : vector<1x1xf32>
    %185 = vector.broadcast %184 : vector<1x1xf32> to vector<1x32xf32>
    %186 = arith.mulf %181, %185 : vector<1x32xf32>
    %187 = vector.shape_cast %126 : vector<32xf32> to vector<1x32xf32>
    %188 = arith.mulf %186, %187 : vector<1x32xf32>
    %189 = vector.shape_cast %128 : vector<32xf32> to vector<1x32xf32>
    %190 = arith.addf %188, %189 : vector<1x32xf32>
    %c0_107 = arith.constant 0 : index
    %c0_108 = arith.constant 0 : index
    %191 = vector.load %arg13[%c0_107, %c0_108] : memref<192x32xf32, #tpu.memory_space<vmem>>, vector<32x32xf32>
    %cst_109 = arith.constant dense<0.000000e+00> : vector<4x32xf32>
    %192 = tpu.matmul %168, %191, %cst_109 {dimension_numbers = #tpu.dot_dimension_numbers<[1], [0], [0], [1], [0, 0, 1, 1], [], []>} : vector<4x32xf32>, vector<32x32xf32>, vector<4x32xf32> -> vector<4x32xf32>
    %193 = vector.shape_cast %110 : vector<32xf32> to vector<1x32xf32>
    %194 = vector.broadcast %193 : vector<1x32xf32> to vector<4x32xf32>
    %195 = arith.addf %192, %194 : vector<4x32xf32>
    %c32 = arith.constant 32 : index
    %c0_110 = arith.constant 0 : index
    %196 = vector.load %arg13[%c32, %c0_110] : memref<192x32xf32, #tpu.memory_space<vmem>>, vector<32x32xf32>
    %cst_111 = arith.constant dense<0.000000e+00> : vector<1x32xf32>
    %197 = tpu.matmul %190, %196, %cst_111 {dimension_numbers = #tpu.dot_dimension_numbers<[1], [0], [0], [1], [0, 0, 1, 1], [], []>} : vector<1x32xf32>, vector<32x32xf32>, vector<1x32xf32> -> vector<1x32xf32>
    %198 = vector.shape_cast %112 : vector<32xf32> to vector<1x32xf32>
    %199 = arith.addf %197, %198 : vector<1x32xf32>
    %200 = tpu.concatenate %199, %195 in 0 : vector<1x32xf32>, vector<4x32xf32> -> vector<5x32xf32>
    %cst_112 = arith.constant dense<0.000000e+00> : vector<5x256xf32>
    %201 = tpu.matmul %200, %93, %cst_112 {dimension_numbers = #tpu.dot_dimension_numbers<[1], [0], [0], [1], [0, 0, 1, 1], [], []>} : vector<5x32xf32>, vector<32x256xf32>, vector<5x256xf32> -> vector<5x256xf32>
    %cst_113 = arith.constant 0.176776692 : f32
    %202 = vector.broadcast %cst_113 : f32 to vector<5x256xf32>
    %203 = arith.mulf %201, %202 : vector<5x256xf32>
    %cst_114 = arith.constant dense<0xFF800000> : vector<256xf32>
    %204 = vector.multi_reduction <maximumf>, %203, %cst_114 [0] : vector<5x256xf32> to vector<256xf32>
    %205 = vector.shape_cast %204 : vector<256xf32> to vector<1x256xf32>
    %206 = vector.broadcast %205 : vector<1x256xf32> to vector<5x256xf32>
    %207 = arith.subf %203, %206 : vector<5x256xf32>
    %208 = math.exp %207 : vector<5x256xf32>
    %cst_115 = arith.constant dense<0.000000e+00> : vector<256xf32>
    %209 = vector.multi_reduction <add>, %208, %cst_115 [0] : vector<5x256xf32> to vector<256xf32>
    %210 = vector.shape_cast %209 : vector<256xf32> to vector<1x256xf32>
    %211 = tpu.reciprocal %210 {approx = true} : vector<1x256xf32> -> vector<1x256xf32>
    %212 = vector.broadcast %211 : vector<1x256xf32> to vector<5x256xf32>
    %213 = arith.mulf %208, %212 : vector<5x256xf32>
    %cst_116 = arith.constant 9.99999993E-9 : f32
    %214 = vector.broadcast %cst_116 : f32 to vector<5x256xf32>
    %215 = arith.addf %213, %214 : vector<5x256xf32>
    %cst_117 = arith.constant dense<0.000000e+00> : vector<5xf32>
    %216 = vector.multi_reduction <add>, %215, %cst_117 [1] : vector<5x256xf32> to vector<5xf32>
    %217 = vector.shape_cast %216 : vector<5xf32> to vector<5x1xf32>
    %218 = tpu.reciprocal %217 {approx = true} : vector<5x1xf32> -> vector<5x1xf32>
    %219 = vector.broadcast %218 : vector<5x1xf32> to vector<5x256xf32>
    %220 = arith.mulf %215, %219 : vector<5x256xf32>
    %221 = vector.extract_strided_slice %220 {offsets = [1, 0], sizes = [4, 256], strides = [1, 1]} : vector<5x256xf32> to vector<4x256xf32>
    %cst_118 = arith.constant dense<0.000000e+00> : vector<4x32xf32>
    %222 = tpu.matmul %221, %98, %cst_118 {dimension_numbers = #tpu.dot_dimension_numbers<[1], [1], [0], [0], [0, 0, 1, 0], [], []>} : vector<4x256xf32>, vector<32x256xf32>, vector<4x32xf32> -> vector<4x32xf32>
    %223 = vector.extract_strided_slice %220 {offsets = [0, 0], sizes = [1, 256], strides = [1, 1]} : vector<5x256xf32> to vector<1x256xf32>
    %cst_119 = arith.constant dense<0.000000e+00> : vector<1x32xf32>
    %224 = tpu.matmul %223, %103, %cst_119 {dimension_numbers = #tpu.dot_dimension_numbers<[1], [1], [0], [0], [0, 0, 1, 0], [], []>} : vector<1x256xf32>, vector<32x256xf32>, vector<1x32xf32> -> vector<1x32xf32>
    %c0_120 = arith.constant 0 : index
    %c0_121 = arith.constant 0 : index
    %225 = vector.load %arg14[%c0_120, %c0_121] : memref<128x96xf32, #tpu.memory_space<vmem>>, vector<32x96xf32>
    %c32_122 = arith.constant 32 : index
    %c0_123 = arith.constant 0 : index
    %226 = vector.load %arg14[%c32_122, %c0_123] : memref<128x96xf32, #tpu.memory_space<vmem>>, vector<32x96xf32>
    %cst_124 = arith.constant dense<0.000000e+00> : vector<4x96xf32>
    %227 = tpu.matmul %222, %225, %cst_124 {dimension_numbers = #tpu.dot_dimension_numbers<[1], [0], [0], [1], [0, 0, 1, 1], [], []>} : vector<4x32xf32>, vector<32x96xf32>, vector<4x96xf32> -> vector<4x96xf32>
    %228 = vector.shape_cast %138 : vector<96xf32> to vector<1x96xf32>
    %229 = vector.broadcast %228 : vector<1x96xf32> to vector<4x96xf32>
    %230 = arith.addf %227, %229 : vector<4x96xf32>
    %cst_125 = arith.constant dense<0.000000e+00> : vector<4x96xf32>
    %231 = tpu.matmul %107, %226, %cst_125 {dimension_numbers = #tpu.dot_dimension_numbers<[1], [0], [0], [1], [0, 0, 1, 1], [], []>} : vector<4x32xf32>, vector<32x96xf32>, vector<4x96xf32> -> vector<4x96xf32>
    %232 = vector.shape_cast %140 : vector<96xf32> to vector<1x96xf32>
    %233 = vector.broadcast %232 : vector<1x96xf32> to vector<4x96xf32>
    %234 = arith.addf %231, %233 : vector<4x96xf32>
    %235 = vector.extract_strided_slice %230 {offsets = [0, 0], sizes = [4, 32], strides = [1, 1]} : vector<4x96xf32> to vector<4x32xf32>
    %236 = vector.extract_strided_slice %234 {offsets = [0, 0], sizes = [4, 32], strides = [1, 1]} : vector<4x96xf32> to vector<4x32xf32>
    %237 = arith.addf %235, %236 : vector<4x32xf32>
    %238 = arith.negf %237 : vector<4x32xf32>
    %239 = math.exp %238 : vector<4x32xf32>
    %cst_126 = arith.constant 1.000000e+00 : f32
    %240 = vector.broadcast %cst_126 : f32 to vector<4x32xf32>
    %241 = arith.addf %240, %239 : vector<4x32xf32>
    %242 = arith.divf %240, %241 : vector<4x32xf32>
    %243 = vector.extract_strided_slice %230 {offsets = [0, 32], sizes = [4, 32], strides = [1, 1]} : vector<4x96xf32> to vector<4x32xf32>
    %244 = vector.extract_strided_slice %234 {offsets = [0, 32], sizes = [4, 32], strides = [1, 1]} : vector<4x96xf32> to vector<4x32xf32>
    %245 = arith.addf %243, %244 : vector<4x32xf32>
    %246 = arith.negf %245 : vector<4x32xf32>
    %247 = math.exp %246 : vector<4x32xf32>
    %cst_127 = arith.constant 1.000000e+00 : f32
    %248 = vector.broadcast %cst_127 : f32 to vector<4x32xf32>
    %249 = arith.addf %248, %247 : vector<4x32xf32>
    %250 = arith.divf %248, %249 : vector<4x32xf32>
    %251 = vector.extract_strided_slice %230 {offsets = [0, 64], sizes = [4, 32], strides = [1, 1]} : vector<4x96xf32> to vector<4x32xf32>
    %252 = vector.extract_strided_slice %234 {offsets = [0, 64], sizes = [4, 32], strides = [1, 1]} : vector<4x96xf32> to vector<4x32xf32>
    %253 = arith.mulf %242, %252 : vector<4x32xf32>
    %254 = arith.addf %251, %253 : vector<4x32xf32>
    %255 = math.tanh %254 : vector<4x32xf32>
    %cst_128 = arith.constant 1.000000e+00 : f32
    %256 = vector.broadcast %cst_128 : f32 to vector<4x32xf32>
    %257 = arith.subf %256, %250 : vector<4x32xf32>
    %258 = arith.mulf %257, %255 : vector<4x32xf32>
    %259 = arith.mulf %250, %107 : vector<4x32xf32>
    %260 = arith.addf %258, %259 : vector<4x32xf32>
    %c64 = arith.constant 64 : index
    %c0_129 = arith.constant 0 : index
    %261 = vector.load %arg14[%c64, %c0_129] : memref<128x96xf32, #tpu.memory_space<vmem>>, vector<32x96xf32>
    %c96 = arith.constant 96 : index
    %c0_130 = arith.constant 0 : index
    %262 = vector.load %arg14[%c96, %c0_130] : memref<128x96xf32, #tpu.memory_space<vmem>>, vector<32x96xf32>
    %cst_131 = arith.constant dense<0.000000e+00> : vector<1x96xf32>
    %263 = tpu.matmul %224, %261, %cst_131 {dimension_numbers = #tpu.dot_dimension_numbers<[1], [0], [0], [1], [0, 0, 1, 1], [], []>} : vector<1x32xf32>, vector<32x96xf32>, vector<1x96xf32> -> vector<1x96xf32>
    %264 = vector.shape_cast %142 : vector<96xf32> to vector<1x96xf32>
    %265 = arith.addf %263, %264 : vector<1x96xf32>
    %cst_132 = arith.constant dense<0.000000e+00> : vector<1x96xf32>
    %266 = tpu.matmul %108, %262, %cst_132 {dimension_numbers = #tpu.dot_dimension_numbers<[1], [0], [0], [1], [0, 0, 1, 1], [], []>} : vector<1x32xf32>, vector<32x96xf32>, vector<1x96xf32> -> vector<1x96xf32>
    %267 = vector.shape_cast %144 : vector<96xf32> to vector<1x96xf32>
    %268 = arith.addf %266, %267 : vector<1x96xf32>
    %269 = vector.extract_strided_slice %265 {offsets = [0, 0], sizes = [1, 32], strides = [1, 1]} : vector<1x96xf32> to vector<1x32xf32>
    %270 = vector.extract_strided_slice %268 {offsets = [0, 0], sizes = [1, 32], strides = [1, 1]} : vector<1x96xf32> to vector<1x32xf32>
    %271 = arith.addf %269, %270 : vector<1x32xf32>
    %272 = arith.negf %271 : vector<1x32xf32>
    %273 = math.exp %272 : vector<1x32xf32>
    %cst_133 = arith.constant 1.000000e+00 : f32
    %274 = vector.broadcast %cst_133 : f32 to vector<1x32xf32>
    %275 = arith.addf %274, %273 : vector<1x32xf32>
    %276 = arith.divf %274, %275 : vector<1x32xf32>
    %277 = vector.extract_strided_slice %265 {offsets = [0, 32], sizes = [1, 32], strides = [1, 1]} : vector<1x96xf32> to vector<1x32xf32>
    %278 = vector.extract_strided_slice %268 {offsets = [0, 32], sizes = [1, 32], strides = [1, 1]} : vector<1x96xf32> to vector<1x32xf32>
    %279 = arith.addf %277, %278 : vector<1x32xf32>
    %280 = arith.negf %279 : vector<1x32xf32>
    %281 = math.exp %280 : vector<1x32xf32>
    %cst_134 = arith.constant 1.000000e+00 : f32
    %282 = vector.broadcast %cst_134 : f32 to vector<1x32xf32>
    %283 = arith.addf %282, %281 : vector<1x32xf32>
    %284 = arith.divf %282, %283 : vector<1x32xf32>
    %285 = vector.extract_strided_slice %265 {offsets = [0, 64], sizes = [1, 32], strides = [1, 1]} : vector<1x96xf32> to vector<1x32xf32>
    %286 = vector.extract_strided_slice %268 {offsets = [0, 64], sizes = [1, 32], strides = [1, 1]} : vector<1x96xf32> to vector<1x32xf32>
    %287 = arith.mulf %276, %286 : vector<1x32xf32>
    %288 = arith.addf %285, %287 : vector<1x32xf32>
    %289 = math.tanh %288 : vector<1x32xf32>
    %cst_135 = arith.constant 1.000000e+00 : f32
    %290 = vector.broadcast %cst_135 : f32 to vector<1x32xf32>
    %291 = arith.subf %290, %284 : vector<1x32xf32>
    %292 = arith.mulf %291, %289 : vector<1x32xf32>
    %293 = arith.mulf %284, %108 : vector<1x32xf32>
    %294 = arith.addf %292, %293 : vector<1x32xf32>
    %cst_136 = arith.constant dense<0.000000e+00> : vector<4xf32>
    %295 = vector.multi_reduction <add>, %260, %cst_136 [1] : vector<4x32xf32> to vector<4xf32>
    %296 = vector.shape_cast %295 : vector<4xf32> to vector<4x1xf32>
    %cst_137 = arith.constant 3.200000e+01 : f32
    %297 = vector.broadcast %cst_137 : f32 to vector<4x1xf32>
    %298 = arith.divf %296, %297 : vector<4x1xf32>
    %299 = vector.broadcast %298 : vector<4x1xf32> to vector<4x32xf32>
    %300 = arith.subf %260, %299 : vector<4x32xf32>
    %301 = arith.mulf %300, %300 : vector<4x32xf32>
    %cst_138 = arith.constant dense<0.000000e+00> : vector<4xf32>
    %302 = vector.multi_reduction <add>, %301, %cst_138 [1] : vector<4x32xf32> to vector<4xf32>
    %303 = vector.shape_cast %302 : vector<4xf32> to vector<4x1xf32>
    %cst_139 = arith.constant 3.200000e+01 : f32
    %304 = vector.broadcast %cst_139 : f32 to vector<4x1xf32>
    %305 = arith.divf %303, %304 : vector<4x1xf32>
    %306 = vector.broadcast %298 : vector<4x1xf32> to vector<4x32xf32>
    %307 = arith.subf %260, %306 : vector<4x32xf32>
    %cst_140 = arith.constant 9.99999974E-6 : f32
    %308 = vector.broadcast %cst_140 : f32 to vector<4x1xf32>
    %309 = arith.addf %305, %308 : vector<4x1xf32>
    %310 = math.rsqrt %309 : vector<4x1xf32>
    %311 = vector.broadcast %310 : vector<4x1xf32> to vector<4x32xf32>
    %312 = arith.mulf %307, %311 : vector<4x32xf32>
    %313 = vector.shape_cast %130 : vector<32xf32> to vector<1x32xf32>
    %314 = vector.broadcast %313 : vector<1x32xf32> to vector<4x32xf32>
    %315 = arith.mulf %312, %314 : vector<4x32xf32>
    %316 = vector.shape_cast %132 : vector<32xf32> to vector<1x32xf32>
    %317 = vector.broadcast %316 : vector<1x32xf32> to vector<4x32xf32>
    %318 = arith.addf %315, %317 : vector<4x32xf32>
    %c64_141 = arith.constant 64 : index
    %c0_142 = arith.constant 0 : index
    %319 = vector.load %arg13[%c64_141, %c0_142] : memref<192x32xf32, #tpu.memory_space<vmem>>, vector<32x32xf32>
    %cst_143 = arith.constant dense<0.000000e+00> : vector<4x32xf32>
    %320 = tpu.matmul %318, %319, %cst_143 {dimension_numbers = #tpu.dot_dimension_numbers<[1], [0], [0], [1], [0, 0, 1, 1], [], []>} : vector<4x32xf32>, vector<32x32xf32>, vector<4x32xf32> -> vector<4x32xf32>
    %321 = vector.shape_cast %114 : vector<32xf32> to vector<1x32xf32>
    %322 = vector.broadcast %321 : vector<1x32xf32> to vector<4x32xf32>
    %323 = arith.addf %320, %322 : vector<4x32xf32>
    %cst_144 = arith.constant 0.000000e+00 : f32
    %324 = vector.broadcast %cst_144 : f32 to vector<4x32xf32>
    %325 = arith.maximumf %323, %324 : vector<4x32xf32>
    %c96_145 = arith.constant 96 : index
    %c0_146 = arith.constant 0 : index
    %326 = vector.load %arg13[%c96_145, %c0_146] : memref<192x32xf32, #tpu.memory_space<vmem>>, vector<32x32xf32>
    %cst_147 = arith.constant dense<0.000000e+00> : vector<4x32xf32>
    %327 = tpu.matmul %325, %326, %cst_147 {dimension_numbers = #tpu.dot_dimension_numbers<[1], [0], [0], [1], [0, 0, 1, 1], [], []>} : vector<4x32xf32>, vector<32x32xf32>, vector<4x32xf32> -> vector<4x32xf32>
    %328 = arith.addf %260, %327 : vector<4x32xf32>
    %329 = vector.shape_cast %116 : vector<32xf32> to vector<1x32xf32>
    %330 = vector.broadcast %329 : vector<1x32xf32> to vector<4x32xf32>
    %331 = arith.addf %328, %330 : vector<4x32xf32>
    %cst_148 = arith.constant dense<0.000000e+00> : vector<1xf32>
    %332 = vector.multi_reduction <add>, %294, %cst_148 [1] : vector<1x32xf32> to vector<1xf32>
    %333 = vector.shape_cast %332 : vector<1xf32> to vector<1x1xf32>
    %cst_149 = arith.constant 3.200000e+01 : f32
    %334 = vector.broadcast %cst_149 : f32 to vector<1x1xf32>
    %335 = arith.divf %333, %334 : vector<1x1xf32>
    %336 = vector.broadcast %335 : vector<1x1xf32> to vector<1x32xf32>
    %337 = arith.subf %294, %336 : vector<1x32xf32>
    %338 = arith.mulf %337, %337 : vector<1x32xf32>
    %cst_150 = arith.constant dense<0.000000e+00> : vector<1xf32>
    %339 = vector.multi_reduction <add>, %338, %cst_150 [1] : vector<1x32xf32> to vector<1xf32>
    %340 = vector.shape_cast %339 : vector<1xf32> to vector<1x1xf32>
    %cst_151 = arith.constant 3.200000e+01 : f32
    %341 = vector.broadcast %cst_151 : f32 to vector<1x1xf32>
    %342 = arith.divf %340, %341 : vector<1x1xf32>
    %343 = vector.broadcast %335 : vector<1x1xf32> to vector<1x32xf32>
    %344 = arith.subf %294, %343 : vector<1x32xf32>
    %cst_152 = arith.constant 9.99999974E-6 : f32
    %345 = vector.broadcast %cst_152 : f32 to vector<1x1xf32>
    %346 = arith.addf %342, %345 : vector<1x1xf32>
    %347 = math.rsqrt %346 : vector<1x1xf32>
    %348 = vector.broadcast %347 : vector<1x1xf32> to vector<1x32xf32>
    %349 = arith.mulf %344, %348 : vector<1x32xf32>
    %350 = vector.shape_cast %134 : vector<32xf32> to vector<1x32xf32>
    %351 = arith.mulf %349, %350 : vector<1x32xf32>
    %352 = vector.shape_cast %136 : vector<32xf32> to vector<1x32xf32>
    %353 = arith.addf %351, %352 : vector<1x32xf32>
    %c128 = arith.constant 128 : index
    %c0_153 = arith.constant 0 : index
    %354 = vector.load %arg13[%c128, %c0_153] : memref<192x32xf32, #tpu.memory_space<vmem>>, vector<32x32xf32>
    %cst_154 = arith.constant dense<0.000000e+00> : vector<1x32xf32>
    %355 = tpu.matmul %353, %354, %cst_154 {dimension_numbers = #tpu.dot_dimension_numbers<[1], [0], [0], [1], [0, 0, 1, 1], [], []>} : vector<1x32xf32>, vector<32x32xf32>, vector<1x32xf32> -> vector<1x32xf32>
    %356 = vector.shape_cast %118 : vector<32xf32> to vector<1x32xf32>
    %357 = arith.addf %355, %356 : vector<1x32xf32>
    %cst_155 = arith.constant 0.000000e+00 : f32
    %358 = vector.broadcast %cst_155 : f32 to vector<1x32xf32>
    %359 = arith.maximumf %357, %358 : vector<1x32xf32>
    %c160 = arith.constant 160 : index
    %c0_156 = arith.constant 0 : index
    %360 = vector.load %arg13[%c160, %c0_156] : memref<192x32xf32, #tpu.memory_space<vmem>>, vector<32x32xf32>
    %cst_157 = arith.constant dense<0.000000e+00> : vector<1x32xf32>
    %361 = tpu.matmul %359, %360, %cst_157 {dimension_numbers = #tpu.dot_dimension_numbers<[1], [0], [0], [1], [0, 0, 1, 1], [], []>} : vector<1x32xf32>, vector<32x32xf32>, vector<1x32xf32> -> vector<1x32xf32>
    %362 = arith.addf %294, %361 : vector<1x32xf32>
    %363 = vector.shape_cast %120 : vector<32xf32> to vector<1x32xf32>
    %364 = arith.addf %362, %363 : vector<1x32xf32>
    %cst_158 = arith.constant dense<0.000000e+00> : vector<4xf32>
    %365 = vector.multi_reduction <add>, %331, %cst_158 [1] : vector<4x32xf32> to vector<4xf32>
    %366 = vector.shape_cast %365 : vector<4xf32> to vector<4x1xf32>
    %cst_159 = arith.constant 3.200000e+01 : f32
    %367 = vector.broadcast %cst_159 : f32 to vector<4x1xf32>
    %368 = arith.divf %366, %367 : vector<4x1xf32>
    %369 = vector.broadcast %368 : vector<4x1xf32> to vector<4x32xf32>
    %370 = arith.subf %331, %369 : vector<4x32xf32>
    %371 = arith.mulf %370, %370 : vector<4x32xf32>
    %cst_160 = arith.constant dense<0.000000e+00> : vector<4xf32>
    %372 = vector.multi_reduction <add>, %371, %cst_160 [1] : vector<4x32xf32> to vector<4xf32>
    %373 = vector.shape_cast %372 : vector<4xf32> to vector<4x1xf32>
    %cst_161 = arith.constant 3.200000e+01 : f32
    %374 = vector.broadcast %cst_161 : f32 to vector<4x1xf32>
    %375 = arith.divf %373, %374 : vector<4x1xf32>
    %376 = vector.broadcast %368 : vector<4x1xf32> to vector<4x32xf32>
    %377 = arith.subf %331, %376 : vector<4x32xf32>
    %cst_162 = arith.constant 9.99999974E-6 : f32
    %378 = vector.broadcast %cst_162 : f32 to vector<4x1xf32>
    %379 = arith.addf %375, %378 : vector<4x1xf32>
    %380 = math.rsqrt %379 : vector<4x1xf32>
    %381 = vector.broadcast %380 : vector<4x1xf32> to vector<4x32xf32>
    %382 = arith.mulf %377, %381 : vector<4x32xf32>
    %383 = vector.shape_cast %122 : vector<32xf32> to vector<1x32xf32>
    %384 = vector.broadcast %383 : vector<1x32xf32> to vector<4x32xf32>
    %385 = arith.mulf %382, %384 : vector<4x32xf32>
    %386 = vector.shape_cast %124 : vector<32xf32> to vector<1x32xf32>
    %387 = vector.broadcast %386 : vector<1x32xf32> to vector<4x32xf32>
    %388 = arith.addf %385, %387 : vector<4x32xf32>
    %cst_163 = arith.constant dense<0.000000e+00> : vector<1xf32>
    %389 = vector.multi_reduction <add>, %364, %cst_163 [1] : vector<1x32xf32> to vector<1xf32>
    %390 = vector.shape_cast %389 : vector<1xf32> to vector<1x1xf32>
    %cst_164 = arith.constant 3.200000e+01 : f32
    %391 = vector.broadcast %cst_164 : f32 to vector<1x1xf32>
    %392 = arith.divf %390, %391 : vector<1x1xf32>
    %393 = vector.broadcast %392 : vector<1x1xf32> to vector<1x32xf32>
    %394 = arith.subf %364, %393 : vector<1x32xf32>
    %395 = arith.mulf %394, %394 : vector<1x32xf32>
    %cst_165 = arith.constant dense<0.000000e+00> : vector<1xf32>
    %396 = vector.multi_reduction <add>, %395, %cst_165 [1] : vector<1x32xf32> to vector<1xf32>
    %397 = vector.shape_cast %396 : vector<1xf32> to vector<1x1xf32>
    %cst_166 = arith.constant 3.200000e+01 : f32
    %398 = vector.broadcast %cst_166 : f32 to vector<1x1xf32>
    %399 = arith.divf %397, %398 : vector<1x1xf32>
    %400 = vector.broadcast %392 : vector<1x1xf32> to vector<1x32xf32>
    %401 = arith.subf %364, %400 : vector<1x32xf32>
    %cst_167 = arith.constant 9.99999974E-6 : f32
    %402 = vector.broadcast %cst_167 : f32 to vector<1x1xf32>
    %403 = arith.addf %399, %402 : vector<1x1xf32>
    %404 = math.rsqrt %403 : vector<1x1xf32>
    %405 = vector.broadcast %404 : vector<1x1xf32> to vector<1x32xf32>
    %406 = arith.mulf %401, %405 : vector<1x32xf32>
    %407 = vector.shape_cast %126 : vector<32xf32> to vector<1x32xf32>
    %408 = arith.mulf %406, %407 : vector<1x32xf32>
    %409 = vector.shape_cast %128 : vector<32xf32> to vector<1x32xf32>
    %410 = arith.addf %408, %409 : vector<1x32xf32>
    %c0_168 = arith.constant 0 : index
    %c0_169 = arith.constant 0 : index
    %411 = vector.load %arg13[%c0_168, %c0_169] : memref<192x32xf32, #tpu.memory_space<vmem>>, vector<32x32xf32>
    %cst_170 = arith.constant dense<0.000000e+00> : vector<4x32xf32>
    %412 = tpu.matmul %388, %411, %cst_170 {dimension_numbers = #tpu.dot_dimension_numbers<[1], [0], [0], [1], [0, 0, 1, 1], [], []>} : vector<4x32xf32>, vector<32x32xf32>, vector<4x32xf32> -> vector<4x32xf32>
    %413 = vector.shape_cast %110 : vector<32xf32> to vector<1x32xf32>
    %414 = vector.broadcast %413 : vector<1x32xf32> to vector<4x32xf32>
    %415 = arith.addf %412, %414 : vector<4x32xf32>
    %c32_171 = arith.constant 32 : index
    %c0_172 = arith.constant 0 : index
    %416 = vector.load %arg13[%c32_171, %c0_172] : memref<192x32xf32, #tpu.memory_space<vmem>>, vector<32x32xf32>
    %cst_173 = arith.constant dense<0.000000e+00> : vector<1x32xf32>
    %417 = tpu.matmul %410, %416, %cst_173 {dimension_numbers = #tpu.dot_dimension_numbers<[1], [0], [0], [1], [0, 0, 1, 1], [], []>} : vector<1x32xf32>, vector<32x32xf32>, vector<1x32xf32> -> vector<1x32xf32>
    %418 = vector.shape_cast %112 : vector<32xf32> to vector<1x32xf32>
    %419 = arith.addf %417, %418 : vector<1x32xf32>
    %420 = tpu.concatenate %419, %415 in 0 : vector<1x32xf32>, vector<4x32xf32> -> vector<5x32xf32>
    %cst_174 = arith.constant dense<0.000000e+00> : vector<5x256xf32>
    %421 = tpu.matmul %420, %93, %cst_174 {dimension_numbers = #tpu.dot_dimension_numbers<[1], [0], [0], [1], [0, 0, 1, 1], [], []>} : vector<5x32xf32>, vector<32x256xf32>, vector<5x256xf32> -> vector<5x256xf32>
    %cst_175 = arith.constant 0.176776692 : f32
    %422 = vector.broadcast %cst_175 : f32 to vector<5x256xf32>
    %423 = arith.mulf %421, %422 : vector<5x256xf32>
    %cst_176 = arith.constant dense<0xFF800000> : vector<256xf32>
    %424 = vector.multi_reduction <maximumf>, %423, %cst_176 [0] : vector<5x256xf32> to vector<256xf32>
    %425 = vector.shape_cast %424 : vector<256xf32> to vector<1x256xf32>
    %426 = vector.broadcast %425 : vector<1x256xf32> to vector<5x256xf32>
    %427 = arith.subf %423, %426 : vector<5x256xf32>
    %428 = math.exp %427 : vector<5x256xf32>
    %cst_177 = arith.constant dense<0.000000e+00> : vector<256xf32>
    %429 = vector.multi_reduction <add>, %428, %cst_177 [0] : vector<5x256xf32> to vector<256xf32>
    %430 = vector.shape_cast %429 : vector<256xf32> to vector<1x256xf32>
    %431 = tpu.reciprocal %430 {approx = true} : vector<1x256xf32> -> vector<1x256xf32>
    %432 = vector.broadcast %431 : vector<1x256xf32> to vector<5x256xf32>
    %433 = arith.mulf %428, %432 : vector<5x256xf32>
    %cst_178 = arith.constant 9.99999993E-9 : f32
    %434 = vector.broadcast %cst_178 : f32 to vector<5x256xf32>
    %435 = arith.addf %433, %434 : vector<5x256xf32>
    %cst_179 = arith.constant dense<0.000000e+00> : vector<5xf32>
    %436 = vector.multi_reduction <add>, %435, %cst_179 [1] : vector<5x256xf32> to vector<5xf32>
    %437 = vector.shape_cast %436 : vector<5xf32> to vector<5x1xf32>
    %438 = tpu.reciprocal %437 {approx = true} : vector<5x1xf32> -> vector<5x1xf32>
    %439 = vector.broadcast %438 : vector<5x1xf32> to vector<5x256xf32>
    %440 = arith.mulf %435, %439 : vector<5x256xf32>
    %441 = vector.extract_strided_slice %440 {offsets = [1, 0], sizes = [4, 256], strides = [1, 1]} : vector<5x256xf32> to vector<4x256xf32>
    %cst_180 = arith.constant dense<0.000000e+00> : vector<4x32xf32>
    %442 = tpu.matmul %441, %98, %cst_180 {dimension_numbers = #tpu.dot_dimension_numbers<[1], [1], [0], [0], [0, 0, 1, 0], [], []>} : vector<4x256xf32>, vector<32x256xf32>, vector<4x32xf32> -> vector<4x32xf32>
    %443 = vector.extract_strided_slice %440 {offsets = [0, 0], sizes = [1, 256], strides = [1, 1]} : vector<5x256xf32> to vector<1x256xf32>
    %cst_181 = arith.constant dense<0.000000e+00> : vector<1x32xf32>
    %444 = tpu.matmul %443, %103, %cst_181 {dimension_numbers = #tpu.dot_dimension_numbers<[1], [1], [0], [0], [0, 0, 1, 0], [], []>} : vector<1x256xf32>, vector<32x256xf32>, vector<1x32xf32> -> vector<1x32xf32>
    %c0_182 = arith.constant 0 : index
    %c0_183 = arith.constant 0 : index
    %445 = vector.load %arg14[%c0_182, %c0_183] : memref<128x96xf32, #tpu.memory_space<vmem>>, vector<32x96xf32>
    %c32_184 = arith.constant 32 : index
    %c0_185 = arith.constant 0 : index
    %446 = vector.load %arg14[%c32_184, %c0_185] : memref<128x96xf32, #tpu.memory_space<vmem>>, vector<32x96xf32>
    %cst_186 = arith.constant dense<0.000000e+00> : vector<4x96xf32>
    %447 = tpu.matmul %442, %445, %cst_186 {dimension_numbers = #tpu.dot_dimension_numbers<[1], [0], [0], [1], [0, 0, 1, 1], [], []>} : vector<4x32xf32>, vector<32x96xf32>, vector<4x96xf32> -> vector<4x96xf32>
    %448 = vector.shape_cast %138 : vector<96xf32> to vector<1x96xf32>
    %449 = vector.broadcast %448 : vector<1x96xf32> to vector<4x96xf32>
    %450 = arith.addf %447, %449 : vector<4x96xf32>
    %cst_187 = arith.constant dense<0.000000e+00> : vector<4x96xf32>
    %451 = tpu.matmul %331, %446, %cst_187 {dimension_numbers = #tpu.dot_dimension_numbers<[1], [0], [0], [1], [0, 0, 1, 1], [], []>} : vector<4x32xf32>, vector<32x96xf32>, vector<4x96xf32> -> vector<4x96xf32>
    %452 = vector.shape_cast %140 : vector<96xf32> to vector<1x96xf32>
    %453 = vector.broadcast %452 : vector<1x96xf32> to vector<4x96xf32>
    %454 = arith.addf %451, %453 : vector<4x96xf32>
    %455 = vector.extract_strided_slice %450 {offsets = [0, 0], sizes = [4, 32], strides = [1, 1]} : vector<4x96xf32> to vector<4x32xf32>
    %456 = vector.extract_strided_slice %454 {offsets = [0, 0], sizes = [4, 32], strides = [1, 1]} : vector<4x96xf32> to vector<4x32xf32>
    %457 = arith.addf %455, %456 : vector<4x32xf32>
    %458 = arith.negf %457 : vector<4x32xf32>
    %459 = math.exp %458 : vector<4x32xf32>
    %cst_188 = arith.constant 1.000000e+00 : f32
    %460 = vector.broadcast %cst_188 : f32 to vector<4x32xf32>
    %461 = arith.addf %460, %459 : vector<4x32xf32>
    %462 = arith.divf %460, %461 : vector<4x32xf32>
    %463 = vector.extract_strided_slice %450 {offsets = [0, 32], sizes = [4, 32], strides = [1, 1]} : vector<4x96xf32> to vector<4x32xf32>
    %464 = vector.extract_strided_slice %454 {offsets = [0, 32], sizes = [4, 32], strides = [1, 1]} : vector<4x96xf32> to vector<4x32xf32>
    %465 = arith.addf %463, %464 : vector<4x32xf32>
    %466 = arith.negf %465 : vector<4x32xf32>
    %467 = math.exp %466 : vector<4x32xf32>
    %cst_189 = arith.constant 1.000000e+00 : f32
    %468 = vector.broadcast %cst_189 : f32 to vector<4x32xf32>
    %469 = arith.addf %468, %467 : vector<4x32xf32>
    %470 = arith.divf %468, %469 : vector<4x32xf32>
    %471 = vector.extract_strided_slice %450 {offsets = [0, 64], sizes = [4, 32], strides = [1, 1]} : vector<4x96xf32> to vector<4x32xf32>
    %472 = vector.extract_strided_slice %454 {offsets = [0, 64], sizes = [4, 32], strides = [1, 1]} : vector<4x96xf32> to vector<4x32xf32>
    %473 = arith.mulf %462, %472 : vector<4x32xf32>
    %474 = arith.addf %471, %473 : vector<4x32xf32>
    %475 = math.tanh %474 : vector<4x32xf32>
    %cst_190 = arith.constant 1.000000e+00 : f32
    %476 = vector.broadcast %cst_190 : f32 to vector<4x32xf32>
    %477 = arith.subf %476, %470 : vector<4x32xf32>
    %478 = arith.mulf %477, %475 : vector<4x32xf32>
    %479 = arith.mulf %470, %331 : vector<4x32xf32>
    %480 = arith.addf %478, %479 : vector<4x32xf32>
    %c64_191 = arith.constant 64 : index
    %c0_192 = arith.constant 0 : index
    %481 = vector.load %arg14[%c64_191, %c0_192] : memref<128x96xf32, #tpu.memory_space<vmem>>, vector<32x96xf32>
    %c96_193 = arith.constant 96 : index
    %c0_194 = arith.constant 0 : index
    %482 = vector.load %arg14[%c96_193, %c0_194] : memref<128x96xf32, #tpu.memory_space<vmem>>, vector<32x96xf32>
    %cst_195 = arith.constant dense<0.000000e+00> : vector<1x96xf32>
    %483 = tpu.matmul %444, %481, %cst_195 {dimension_numbers = #tpu.dot_dimension_numbers<[1], [0], [0], [1], [0, 0, 1, 1], [], []>} : vector<1x32xf32>, vector<32x96xf32>, vector<1x96xf32> -> vector<1x96xf32>
    %484 = vector.shape_cast %142 : vector<96xf32> to vector<1x96xf32>
    %485 = arith.addf %483, %484 : vector<1x96xf32>
    %cst_196 = arith.constant dense<0.000000e+00> : vector<1x96xf32>
    %486 = tpu.matmul %364, %482, %cst_196 {dimension_numbers = #tpu.dot_dimension_numbers<[1], [0], [0], [1], [0, 0, 1, 1], [], []>} : vector<1x32xf32>, vector<32x96xf32>, vector<1x96xf32> -> vector<1x96xf32>
    %487 = vector.shape_cast %144 : vector<96xf32> to vector<1x96xf32>
    %488 = arith.addf %486, %487 : vector<1x96xf32>
    %489 = vector.extract_strided_slice %485 {offsets = [0, 0], sizes = [1, 32], strides = [1, 1]} : vector<1x96xf32> to vector<1x32xf32>
    %490 = vector.extract_strided_slice %488 {offsets = [0, 0], sizes = [1, 32], strides = [1, 1]} : vector<1x96xf32> to vector<1x32xf32>
    %491 = arith.addf %489, %490 : vector<1x32xf32>
    %492 = arith.negf %491 : vector<1x32xf32>
    %493 = math.exp %492 : vector<1x32xf32>
    %cst_197 = arith.constant 1.000000e+00 : f32
    %494 = vector.broadcast %cst_197 : f32 to vector<1x32xf32>
    %495 = arith.addf %494, %493 : vector<1x32xf32>
    %496 = arith.divf %494, %495 : vector<1x32xf32>
    %497 = vector.extract_strided_slice %485 {offsets = [0, 32], sizes = [1, 32], strides = [1, 1]} : vector<1x96xf32> to vector<1x32xf32>
    %498 = vector.extract_strided_slice %488 {offsets = [0, 32], sizes = [1, 32], strides = [1, 1]} : vector<1x96xf32> to vector<1x32xf32>
    %499 = arith.addf %497, %498 : vector<1x32xf32>
    %500 = arith.negf %499 : vector<1x32xf32>
    %501 = math.exp %500 : vector<1x32xf32>
    %cst_198 = arith.constant 1.000000e+00 : f32
    %502 = vector.broadcast %cst_198 : f32 to vector<1x32xf32>
    %503 = arith.addf %502, %501 : vector<1x32xf32>
    %504 = arith.divf %502, %503 : vector<1x32xf32>
    %505 = vector.extract_strided_slice %485 {offsets = [0, 64], sizes = [1, 32], strides = [1, 1]} : vector<1x96xf32> to vector<1x32xf32>
    %506 = vector.extract_strided_slice %488 {offsets = [0, 64], sizes = [1, 32], strides = [1, 1]} : vector<1x96xf32> to vector<1x32xf32>
    %507 = arith.mulf %496, %506 : vector<1x32xf32>
    %508 = arith.addf %505, %507 : vector<1x32xf32>
    %509 = math.tanh %508 : vector<1x32xf32>
    %cst_199 = arith.constant 1.000000e+00 : f32
    %510 = vector.broadcast %cst_199 : f32 to vector<1x32xf32>
    %511 = arith.subf %510, %504 : vector<1x32xf32>
    %512 = arith.mulf %511, %509 : vector<1x32xf32>
    %513 = arith.mulf %504, %364 : vector<1x32xf32>
    %514 = arith.addf %512, %513 : vector<1x32xf32>
    %cst_200 = arith.constant dense<0.000000e+00> : vector<4xf32>
    %515 = vector.multi_reduction <add>, %480, %cst_200 [1] : vector<4x32xf32> to vector<4xf32>
    %516 = vector.shape_cast %515 : vector<4xf32> to vector<4x1xf32>
    %cst_201 = arith.constant 3.200000e+01 : f32
    %517 = vector.broadcast %cst_201 : f32 to vector<4x1xf32>
    %518 = arith.divf %516, %517 : vector<4x1xf32>
    %519 = vector.broadcast %518 : vector<4x1xf32> to vector<4x32xf32>
    %520 = arith.subf %480, %519 : vector<4x32xf32>
    %521 = arith.mulf %520, %520 : vector<4x32xf32>
    %cst_202 = arith.constant dense<0.000000e+00> : vector<4xf32>
    %522 = vector.multi_reduction <add>, %521, %cst_202 [1] : vector<4x32xf32> to vector<4xf32>
    %523 = vector.shape_cast %522 : vector<4xf32> to vector<4x1xf32>
    %cst_203 = arith.constant 3.200000e+01 : f32
    %524 = vector.broadcast %cst_203 : f32 to vector<4x1xf32>
    %525 = arith.divf %523, %524 : vector<4x1xf32>
    %526 = vector.broadcast %518 : vector<4x1xf32> to vector<4x32xf32>
    %527 = arith.subf %480, %526 : vector<4x32xf32>
    %cst_204 = arith.constant 9.99999974E-6 : f32
    %528 = vector.broadcast %cst_204 : f32 to vector<4x1xf32>
    %529 = arith.addf %525, %528 : vector<4x1xf32>
    %530 = math.rsqrt %529 : vector<4x1xf32>
    %531 = vector.broadcast %530 : vector<4x1xf32> to vector<4x32xf32>
    %532 = arith.mulf %527, %531 : vector<4x32xf32>
    %533 = vector.shape_cast %130 : vector<32xf32> to vector<1x32xf32>
    %534 = vector.broadcast %533 : vector<1x32xf32> to vector<4x32xf32>
    %535 = arith.mulf %532, %534 : vector<4x32xf32>
    %536 = vector.shape_cast %132 : vector<32xf32> to vector<1x32xf32>
    %537 = vector.broadcast %536 : vector<1x32xf32> to vector<4x32xf32>
    %538 = arith.addf %535, %537 : vector<4x32xf32>
    %c64_205 = arith.constant 64 : index
    %c0_206 = arith.constant 0 : index
    %539 = vector.load %arg13[%c64_205, %c0_206] : memref<192x32xf32, #tpu.memory_space<vmem>>, vector<32x32xf32>
    %cst_207 = arith.constant dense<0.000000e+00> : vector<4x32xf32>
    %540 = tpu.matmul %538, %539, %cst_207 {dimension_numbers = #tpu.dot_dimension_numbers<[1], [0], [0], [1], [0, 0, 1, 1], [], []>} : vector<4x32xf32>, vector<32x32xf32>, vector<4x32xf32> -> vector<4x32xf32>
    %541 = vector.shape_cast %114 : vector<32xf32> to vector<1x32xf32>
    %542 = vector.broadcast %541 : vector<1x32xf32> to vector<4x32xf32>
    %543 = arith.addf %540, %542 : vector<4x32xf32>
    %cst_208 = arith.constant 0.000000e+00 : f32
    %544 = vector.broadcast %cst_208 : f32 to vector<4x32xf32>
    %545 = arith.maximumf %543, %544 : vector<4x32xf32>
    %c96_209 = arith.constant 96 : index
    %c0_210 = arith.constant 0 : index
    %546 = vector.load %arg13[%c96_209, %c0_210] : memref<192x32xf32, #tpu.memory_space<vmem>>, vector<32x32xf32>
    %cst_211 = arith.constant dense<0.000000e+00> : vector<4x32xf32>
    %547 = tpu.matmul %545, %546, %cst_211 {dimension_numbers = #tpu.dot_dimension_numbers<[1], [0], [0], [1], [0, 0, 1, 1], [], []>} : vector<4x32xf32>, vector<32x32xf32>, vector<4x32xf32> -> vector<4x32xf32>
    %548 = arith.addf %480, %547 : vector<4x32xf32>
    %549 = vector.shape_cast %116 : vector<32xf32> to vector<1x32xf32>
    %550 = vector.broadcast %549 : vector<1x32xf32> to vector<4x32xf32>
    %551 = arith.addf %548, %550 : vector<4x32xf32>
    %cst_212 = arith.constant dense<0.000000e+00> : vector<1xf32>
    %552 = vector.multi_reduction <add>, %514, %cst_212 [1] : vector<1x32xf32> to vector<1xf32>
    %553 = vector.shape_cast %552 : vector<1xf32> to vector<1x1xf32>
    %cst_213 = arith.constant 3.200000e+01 : f32
    %554 = vector.broadcast %cst_213 : f32 to vector<1x1xf32>
    %555 = arith.divf %553, %554 : vector<1x1xf32>
    %556 = vector.broadcast %555 : vector<1x1xf32> to vector<1x32xf32>
    %557 = arith.subf %514, %556 : vector<1x32xf32>
    %558 = arith.mulf %557, %557 : vector<1x32xf32>
    %cst_214 = arith.constant dense<0.000000e+00> : vector<1xf32>
    %559 = vector.multi_reduction <add>, %558, %cst_214 [1] : vector<1x32xf32> to vector<1xf32>
    %560 = vector.shape_cast %559 : vector<1xf32> to vector<1x1xf32>
    %cst_215 = arith.constant 3.200000e+01 : f32
    %561 = vector.broadcast %cst_215 : f32 to vector<1x1xf32>
    %562 = arith.divf %560, %561 : vector<1x1xf32>
    %563 = vector.broadcast %555 : vector<1x1xf32> to vector<1x32xf32>
    %564 = arith.subf %514, %563 : vector<1x32xf32>
    %cst_216 = arith.constant 9.99999974E-6 : f32
    %565 = vector.broadcast %cst_216 : f32 to vector<1x1xf32>
    %566 = arith.addf %562, %565 : vector<1x1xf32>
    %567 = math.rsqrt %566 : vector<1x1xf32>
    %568 = vector.broadcast %567 : vector<1x1xf32> to vector<1x32xf32>
    %569 = arith.mulf %564, %568 : vector<1x32xf32>
    %570 = vector.shape_cast %134 : vector<32xf32> to vector<1x32xf32>
    %571 = arith.mulf %569, %570 : vector<1x32xf32>
    %572 = vector.shape_cast %136 : vector<32xf32> to vector<1x32xf32>
    %573 = arith.addf %571, %572 : vector<1x32xf32>
    %c128_217 = arith.constant 128 : index
    %c0_218 = arith.constant 0 : index
    %574 = vector.load %arg13[%c128_217, %c0_218] : memref<192x32xf32, #tpu.memory_space<vmem>>, vector<32x32xf32>
    %cst_219 = arith.constant dense<0.000000e+00> : vector<1x32xf32>
    %575 = tpu.matmul %573, %574, %cst_219 {dimension_numbers = #tpu.dot_dimension_numbers<[1], [0], [0], [1], [0, 0, 1, 1], [], []>} : vector<1x32xf32>, vector<32x32xf32>, vector<1x32xf32> -> vector<1x32xf32>
    %576 = vector.shape_cast %118 : vector<32xf32> to vector<1x32xf32>
    %577 = arith.addf %575, %576 : vector<1x32xf32>
    %cst_220 = arith.constant 0.000000e+00 : f32
    %578 = vector.broadcast %cst_220 : f32 to vector<1x32xf32>
    %579 = arith.maximumf %577, %578 : vector<1x32xf32>
    %c160_221 = arith.constant 160 : index
    %c0_222 = arith.constant 0 : index
    %580 = vector.load %arg13[%c160_221, %c0_222] : memref<192x32xf32, #tpu.memory_space<vmem>>, vector<32x32xf32>
    %cst_223 = arith.constant dense<0.000000e+00> : vector<1x32xf32>
    %581 = tpu.matmul %579, %580, %cst_223 {dimension_numbers = #tpu.dot_dimension_numbers<[1], [0], [0], [1], [0, 0, 1, 1], [], []>} : vector<1x32xf32>, vector<32x32xf32>, vector<1x32xf32> -> vector<1x32xf32>
    %582 = arith.addf %514, %581 : vector<1x32xf32>
    %583 = vector.shape_cast %120 : vector<32xf32> to vector<1x32xf32>
    %584 = arith.addf %582, %583 : vector<1x32xf32>
    %cst_224 = arith.constant dense<0.000000e+00> : vector<4xf32>
    %585 = vector.multi_reduction <add>, %551, %cst_224 [1] : vector<4x32xf32> to vector<4xf32>
    %586 = vector.shape_cast %585 : vector<4xf32> to vector<4x1xf32>
    %cst_225 = arith.constant 3.200000e+01 : f32
    %587 = vector.broadcast %cst_225 : f32 to vector<4x1xf32>
    %588 = arith.divf %586, %587 : vector<4x1xf32>
    %589 = vector.broadcast %588 : vector<4x1xf32> to vector<4x32xf32>
    %590 = arith.subf %551, %589 : vector<4x32xf32>
    %591 = arith.mulf %590, %590 : vector<4x32xf32>
    %cst_226 = arith.constant dense<0.000000e+00> : vector<4xf32>
    %592 = vector.multi_reduction <add>, %591, %cst_226 [1] : vector<4x32xf32> to vector<4xf32>
    %593 = vector.shape_cast %592 : vector<4xf32> to vector<4x1xf32>
    %cst_227 = arith.constant 3.200000e+01 : f32
    %594 = vector.broadcast %cst_227 : f32 to vector<4x1xf32>
    %595 = arith.divf %593, %594 : vector<4x1xf32>
    %596 = vector.broadcast %588 : vector<4x1xf32> to vector<4x32xf32>
    %597 = arith.subf %551, %596 : vector<4x32xf32>
    %cst_228 = arith.constant 9.99999974E-6 : f32
    %598 = vector.broadcast %cst_228 : f32 to vector<4x1xf32>
    %599 = arith.addf %595, %598 : vector<4x1xf32>
    %600 = math.rsqrt %599 : vector<4x1xf32>
    %601 = vector.broadcast %600 : vector<4x1xf32> to vector<4x32xf32>
    %602 = arith.mulf %597, %601 : vector<4x32xf32>
    %603 = vector.shape_cast %122 : vector<32xf32> to vector<1x32xf32>
    %604 = vector.broadcast %603 : vector<1x32xf32> to vector<4x32xf32>
    %605 = arith.mulf %602, %604 : vector<4x32xf32>
    %606 = vector.shape_cast %124 : vector<32xf32> to vector<1x32xf32>
    %607 = vector.broadcast %606 : vector<1x32xf32> to vector<4x32xf32>
    %608 = arith.addf %605, %607 : vector<4x32xf32>
    %cst_229 = arith.constant dense<0.000000e+00> : vector<1xf32>
    %609 = vector.multi_reduction <add>, %584, %cst_229 [1] : vector<1x32xf32> to vector<1xf32>
    %610 = vector.shape_cast %609 : vector<1xf32> to vector<1x1xf32>
    %cst_230 = arith.constant 3.200000e+01 : f32
    %611 = vector.broadcast %cst_230 : f32 to vector<1x1xf32>
    %612 = arith.divf %610, %611 : vector<1x1xf32>
    %613 = vector.broadcast %612 : vector<1x1xf32> to vector<1x32xf32>
    %614 = arith.subf %584, %613 : vector<1x32xf32>
    %615 = arith.mulf %614, %614 : vector<1x32xf32>
    %cst_231 = arith.constant dense<0.000000e+00> : vector<1xf32>
    %616 = vector.multi_reduction <add>, %615, %cst_231 [1] : vector<1x32xf32> to vector<1xf32>
    %617 = vector.shape_cast %616 : vector<1xf32> to vector<1x1xf32>
    %cst_232 = arith.constant 3.200000e+01 : f32
    %618 = vector.broadcast %cst_232 : f32 to vector<1x1xf32>
    %619 = arith.divf %617, %618 : vector<1x1xf32>
    %620 = vector.broadcast %612 : vector<1x1xf32> to vector<1x32xf32>
    %621 = arith.subf %584, %620 : vector<1x32xf32>
    %cst_233 = arith.constant 9.99999974E-6 : f32
    %622 = vector.broadcast %cst_233 : f32 to vector<1x1xf32>
    %623 = arith.addf %619, %622 : vector<1x1xf32>
    %624 = math.rsqrt %623 : vector<1x1xf32>
    %625 = vector.broadcast %624 : vector<1x1xf32> to vector<1x32xf32>
    %626 = arith.mulf %621, %625 : vector<1x32xf32>
    %627 = vector.shape_cast %126 : vector<32xf32> to vector<1x32xf32>
    %628 = arith.mulf %626, %627 : vector<1x32xf32>
    %629 = vector.shape_cast %128 : vector<32xf32> to vector<1x32xf32>
    %630 = arith.addf %628, %629 : vector<1x32xf32>
    %c0_234 = arith.constant 0 : index
    %c0_235 = arith.constant 0 : index
    %631 = vector.load %arg13[%c0_234, %c0_235] : memref<192x32xf32, #tpu.memory_space<vmem>>, vector<32x32xf32>
    %cst_236 = arith.constant dense<0.000000e+00> : vector<4x32xf32>
    %632 = tpu.matmul %608, %631, %cst_236 {dimension_numbers = #tpu.dot_dimension_numbers<[1], [0], [0], [1], [0, 0, 1, 1], [], []>} : vector<4x32xf32>, vector<32x32xf32>, vector<4x32xf32> -> vector<4x32xf32>
    %633 = vector.shape_cast %110 : vector<32xf32> to vector<1x32xf32>
    %634 = vector.broadcast %633 : vector<1x32xf32> to vector<4x32xf32>
    %635 = arith.addf %632, %634 : vector<4x32xf32>
    %c32_237 = arith.constant 32 : index
    %c0_238 = arith.constant 0 : index
    %636 = vector.load %arg13[%c32_237, %c0_238] : memref<192x32xf32, #tpu.memory_space<vmem>>, vector<32x32xf32>
    %cst_239 = arith.constant dense<0.000000e+00> : vector<1x32xf32>
    %637 = tpu.matmul %630, %636, %cst_239 {dimension_numbers = #tpu.dot_dimension_numbers<[1], [0], [0], [1], [0, 0, 1, 1], [], []>} : vector<1x32xf32>, vector<32x32xf32>, vector<1x32xf32> -> vector<1x32xf32>
    %638 = vector.shape_cast %112 : vector<32xf32> to vector<1x32xf32>
    %639 = arith.addf %637, %638 : vector<1x32xf32>
    %640 = tpu.concatenate %639, %635 in 0 : vector<1x32xf32>, vector<4x32xf32> -> vector<5x32xf32>
    %cst_240 = arith.constant dense<0.000000e+00> : vector<5x256xf32>
    %641 = tpu.matmul %640, %93, %cst_240 {dimension_numbers = #tpu.dot_dimension_numbers<[1], [0], [0], [1], [0, 0, 1, 1], [], []>} : vector<5x32xf32>, vector<32x256xf32>, vector<5x256xf32> -> vector<5x256xf32>
    %cst_241 = arith.constant 0.176776692 : f32
    %642 = vector.broadcast %cst_241 : f32 to vector<5x256xf32>
    %643 = arith.mulf %641, %642 : vector<5x256xf32>
    %cst_242 = arith.constant dense<0xFF800000> : vector<256xf32>
    %644 = vector.multi_reduction <maximumf>, %643, %cst_242 [0] : vector<5x256xf32> to vector<256xf32>
    %645 = vector.shape_cast %644 : vector<256xf32> to vector<1x256xf32>
    %646 = vector.broadcast %645 : vector<1x256xf32> to vector<5x256xf32>
    %647 = arith.subf %643, %646 : vector<5x256xf32>
    %648 = math.exp %647 : vector<5x256xf32>
    %cst_243 = arith.constant dense<0.000000e+00> : vector<256xf32>
    %649 = vector.multi_reduction <add>, %648, %cst_243 [0] : vector<5x256xf32> to vector<256xf32>
    %650 = vector.shape_cast %649 : vector<256xf32> to vector<1x256xf32>
    %651 = tpu.reciprocal %650 {approx = true} : vector<1x256xf32> -> vector<1x256xf32>
    %652 = vector.broadcast %651 : vector<1x256xf32> to vector<5x256xf32>
    %653 = arith.mulf %648, %652 : vector<5x256xf32>
    %cst_244 = arith.constant 9.99999993E-9 : f32
    %654 = vector.broadcast %cst_244 : f32 to vector<5x256xf32>
    %655 = arith.addf %653, %654 : vector<5x256xf32>
    %cst_245 = arith.constant dense<0.000000e+00> : vector<5xf32>
    %656 = vector.multi_reduction <add>, %655, %cst_245 [1] : vector<5x256xf32> to vector<5xf32>
    %657 = vector.shape_cast %656 : vector<5xf32> to vector<5x1xf32>
    %658 = tpu.reciprocal %657 {approx = true} : vector<5x1xf32> -> vector<5x1xf32>
    %659 = vector.broadcast %658 : vector<5x1xf32> to vector<5x256xf32>
    %660 = arith.mulf %655, %659 : vector<5x256xf32>
    %661 = vector.extract_strided_slice %660 {offsets = [1, 0], sizes = [4, 256], strides = [1, 1]} : vector<5x256xf32> to vector<4x256xf32>
    %cst_246 = arith.constant dense<0.000000e+00> : vector<4x32xf32>
    %662 = tpu.matmul %661, %98, %cst_246 {dimension_numbers = #tpu.dot_dimension_numbers<[1], [1], [0], [0], [0, 0, 1, 0], [], []>} : vector<4x256xf32>, vector<32x256xf32>, vector<4x32xf32> -> vector<4x32xf32>
    %663 = vector.extract_strided_slice %660 {offsets = [0, 0], sizes = [1, 256], strides = [1, 1]} : vector<5x256xf32> to vector<1x256xf32>
    %cst_247 = arith.constant dense<0.000000e+00> : vector<1x32xf32>
    %664 = tpu.matmul %663, %103, %cst_247 {dimension_numbers = #tpu.dot_dimension_numbers<[1], [1], [0], [0], [0, 0, 1, 0], [], []>} : vector<1x256xf32>, vector<32x256xf32>, vector<1x32xf32> -> vector<1x32xf32>
    %c0_248 = arith.constant 0 : index
    %c0_249 = arith.constant 0 : index
    %665 = vector.load %arg14[%c0_248, %c0_249] : memref<128x96xf32, #tpu.memory_space<vmem>>, vector<32x96xf32>
    %c32_250 = arith.constant 32 : index
    %c0_251 = arith.constant 0 : index
    %666 = vector.load %arg14[%c32_250, %c0_251] : memref<128x96xf32, #tpu.memory_space<vmem>>, vector<32x96xf32>
    %cst_252 = arith.constant dense<0.000000e+00> : vector<4x96xf32>
    %667 = tpu.matmul %662, %665, %cst_252 {dimension_numbers = #tpu.dot_dimension_numbers<[1], [0], [0], [1], [0, 0, 1, 1], [], []>} : vector<4x32xf32>, vector<32x96xf32>, vector<4x96xf32> -> vector<4x96xf32>
    %668 = vector.shape_cast %138 : vector<96xf32> to vector<1x96xf32>
    %669 = vector.broadcast %668 : vector<1x96xf32> to vector<4x96xf32>
    %670 = arith.addf %667, %669 : vector<4x96xf32>
    %cst_253 = arith.constant dense<0.000000e+00> : vector<4x96xf32>
    %671 = tpu.matmul %551, %666, %cst_253 {dimension_numbers = #tpu.dot_dimension_numbers<[1], [0], [0], [1], [0, 0, 1, 1], [], []>} : vector<4x32xf32>, vector<32x96xf32>, vector<4x96xf32> -> vector<4x96xf32>
    %672 = vector.shape_cast %140 : vector<96xf32> to vector<1x96xf32>
    %673 = vector.broadcast %672 : vector<1x96xf32> to vector<4x96xf32>
    %674 = arith.addf %671, %673 : vector<4x96xf32>
    %675 = vector.extract_strided_slice %670 {offsets = [0, 0], sizes = [4, 32], strides = [1, 1]} : vector<4x96xf32> to vector<4x32xf32>
    %676 = vector.extract_strided_slice %674 {offsets = [0, 0], sizes = [4, 32], strides = [1, 1]} : vector<4x96xf32> to vector<4x32xf32>
    %677 = arith.addf %675, %676 : vector<4x32xf32>
    %678 = arith.negf %677 : vector<4x32xf32>
    %679 = math.exp %678 : vector<4x32xf32>
    %cst_254 = arith.constant 1.000000e+00 : f32
    %680 = vector.broadcast %cst_254 : f32 to vector<4x32xf32>
    %681 = arith.addf %680, %679 : vector<4x32xf32>
    %682 = arith.divf %680, %681 : vector<4x32xf32>
    %683 = vector.extract_strided_slice %670 {offsets = [0, 32], sizes = [4, 32], strides = [1, 1]} : vector<4x96xf32> to vector<4x32xf32>
    %684 = vector.extract_strided_slice %674 {offsets = [0, 32], sizes = [4, 32], strides = [1, 1]} : vector<4x96xf32> to vector<4x32xf32>
    %685 = arith.addf %683, %684 : vector<4x32xf32>
    %686 = arith.negf %685 : vector<4x32xf32>
    %687 = math.exp %686 : vector<4x32xf32>
    %cst_255 = arith.constant 1.000000e+00 : f32
    %688 = vector.broadcast %cst_255 : f32 to vector<4x32xf32>
    %689 = arith.addf %688, %687 : vector<4x32xf32>
    %690 = arith.divf %688, %689 : vector<4x32xf32>
    %691 = vector.extract_strided_slice %670 {offsets = [0, 64], sizes = [4, 32], strides = [1, 1]} : vector<4x96xf32> to vector<4x32xf32>
    %692 = vector.extract_strided_slice %674 {offsets = [0, 64], sizes = [4, 32], strides = [1, 1]} : vector<4x96xf32> to vector<4x32xf32>
    %693 = arith.mulf %682, %692 : vector<4x32xf32>
    %694 = arith.addf %691, %693 : vector<4x32xf32>
    %695 = math.tanh %694 : vector<4x32xf32>
    %cst_256 = arith.constant 1.000000e+00 : f32
    %696 = vector.broadcast %cst_256 : f32 to vector<4x32xf32>
    %697 = arith.subf %696, %690 : vector<4x32xf32>
    %698 = arith.mulf %697, %695 : vector<4x32xf32>
    %699 = arith.mulf %690, %551 : vector<4x32xf32>
    %700 = arith.addf %698, %699 : vector<4x32xf32>
    %c64_257 = arith.constant 64 : index
    %c0_258 = arith.constant 0 : index
    %701 = vector.load %arg14[%c64_257, %c0_258] : memref<128x96xf32, #tpu.memory_space<vmem>>, vector<32x96xf32>
    %c96_259 = arith.constant 96 : index
    %c0_260 = arith.constant 0 : index
    %702 = vector.load %arg14[%c96_259, %c0_260] : memref<128x96xf32, #tpu.memory_space<vmem>>, vector<32x96xf32>
    %cst_261 = arith.constant dense<0.000000e+00> : vector<1x96xf32>
    %703 = tpu.matmul %664, %701, %cst_261 {dimension_numbers = #tpu.dot_dimension_numbers<[1], [0], [0], [1], [0, 0, 1, 1], [], []>} : vector<1x32xf32>, vector<32x96xf32>, vector<1x96xf32> -> vector<1x96xf32>
    %704 = vector.shape_cast %142 : vector<96xf32> to vector<1x96xf32>
    %705 = arith.addf %703, %704 : vector<1x96xf32>
    %cst_262 = arith.constant dense<0.000000e+00> : vector<1x96xf32>
    %706 = tpu.matmul %584, %702, %cst_262 {dimension_numbers = #tpu.dot_dimension_numbers<[1], [0], [0], [1], [0, 0, 1, 1], [], []>} : vector<1x32xf32>, vector<32x96xf32>, vector<1x96xf32> -> vector<1x96xf32>
    %707 = vector.shape_cast %144 : vector<96xf32> to vector<1x96xf32>
    %708 = arith.addf %706, %707 : vector<1x96xf32>
    %709 = vector.extract_strided_slice %705 {offsets = [0, 0], sizes = [1, 32], strides = [1, 1]} : vector<1x96xf32> to vector<1x32xf32>
    %710 = vector.extract_strided_slice %708 {offsets = [0, 0], sizes = [1, 32], strides = [1, 1]} : vector<1x96xf32> to vector<1x32xf32>
    %711 = arith.addf %709, %710 : vector<1x32xf32>
    %712 = arith.negf %711 : vector<1x32xf32>
    %713 = math.exp %712 : vector<1x32xf32>
    %cst_263 = arith.constant 1.000000e+00 : f32
    %714 = vector.broadcast %cst_263 : f32 to vector<1x32xf32>
    %715 = arith.addf %714, %713 : vector<1x32xf32>
    %716 = arith.divf %714, %715 : vector<1x32xf32>
    %717 = vector.extract_strided_slice %705 {offsets = [0, 32], sizes = [1, 32], strides = [1, 1]} : vector<1x96xf32> to vector<1x32xf32>
    %718 = vector.extract_strided_slice %708 {offsets = [0, 32], sizes = [1, 32], strides = [1, 1]} : vector<1x96xf32> to vector<1x32xf32>
    %719 = arith.addf %717, %718 : vector<1x32xf32>
    %720 = arith.negf %719 : vector<1x32xf32>
    %721 = math.exp %720 : vector<1x32xf32>
    %cst_264 = arith.constant 1.000000e+00 : f32
    %722 = vector.broadcast %cst_264 : f32 to vector<1x32xf32>
    %723 = arith.addf %722, %721 : vector<1x32xf32>
    %724 = arith.divf %722, %723 : vector<1x32xf32>
    %725 = vector.extract_strided_slice %705 {offsets = [0, 64], sizes = [1, 32], strides = [1, 1]} : vector<1x96xf32> to vector<1x32xf32>
    %726 = vector.extract_strided_slice %708 {offsets = [0, 64], sizes = [1, 32], strides = [1, 1]} : vector<1x96xf32> to vector<1x32xf32>
    %727 = arith.mulf %716, %726 : vector<1x32xf32>
    %728 = arith.addf %725, %727 : vector<1x32xf32>
    %729 = math.tanh %728 : vector<1x32xf32>
    %cst_265 = arith.constant 1.000000e+00 : f32
    %730 = vector.broadcast %cst_265 : f32 to vector<1x32xf32>
    %731 = arith.subf %730, %724 : vector<1x32xf32>
    %732 = arith.mulf %731, %729 : vector<1x32xf32>
    %733 = arith.mulf %724, %584 : vector<1x32xf32>
    %734 = arith.addf %732, %733 : vector<1x32xf32>
    %cst_266 = arith.constant dense<0.000000e+00> : vector<4xf32>
    %735 = vector.multi_reduction <add>, %700, %cst_266 [1] : vector<4x32xf32> to vector<4xf32>
    %736 = vector.shape_cast %735 : vector<4xf32> to vector<4x1xf32>
    %cst_267 = arith.constant 3.200000e+01 : f32
    %737 = vector.broadcast %cst_267 : f32 to vector<4x1xf32>
    %738 = arith.divf %736, %737 : vector<4x1xf32>
    %739 = vector.broadcast %738 : vector<4x1xf32> to vector<4x32xf32>
    %740 = arith.subf %700, %739 : vector<4x32xf32>
    %741 = arith.mulf %740, %740 : vector<4x32xf32>
    %cst_268 = arith.constant dense<0.000000e+00> : vector<4xf32>
    %742 = vector.multi_reduction <add>, %741, %cst_268 [1] : vector<4x32xf32> to vector<4xf32>
    %743 = vector.shape_cast %742 : vector<4xf32> to vector<4x1xf32>
    %cst_269 = arith.constant 3.200000e+01 : f32
    %744 = vector.broadcast %cst_269 : f32 to vector<4x1xf32>
    %745 = arith.divf %743, %744 : vector<4x1xf32>
    %746 = vector.broadcast %738 : vector<4x1xf32> to vector<4x32xf32>
    %747 = arith.subf %700, %746 : vector<4x32xf32>
    %cst_270 = arith.constant 9.99999974E-6 : f32
    %748 = vector.broadcast %cst_270 : f32 to vector<4x1xf32>
    %749 = arith.addf %745, %748 : vector<4x1xf32>
    %750 = math.rsqrt %749 : vector<4x1xf32>
    %751 = vector.broadcast %750 : vector<4x1xf32> to vector<4x32xf32>
    %752 = arith.mulf %747, %751 : vector<4x32xf32>
    %753 = vector.shape_cast %130 : vector<32xf32> to vector<1x32xf32>
    %754 = vector.broadcast %753 : vector<1x32xf32> to vector<4x32xf32>
    %755 = arith.mulf %752, %754 : vector<4x32xf32>
    %756 = vector.shape_cast %132 : vector<32xf32> to vector<1x32xf32>
    %757 = vector.broadcast %756 : vector<1x32xf32> to vector<4x32xf32>
    %758 = arith.addf %755, %757 : vector<4x32xf32>
    %c64_271 = arith.constant 64 : index
    %c0_272 = arith.constant 0 : index
    %759 = vector.load %arg13[%c64_271, %c0_272] : memref<192x32xf32, #tpu.memory_space<vmem>>, vector<32x32xf32>
    %cst_273 = arith.constant dense<0.000000e+00> : vector<4x32xf32>
    %760 = tpu.matmul %758, %759, %cst_273 {dimension_numbers = #tpu.dot_dimension_numbers<[1], [0], [0], [1], [0, 0, 1, 1], [], []>} : vector<4x32xf32>, vector<32x32xf32>, vector<4x32xf32> -> vector<4x32xf32>
    %761 = vector.shape_cast %114 : vector<32xf32> to vector<1x32xf32>
    %762 = vector.broadcast %761 : vector<1x32xf32> to vector<4x32xf32>
    %763 = arith.addf %760, %762 : vector<4x32xf32>
    %cst_274 = arith.constant 0.000000e+00 : f32
    %764 = vector.broadcast %cst_274 : f32 to vector<4x32xf32>
    %765 = arith.maximumf %763, %764 : vector<4x32xf32>
    %c96_275 = arith.constant 96 : index
    %c0_276 = arith.constant 0 : index
    %766 = vector.load %arg13[%c96_275, %c0_276] : memref<192x32xf32, #tpu.memory_space<vmem>>, vector<32x32xf32>
    %cst_277 = arith.constant dense<0.000000e+00> : vector<4x32xf32>
    %767 = tpu.matmul %765, %766, %cst_277 {dimension_numbers = #tpu.dot_dimension_numbers<[1], [0], [0], [1], [0, 0, 1, 1], [], []>} : vector<4x32xf32>, vector<32x32xf32>, vector<4x32xf32> -> vector<4x32xf32>
    %768 = arith.addf %700, %767 : vector<4x32xf32>
    %769 = vector.shape_cast %116 : vector<32xf32> to vector<1x32xf32>
    %770 = vector.broadcast %769 : vector<1x32xf32> to vector<4x32xf32>
    %771 = arith.addf %768, %770 : vector<4x32xf32>
    %cst_278 = arith.constant dense<0.000000e+00> : vector<1xf32>
    %772 = vector.multi_reduction <add>, %734, %cst_278 [1] : vector<1x32xf32> to vector<1xf32>
    %773 = vector.shape_cast %772 : vector<1xf32> to vector<1x1xf32>
    %cst_279 = arith.constant 3.200000e+01 : f32
    %774 = vector.broadcast %cst_279 : f32 to vector<1x1xf32>
    %775 = arith.divf %773, %774 : vector<1x1xf32>
    %776 = vector.broadcast %775 : vector<1x1xf32> to vector<1x32xf32>
    %777 = arith.subf %734, %776 : vector<1x32xf32>
    %778 = arith.mulf %777, %777 : vector<1x32xf32>
    %cst_280 = arith.constant dense<0.000000e+00> : vector<1xf32>
    %779 = vector.multi_reduction <add>, %778, %cst_280 [1] : vector<1x32xf32> to vector<1xf32>
    %780 = vector.shape_cast %779 : vector<1xf32> to vector<1x1xf32>
    %cst_281 = arith.constant 3.200000e+01 : f32
    %781 = vector.broadcast %cst_281 : f32 to vector<1x1xf32>
    %782 = arith.divf %780, %781 : vector<1x1xf32>
    %783 = vector.broadcast %775 : vector<1x1xf32> to vector<1x32xf32>
    %784 = arith.subf %734, %783 : vector<1x32xf32>
    %cst_282 = arith.constant 9.99999974E-6 : f32
    %785 = vector.broadcast %cst_282 : f32 to vector<1x1xf32>
    %786 = arith.addf %782, %785 : vector<1x1xf32>
    %787 = math.rsqrt %786 : vector<1x1xf32>
    %788 = vector.broadcast %787 : vector<1x1xf32> to vector<1x32xf32>
    %789 = arith.mulf %784, %788 : vector<1x32xf32>
    %790 = vector.shape_cast %134 : vector<32xf32> to vector<1x32xf32>
    %791 = arith.mulf %789, %790 : vector<1x32xf32>
    %792 = vector.shape_cast %136 : vector<32xf32> to vector<1x32xf32>
    %793 = arith.addf %791, %792 : vector<1x32xf32>
    %c128_283 = arith.constant 128 : index
    %c0_284 = arith.constant 0 : index
    %794 = vector.load %arg13[%c128_283, %c0_284] : memref<192x32xf32, #tpu.memory_space<vmem>>, vector<32x32xf32>
    %cst_285 = arith.constant dense<0.000000e+00> : vector<1x32xf32>
    %795 = tpu.matmul %793, %794, %cst_285 {dimension_numbers = #tpu.dot_dimension_numbers<[1], [0], [0], [1], [0, 0, 1, 1], [], []>} : vector<1x32xf32>, vector<32x32xf32>, vector<1x32xf32> -> vector<1x32xf32>
    %796 = vector.shape_cast %118 : vector<32xf32> to vector<1x32xf32>
    %797 = arith.addf %795, %796 : vector<1x32xf32>
    %cst_286 = arith.constant 0.000000e+00 : f32
    %798 = vector.broadcast %cst_286 : f32 to vector<1x32xf32>
    %799 = arith.maximumf %797, %798 : vector<1x32xf32>
    %c160_287 = arith.constant 160 : index
    %c0_288 = arith.constant 0 : index
    %800 = vector.load %arg13[%c160_287, %c0_288] : memref<192x32xf32, #tpu.memory_space<vmem>>, vector<32x32xf32>
    %cst_289 = arith.constant dense<0.000000e+00> : vector<1x32xf32>
    %801 = tpu.matmul %799, %800, %cst_289 {dimension_numbers = #tpu.dot_dimension_numbers<[1], [0], [0], [1], [0, 0, 1, 1], [], []>} : vector<1x32xf32>, vector<32x32xf32>, vector<1x32xf32> -> vector<1x32xf32>
    %802 = arith.addf %734, %801 : vector<1x32xf32>
    %803 = vector.shape_cast %120 : vector<32xf32> to vector<1x32xf32>
    %804 = arith.addf %802, %803 : vector<1x32xf32>
    %c0_290 = arith.constant 0 : index
    %c0_291 = arith.constant 0 : index
    %805 = vector.load %arg19[%c0_290, %c0_291] : memref<4x32xf32, #tpu.memory_space<vmem>>, vector<4x32xf32>
    tpu.vector_store %arg19[%c0_290, %c0_291], %771 {strides = array<i32>} : memref<4x32xf32, #tpu.memory_space<vmem>>, vector<4x32xf32>,
    %c0_292 = arith.constant 0 : index
    %c0_293 = arith.constant 0 : index
    %806 = vector.load %arg20[%c0_292, %c0_293] : memref<1x32xf32, #tpu.memory_space<vmem>>, vector<1x32xf32>
    tpu.vector_store %arg20[%c0_292, %c0_293], %804 {strides = array<i32>} : memref<1x32xf32, #tpu.memory_space<vmem>>, vector<1x32xf32>,
    %c0_294 = arith.constant 0 : index
    %c0_295 = arith.constant 0 : index
    %c0_296 = arith.constant 0 : index
    %c0_297 = arith.constant 0 : index
    %807 = vector.load %arg17[%c0_294, %c0_295, %c0_296, %c0_297] : memref<1x1x4x32xf32, #tpu.memory_space<vmem>>, vector<1x1x4x32xf32>
    %808 = vector.shape_cast %807 : vector<1x1x4x32xf32> to vector<4x32xf32>
    %809 = vector.shape_cast %771 : vector<4x32xf32> to vector<1x1x4x32xf32>
    tpu.vector_store %arg17[%c0_294, %c0_295, %c0_296, %c0_297], %809 {strides = array<i32>} : memref<1x1x4x32xf32, #tpu.memory_space<vmem>>, vector<1x1x4x32xf32>,
    %c0_298 = arith.constant 0 : index
    %c0_299 = arith.constant 0 : index
    %c0_300 = arith.constant 0 : index
    %c0_301 = arith.constant 0 : index
    %810 = vector.load %arg18[%c0_298, %c0_299, %c0_300, %c0_301] : memref<1x1x1x32xf32, #tpu.memory_space<vmem>>, vector<1x1x1x32xf32>
    %811 = vector.shape_cast %810 : vector<1x1x1x32xf32> to vector<1x32xf32>
    %812 = vector.shape_cast %804 : vector<1x32xf32> to vector<1x1x1x32xf32>
    tpu.vector_store %arg18[%c0_298, %c0_299, %c0_300, %c0_301], %812 {strides = array<i32>} : memref<1x1x1x32xf32, #tpu.memory_space<vmem>>, vector<1x1x1x32xf32>,
    return
  }
  func.func @transform_0(%arg0: i32, %arg1: i32) -> (i32, i32, i32, i32) {
    %c0_i32 = arith.constant 0 : i32
    %c0_i32_0 = arith.constant 0 : i32
    %c0_i32_1 = arith.constant 0 : i32
    return %arg0, %arg1, %c0_i32, %c0_i32_0 : i32, i32, i32, i32
  }
  func.func @transform_1(%arg0: i32, %arg1: i32) -> (i32, i32, i32, i32) {
    %c0_i32 = arith.constant 0 : i32
    %c0_i32_0 = arith.constant 0 : i32
    %c0_i32_1 = arith.constant 0 : i32
    return %arg0, %arg1, %c0_i32, %c0_i32_0 : i32, i32, i32, i32
  }
  func.func @transform_2(%arg0: i32, %arg1: i32) -> (i32, i32, i32) {
    %c0_i32 = arith.constant 0 : i32
    %c0_i32_0 = arith.constant 0 : i32
    %c0_i32_1 = arith.constant 0 : i32
    return %arg0, %c0_i32, %c0_i32_0 : i32, i32, i32
  }
  func.func @transform_3(%arg0: i32, %arg1: i32) -> (i32, i32, i32) {
    %c0_i32 = arith.constant 0 : i32
    %c0_i32_0 = arith.constant 0 : i32
    %c0_i32_1 = arith.constant 0 : i32
    return %arg0, %c0_i32, %c0_i32_0 : i32, i32, i32
  }
  func.func @transform_4(%arg0: i32, %arg1: i32) -> (i32, i32) {
    %c0_i32 = arith.constant 0 : i32
    %c0_i32_0 = arith.constant 0 : i32
    %c0_i32_1 = arith.constant 0 : i32
    return %c0_i32, %c0_i32_0 : i32, i32
  }
  func.func @transform_5(%arg0: i32, %arg1: i32) -> (i32, i32) {
    %c0_i32 = arith.constant 0 : i32
    %c0_i32_0 = arith.constant 0 : i32
    %c0_i32_1 = arith.constant 0 : i32
    return %c0_i32, %c0_i32_0 : i32, i32
  }
  func.func @transform_6(%arg0: i32, %arg1: i32) -> (i32, i32) {
    %c0_i32 = arith.constant 0 : i32
    %c0_i32_0 = arith.constant 0 : i32
    %c0_i32_1 = arith.constant 0 : i32
    return %c0_i32, %c0_i32_0 : i32, i32
  }
  func.func @transform_7(%arg0: i32, %arg1: i32) -> (i32, i32) {
    %c0_i32 = arith.constant 0 : i32
    %c0_i32_0 = arith.constant 0 : i32
    %c0_i32_1 = arith.constant 0 : i32
    return %c0_i32, %c0_i32_0 : i32, i32
  }
  func.func @transform_8(%arg0: i32, %arg1: i32) -> (i32, i32) {
    %c0_i32 = arith.constant 0 : i32
    %c0_i32_0 = arith.constant 0 : i32
    %c0_i32_1 = arith.constant 0 : i32
    return %c0_i32, %c0_i32_0 : i32, i32
  }
  func.func @transform_9(%arg0: i32, %arg1: i32) -> (i32, i32, i32) {
    %c0_i32 = arith.constant 0 : i32
    %c0_i32_0 = arith.constant 0 : i32
    %c0_i32_1 = arith.constant 0 : i32
    %c0_i32_2 = arith.constant 0 : i32
    return %c0_i32, %c0_i32_0, %c0_i32_1 : i32, i32, i32
  }
  func.func @transform_10(%arg0: i32, %arg1: i32) -> (i32, i32) {
    %c0_i32 = arith.constant 0 : i32
    %c0_i32_0 = arith.constant 0 : i32
    %c0_i32_1 = arith.constant 0 : i32
    return %c0_i32, %c0_i32_0 : i32, i32
  }
  func.func @transform_11(%arg0: i32, %arg1: i32) -> (i32, i32) {
    %c0_i32 = arith.constant 0 : i32
    %c0_i32_0 = arith.constant 0 : i32
    %c0_i32_1 = arith.constant 0 : i32
    return %c0_i32, %c0_i32_0 : i32, i32
  }
  func.func @transform_12(%arg0: i32, %arg1: i32) -> (i32, i32) {
    %c0_i32 = arith.constant 0 : i32
    %c0_i32_0 = arith.constant 0 : i32
    %c0_i32_1 = arith.constant 0 : i32
    return %c0_i32, %c0_i32_0 : i32, i32
  }
  func.func @transform_13(%arg0: i32, %arg1: i32) -> (i32, i32) {
    %c0_i32 = arith.constant 0 : i32
    %c0_i32_0 = arith.constant 0 : i32
    %c0_i32_1 = arith.constant 0 : i32
    return %c0_i32, %c0_i32_0 : i32, i32
  }
  func.func @transform_14(%arg0: i32, %arg1: i32) -> (i32, i32) {
    %c0_i32 = arith.constant 0 : i32
    %c0_i32_0 = arith.constant 0 : i32
    %c0_i32_1 = arith.constant 0 : i32
    return %c0_i32, %c0_i32_0 : i32, i32
  }
  func.func @transform_15(%arg0: i32, %arg1: i32) -> (i32, i32, i32, i32) {
    %c0_i32 = arith.constant 0 : i32
    %c0_i32_0 = arith.constant 0 : i32
    %c0_i32_1 = arith.constant 0 : i32
    return %arg0, %arg1, %c0_i32, %c0_i32_0 : i32, i32, i32, i32
  }
  func.func @transform_16(%arg0: i32, %arg1: i32) -> (i32, i32, i32, i32) {
    %c0_i32 = arith.constant 0 : i32
    %c0_i32_0 = arith.constant 0 : i32
    %c0_i32_1 = arith.constant 0 : i32
    return %arg0, %arg1, %c0_i32, %c0_i32_0 : i32, i32, i32, i32
  }
}

module attributes {stable_mosaic.version = 11 : i64} {
  func.func @sigma_loss_kernel(%arg0: i32, %arg1: i32, %arg2: memref<5x512xf32, #tpu.memory_space<vmem>>, %arg3: memref<5x512xf32, #tpu.memory_space<vmem>>, %arg4: memref<3x512xf32, #tpu.memory_space<vmem>>, %arg5: memref<3x5x512xf32, #tpu.memory_space<vmem>>, %arg6: memref<1x512xf32, #tpu.memory_space<vmem>>, %arg7: memref<5x512xf32, #tpu.memory_space<vmem>>, %arg8: memref<1x512xf32, #tpu.memory_space<vmem>>, %arg9: memref<1x3x128xf32, #tpu.memory_space<vmem>>) attributes {dimension_semantics = [#tpu.dimension_semantics<parallel>, #tpu.dimension_semantics<arbitrary>], iteration_bounds = array<i64: 2, 1>, scalar_prefetch = 0 : i64, scratch_operands = 0 : i64, tpu.core_type = #tpu.core_type<tc>, window_params = [{transform_indices = @transform_0, window_bounds = array<i64: 5, 512>}, {transform_indices = @transform_1, window_bounds = array<i64: 5, 512>}, {transform_indices = @transform_2, window_bounds = array<i64: 3, 512>}, {transform_indices = @transform_3, window_bounds = array<i64: 3, 5, 512>}, {transform_indices = @transform_4, window_bounds = array<i64: 1, 512>}, {transform_indices = @transform_5, window_bounds = array<i64: 5, 512>}, {transform_indices = @transform_6, window_bounds = array<i64: 1, 512>}, {transform_indices = @transform_7, window_bounds = array<i64: 1, 3, 128>}]} {
    %c0_i32 = arith.constant 0 : i32
    %0 = arith.cmpi eq, %arg1, %c0_i32 : i32
    %1 = arith.extui %0 : i1 to i32
    %c0_i32_0 = arith.constant 0 : i32
    %2 = arith.cmpi ne, %1, %c0_i32_0 : i32
    scf.if %2 {
      %cst_62 = arith.constant 0.000000e+00 : f32
      %152 = vector.broadcast %cst_62 : f32 to vector<1x3x128xf32>
      %c0_63 = arith.constant 0 : index
      %c0_64 = arith.constant 0 : index
      %c0_65 = arith.constant 0 : index
      %153 = vector.load %arg9[%c0_63, %c0_64, %c0_65] : memref<1x3x128xf32, #tpu.memory_space<vmem>>, vector<1x3x128xf32>
      tpu.vector_store %arg9[%c0_63, %c0_64, %c0_65], %152 {strides = array<i32>} : memref<1x3x128xf32, #tpu.memory_space<vmem>>, vector<1x3x128xf32>,
    } else {
    }
    %c0 = arith.constant 0 : index
    %c0_1 = arith.constant 0 : index
    %3 = vector.load %arg2[%c0, %c0_1] : memref<5x512xf32, #tpu.memory_space<vmem>>, vector<5x512xf32>
    %c0_2 = arith.constant 0 : index
    %c0_3 = arith.constant 0 : index
    %4 = vector.load %arg3[%c0_2, %c0_3] : memref<5x512xf32, #tpu.memory_space<vmem>>, vector<5x512xf32>
    %c0_4 = arith.constant 0 : index
    %c0_5 = arith.constant 0 : index
    %5 = vector.load %arg4[%c0_4, %c0_5] : memref<3x512xf32, #tpu.memory_space<vmem>>, vector<3x512xf32>
    %c0_6 = arith.constant 0 : index
    %c0_7 = arith.constant 0 : index
    %6 = vector.load %arg6[%c0_6, %c0_7] : memref<1x512xf32, #tpu.memory_space<vmem>>, vector<1x512xf32>
    %cst = arith.constant 2.000000e+01 : f32
    %7 = vector.broadcast %cst : f32 to vector<5x512xf32>
    %8 = arith.cmpf ogt, %3, %7 : vector<5x512xf32>
    %cst_8 = arith.constant 2.000000e+01 : f32
    %9 = vector.broadcast %cst_8 : f32 to vector<5x512xf32>
    %10 = arith.minimumf %3, %9 : vector<5x512xf32>
    %11 = math.exp %10 : vector<5x512xf32>
    %12 = math.log1p %11 : vector<5x512xf32>
    %13 = arith.select %8, %3, %12 : vector<5x512xi1>, vector<5x512xf32>
    %cst_9 = arith.constant dense<0.000000e+00> : vector<512xf32>
    %14 = vector.multi_reduction <add>, %13, %cst_9 [0] : vector<5x512xf32> to vector<512xf32>
    %15 = vector.shape_cast %14 : vector<512xf32> to vector<1x512xf32>
    %16 = math.tanh %15 : vector<1x512xf32>
    %cst_10 = arith.constant dense<0xFF800000> : vector<512xf32>
    %17 = vector.multi_reduction <maximumf>, %3, %cst_10 [0] : vector<5x512xf32> to vector<512xf32>
    %18 = vector.shape_cast %17 : vector<512xf32> to vector<1x512xf32>
    %19 = vector.broadcast %18 : vector<1x512xf32> to vector<5x512xf32>
    %20 = arith.subf %3, %19 : vector<5x512xf32>
    %21 = math.exp %20 : vector<5x512xf32>
    %22 = vector.broadcast %16 : vector<1x512xf32> to vector<5x512xf32>
    %23 = arith.mulf %22, %21 : vector<5x512xf32>
    %cst_11 = arith.constant dense<0.000000e+00> : vector<512xf32>
    %24 = vector.multi_reduction <add>, %21, %cst_11 [0] : vector<5x512xf32> to vector<512xf32>
    %25 = vector.shape_cast %24 : vector<512xf32> to vector<1x512xf32>
    %26 = tpu.reciprocal %25 {approx = true} : vector<1x512xf32> -> vector<1x512xf32>
    %27 = vector.broadcast %26 : vector<1x512xf32> to vector<5x512xf32>
    %28 = arith.mulf %23, %27 : vector<5x512xf32>
    %cst_12 = arith.constant 2.000000e+01 : f32
    %29 = vector.broadcast %cst_12 : f32 to vector<5x512xf32>
    %30 = arith.cmpf ogt, %4, %29 : vector<5x512xf32>
    %cst_13 = arith.constant 2.000000e+01 : f32
    %31 = vector.broadcast %cst_13 : f32 to vector<5x512xf32>
    %32 = arith.minimumf %4, %31 : vector<5x512xf32>
    %33 = math.exp %32 : vector<5x512xf32>
    %34 = math.log1p %33 : vector<5x512xf32>
    %35 = arith.select %30, %4, %34 : vector<5x512xi1>, vector<5x512xf32>
    %cst_14 = arith.constant dense<0.000000e+00> : vector<512xf32>
    %36 = vector.multi_reduction <add>, %35, %cst_14 [0] : vector<5x512xf32> to vector<512xf32>
    %37 = vector.shape_cast %36 : vector<512xf32> to vector<1x512xf32>
    %38 = math.tanh %37 : vector<1x512xf32>
    %cst_15 = arith.constant 9.99999993E-9 : f32
    %39 = vector.broadcast %cst_15 : f32 to vector<5x512xf32>
    %40 = arith.addf %28, %39 : vector<5x512xf32>
    %c0_16 = arith.constant 0 : index
    %c0_17 = arith.constant 0 : index
    %c0_18 = arith.constant 0 : index
    %41 = vector.load %arg5[%c0_16, %c0_17, %c0_18] : memref<3x5x512xf32, #tpu.memory_space<vmem>>, vector<1x5x512xf32>
    %42 = vector.shape_cast %41 : vector<1x5x512xf32> to vector<5x512xf32>
    %43 = vector.extract_strided_slice %5 {offsets = [0, 0], sizes = [1, 512], strides = [1, 1]} : vector<3x512xf32> to vector<1x512xf32>
    %44 = vector.broadcast %43 : vector<1x512xf32> to vector<5x512xf32>
    %45 = arith.subf %44, %42 : vector<5x512xf32>
    %46 = arith.mulf %45, %45 : vector<5x512xf32>
    %cst_19 = arith.constant 0.000000e+00 : f32
    %47 = vector.broadcast %cst_19 : f32 to vector<5x512xf32>
    %48 = arith.subf %47, %46 : vector<5x512xf32>
    %cst_20 = arith.constant 5.000000e+01 : f32
    %49 = vector.broadcast %cst_20 : f32 to vector<5x512xf32>
    %50 = arith.mulf %48, %49 : vector<5x512xf32>
    %cst_21 = arith.constant -1.38364661 : f32
    %51 = vector.broadcast %cst_21 : f32 to vector<5x512xf32>
    %52 = arith.subf %50, %51 : vector<5x512xf32>
    %53 = math.exp %52 : vector<5x512xf32>
    %54 = arith.mulf %40, %53 : vector<5x512xf32>
    %cst_22 = arith.constant dense<0.000000e+00> : vector<512xf32>
    %55 = vector.multi_reduction <add>, %54, %cst_22 [0] : vector<5x512xf32> to vector<512xf32>
    %56 = vector.shape_cast %55 : vector<512xf32> to vector<1x512xf32>
    %cst_23 = arith.constant 9.99999993E-9 : f32
    %57 = vector.broadcast %cst_23 : f32 to vector<1x512xf32>
    %58 = arith.addf %56, %57 : vector<1x512xf32>
    %59 = math.log %58 : vector<1x512xf32>
    %cst_24 = arith.constant 0.000000e+00 : f32
    %60 = vector.broadcast %cst_24 : f32 to vector<1x512xf32>
    %61 = arith.subf %60, %59 : vector<1x512xf32>
    %62 = vector.shape_cast %61 : vector<1x512xf32> to vector<1x1x512xf32>
    %cst_25 = arith.constant dense<0.000000e+00> : vector<1xf32>
    %63 = vector.multi_reduction <add>, %62, %cst_25 [1, 2] : vector<1x1x512xf32> to vector<1xf32>
    %64 = vector.shape_cast %63 : vector<1xf32> to vector<1x1x1xf32>
    %65 = vector.extract %64[0, 0, 0] : f32 from vector<1x1x1xf32>
    %cst_26 = arith.constant 0.000000e+00 : f32
    %66 = arith.addf %cst_26, %65 : f32
    %c1 = arith.constant 1 : index
    %c0_27 = arith.constant 0 : index
    %c0_28 = arith.constant 0 : index
    %67 = vector.load %arg5[%c1, %c0_27, %c0_28] : memref<3x5x512xf32, #tpu.memory_space<vmem>>, vector<1x5x512xf32>
    %68 = vector.shape_cast %67 : vector<1x5x512xf32> to vector<5x512xf32>
    %69 = vector.extract_strided_slice %5 {offsets = [1, 0], sizes = [1, 512], strides = [1, 1]} : vector<3x512xf32> to vector<1x512xf32>
    %70 = vector.broadcast %69 : vector<1x512xf32> to vector<5x512xf32>
    %71 = arith.subf %70, %68 : vector<5x512xf32>
    %72 = arith.mulf %71, %71 : vector<5x512xf32>
    %cst_29 = arith.constant 0.000000e+00 : f32
    %73 = vector.broadcast %cst_29 : f32 to vector<5x512xf32>
    %74 = arith.subf %73, %72 : vector<5x512xf32>
    %cst_30 = arith.constant 5.000000e+01 : f32
    %75 = vector.broadcast %cst_30 : f32 to vector<5x512xf32>
    %76 = arith.mulf %74, %75 : vector<5x512xf32>
    %cst_31 = arith.constant -1.38364661 : f32
    %77 = vector.broadcast %cst_31 : f32 to vector<5x512xf32>
    %78 = arith.subf %76, %77 : vector<5x512xf32>
    %79 = math.exp %78 : vector<5x512xf32>
    %80 = arith.mulf %40, %79 : vector<5x512xf32>
    %cst_32 = arith.constant dense<0.000000e+00> : vector<512xf32>
    %81 = vector.multi_reduction <add>, %80, %cst_32 [0] : vector<5x512xf32> to vector<512xf32>
    %82 = vector.shape_cast %81 : vector<512xf32> to vector<1x512xf32>
    %cst_33 = arith.constant 9.99999993E-9 : f32
    %83 = vector.broadcast %cst_33 : f32 to vector<1x512xf32>
    %84 = arith.addf %82, %83 : vector<1x512xf32>
    %85 = math.log %84 : vector<1x512xf32>
    %cst_34 = arith.constant 0.000000e+00 : f32
    %86 = vector.broadcast %cst_34 : f32 to vector<1x512xf32>
    %87 = arith.subf %86, %85 : vector<1x512xf32>
    %88 = vector.shape_cast %87 : vector<1x512xf32> to vector<1x1x512xf32>
    %cst_35 = arith.constant dense<0.000000e+00> : vector<1xf32>
    %89 = vector.multi_reduction <add>, %88, %cst_35 [1, 2] : vector<1x1x512xf32> to vector<1xf32>
    %90 = vector.shape_cast %89 : vector<1xf32> to vector<1x1x1xf32>
    %91 = vector.extract %90[0, 0, 0] : f32 from vector<1x1x1xf32>
    %92 = arith.addf %66, %91 : f32
    %c2 = arith.constant 2 : index
    %c0_36 = arith.constant 0 : index
    %c0_37 = arith.constant 0 : index
    %93 = vector.load %arg5[%c2, %c0_36, %c0_37] : memref<3x5x512xf32, #tpu.memory_space<vmem>>, vector<1x5x512xf32>
    %94 = vector.shape_cast %93 : vector<1x5x512xf32> to vector<5x512xf32>
    %95 = vector.extract_strided_slice %5 {offsets = [2, 0], sizes = [1, 512], strides = [1, 1]} : vector<3x512xf32> to vector<1x512xf32>
    %96 = vector.broadcast %95 : vector<1x512xf32> to vector<5x512xf32>
    %97 = arith.subf %96, %94 : vector<5x512xf32>
    %98 = arith.mulf %97, %97 : vector<5x512xf32>
    %cst_38 = arith.constant 0.000000e+00 : f32
    %99 = vector.broadcast %cst_38 : f32 to vector<5x512xf32>
    %100 = arith.subf %99, %98 : vector<5x512xf32>
    %cst_39 = arith.constant 5.000000e+01 : f32
    %101 = vector.broadcast %cst_39 : f32 to vector<5x512xf32>
    %102 = arith.mulf %100, %101 : vector<5x512xf32>
    %cst_40 = arith.constant -1.38364661 : f32
    %103 = vector.broadcast %cst_40 : f32 to vector<5x512xf32>
    %104 = arith.subf %102, %103 : vector<5x512xf32>
    %105 = math.exp %104 : vector<5x512xf32>
    %106 = arith.mulf %40, %105 : vector<5x512xf32>
    %cst_41 = arith.constant dense<0.000000e+00> : vector<512xf32>
    %107 = vector.multi_reduction <add>, %106, %cst_41 [0] : vector<5x512xf32> to vector<512xf32>
    %108 = vector.shape_cast %107 : vector<512xf32> to vector<1x512xf32>
    %cst_42 = arith.constant 9.99999993E-9 : f32
    %109 = vector.broadcast %cst_42 : f32 to vector<1x512xf32>
    %110 = arith.addf %108, %109 : vector<1x512xf32>
    %111 = math.log %110 : vector<1x512xf32>
    %cst_43 = arith.constant 0.000000e+00 : f32
    %112 = vector.broadcast %cst_43 : f32 to vector<1x512xf32>
    %113 = arith.subf %112, %111 : vector<1x512xf32>
    %114 = vector.shape_cast %113 : vector<1x512xf32> to vector<1x1x512xf32>
    %cst_44 = arith.constant dense<0.000000e+00> : vector<1xf32>
    %115 = vector.multi_reduction <add>, %114, %cst_44 [1, 2] : vector<1x1x512xf32> to vector<1xf32>
    %116 = vector.shape_cast %115 : vector<1xf32> to vector<1x1x1xf32>
    %117 = vector.extract %116[0, 0, 0] : f32 from vector<1x1x1xf32>
    %118 = arith.addf %92, %117 : f32
    %cst_45 = arith.constant 1.000000e+01 : f32
    %119 = vector.broadcast %cst_45 : f32 to vector<1x512xf32>
    %120 = arith.mulf %119, %38 : vector<1x512xf32>
    %121 = tpu.reciprocal %6 {approx = true} : vector<1x512xf32> -> vector<1x512xf32>
    %122 = arith.mulf %120, %121 : vector<1x512xf32>
    %123 = vector.shape_cast %122 : vector<1x512xf32> to vector<1x1x512xf32>
    %cst_46 = arith.constant dense<0.000000e+00> : vector<1xf32>
    %124 = vector.multi_reduction <add>, %123, %cst_46 [1, 2] : vector<1x1x512xf32> to vector<1xf32>
    %125 = vector.shape_cast %124 : vector<1xf32> to vector<1x1x1xf32>
    %126 = vector.extract %125[0, 0, 0] : f32 from vector<1x1x1xf32>
    %cst_47 = arith.constant dense<0.000000e+00> : vector<512xf32>
    %127 = vector.multi_reduction <add>, %28, %cst_47 [0] : vector<5x512xf32> to vector<512xf32>
    %128 = vector.shape_cast %127 : vector<512xf32> to vector<1x512xf32>
    %cst_48 = arith.constant 1.000000e+01 : f32
    %129 = vector.broadcast %cst_48 : f32 to vector<1x512xf32>
    %130 = arith.mulf %129, %128 : vector<1x512xf32>
    %cst_49 = arith.constant 9.99999993E-9 : f32
    %131 = vector.broadcast %cst_49 : f32 to vector<1x512xf32>
    %132 = arith.addf %130, %131 : vector<1x512xf32>
    %133 = math.log %132 : vector<1x512xf32>
    %cst_50 = arith.constant 0.000000e+00 : f32
    %134 = vector.broadcast %cst_50 : f32 to vector<1x512xf32>
    %135 = arith.subf %134, %133 : vector<1x512xf32>
    %136 = vector.shape_cast %135 : vector<1x512xf32> to vector<1x1x512xf32>
    %cst_51 = arith.constant dense<0.000000e+00> : vector<1xf32>
    %137 = vector.multi_reduction <add>, %136, %cst_51 [1, 2] : vector<1x1x512xf32> to vector<1xf32>
    %138 = vector.shape_cast %137 : vector<1xf32> to vector<1x1x1xf32>
    %139 = vector.extract %138[0, 0, 0] : f32 from vector<1x1x1xf32>
    %c0_52 = arith.constant 0 : index
    %c0_53 = arith.constant 0 : index
    %140 = vector.load %arg7[%c0_52, %c0_53] : memref<5x512xf32, #tpu.memory_space<vmem>>, vector<5x512xf32>
    tpu.vector_store %arg7[%c0_52, %c0_53], %28 {strides = array<i32>} : memref<5x512xf32, #tpu.memory_space<vmem>>, vector<5x512xf32>,
    %c0_54 = arith.constant 0 : index
    %c0_55 = arith.constant 0 : index
    %141 = vector.load %arg8[%c0_54, %c0_55] : memref<1x512xf32, #tpu.memory_space<vmem>>, vector<1x512xf32>
    tpu.vector_store %arg8[%c0_54, %c0_55], %38 {strides = array<i32>} : memref<1x512xf32, #tpu.memory_space<vmem>>, vector<1x512xf32>,
    %c0_56 = arith.constant 0 : index
    %c0_57 = arith.constant 0 : index
    %c0_58 = arith.constant 0 : index
    %142 = vector.load %arg9[%c0_56, %c0_57, %c0_58] : memref<1x3x128xf32, #tpu.memory_space<vmem>>, vector<1x3x128xf32>
    %143 = vector.shape_cast %142 : vector<1x3x128xf32> to vector<3x128xf32>
    %144 = vector.broadcast %118 : f32 to vector<1x128xf32>
    %145 = vector.broadcast %126 : f32 to vector<1x128xf32>
    %146 = vector.broadcast %139 : f32 to vector<1x128xf32>
    %147 = tpu.concatenate %144, %145, %146 in 0 : vector<1x128xf32>, vector<1x128xf32>, vector<1x128xf32> -> vector<3x128xf32>
    %148 = arith.addf %143, %147 : vector<3x128xf32>
    %c0_59 = arith.constant 0 : index
    %c0_60 = arith.constant 0 : index
    %c0_61 = arith.constant 0 : index
    %149 = vector.load %arg9[%c0_59, %c0_60, %c0_61] : memref<1x3x128xf32, #tpu.memory_space<vmem>>, vector<1x3x128xf32>
    %150 = vector.shape_cast %149 : vector<1x3x128xf32> to vector<3x128xf32>
    %151 = vector.shape_cast %148 : vector<3x128xf32> to vector<1x3x128xf32>
    tpu.vector_store %arg9[%c0_59, %c0_60, %c0_61], %151 {strides = array<i32>} : memref<1x3x128xf32, #tpu.memory_space<vmem>>, vector<1x3x128xf32>,
    return
  }
  func.func @transform_0(%arg0: i32, %arg1: i32) -> (i32, i32) {
    %c1_i32 = arith.constant 1 : i32
    %0 = arith.muli %arg0, %c1_i32 : i32
    %1 = arith.addi %0, %arg1 : i32
    %c0_i32 = arith.constant 0 : i32
    %c0_i32_0 = arith.constant 0 : i32
    return %c0_i32, %1 : i32, i32
  }
  func.func @transform_1(%arg0: i32, %arg1: i32) -> (i32, i32) {
    %c1_i32 = arith.constant 1 : i32
    %0 = arith.muli %arg0, %c1_i32 : i32
    %1 = arith.addi %0, %arg1 : i32
    %c0_i32 = arith.constant 0 : i32
    %c0_i32_0 = arith.constant 0 : i32
    return %c0_i32, %1 : i32, i32
  }
  func.func @transform_2(%arg0: i32, %arg1: i32) -> (i32, i32) {
    %c1_i32 = arith.constant 1 : i32
    %0 = arith.muli %arg0, %c1_i32 : i32
    %1 = arith.addi %0, %arg1 : i32
    %c0_i32 = arith.constant 0 : i32
    %c0_i32_0 = arith.constant 0 : i32
    return %c0_i32, %1 : i32, i32
  }
  func.func @transform_3(%arg0: i32, %arg1: i32) -> (i32, i32, i32) {
    %c1_i32 = arith.constant 1 : i32
    %0 = arith.muli %arg0, %c1_i32 : i32
    %1 = arith.addi %0, %arg1 : i32
    %c0_i32 = arith.constant 0 : i32
    %c0_i32_0 = arith.constant 0 : i32
    %c0_i32_1 = arith.constant 0 : i32
    return %c0_i32, %c0_i32_0, %1 : i32, i32, i32
  }
  func.func @transform_4(%arg0: i32, %arg1: i32) -> (i32, i32) {
    %c1_i32 = arith.constant 1 : i32
    %0 = arith.muli %arg0, %c1_i32 : i32
    %1 = arith.addi %0, %arg1 : i32
    %c0_i32 = arith.constant 0 : i32
    %c0_i32_0 = arith.constant 0 : i32
    return %c0_i32, %1 : i32, i32
  }
  func.func @transform_5(%arg0: i32, %arg1: i32) -> (i32, i32) {
    %c1_i32 = arith.constant 1 : i32
    %0 = arith.muli %arg0, %c1_i32 : i32
    %1 = arith.addi %0, %arg1 : i32
    %c0_i32 = arith.constant 0 : i32
    %c0_i32_0 = arith.constant 0 : i32
    return %c0_i32, %1 : i32, i32
  }
  func.func @transform_6(%arg0: i32, %arg1: i32) -> (i32, i32) {
    %c1_i32 = arith.constant 1 : i32
    %0 = arith.muli %arg0, %c1_i32 : i32
    %1 = arith.addi %0, %arg1 : i32
    %c0_i32 = arith.constant 0 : i32
    %c0_i32_0 = arith.constant 0 : i32
    return %c0_i32, %1 : i32, i32
  }
  func.func @transform_7(%arg0: i32, %arg1: i32) -> (i32, i32, i32) {
    %c0_i32 = arith.constant 0 : i32
    %c0_i32_0 = arith.constant 0 : i32
    %c0_i32_1 = arith.constant 0 : i32
    return %arg0, %c0_i32, %c0_i32_0 : i32, i32, i32
  }
}

</mosaic_0001>

<llo_original>
// kernel: forward.2
$region0: #{forward.2}
  #allocation0 [shape = 'u32[]', space=smem, size = 0x4, offset = 0x4, fixed_abs, tag = 'smem constant byte address 0x4 - core index']
  #allocation1 [shape = 'u32[144,128]{1,0:T(1,128)}', space=vmem, size = 0x12000, scoped, tag = 'internal scratch']
  %s0 = inlined_call_operand.vmem [shape: f32[5,1024], index: 0, kind: input, shape index: {}]
  %s1 = inlined_call_operand.vmem [shape: f32[5,1024], index: 1, kind: input, shape index: {}]
  %s2 = inlined_call_operand.vmem [shape: f32[3,1024], index: 2, kind: input, shape index: {}]
  %s3 = inlined_call_operand.vmem [shape: f32[3,5,1024], index: 3, kind: input, shape index: {}]
  %s4 = inlined_call_operand.vmem [shape: f32[1,1024], index: 4, kind: input, shape index: {}]
  %s5 = inlined_call_operand.hbm [shape: f32[5,1024], index: 5, kind: output, shape index: {0}]
  %s6 = inlined_call_operand.hbm [shape: f32[1,1024], index: 6, kind: output, shape index: {1}]
  %s7 = inlined_call_operand.vmem [shape: f32[2,3,128], index: 7, kind: output, shape index: {2}]
  %8 = xla_tuple %s5, %s6, %s7
  %s9 = sld [smem:[#allocation0]]
  $region96: #{forward.2} parent=0
    _
  %s11 = ssub.s32 1, %s9
  %s12 = scalar_select 0, %s11, %s9
  $region1: #{forward.2} parent=0
    #allocation2 [shape = 'u8[98304]{0}', space=vmem, size = 0x18000, scoped, tag = 'input window, operand 3']
    #allocation3 [shape = 'u8[32768]{0}', space=vmem, size = 0x8000, scoped, tag = 'output window, operand 0']
    #allocation4 [shape = 's32[2]{0}', space=sflag, size = 0x8, scoped, tag = 'scoped memory for forward.2']
    #allocation5 [shape = 'u8[4096]{0}', space=vmem, size = 0x1000, scoped, tag = 'output window, operand 1']
    #allocation6 [shape = 's32[2]{0}', space=sflag, size = 0x8, scoped, tag = 'scoped memory for forward.2']
    %13 = vsyncpa [#allocation4], 0
    %s14 = scalar_lea.sflag [#allocation4], 1
    %15 = vsyncpa %s14, 0
    %16 = vsyncpa [#allocation6], 0
    %s17 = scalar_lea.sflag [#allocation6], 1
    %18 = vsyncpa %s17, 0
    loop: start=0, step=1, limit=4
    $region2: #{forward.2} parent=1 // loop_pre_header
      _
    $region3: #{forward.2} parent=1 // loop_header
      %s20 = sphi 0, %s24
      %p21 = scmp.ge.s32.totalorder %s20, 4
      %s27 = sphi 0, %s39
      %s28 = sphi 0, %s35
      %s29 = sphi 0, %s27
      %s30 = sphi 0, %s28
      %s31 = sphi 0, %s29
      %s32 = sphi 0, %s30
      %s44 = sphi 0, %s46
      %s47 = sphi 0, %s44
      %s48 = sphi 0, %s47
      %s64 = sphi 0, %s48
      %s72 = sphi 0, %s74
      %s75 = sphi 0, %s72
      %s76 = sphi 0, %s75
      %s92 = sphi 0, %s76
      %s100 = sphi 0, %s102
      %s103 = sphi 0, %s100
      %s104 = sphi 0, %s103
      %s120 = sphi 0, %s104
      %s128 = sphi 0, %s130
      %s131 = sphi 0, %s128
      %s132 = sphi 0, %s131
      %s148 = sphi 0, %s132
      %s156 = sphi 0, %s158
      %s159 = sphi 0, %s156
      %s160 = sphi 0, %s159
      %s176 = sphi 0, %s160
      %s184 = sphi 0, %s186
      %s187 = sphi 0, %s184
      %s188 = sphi 0, %s187
      %s204 = sphi 0, %s188
      %s212 = sphi 0, %s214
      %s215 = sphi 0, %s212
      %s216 = sphi 0, %s215
      %s232 = sphi 0, %s216
      %s238 = sphi 0, %s240
      %s241 = sphi 0, %s238
      %s242 = sphi 0, %s241
      %s258 = sphi 0, %s242
    $region4: #{forward.2} parent=1 // loop_header_branch
      %23 = sbr.rel (%p21) target = $region8
    $region5: #{forward.2} parent=1 // loop_body
      %s25 = ssub.s32 %s20, 1
      %s26 = ssub.s32 %s20, 2
      %s33 = sadd.s32 1, %s28
      %p34 = scmp.ge.s32.totalorder %s33, 1
      %s35 = scalar_select %p34, 0, %s33
      %s36 = sadd.s32 1, %s27
      %s37 = scalar_select %p34, %s36, %s27
      %p38 = scmp.ge.s32.totalorder %s37, 2
      %s39 = scalar_select %p38, 0, %s37
      %s40 = sadd.s32 %s27, %s28
      %s41 = sadd.s32 %s39, %s35
      %s42 = ssub.s32 %s40, %s41
      %p43 = scmp.eq.s32.totalorder %s42, 0
      %s45 = sadd.s32 %s44, 1
      %s46 = scalar_select %p43, %s44, %s45
      %p49 = pneg %p43
      %p50 = scmp.eq.s32.totalorder %s20, 1
      %p51 = por %p49, %p50
      %p52 = scmp.ne.s32.totalorder %s44, %s47
      %p53 = scmp.eq.s32.totalorder %s20, 0
      %p54 = por %p52, %p53
      %p55 = scmp.ne.s32.totalorder %s44, %s47
      %p56 = scmp.eq.s32.totalorder %s25, 1
      %p57 = por %p55, %p56
      %p58 = scmp.ne.s32.totalorder %s47, %s48
      %p59 = scmp.eq.s32.totalorder %s25, 0
      %p60 = por %p58, %p59
      %p61 = scmp.ne.s32.totalorder %s47, %s48
      %p62 = scmp.eq.s32.totalorder %s26, 1
      %p63 = por %p61, %p62
      %p65 = scmp.ne.s32.totalorder %s48, %s64
      %p66 = scmp.eq.s32.totalorder %s26, 0
      %p67 = por %p65, %p66
      %s68 = sadd.s32 %s27, %s28
      %s69 = sadd.s32 %s39, %s35
      %s70 = ssub.s32 %s68, %s69
      %p71 = scmp.eq.s32.totalorder %s70, 0
      %s73 = sadd.s32 %s72, 1
      %s74 = scalar_select %p71, %s72, %s73
      %p77 = pneg %p71
      %p78 = scmp.eq.s32.totalorder %s20, 1
      %p79 = por %p77, %p78
      %p80 = scmp.ne.s32.totalorder %s72, %s75
      %p81 = scmp.eq.s32.totalorder %s20, 0
      %p82 = por %p80, %p81
      %p83 = scmp.ne.s32.totalorder %s72, %s75
      %p84 = scmp.eq.s32.totalorder %s25, 1
      %p85 = por %p83, %p84
      %p86 = scmp.ne.s32.totalorder %s75, %s76
      %p87 = scmp.eq.s32.totalorder %s25, 0
      %p88 = por %p86, %p87
      %p89 = scmp.ne.s32.totalorder %s75, %s76
      %p90 = scmp.eq.s32.totalorder %s26, 1
      %p91 = por %p89, %p90
      %p93 = scmp.ne.s32.totalorder %s76, %s92
      %p94 = scmp.eq.s32.totalorder %s26, 0
      %p95 = por %p93, %p94
      %s96 = sadd.s32 %s27, %s28
      %s97 = sadd.s32 %s39, %s35
      %s98 = ssub.s32 %s96, %s97
      %p99 = scmp.eq.s32.totalorder %s98, 0
      %s101 = sadd.s32 %s100, 1
      %s102 = scalar_select %p99, %s100, %s101
      %p105 = pneg %p99
      %p106 = scmp.eq.s32.totalorder %s20, 1
      %p107 = por %p105, %p106
      %p108 = scmp.ne.s32.totalorder %s100, %s103
      %p109 = scmp.eq.s32.totalorder %s20, 0
      %p110 = por %p108, %p109
      %p111 = scmp.ne.s32.totalorder %s100, %s103
      %p112 = scmp.eq.s32.totalorder %s25, 1
      %p113 = por %p111, %p112
      %p114 = scmp.ne.s32.totalorder %s103, %s104
      %p115 = scmp.eq.s32.totalorder %s25, 0
      %p116 = por %p114, %p115
      %p117 = scmp.ne.s32.totalorder %s103, %s104
      %p118 = scmp.eq.s32.totalorder %s26, 1
      %p119 = por %p117, %p118
      %p121 = scmp.ne.s32.totalorder %s104, %s120
      %p122 = scmp.eq.s32.totalorder %s26, 0
      %p123 = por %p121, %p122
      %s124 = sadd.s32 %s27, %s28
      %s125 = sadd.s32 %s39, %s35
      %s126 = ssub.s32 %s124, %s125
      %p127 = scmp.eq.s32.totalorder %s126, 0
      %s129 = sadd.s32 %s128, 1
      %s130 = scalar_select %p127, %s128, %s129
      %p133 = pneg %p127
      %p134 = scmp.eq.s32.totalorder %s20, 1
      %p135 = por %p133, %p134
      %p136 = scmp.ne.s32.totalorder %s128, %s131
      %p137 = scmp.eq.s32.totalorder %s20, 0
      %p138 = por %p136, %p137
      %p139 = scmp.ne.s32.totalorder %s128, %s131
      %p140 = scmp.eq.s32.totalorder %s25, 1
      %p141 = por %p139, %p140
      %p142 = scmp.ne.s32.totalorder %s131, %s132
      %p143 = scmp.eq.s32.totalorder %s25, 0
      %p144 = por %p142, %p143
      %p145 = scmp.ne.s32.totalorder %s131, %s132
      %p146 = scmp.eq.s32.totalorder %s26, 1
      %p147 = por %p145, %p146
      %p149 = scmp.ne.s32.totalorder %s132, %s148
      %p150 = scmp.eq.s32.totalorder %s26, 0
      %p151 = por %p149, %p150
      %s152 = sadd.s32 %s27, %s28
      %s153 = sadd.s32 %s39, %s35
      %s154 = ssub.s32 %s152, %s153
      %p155 = scmp.eq.s32.totalorder %s154, 0
      %s157 = sadd.s32 %s156, 1
      %s158 = scalar_select %p155, %s156, %s157
      %p161 = pneg %p155
      %p162 = scmp.eq.s32.totalorder %s20, 1
      %p163 = por %p161, %p162
      %p164 = scmp.ne.s32.totalorder %s156, %s159
      %p165 = scmp.eq.s32.totalorder %s20, 0
      %p166 = por %p164, %p165
      %p167 = scmp.ne.s32.totalorder %s156, %s159
      %p168 = scmp.eq.s32.totalorder %s25, 1
      %p169 = por %p167, %p168
      %p170 = scmp.ne.s32.totalorder %s159, %s160
      %p171 = scmp.eq.s32.totalorder %s25, 0
      %p172 = por %p170, %p171
      %p173 = scmp.ne.s32.totalorder %s159, %s160
      %p174 = scmp.eq.s32.totalorder %s26, 1
      %p175 = por %p173, %p174
      %p177 = scmp.ne.s32.totalorder %s160, %s176
      %p178 = scmp.eq.s32.totalorder %s26, 0
      %p179 = por %p177, %p178
      %s180 = sadd.s32 %s27, %s28
      %s181 = sadd.s32 %s39, %s35
      %s182 = ssub.s32 %s180, %s181
      %p183 = scmp.eq.s32.totalorder %s182, 0
      %s185 = sadd.s32 %s184, 1
      %s186 = scalar_select %p183, %s184, %s185
      %p189 = pneg %p183
      %p190 = scmp.eq.s32.totalorder %s20, 1
      %p191 = por %p189, %p190
      %p192 = scmp.ne.s32.totalorder %s184, %s187
      %p193 = scmp.eq.s32.totalorder %s20, 0
      %p194 = por %p192, %p193
      %p195 = scmp.ne.s32.totalorder %s184, %s187
      %p196 = scmp.eq.s32.totalorder %s25, 1
      %p197 = por %p195, %p196
      %p198 = scmp.ne.s32.totalorder %s187, %s188
      %p199 = scmp.eq.s32.totalorder %s25, 0
      %p200 = por %p198, %p199
      %p201 = scmp.ne.s32.totalorder %s187, %s188
      %p202 = scmp.eq.s32.totalorder %s26, 1
      %p203 = por %p201, %p202
      %p205 = scmp.ne.s32.totalorder %s188, %s204
      %p206 = scmp.eq.s32.totalorder %s26, 0
      %p207 = por %p205, %p206
      %s208 = sadd.s32 %s27, %s28
      %s209 = sadd.s32 %s39, %s35
      %s210 = ssub.s32 %s208, %s209
      %p211 = scmp.eq.s32.totalorder %s210, 0
      %s213 = sadd.s32 %s212, 1
      %s214 = scalar_select %p211, %s212, %s213
      %p217 = pneg %p211
      %p218 = scmp.eq.s32.totalorder %s20, 1
      %p219 = por %p217, %p218
      %p220 = scmp.ne.s32.totalorder %s212, %s215
      %p221 = scmp.eq.s32.totalorder %s20, 0
      %p222 = por %p220, %p221
      %p223 = scmp.ne.s32.totalorder %s212, %s215
      %p224 = scmp.eq.s32.totalorder %s25, 1
      %p225 = por %p223, %p224
      %p226 = scmp.ne.s32.totalorder %s215, %s216
      %p227 = scmp.eq.s32.totalorder %s25, 0
      %p228 = por %p226, %p227
      %p229 = scmp.ne.s32.totalorder %s215, %s216
      %p230 = scmp.eq.s32.totalorder %s26, 1
      %p231 = por %p229, %p230
      %p233 = scmp.ne.s32.totalorder %s216, %s232
      %p234 = scmp.eq.s32.totalorder %s26, 0
      %p235 = por %p233, %p234
      %s236 = ssub.s32 %s27, %s39
      %p237 = scmp.eq.s32.totalorder %s236, 0
      %s239 = sadd.s32 %s238, 1
      %s240 = scalar_select %p237, %s238, %s239
      %p243 = pneg %p237
      %p244 = scmp.eq.s32.totalorder %s20, 1
      %p245 = por %p243, %p244
      %p246 = scmp.ne.s32.totalorder %s238, %s241
      %p247 = scmp.eq.s32.totalorder %s20, 0
      %p248 = por %p246, %p247
      %p249 = scmp.ne.s32.totalorder %s238, %s241
      %p250 = scmp.eq.s32.totalorder %s25, 1
      %p251 = por %p249, %p250
      %p252 = scmp.ne.s32.totalorder %s241, %s242
      %p253 = scmp.eq.s32.totalorder %s25, 0
      %p254 = por %p252, %p253
      %p255 = scmp.ne.s32.totalorder %s241, %s242
      %p256 = scmp.eq.s32.totalorder %s26, 1
      %p257 = por %p255, %p256
      %p259 = scmp.ne.s32.totalorder %s242, %s258
      %p260 = scmp.eq.s32.totalorder %s26, 0
      %p261 = por %p259, %p260
      %p262 = scmp.le.s32.totalorder 1, %s20
      %p263 = scmp.lt.s32.totalorder %s20, 3
      %p264 = pnand %p262, %p263
      %p265 = pneg %p264
      // Predicated region
      $region9: #{forward.2} parent=5 // pred_check
        _
      $region10: #{forward.2} parent=5 // pred_check_branch
        %267 = sbr.rel (%p264) target = $region12
      $region11: #{forward.2} parent=5 // pred_region
        %s268 = ssub.s32 %s20, 1
      $region12: #{forward.2} parent=5 // pred_fallthru
        _
      %p269 = scmp.lt.s32.totalorder %s20, 2
      // Predicated region
      $region13: #{forward.2} parent=5 // pred_check
        %p270 = pneg %p269
      $region14: #{forward.2} parent=5 // pred_check_branch
        %272 = sbr.rel (%p270) target = $region16
      $region15: #{forward.2} parent=5 // pred_region
        // Predicated region
        $region17: #{forward.2} parent=15 // pred_check
          %p273 = pneg %p54
        $region18: #{forward.2} parent=15 // pred_check_branch
          %275 = sbr.rel (%p273) target = $region20
        $region19: #{forward.2} parent=15 // pred_region
          %s276 = sadd.s32 %s27, %s28
          %s277 = smul.u32 4, %s276
          %p278 = scmp.lt.s32.totalorder %s277, 7
          %s279 = scalar_select %p278, %s277, 7
          %s280 = smul.addr %s279, 8
          %s281 = scalar_lea.vmem %s0, %s280
          %s282 = sadd.s32 %s27, %s28
          %s283 = smul.u32 4, %s282
        $region20: #{forward.2} parent=15 // pred_fallthru
          _
        // Predicated region
        $region21: #{forward.2} parent=15 // pred_check
          %p284 = pneg %p82
        $region22: #{forward.2} parent=15 // pred_check_branch
          %286 = sbr.rel (%p284) target = $region24
        $region23: #{forward.2} parent=15 // pred_region
          %s287 = sadd.s32 %s27, %s28
          %s288 = smul.u32 4, %s287
          %p289 = scmp.lt.s32.totalorder %s288, 7
          %s290 = scalar_select %p289, %s288, 7
          %s291 = smul.addr %s290, 8
          %s292 = scalar_lea.vmem %s1, %s291
          %s293 = sadd.s32 %s27, %s28
          %s294 = smul.u32 4, %s293
        $region24: #{forward.2} parent=15 // pred_fallthru
          _
        // Predicated region
        $region25: #{forward.2} parent=15 // pred_check
          %p295 = pneg %p110
        $region26: #{forward.2} parent=15 // pred_check_branch
          %297 = sbr.rel (%p295) target = $region28
        $region27: #{forward.2} parent=15 // pred_region
          %s298 = sadd.s32 %s27, %s28
          %s299 = smul.u32 4, %s298
          %p300 = scmp.lt.s32.totalorder %s299, 7
          %s301 = scalar_select %p300, %s299, 7
          %s302 = smul.addr %s301, 4
          %s303 = scalar_lea.vmem %s2, %s302
          %s304 = sadd.s32 %s27, %s28
          %s305 = smul.u32 4, %s304
        $region28: #{forward.2} parent=15 // pred_fallthru
          _
        // Predicated region
        $region29: #{forward.2} parent=15 // pred_check
          %p306 = pneg %p138
        $region30: #{forward.2} parent=15 // pred_check_branch
          %308 = sbr.rel (%p306) target = $region32
        $region31: #{forward.2} parent=15 // pred_region
          %s309 = sand.u32 %s128, 1
          %s310 = sand.u32 %s128, 1
          %s311 = smul.addr %s310, 96
          %s312 = scalar_lea.vmem [#allocation2], %s311
          %s313 = sadd.s32 %s27, %s28
          %s314 = smul.u32 4, %s313
          %s315 = smul.addr %s314, 8
          %s316 = scalar_lea.vmem %s3, %s315
          // Predicated region
          $region33: #{forward.2} parent=31 // pred_check
            _
          $region34: #{forward.2} parent=31 // pred_check_branch
            %318 = sbr.rel (0) target = $region36
          $region35: #{forward.2} parent=31 // pred_region
            // Predicated region
            $region37: #{forward.2} parent=35 // pred_check
              _
            $region38: #{forward.2} parent=35 // pred_check_branch
              %320 = sbr.rel (0) target = $region40
            $region39: #{forward.2} parent=35 // pred_region
              loop: start=0, step=1, limit=1
              $region41: #{forward.2} parent=39 // loop_pre_header
                _
              $region42: #{forward.2} parent=39 // loop_header
                %s322 = sphi 0, %s326
                %p323 = scmp.ge.s32.totalorder %s322, 1
                %s327 = sphi %s316, %s316
                %s328 = sphi %s312, %s312
              $region43: #{forward.2} parent=39 // loop_header_branch
                %325 = sbr.rel (%p323) target = $region47
              $region44: #{forward.2} parent=39 // loop_body
                %v329 = vld [vmem:[%s327] sm:$0xff]
                %330 = vst [vmem:[%s328] sm:$0xff] %v329
                %v331 = vld [vmem:[%s327 + $0x8] sm:$0xff]
                %332 = vst [vmem:[%s328 + $0x8] sm:$0xff] %v331
                %v333 = vld [vmem:[%s327 + $0x10] sm:$0xff]
                %334 = vst [vmem:[%s328 + $0x10] sm:$0xff] %v333
                %v335 = vld [vmem:[%s327 + $0x18] sm:$0xff]
                %336 = vst [vmem:[%s328 + $0x18] sm:$0xff] %v335
                %v337 = vld [vmem:[%s327 + $0x40] sm:$0xff]
                %338 = vst [vmem:[%s328 + $0x20] sm:$0xff] %v337
                %v339 = vld [vmem:[%s327 + $0x48] sm:$0xff]
                %340 = vst [vmem:[%s328 + $0x28] sm:$0xff] %v339
                %v341 = vld [vmem:[%s327 + $0x50] sm:$0xff]
                %342 = vst [vmem:[%s328 + $0x30] sm:$0xff] %v341
                %v343 = vld [vmem:[%s327 + $0x58] sm:$0xff]
                %344 = vst [vmem:[%s328 + $0x38] sm:$0xff] %v343
                %v345 = vld [vmem:[%s327 + $0x80] sm:$0xff]
                %346 = vst [vmem:[%s328 + $0x40] sm:$0xff] %v345
                %v347 = vld [vmem:[%s327 + $0x88] sm:$0xff]
                %348 = vst [vmem:[%s328 + $0x48] sm:$0xff] %v347
                %v349 = vld [vmem:[%s327 + $0x90] sm:$0xff]
                %350 = vst [vmem:[%s328 + $0x50] sm:$0xff] %v349
                %v351 = vld [vmem:[%s327 + $0x98] sm:$0xff]
                %352 = vst [vmem:[%s328 + $0x58] sm:$0xff] %v351
              $region45: #{forward.2} parent=39 // loop_footer
                %s326 = sadd.s32 1, %s322
              $region46: #{forward.2} parent=39 // loop_footer_branch
                %321 = sbr.rel target = $region42
              $region47: #{forward.2} parent=39 // loop_exit
                _
            $region40: #{forward.2} parent=35 // pred_fallthru
              _
            // Predicated region
            $region48: #{forward.2} parent=35 // pred_check
              _
            $region49: #{forward.2} parent=35 // pred_check_branch
              %354 = sbr.rel target = $region51
            $region50: #{forward.2} parent=35 // pred_region
              _
            $region51: #{forward.2} parent=35 // pred_fallthru
              _
          $region36: #{forward.2} parent=31 // pred_fallthru
            _
          %355 = vnop
        $region32: #{forward.2} parent=15 // pred_fallthru
          _
        // Predicated region
        $region52: #{forward.2} parent=15 // pred_check
          %p356 = pneg %p166
        $region53: #{forward.2} parent=15 // pred_check_branch
          %358 = sbr.rel (%p356) target = $region55
        $region54: #{forward.2} parent=15 // pred_region
          %s359 = sadd.s32 %s27, %s28
          %s360 = smul.u32 4, %s359
          %p361 = scmp.lt.s32.totalorder %s360, 7
          %s362 = scalar_select %p361, %s360, 7
          %s363 = scalar_lea.vmem %s4, %s362
          %s364 = sadd.s32 %s27, %s28
          %s365 = smul.u32 4, %s364
        $region55: #{forward.2} parent=15 // pred_fallthru
          _
      $region16: #{forward.2} parent=5 // pred_fallthru
        _
      %p366 = scmp.le.s32.totalorder 1, %s20
      %p367 = scmp.lt.s32.totalorder %s20, 3
      %p368 = pnand %p366, %p367
      %p369 = pneg %p368
      // Predicated region
      $region56: #{forward.2} parent=5 // pred_check
        _
      $region57: #{forward.2} parent=5 // pred_check_branch
        %371 = sbr.rel (%p368) target = $region59
      $region58: #{forward.2} parent=5 // pred_region
        %s372 = ssub.s32 %s20, 1
        %s373 = sand.u32 %s131, 1
        %s374 = sand.u32 %s131, 1
        %s375 = smul.addr %s374, 96
        %s376 = scalar_lea.vmem [#allocation2], %s375
        // Predicated region
        $region60: #{forward.2} parent=58 // pred_check
          %p377 = pneg %p144
        $region61: #{forward.2} parent=58 // pred_check_branch
          %379 = sbr.rel (%p377) target = $region63
        $region62: #{forward.2} parent=58 // pred_region
          _
        $region63: #{forward.2} parent=58 // pred_fallthru
          _
        %s380 = sadd.s32 %s29, %s30
        %s381 = smul.u32 4, %s380
        %p382 = scmp.lt.s32.totalorder %s381, 7
        %s383 = scalar_select %p382, %s381, 7
        %s384 = smul.addr %s383, 8
        %s385 = scalar_lea.vmem %s0, %s384
        %p386 = pneg %p60
        %p387 = pneg %p57
        %s388 = sadd.s32 %s29, %s30
        %s389 = smul.u32 4, %s388
        %p390 = scmp.lt.s32.totalorder %s389, 7
        %s391 = scalar_select %p390, %s389, 7
        %s392 = smul.addr %s391, 8
        %s393 = scalar_lea.vmem %s1, %s392
        %p394 = pneg %p88
        %p395 = pneg %p85
        %s396 = sadd.s32 %s29, %s30
        %s397 = smul.u32 4, %s396
        %p398 = scmp.lt.s32.totalorder %s397, 7
        %s399 = scalar_select %p398, %s397, 7
        %s400 = smul.addr %s399, 4
        %s401 = scalar_lea.vmem %s2, %s400
        %p402 = pneg %p116
        %p403 = pneg %p113
        %s404 = sand.u32 %s131, 1
        %s405 = sand.u32 %s131, 1
        %s406 = smul.addr %s405, 96
        %s407 = scalar_lea.vmem [#allocation2], %s406
        %p408 = pneg %p144
        %p409 = pneg %p141
        %s410 = sadd.s32 %s29, %s30
        %s411 = smul.u32 4, %s410
        %p412 = scmp.lt.s32.totalorder %s411, 7
        %s413 = scalar_select %p412, %s411, 7
        %s414 = scalar_lea.vmem %s4, %s413
        %p415 = pneg %p172
        %p416 = pneg %p169
        %p417 = pneg %p200
        %p418 = pneg %p197
        %s419 = sand.u32 %s187, 1
        %s420 = scalar_lea.sflag [#allocation4], %s419
        %s421 = sand.u32 %s187, 1
        %s422 = smul.addr %s421, 32
        %s423 = scalar_lea.vmem [#allocation3], %s422
        %p424 = pneg %p228
        %p425 = pneg %p225
        %s426 = sand.u32 %s215, 1
        %s427 = scalar_lea.sflag [#allocation6], %s426
        %s428 = sand.u32 %s215, 1
        %s429 = smul.addr %s428, 4
        %s430 = scalar_lea.vmem [#allocation5], %s429
        %p431 = pneg %p254
        %p432 = pneg %p251
        %p433 = scmp.lt.s32.totalorder %s29, 1
        %s434 = scalar_select %p433, %s29, 1
        %s435 = smul.addr %s434, 4
        %s436 = scalar_lea.vmem %s7, %s435
        %s437 = sadd.s32 %s29, %s30
        %s438 = smul.u32 4, %s437
        %p439 = scmp.lt.s32.totalorder %s438, 7
        %s440 = scalar_select %p439, %s438, 7
        %s441 = smul.addr %s440, 8
        %s442 = scalar_lea.vmem %s0, %s441
        %s443 = sadd.s32 %s29, %s30
        %s444 = smul.u32 4, %s443
        %s445 = sadd.s32 %s29, %s30
        %s446 = smul.u32 4, %s445
        %p447 = scmp.lt.s32.totalorder %s446, 7
        %s448 = scalar_select %p447, %s446, 7
        %s449 = smul.addr %s448, 8
        %s450 = scalar_lea.vmem %s1, %s449
        %s451 = sadd.s32 %s29, %s30
        %s452 = smul.u32 4, %s451
        %s453 = sadd.s32 %s29, %s30
        %s454 = smul.u32 4, %s453
        %p455 = scmp.lt.s32.totalorder %s454, 7
        %s456 = scalar_select %p455, %s454, 7
        %s457 = smul.addr %s456, 4
        %s458 = scalar_lea.vmem %s2, %s457
        %s459 = sadd.s32 %s29, %s30
        %s460 = smul.u32 4, %s459
        %s461 = sadd.s32 %s29, %s30
        %s462 = smul.u32 4, %s461
        %s463 = sadd.s32 %s29, %s30
        %s464 = smul.u32 4, %s463
        %p465 = scmp.lt.s32.totalorder %s464, 7
        %s466 = scalar_select %p465, %s464, 7
        %s467 = scalar_lea.vmem %s4, %s466
        %s468 = sadd.s32 %s29, %s30
        %s469 = smul.u32 4, %s468
        %s470 = sadd.s32 %s29, %s30
        %s471 = smul.u32 4, %s470
        %s472 = sadd.s32 %s29, %s30
        %s473 = smul.u32 4, %s472
        %p474 = scmp.lt.s32.totalorder %s29, 1
        %s475 = scalar_select %p474, %s29, 1
        %s476 = smul.addr %s475, 4
        %s477 = scalar_lea.vmem %s7, %s476
        %p478 = scmp.eq.s32.totalorder %s30, 0
        // Predicated region
        $region64: #{forward.2} parent=58 // pred_check
          %p479 = pneg %p478
        $region65: #{forward.2} parent=58 // pred_check_branch
          %481 = sbr.rel (%p479) target = $region67
        $region66: #{forward.2} parent=58 // pred_region
          %482 = vst [vmem:[%s477] sm:$0x7] 0.0
        $region67: #{forward.2} parent=58 // pred_fallthru
          _
        %v483 = vld [vmem:[%s442] sm:$0x1f]
        %v484 = vld [vmem:[%s442 + $0x8] sm:$0x1f]
        %v485 = vld [vmem:[%s442 + $0x10] sm:$0x1f]
        %v486 = vld [vmem:[%s442 + $0x18] sm:$0x1f]
        %v487 = vld [vmem:[%s450] sm:$0x1f]
        %v488 = vld [vmem:[%s450 + $0x8] sm:$0x1f]
        %v489 = vld [vmem:[%s450 + $0x10] sm:$0x1f]
        %v490 = vld [vmem:[%s450 + $0x18] sm:$0x1f]
        %v491 = vld [vmem:[%s458] sm:$0x77]
        %v492 = vld [vmem:[%s458 + $0x8] sm:$0x77]
        %v493 = vld [vmem:[%s467] sm:$0xf]
        %vm494 = vcmp.gt.f32.partialorder %v483, 20.0
        %vm495 = vcmp.gt.f32.partialorder %v484, 20.0
        %vm496 = vcmp.gt.f32.partialorder %v485, 20.0
        %vm497 = vcmp.gt.f32.partialorder %v486, 20.0
        %v498 = vmin.f32 %v483, 20.0
        %v499 = vmin.f32 %v484, 20.0
        %v500 = vmin.f32 %v485, 20.0
        %v501 = vmin.f32 %v486, 20.0
        %v502 = vmul.f32 %v498, 1.442695
        %v503 = vpow.pop %v502
        %v504 = vmul.f32 %v499, 1.442695
        %v505 = vpow.pop %v504
        %v506 = vmul.f32 %v500, 1.442695
        %v507 = vpow.pop %v506
        %v508 = vmul.f32 %v501, 1.442695
        %v509 = vpow.pop %v508
        %v510 = vadd.f32 %v503, 1.0
        %v511 = vlog2.pop %v510
        %v512 = vmul.f32 %v511, 0.6931472
        %v513 = vmul.f32 -0.5, %v503
        %v514 = vadd.f32 %v513, 1.0
        %v515 = vmul.f32 %v514, %v503
        %v516 = vand.u32 2147483647, %v503
        %vm517 = vcmp.lt.f32.partialorder %v516, 0.0004427343
        %v518 = vsel %vm517, %v515, %v512
        %v519 = vadd.f32 %v505, 1.0
        %v520 = vlog2.pop %v519
        %v521 = vmul.f32 %v520, 0.6931472
        %v522 = vmul.f32 -0.5, %v505
        %v523 = vadd.f32 %v522, 1.0
        %v524 = vmul.f32 %v523, %v505
        %v525 = vand.u32 2147483647, %v505
        %vm526 = vcmp.lt.f32.partialorder %v525, 0.0004427343
        %v527 = vsel %vm526, %v524, %v521
        %v528 = vadd.f32 %v507, 1.0
        %v529 = vlog2.pop %v528
        %v530 = vmul.f32 %v529, 0.6931472
        %v531 = vmul.f32 -0.5, %v507
        %v532 = vadd.f32 %v531, 1.0
        %v533 = vmul.f32 %v532, %v507
        %v534 = vand.u32 2147483647, %v507
        %vm535 = vcmp.lt.f32.partialorder %v534, 0.0004427343
        %v536 = vsel %vm535, %v533, %v530
        %v537 = vadd.f32 %v509, 1.0
        %v538 = vlog2.pop %v537
        %v539 = vmul.f32 %v538, 0.6931472
        %v540 = vmul.f32 -0.5, %v509
        %v541 = vadd.f32 %v540, 1.0
        %v542 = vmul.f32 %v541, %v509
        %v543 = vand.u32 2147483647, %v509
        %vm544 = vcmp.lt.f32.partialorder %v543, 0.0004427343
        %v545 = vsel %vm544, %v542, %v539
        %v546 = vsel %vm494, %v483, %v518
        %v547 = vsel %vm495, %v484, %v527
        %v548 = vsel %vm496, %v485, %v536
        %v549 = vsel %vm497, %v486, %v545
        %vm550 = vcmask 1044480
        %v551 = vsel %vm550, %v546, 0.0
        %v552 = vrot.slane %v551, 4
        %v553 = vadd.f32 %v551, %v552
        %v554 = vrot.slane %v553, 2
        %v555 = vadd.f32 %v553, %v554
        %v556 = vrot.slane %v555, 1
        %v557 = vadd.f32 %v555, %v556
        %v558 = vsel %vm550, %v547, 0.0
        %v559 = vrot.slane %v558, 4
        %v560 = vadd.f32 %v558, %v559
        %v561 = vrot.slane %v560, 2
        %v562 = vadd.f32 %v560, %v561
        %v563 = vrot.slane %v562, 1
        %v564 = vadd.f32 %v562, %v563
        %v565 = vsel %vm550, %v548, 0.0
        %v566 = vrot.slane %v565, 4
        %v567 = vadd.f32 %v565, %v566
        %v568 = vrot.slane %v567, 2
        %v569 = vadd.f32 %v567, %v568
        %v570 = vrot.slane %v569, 1
        %v571 = vadd.f32 %v569, %v570
        %v572 = vsel %vm550, %v549, 0.0
        %v573 = vrot.slane %v572, 4
        %v574 = vadd.f32 %v572, %v573
        %v575 = vrot.slane %v574, 2
        %v576 = vadd.f32 %v574, %v575
        %v577 = vrot.slane %v576, 1
        %v578 = vadd.f32 %v576, %v577
        %v579 = vtanh.pop %v557
        %v580 = vtanh.pop %v564
        %v581 = vtanh.pop %v571
        %v582 = vtanh.pop %v578
        %v583 = vsel %vm550, %v483, -inf
        %v584 = vrot.slane %v583, 4
        %v585 = vmax.f32 %v583, %v584
        %v586 = vrot.slane %v585, 2
        %v587 = vmax.f32 %v585, %v586
        %v588 = vrot.slane %v587, 1
        %v589 = vmax.f32 %v587, %v588
        %v590 = vsel %vm550, %v484, -inf
        %v591 = vrot.slane %v590, 4
        %v592 = vmax.f32 %v590, %v591
        %v593 = vrot.slane %v592, 2
        %v594 = vmax.f32 %v592, %v593
        %v595 = vrot.slane %v594, 1
        %v596 = vmax.f32 %v594, %v595
        %v597 = vsel %vm550, %v485, -inf
        %v598 = vrot.slane %v597, 4
        %v599 = vmax.f32 %v597, %v598
        %v600 = vrot.slane %v599, 2
        %v601 = vmax.f32 %v599, %v600
        %v602 = vrot.slane %v601, 1
        %v603 = vmax.f32 %v601, %v602
        %v604 = vsel %vm550, %v486, -inf
        %v605 = vrot.slane %v604, 4
        %v606 = vmax.f32 %v604, %v605
        %v607 = vrot.slane %v606, 2
        %v608 = vmax.f32 %v606, %v607
        %v609 = vrot.slane %v608, 1
        %v610 = vmax.f32 %v608, %v609
        %v611 = vsub.f32 %v483, %v589
        %v612 = vsub.f32 %v484, %v596
        %v613 = vsub.f32 %v485, %v603
        %v614 = vsub.f32 %v486, %v610
        %v615 = vmul.f32 %v611, 1.442695
        %v616 = vpow.pop %v615
        %v617 = vmul.f32 %v612, 1.442695
        %v618 = vpow.pop %v617
        %v619 = vmul.f32 %v613, 1.442695
        %v620 = vpow.pop %v619
        %v621 = vmul.f32 %v614, 1.442695
        %v622 = vpow.pop %v621
        %v623 = vmul.f32 %v579, %v616
        %v624 = vmul.f32 %v580, %v618
        %v625 = vmul.f32 %v581, %v620
        %v626 = vmul.f32 %v582, %v622
        %v627 = vsel %vm550, %v616, 0.0
        %v628 = vrot.slane %v627, 4
        %v629 = vadd.f32 %v627, %v628
        %v630 = vrot.slane %v629, 2
        %v631 = vadd.f32 %v629, %v630
        %v632 = vrot.slane %v631, 1
        %v633 = vadd.f32 %v631, %v632
        %v634 = vsel %vm550, %v618, 0.0
        %v635 = vrot.slane %v634, 4
        %v636 = vadd.f32 %v634, %v635
        %v637 = vrot.slane %v636, 2
        %v638 = vadd.f32 %v636, %v637
        %v639 = vrot.slane %v638, 1
        %v640 = vadd.f32 %v638, %v639
        %v641 = vsel %vm550, %v620, 0.0
        %v642 = vrot.slane %v641, 4
        %v643 = vadd.f32 %v641, %v642
        %v644 = vrot.slane %v643, 2
        %v645 = vadd.f32 %v643, %v644
        %v646 = vrot.slane %v645, 1
        %v647 = vadd.f32 %v645, %v646
        %v648 = vsel %vm550, %v622, 0.0
        %v649 = vrot.slane %v648, 4
        %v650 = vadd.f32 %v648, %v649
        %v651 = vrot.slane %v650, 2
        %v652 = vadd.f32 %v650, %v651
        %v653 = vrot.slane %v652, 1
        %v654 = vadd.f32 %v652, %v653
        %v655 = vrcp.pop %v633
        %v656 = vrcp.pop %v640
        %v657 = vrcp.pop %v647
        %v658 = vrcp.pop %v654
        %v659 = vmul.f32 %v623, %v655
        %v660 = vmul.f32 %v624, %v656
        %v661 = vmul.f32 %v625, %v657
        %v662 = vmul.f32 %v626, %v658
        %vm663 = vcmp.gt.f32.partialorder %v487, 20.0
        %vm664 = vcmp.gt.f32.partialorder %v488, 20.0
        %vm665 = vcmp.gt.f32.partialorder %v489, 20.0
        %vm666 = vcmp.gt.f32.partialorder %v490, 20.0
        %v667 = vmin.f32 %v487, 20.0
        %v668 = vmin.f32 %v488, 20.0
        %v669 = vmin.f32 %v489, 20.0
        %v670 = vmin.f32 %v490, 20.0
        %v671 = vmul.f32 %v667, 1.442695
        %v672 = vpow.pop %v671
        %v673 = vmul.f32 %v668, 1.442695
        %v674 = vpow.pop %v673
        %v675 = vmul.f32 %v669, 1.442695
        %v676 = vpow.pop %v675
        %v677 = vmul.f32 %v670, 1.442695
        %v678 = vpow.pop %v677
        %v679 = vadd.f32 %v672, 1.0
        %v680 = vlog2.pop %v679
        %v681 = vmul.f32 %v680, 0.6931472
        %v682 = vmul.f32 -0.5, %v672
        %v683 = vadd.f32 %v682, 1.0
        %v684 = vmul.f32 %v683, %v672
        %v685 = vand.u32 2147483647, %v672
        %vm686 = vcmp.lt.f32.partialorder %v685, 0.0004427343
        %v687 = vsel %vm686, %v684, %v681
        %v688 = vadd.f32 %v674, 1.0
        %v689 = vlog2.pop %v688
        %v690 = vmul.f32 %v689, 0.6931472
        %v691 = vmul.f32 -0.5, %v674
        %v692 = vadd.f32 %v691, 1.0
        %v693 = vmul.f32 %v692, %v674
        %v694 = vand.u32 2147483647, %v674
        %vm695 = vcmp.lt.f32.partialorder %v694, 0.0004427343
        %v696 = vsel %vm695, %v693, %v690
        %v697 = vadd.f32 %v676, 1.0
        %v698 = vlog2.pop %v697
        %v699 = vmul.f32 %v698, 0.6931472
        %v700 = vmul.f32 -0.5, %v676
        %v701 = vadd.f32 %v700, 1.0
        %v702 = vmul.f32 %v701, %v676
        %v703 = vand.u32 2147483647, %v676
        %vm704 = vcmp.lt.f32.partialorder %v703, 0.0004427343
        %v705 = vsel %vm704, %v702, %v699
        %v706 = vadd.f32 %v678, 1.0
        %v707 = vlog2.pop %v706
        %v708 = vmul.f32 %v707, 0.6931472
        %v709 = vmul.f32 -0.5, %v678
        %v710 = vadd.f32 %v709, 1.0
        %v711 = vmul.f32 %v710, %v678
        %v712 = vand.u32 2147483647, %v678
        %vm713 = vcmp.lt.f32.partialorder %v712, 0.0004427343
        %v714 = vsel %vm713, %v711, %v708
        %v715 = vsel %vm663, %v487, %v687
        %v716 = vsel %vm664, %v488, %v696
        %v717 = vsel %vm665, %v489, %v705
        %v718 = vsel %vm666, %v490, %v714
        %v719 = vsel %vm550, %v715, 0.0
        %v720 = vrot.slane %v719, 4
        %v721 = vadd.f32 %v719, %v720
        %v722 = vrot.slane %v721, 2
        %v723 = vadd.f32 %v721, %v722
        %v724 = vrot.slane %v723, 1
        %v725 = vadd.f32 %v723, %v724
        %v726 = vsel %vm550, %v716, 0.0
        %v727 = vrot.slane %v726, 4
        %v728 = vadd.f32 %v726, %v727
        %v729 = vrot.slane %v728, 2
        %v730 = vadd.f32 %v728, %v729
        %v731 = vrot.slane %v730, 1
        %v732 = vadd.f32 %v730, %v731
        %v733 = vsel %vm550, %v717, 0.0
        %v734 = vrot.slane %v733, 4
        %v735 = vadd.f32 %v733, %v734
        %v736 = vrot.slane %v735, 2
        %v737 = vadd.f32 %v735, %v736
        %v738 = vrot.slane %v737, 1
        %v739 = vadd.f32 %v737, %v738
        %v740 = vsel %vm550, %v718, 0.0
        %v741 = vrot.slane %v740, 4
        %v742 = vadd.f32 %v740, %v741
        %v743 = vrot.slane %v742, 2
        %v744 = vadd.f32 %v742, %v743
        %v745 = vrot.slane %v744, 1
        %v746 = vadd.f32 %v744, %v745
        %v747 = vtanh.pop %v725
        %v748 = vtanh.pop %v732
        %v749 = vtanh.pop %v739
        %v750 = vtanh.pop %v746
        %v751 = vadd.f32 %v659, 1e-08
        %v752 = vadd.f32 %v660, 1e-08
        %v753 = vadd.f32 %v661, 1e-08
        %v754 = vadd.f32 %v662, 1e-08
        %v755 = vld [vmem:[%s376] sm:$0x1f]
        %v756 = vld [vmem:[%s376 + $0x8] sm:$0x1f]
        %v757 = vld [vmem:[%s376 + $0x10] sm:$0x1f]
        %v758 = vld [vmem:[%s376 + $0x18] sm:$0x1f]
        %v761 = vlaneseq
        %v762 = vshrl.u32 %v761, 7
        %v763 = vsub.s32 0, %v762
        %v764 = vrot.slane %v491, %v763
        %v765 = vlaneseq
        %v766 = vshrl.u32 %v765, 7
        %v767 = vsub.s32 4, %v766
        %v768 = vrot.slane %v491, %v767
        %v769 = vlaneseq
        %v770 = vshrl.u32 %v769, 7
        %v771 = vsub.s32 0, %v770
        %v772 = vrot.slane %v492, %v771
        %v773 = vlaneseq
        %v774 = vshrl.u32 %v773, 7
        %v775 = vsub.s32 4, %v774
        %v776 = vrot.slane %v492, %v775
        %v781 = vlaneseq
        %v782 = vshrl.u32 %v781, 7
        %v783 = vsub.s32 0, %v782
        %v784 = vrot.slane %v764, %v783
        %v785 = vlaneseq
        %v786 = vshrl.u32 %v785, 7
        %v787 = vsub.s32 0, %v786
        %v788 = vrot.slane %v768, %v787
        %v789 = vlaneseq
        %v790 = vshrl.u32 %v789, 7
        %v791 = vsub.s32 0, %v790
        %v792 = vrot.slane %v772, %v791
        %v793 = vlaneseq
        %v794 = vshrl.u32 %v793, 7
        %v795 = vsub.s32 0, %v794
        %v796 = vrot.slane %v776, %v795
        %v797 = vsub.f32 %v784, %v755
        %v798 = vsub.f32 %v788, %v756
        %v799 = vsub.f32 %v792, %v757
        %v800 = vsub.f32 %v796, %v758
        %v801 = vmul.f32 %v797, %v797
        %v802 = vmul.f32 %v798, %v798
        %v803 = vmul.f32 %v799, %v799
        %v804 = vmul.f32 %v800, %v800
        %v805 = vsub.f32 0.0, %v801
        %v806 = vsub.f32 0.0, %v802
        %v807 = vsub.f32 0.0, %v803
        %v808 = vsub.f32 0.0, %v804
        %v809 = vmul.f32 %v805, 50.0
        %v810 = vmul.f32 %v806, 50.0
        %v811 = vmul.f32 %v807, 50.0
        %v812 = vmul.f32 %v808, 50.0
        %v813 = vsub.f32 %v809, -1.3836466
        %v814 = vsub.f32 %v810, -1.3836466
        %v815 = vsub.f32 %v811, -1.3836466
        %v816 = vsub.f32 %v812, -1.3836466
        %v817 = vmul.f32 %v813, 1.442695
        %v818 = vpow.pop %v817
        %v819 = vmul.f32 %v814, 1.442695
        %v820 = vpow.pop %v819
        %v821 = vmul.f32 %v815, 1.442695
        %v822 = vpow.pop %v821
        %v823 = vmul.f32 %v816, 1.442695
        %v824 = vpow.pop %v823
        %v825 = vmul.f32 %v751, %v818
        %v826 = vmul.f32 %v752, %v820
        %v827 = vmul.f32 %v753, %v822
        %v828 = vmul.f32 %v754, %v824
        %v829 = vsel %vm550, %v825, 0.0
        %v830 = vrot.slane %v829, 4
        %v831 = vadd.f32 %v829, %v830
        %v832 = vrot.slane %v831, 2
        %v833 = vadd.f32 %v831, %v832
        %v834 = vrot.slane %v833, 1
        %v835 = vadd.f32 %v833, %v834
        %v836 = vsel %vm550, %v826, 0.0
        %v837 = vrot.slane %v836, 4
        %v838 = vadd.f32 %v836, %v837
        %v839 = vrot.slane %v838, 2
        %v840 = vadd.f32 %v838, %v839
        %v841 = vrot.slane %v840, 1
        %v842 = vadd.f32 %v840, %v841
        %v843 = vsel %vm550, %v827, 0.0
        %v844 = vrot.slane %v843, 4
        %v845 = vadd.f32 %v843, %v844
        %v846 = vrot.slane %v845, 2
        %v847 = vadd.f32 %v845, %v846
        %v848 = vrot.slane %v847, 1
        %v849 = vadd.f32 %v847, %v848
        %v850 = vsel %vm550, %v828, 0.0
        %v851 = vrot.slane %v850, 4
        %v852 = vadd.f32 %v850, %v851
        %v853 = vrot.slane %v852, 2
        %v854 = vadd.f32 %v852, %v853
        %v855 = vrot.slane %v854, 1
        %v856 = vadd.f32 %v854, %v855
        %v857 = vadd.f32 %v835, 1e-08
        %v858 = vadd.f32 %v842, 1e-08
        %v859 = vadd.f32 %v849, 1e-08
        %v860 = vadd.f32 %v856, 1e-08
        %v861 = vlog2.pop %v857
        %v862 = vmul.f32 %v861, 0.6931472
        %v863 = vlog2.pop %v858
        %v864 = vmul.f32 %v863, 0.6931472
        %v865 = vlog2.pop %v859
        %v866 = vmul.f32 %v865, 0.6931472
        %v867 = vlog2.pop %v860
        %v868 = vmul.f32 %v867, 0.6931472
        %v869 = vsub.f32 0.0, %v862
        %v870 = vsub.f32 0.0, %v864
        %v871 = vsub.f32 0.0, %v866
        %v872 = vsub.f32 0.0, %v868
        %vm873 = vcmask 1040384
        %v874 = vsel %vm873, %v869, 0.0
        %v875 = vsel %vm873, %v870, 0.0
        %v876 = vadd.f32 %v874, %v875
        %v877 = vsel %vm873, %v871, 0.0
        %v878 = vadd.f32 %v876, %v877
        %v879 = vsel %vm873, %v872, 0.0
        %v880 = vadd.f32 %v878, %v879
        %881 = vadd.xlane.f32.xlu0 %v880
        %v882 = vpop.xlane.xlu0 %881
        %v883 = vrot.slane %v882, 4
        %v884 = vadd.f32 %v882, %v883
        %v885 = vrot.slane %v884, 2
        %v886 = vadd.f32 %v884, %v885
        %v887 = vrot.slane %v886, 1
        %v888 = vadd.f32 %v886, %v887
        %s889 = vtos %v888
        %s890 = sadd.f32 %s889, 0.0
        %s891 = scalar_lea.vmem %s376, 32 [#allocation2]
        %v892 = vld [vmem:[%s891] sm:$0x1f]
        %v893 = vld [vmem:[%s891 + $0x8] sm:$0x1f]
        %v894 = vld [vmem:[%s891 + $0x10] sm:$0x1f]
        %v895 = vld [vmem:[%s891 + $0x18] sm:$0x1f]
        %v896 = vlaneseq
        %v897 = vshrl.u32 %v896, 7
        %v898 = vsub.s32 1, %v897
        %v899 = vrot.slane %v491, %v898
        %v900 = vlaneseq
        %v901 = vshrl.u32 %v900, 7
        %v902 = vsub.s32 5, %v901
        %v903 = vrot.slane %v491, %v902
        %v904 = vlaneseq
        %v905 = vshrl.u32 %v904, 7
        %v906 = vsub.s32 1, %v905
        %v907 = vrot.slane %v492, %v906
        %v908 = vlaneseq
        %v909 = vshrl.u32 %v908, 7
        %v910 = vsub.s32 5, %v909
        %v911 = vrot.slane %v492, %v910
        %v916 = vlaneseq
        %v917 = vshrl.u32 %v916, 7
        %v918 = vsub.s32 1, %v917
        %v919 = vrot.slane %v899, %v918
        %v920 = vlaneseq
        %v921 = vshrl.u32 %v920, 7
        %v922 = vsub.s32 1, %v921
        %v923 = vrot.slane %v903, %v922
        %v924 = vlaneseq
        %v925 = vshrl.u32 %v924, 7
        %v926 = vsub.s32 1, %v925
        %v927 = vrot.slane %v907, %v926
        %v928 = vlaneseq
        %v929 = vshrl.u32 %v928, 7
        %v930 = vsub.s32 1, %v929
        %v931 = vrot.slane %v911, %v930
        %v932 = vsub.f32 %v919, %v892
        %v933 = vsub.f32 %v923, %v893
        %v934 = vsub.f32 %v927, %v894
        %v935 = vsub.f32 %v931, %v895
        %v936 = vmul.f32 %v932, %v932
        %v937 = vmul.f32 %v933, %v933
        %v938 = vmul.f32 %v934, %v934
        %v939 = vmul.f32 %v935, %v935
        %v940 = vsub.f32 0.0, %v936
        %v941 = vsub.f32 0.0, %v937
        %v942 = vsub.f32 0.0, %v938
        %v943 = vsub.f32 0.0, %v939
        %v944 = vmul.f32 %v940, 50.0
        %v945 = vmul.f32 %v941, 50.0
        %v946 = vmul.f32 %v942, 50.0
        %v947 = vmul.f32 %v943, 50.0
        %v948 = vsub.f32 %v944, -1.3836466
        %v949 = vsub.f32 %v945, -1.3836466
        %v950 = vsub.f32 %v946, -1.3836466
        %v951 = vsub.f32 %v947, -1.3836466
        %v952 = vmul.f32 %v948, 1.442695
        %v953 = vpow.pop %v952
        %v954 = vmul.f32 %v949, 1.442695
        %v955 = vpow.pop %v954
        %v956 = vmul.f32 %v950, 1.442695
        %v957 = vpow.pop %v956
        %v958 = vmul.f32 %v951, 1.442695
        %v959 = vpow.pop %v958
        %v960 = vmul.f32 %v751, %v953
        %v961 = vmul.f32 %v752, %v955
        %v962 = vmul.f32 %v753, %v957
        %v963 = vmul.f32 %v754, %v959
        %v964 = vsel %vm550, %v960, 0.0
        %v965 = vrot.slane %v964, 4
        %v966 = vadd.f32 %v964, %v965
        %v967 = vrot.slane %v966, 2
        %v968 = vadd.f32 %v966, %v967
        %v969 = vrot.slane %v968, 1
        %v970 = vadd.f32 %v968, %v969
        %v971 = vsel %vm550, %v961, 0.0
        %v972 = vrot.slane %v971, 4
        %v973 = vadd.f32 %v971, %v972
        %v974 = vrot.slane %v973, 2
        %v975 = vadd.f32 %v973, %v974
        %v976 = vrot.slane %v975, 1
        %v977 = vadd.f32 %v975, %v976
        %v978 = vsel %vm550, %v962, 0.0
        %v979 = vrot.slane %v978, 4
        %v980 = vadd.f32 %v978, %v979
        %v981 = vrot.slane %v980, 2
        %v982 = vadd.f32 %v980, %v981
        %v983 = vrot.slane %v982, 1
        %v984 = vadd.f32 %v982, %v983
        %v985 = vsel %vm550, %v963, 0.0
        %v986 = vrot.slane %v985, 4
        %v987 = vadd.f32 %v985, %v986
        %v988 = vrot.slane %v987, 2
        %v989 = vadd.f32 %v987, %v988
        %v990 = vrot.slane %v989, 1
        %v991 = vadd.f32 %v989, %v990
        %v992 = vadd.f32 %v970, 1e-08
        %v993 = vadd.f32 %v977, 1e-08
        %v994 = vadd.f32 %v984, 1e-08
        %v995 = vadd.f32 %v991, 1e-08
        %v996 = vlog2.pop %v992
        %v997 = vmul.f32 %v996, 0.6931472
        %v998 = vlog2.pop %v993
        %v999 = vmul.f32 %v998, 0.6931472
        %v1000 = vlog2.pop %v994
        %v1001 = vmul.f32 %v1000, 0.6931472
        %v1002 = vlog2.pop %v995
        %v1003 = vmul.f32 %v1002, 0.6931472
        %v1004 = vsub.f32 0.0, %v997
        %v1005 = vsub.f32 0.0, %v999
        %v1006 = vsub.f32 0.0, %v1001
        %v1007 = vsub.f32 0.0, %v1003
        %v1008 = vsel %vm873, %v1004, 0.0
        %v1009 = vsel %vm873, %v1005, 0.0
        %v1010 = vadd.f32 %v1008, %v1009
        %v1011 = vsel %vm873, %v1006, 0.0
        %v1012 = vadd.f32 %v1010, %v1011
        %v1013 = vsel %vm873, %v1007, 0.0
        %v1014 = vadd.f32 %v1012, %v1013
        %1015 = vadd.xlane.f32.xlu0 %v1014
        %v1016 = vpop.xlane.xlu0 %1015
        %v1017 = vrot.slane %v1016, 4
        %v1018 = vadd.f32 %v1016, %v1017
        %v1019 = vrot.slane %v1018, 2
        %v1020 = vadd.f32 %v1018, %v1019
        %v1021 = vrot.slane %v1020, 1
        %v1022 = vadd.f32 %v1020, %v1021
        %s1023 = vtos %v1022
        %s1024 = sadd.f32 %s890, %s1023
        %s1025 = scalar_lea.vmem %s376, 64 [#allocation2]
        %v1026 = vld [vmem:[%s1025] sm:$0x1f]
        %v1027 = vld [vmem:[%s1025 + $0x8] sm:$0x1f]
        %v1028 = vld [vmem:[%s1025 + $0x10] sm:$0x1f]
        %v1029 = vld [vmem:[%s1025 + $0x18] sm:$0x1f]
        %v1030 = vlaneseq
        %v1031 = vshrl.u32 %v1030, 7
        %v1032 = vsub.s32 2, %v1031
        %v1033 = vrot.slane %v491, %v1032
        %v1034 = vlaneseq
        %v1035 = vshrl.u32 %v1034, 7
        %v1036 = vsub.s32 6, %v1035
        %v1037 = vrot.slane %v491, %v1036
        %v1038 = vlaneseq
        %v1039 = vshrl.u32 %v1038, 7
        %v1040 = vsub.s32 2, %v1039
        %v1041 = vrot.slane %v492, %v1040
        %v1042 = vlaneseq
        %v1043 = vshrl.u32 %v1042, 7
        %v1044 = vsub.s32 6, %v1043
        %v1045 = vrot.slane %v492, %v1044
        %v1050 = vlaneseq
        %v1051 = vshrl.u32 %v1050, 7
        %v1052 = vsub.s32 2, %v1051
        %v1053 = vrot.slane %v1033, %v1052
        %v1054 = vlaneseq
        %v1055 = vshrl.u32 %v1054, 7
        %v1056 = vsub.s32 2, %v1055
        %v1057 = vrot.slane %v1037, %v1056
        %v1058 = vlaneseq
        %v1059 = vshrl.u32 %v1058, 7
        %v1060 = vsub.s32 2, %v1059
        %v1061 = vrot.slane %v1041, %v1060
        %v1062 = vlaneseq
        %v1063 = vshrl.u32 %v1062, 7
        %v1064 = vsub.s32 2, %v1063
        %v1065 = vrot.slane %v1045, %v1064
        %v1066 = vsub.f32 %v1053, %v1026
        %v1067 = vsub.f32 %v1057, %v1027
        %v1068 = vsub.f32 %v1061, %v1028
        %v1069 = vsub.f32 %v1065, %v1029
        %v1070 = vmul.f32 %v1066, %v1066
        %v1071 = vmul.f32 %v1067, %v1067
        %v1072 = vmul.f32 %v1068, %v1068
        %v1073 = vmul.f32 %v1069, %v1069
        %v1074 = vsub.f32 0.0, %v1070
        %v1075 = vsub.f32 0.0, %v1071
        %v1076 = vsub.f32 0.0, %v1072
        %v1077 = vsub.f32 0.0, %v1073
        %v1078 = vmul.f32 %v1074, 50.0
        %v1079 = vmul.f32 %v1075, 50.0
        %v1080 = vmul.f32 %v1076, 50.0
        %v1081 = vmul.f32 %v1077, 50.0
        %v1082 = vsub.f32 %v1078, -1.3836466
        %v1083 = vsub.f32 %v1079, -1.3836466
        %v1084 = vsub.f32 %v1080, -1.3836466
        %v1085 = vsub.f32 %v1081, -1.3836466
        %v1086 = vmul.f32 %v1082, 1.442695
        %v1087 = vpow.pop %v1086
        %v1088 = vmul.f32 %v1083, 1.442695
        %v1089 = vpow.pop %v1088
        %v1090 = vmul.f32 %v1084, 1.442695
        %v1091 = vpow.pop %v1090
        %v1092 = vmul.f32 %v1085, 1.442695
        %v1093 = vpow.pop %v1092
        %v1094 = vmul.f32 %v751, %v1087
        %v1095 = vmul.f32 %v752, %v1089
        %v1096 = vmul.f32 %v753, %v1091
        %v1097 = vmul.f32 %v754, %v1093
        %v1098 = vsel %vm550, %v1094, 0.0
        %v1099 = vrot.slane %v1098, 4
        %v1100 = vadd.f32 %v1098, %v1099
        %v1101 = vrot.slane %v1100, 2
        %v1102 = vadd.f32 %v1100, %v1101
        %v1103 = vrot.slane %v1102, 1
        %v1104 = vadd.f32 %v1102, %v1103
        %v1105 = vsel %vm550, %v1095, 0.0
        %v1106 = vrot.slane %v1105, 4
        %v1107 = vadd.f32 %v1105, %v1106
        %v1108 = vrot.slane %v1107, 2
        %v1109 = vadd.f32 %v1107, %v1108
        %v1110 = vrot.slane %v1109, 1
        %v1111 = vadd.f32 %v1109, %v1110
        %v1112 = vsel %vm550, %v1096, 0.0
        %v1113 = vrot.slane %v1112, 4
        %v1114 = vadd.f32 %v1112, %v1113
        %v1115 = vrot.slane %v1114, 2
        %v1116 = vadd.f32 %v1114, %v1115
        %v1117 = vrot.slane %v1116, 1
        %v1118 = vadd.f32 %v1116, %v1117
        %v1119 = vsel %vm550, %v1097, 0.0
        %v1120 = vrot.slane %v1119, 4
        %v1121 = vadd.f32 %v1119, %v1120
        %v1122 = vrot.slane %v1121, 2
        %v1123 = vadd.f32 %v1121, %v1122
        %v1124 = vrot.slane %v1123, 1
        %v1125 = vadd.f32 %v1123, %v1124
        %v1126 = vadd.f32 %v1104, 1e-08
        %v1127 = vadd.f32 %v1111, 1e-08
        %v1128 = vadd.f32 %v1118, 1e-08
        %v1129 = vadd.f32 %v1125, 1e-08
        %v1130 = vlog2.pop %v1126
        %v1131 = vmul.f32 %v1130, 0.6931472
        %v1132 = vlog2.pop %v1127
        %v1133 = vmul.f32 %v1132, 0.6931472
        %v1134 = vlog2.pop %v1128
        %v1135 = vmul.f32 %v1134, 0.6931472
        %v1136 = vlog2.pop %v1129
        %v1137 = vmul.f32 %v1136, 0.6931472
        %v1138 = vsub.f32 0.0, %v1131
        %v1139 = vsub.f32 0.0, %v1133
        %v1140 = vsub.f32 0.0, %v1135
        %v1141 = vsub.f32 0.0, %v1137
        %v1142 = vsel %vm873, %v1138, 0.0
        %v1143 = vsel %vm873, %v1139, 0.0
        %v1144 = vadd.f32 %v1142, %v1143
        %v1145 = vsel %vm873, %v1140, 0.0
        %v1146 = vadd.f32 %v1144, %v1145
        %v1147 = vsel %vm873, %v1141, 0.0
        %v1148 = vadd.f32 %v1146, %v1147
        %1149 = vadd.xlane.f32.xlu0 %v1148
        %v1150 = vpop.xlane.xlu0 %1149
        %v1151 = vrot.slane %v1150, 4
        %v1152 = vadd.f32 %v1150, %v1151
        %v1153 = vrot.slane %v1152, 2
        %v1154 = vadd.f32 %v1152, %v1153
        %v1155 = vrot.slane %v1154, 1
        %v1156 = vadd.f32 %v1154, %v1155
        %s1157 = vtos %v1156
        %s1158 = sadd.f32 %s1024, %s1157
        %v1159 = vmul.f32 %v747, 10.0
        %v1160 = vmul.f32 %v748, 10.0
        %v1161 = vmul.f32 %v749, 10.0
        %v1162 = vmul.f32 %v750, 10.0
        %v1163 = vrcp.pop %v493
        %v1165 = vlaneseq
        %v1166 = vshrl.u32 %v1165, 7
        %v1167 = vsub.s32 0, %v1166
        %v1168 = vrot.slane %v1163, %v1167
        %v1169 = vlaneseq
        %v1170 = vshrl.u32 %v1169, 7
        %v1171 = vsub.s32 1, %v1170
        %v1172 = vrot.slane %v1163, %v1171
        %v1173 = vlaneseq
        %v1174 = vshrl.u32 %v1173, 7
        %v1175 = vsub.s32 2, %v1174
        %v1176 = vrot.slane %v1163, %v1175
        %v1177 = vlaneseq
        %v1178 = vshrl.u32 %v1177, 7
        %v1179 = vsub.s32 3, %v1178
        %v1180 = vrot.slane %v1163, %v1179
        %v1185 = vmul.f32 %v1159, %v1168
        %v1186 = vmul.f32 %v1160, %v1172
        %v1187 = vmul.f32 %v1161, %v1176
        %v1188 = vmul.f32 %v1162, %v1180
        %v1189 = vsel %vm873, %v1185, 0.0
        %v1190 = vsel %vm873, %v1186, 0.0
        %v1191 = vadd.f32 %v1189, %v1190
        %v1192 = vsel %vm873, %v1187, 0.0
        %v1193 = vadd.f32 %v1191, %v1192
        %v1194 = vsel %vm873, %v1188, 0.0
        %v1195 = vadd.f32 %v1193, %v1194
        %1196 = vadd.xlane.f32.xlu0 %v1195
        %v1197 = vpop.xlane.xlu0 %1196
        %v1198 = vrot.slane %v1197, 4
        %v1199 = vadd.f32 %v1197, %v1198
        %v1200 = vrot.slane %v1199, 2
        %v1201 = vadd.f32 %v1199, %v1200
        %v1202 = vrot.slane %v1201, 1
        %v1203 = vadd.f32 %v1201, %v1202
        %s1204 = vtos %v1203
        %v1205 = vsel %vm550, %v659, 0.0
        %v1206 = vrot.slane %v1205, 4
        %v1207 = vadd.f32 %v1205, %v1206
        %v1208 = vrot.slane %v1207, 2
        %v1209 = vadd.f32 %v1207, %v1208
        %v1210 = vrot.slane %v1209, 1
        %v1211 = vadd.f32 %v1209, %v1210
        %v1212 = vsel %vm550, %v660, 0.0
        %v1213 = vrot.slane %v1212, 4
        %v1214 = vadd.f32 %v1212, %v1213
        %v1215 = vrot.slane %v1214, 2
        %v1216 = vadd.f32 %v1214, %v1215
        %v1217 = vrot.slane %v1216, 1
        %v1218 = vadd.f32 %v1216, %v1217
        %v1219 = vsel %vm550, %v661, 0.0
        %v1220 = vrot.slane %v1219, 4
        %v1221 = vadd.f32 %v1219, %v1220
        %v1222 = vrot.slane %v1221, 2
        %v1223 = vadd.f32 %v1221, %v1222
        %v1224 = vrot.slane %v1223, 1
        %v1225 = vadd.f32 %v1223, %v1224
        %v1226 = vsel %vm550, %v662, 0.0
        %v1227 = vrot.slane %v1226, 4
        %v1228 = vadd.f32 %v1226, %v1227
        %v1229 = vrot.slane %v1228, 2
        %v1230 = vadd.f32 %v1228, %v1229
        %v1231 = vrot.slane %v1230, 1
        %v1232 = vadd.f32 %v1230, %v1231
        %v1233 = vmul.f32 %v1211, 10.0
        %v1234 = vmul.f32 %v1218, 10.0
        %v1235 = vmul.f32 %v1225, 10.0
        %v1236 = vmul.f32 %v1232, 10.0
        %v1237 = vadd.f32 %v1233, 1e-08
        %v1238 = vadd.f32 %v1234, 1e-08
        %v1239 = vadd.f32 %v1235, 1e-08
        %v1240 = vadd.f32 %v1236, 1e-08
        %v1241 = vlog2.pop %v1237
        %v1242 = vmul.f32 %v1241, 0.6931472
        %v1243 = vlog2.pop %v1238
        %v1244 = vmul.f32 %v1243, 0.6931472
        %v1245 = vlog2.pop %v1239
        %v1246 = vmul.f32 %v1245, 0.6931472
        %v1247 = vlog2.pop %v1240
        %v1248 = vmul.f32 %v1247, 0.6931472
        %v1249 = vsub.f32 0.0, %v1242
        %v1250 = vsub.f32 0.0, %v1244
        %v1251 = vsub.f32 0.0, %v1246
        %v1252 = vsub.f32 0.0, %v1248
        %v1253 = vsel %vm873, %v1249, 0.0
        %v1254 = vsel %vm873, %v1250, 0.0
        %v1255 = vadd.f32 %v1253, %v1254
        %v1256 = vsel %vm873, %v1251, 0.0
        %v1257 = vadd.f32 %v1255, %v1256
        %v1258 = vsel %vm873, %v1252, 0.0
        %v1259 = vadd.f32 %v1257, %v1258
        %1260 = vadd.xlane.f32.xlu0 %v1259
        %v1261 = vpop.xlane.xlu0 %1260
        %v1262 = vrot.slane %v1261, 4
        %v1263 = vadd.f32 %v1261, %v1262
        %v1264 = vrot.slane %v1263, 2
        %v1265 = vadd.f32 %v1263, %v1264
        %v1266 = vrot.slane %v1265, 1
        %v1267 = vadd.f32 %v1265, %v1266
        %s1268 = vtos %v1267
        %1269 = vst [vmem:[%s423] sm:$0x1f] %v659
        %1270 = vst [vmem:[%s423 + $0x8] sm:$0x1f] %v660
        %1271 = vst [vmem:[%s423 + $0x10] sm:$0x1f] %v661
        %1272 = vst [vmem:[%s423 + $0x18] sm:$0x1f] %v662
        %v1277 = vcombine.low %v747, %v748
        %v1278 = vcombine.low %v749, %v750
        %v1280 = vunpack.c.l.s4 1966171168
        %v1281 = vunpack.c.0.s8 %v1280
        %v1282 = vlaneseq
        %v1283 = vshrl.u32 %v1282, 7
        %v1284 = vsub.s32 %v1281, %v1283
        %v1285 = vrot.slane %v1277, %v1284
        %v1287 = vunpack.c.l.s4 1966171168
        %v1288 = vunpack.c.0.s8 %v1287
        %v1289 = vlaneseq
        %v1290 = vshrl.u32 %v1289, 7
        %v1291 = vsub.s32 %v1288, %v1290
        %v1292 = vrot.slane %v1278, %v1291
        %v1293 = vcombine.low %v1285, %v1292
        %v1295 = vunpack.c.l.s4 1966171168
        %v1296 = vunpack.c.0.s8 %v1295
        %v1297 = vlaneseq
        %v1298 = vshrl.u32 %v1297, 7
        %v1299 = vsub.s32 %v1296, %v1298
        %v1300 = vrot.slane %v1293, %v1299
        %v1302 = vlaneseq
        %vm1303 = vcmp.ge.s32.totalorder %v1302, 0
        %vm1304 = vcmp.lt.s32.totalorder %v1302, 512
        %vm1305 = vmand %vm1303, %vm1304
        %1306 = vst.msk [vmem:[%s430] sm:$0xf] %vm1305, %v1300
        %v1307 = vld [vmem:[%s477] sm:$0x7]
        %v1308 = vstv %s1158
        %v1309 = vstv %s1204
        %v1310 = vstv %s1268
        %v1311 = vsel %vm873, %v1308, %v1309
        %vm1312 = vcmask 1041408
        %v1313 = vsel %vm1312, %v1311, %v1310
        %v1314 = vadd.f32 %v1307, %v1313
        %1315 = vst [vmem:[%s477] sm:$0x7] %v1314
        %s1316 = sand.u32 %s187, 1
        %s1317 = scalar_lea.sflag [#allocation4], %s1316
        %s1318 = sand.u32 %s187, 1
        %s1319 = smul.addr %s1318, 32
        %s1320 = scalar_lea.vmem [#allocation3], %s1319
        %s1321 = sand.u32 %s215, 1
        %s1322 = scalar_lea.sflag [#allocation6], %s1321
        %s1323 = sand.u32 %s215, 1
        %s1324 = smul.addr %s1323, 4
        %s1325 = scalar_lea.vmem [#allocation5], %s1324
        %p1326 = scmp.lt.s32.totalorder %s29, 1
        %s1327 = scalar_select %p1326, %s29, 1
        %s1328 = smul.addr %s1327, 4
        %s1329 = scalar_lea.vmem %s7, %s1328
        // Predicated region
        $region68: #{forward.2} parent=58 // pred_check
          %p1330 = pneg %p197
        $region69: #{forward.2} parent=58 // pred_check_branch
          %1332 = sbr.rel (%p1330) target = $region71
        $region70: #{forward.2} parent=58 // pred_region
          %s1333 = sadd.s32 %s29, %s30
          %s1334 = smul.u32 4, %s1333
          %s1336 = ssub.s32 512, 512
          %1337 = vsyncadd %s1317, %s1336
          %s1338 = smul.addr %s1334, 128
          %s1339 = scalar_lea.hbm %s5, %s1338
          %s1341 = sshll.u32 %s1320, 4
          %s1342 = int_to_ptr.vmem [resolvable:$true] %s1341
          %1344 = dma.vmem_to_hbm [thread:$0]  %s1342, 512, %s1339, %s1317
        $region71: #{forward.2} parent=58 // pred_fallthru
          _
        // Predicated region
        $region72: #{forward.2} parent=58 // pred_check
          %p1345 = pneg %p225
        $region73: #{forward.2} parent=58 // pred_check_branch
          %1347 = sbr.rel (%p1345) target = $region75
        $region74: #{forward.2} parent=58 // pred_region
          %s1348 = sadd.s32 %s29, %s30
          %s1349 = smul.u32 4, %s1348
          %s1351 = ssub.s32 64, 64
          %1352 = vsyncadd %s1322, %s1351
          %s1353 = smul.addr %s1349, 16
          %s1354 = scalar_lea.hbm %s6, %s1353
          %s1356 = sshll.u32 %s1325, 4
          %s1357 = int_to_ptr.vmem [resolvable:$true] %s1356
          %1359 = dma.vmem_to_hbm [thread:$0]  %s1357, 64, %s1354, %s1322
        $region75: #{forward.2} parent=58 // pred_fallthru
          _
        // Predicated region
        $region76: #{forward.2} parent=58 // pred_check
          %p1360 = pneg %p251
        $region77: #{forward.2} parent=58 // pred_check_branch
          %1362 = sbr.rel (%p1360) target = $region79
        $region78: #{forward.2} parent=58 // pred_region
          _
        $region79: #{forward.2} parent=58 // pred_fallthru
          _
      $region59: #{forward.2} parent=5 // pred_fallthru
        _
      %p1363 = scmp.le.s32.totalorder 2, %s20
      // Predicated region
      $region80: #{forward.2} parent=5 // pred_check
        %p1364 = pneg %p1363
      $region81: #{forward.2} parent=5 // pred_check_branch
        %1366 = sbr.rel (%p1364) target = $region83
      $region82: #{forward.2} parent=5 // pred_region
        %s1367 = ssub.s32 %s20, 2
        // Predicated region
        $region84: #{forward.2} parent=82 // pred_check
          %p1368 = pneg %p203
        $region85: #{forward.2} parent=82 // pred_check_branch
          %1370 = sbr.rel (%p1368) target = $region87
        $region86: #{forward.2} parent=82 // pred_region
          %s1371 = sand.u32 %s188, 1
          %s1372 = scalar_lea.sflag [#allocation4], %s1371
          %s1373 = sand.u32 %s188, 1
          %s1374 = smul.addr %s1373, 32
          %s1375 = scalar_lea.vmem [#allocation3], %s1374
          %1376 = dma.done %s1372, 512
        $region87: #{forward.2} parent=82 // pred_fallthru
          _
        // Predicated region
        $region88: #{forward.2} parent=82 // pred_check
          %p1377 = pneg %p231
        $region89: #{forward.2} parent=82 // pred_check_branch
          %1379 = sbr.rel (%p1377) target = $region91
        $region90: #{forward.2} parent=82 // pred_region
          %s1380 = sand.u32 %s216, 1
          %s1381 = scalar_lea.sflag [#allocation6], %s1380
          %s1382 = sand.u32 %s216, 1
          %s1383 = smul.addr %s1382, 4
          %s1384 = scalar_lea.vmem [#allocation5], %s1383
          %1385 = dma.done %s1381, 64
        $region91: #{forward.2} parent=82 // pred_fallthru
          _
        // Predicated region
        $region92: #{forward.2} parent=82 // pred_check
          %p1386 = pneg %p257
        $region93: #{forward.2} parent=82 // pred_check_branch
          %1388 = sbr.rel (%p1386) target = $region95
        $region94: #{forward.2} parent=82 // pred_region
          %p1389 = scmp.lt.s32.totalorder %s31, 1
          %s1390 = scalar_select %p1389, %s31, 1
          %s1391 = smul.addr %s1390, 4
          %s1392 = scalar_lea.vmem %s7, %s1391
        $region95: #{forward.2} parent=82 // pred_fallthru
          _
      $region83: #{forward.2} parent=5 // pred_fallthru
        _
    $region6: #{forward.2} parent=1 // loop_footer
      %s24 = sadd.s32 1, %s20
    $region7: #{forward.2} parent=1 // loop_footer_branch
      %19 = sbr.rel target = $region3
    $region8: #{forward.2} parent=1 // loop_exit
      _
    %1393 = vsyncpa [#allocation4], 1
    %s1394 = scalar_lea.sflag [#allocation4], 1
    %1395 = vsyncpa %s1394, 1
    %1396 = vsyncpa [#allocation6], 1
    %s1397 = scalar_lea.sflag [#allocation6], 1
    %1398 = vsyncpa %s1397, 1

// kernel: forward.3
$region0: #{forward.3}
  #allocation0 [shape = 'u32[]', space=smem, size = 0x4, offset = 0x4, fixed_abs, tag = 'smem constant byte address 0x4 - core index']
  #allocation1 [shape = 'u32[144,128]{1,0:T(1,128)}', space=vmem, size = 0x12000, scoped, tag = 'internal scratch']
  #allocation2 [shape = 'f32[4,32]{1,0:T(4,128)}', space=vmem, size = 0x800, scoped, tag = 'scratch operand']
  #allocation3 [shape = 'f32[1,32]{1,0:T(1,128)}', space=vmem, size = 0x200, scoped, tag = 'scratch operand']
  %s0 = inlined_call_operand.vmem [shape: f32[2,2,16,256], index: 0, kind: input, shape index: {}]
  %s1 = inlined_call_operand.vmem [shape: f32[2,2,3,256], index: 1, kind: input, shape index: {}]
  %s2 = inlined_call_operand.vmem [shape: f32[2,4,32], index: 2, kind: input, shape index: {}]
  %s3 = inlined_call_operand.vmem [shape: f32[2,1,32], index: 3, kind: input, shape index: {}]
  %s4 = inlined_call_operand.vmem [shape: f32[32,16], index: 4, kind: input, shape index: {}]
  %s5 = inlined_call_operand.vmem [shape: f32[32,32], index: 5, kind: input, shape index: {}]
  %s6 = inlined_call_operand.vmem [shape: f32[32,3], index: 6, kind: input, shape index: {}]
  %s7 = inlined_call_operand.vmem [shape: f32[32,32], index: 7, kind: input, shape index: {}]
  %s8 = inlined_call_operand.vmem [shape: f32[32,32], index: 8, kind: input, shape index: {}]
  %s9 = inlined_call_operand.vmem [shape: f32[11,32,1], index: 9, kind: input, shape index: {}]
  %s10 = inlined_call_operand.vmem [shape: f32[96,32], index: 10, kind: input, shape index: {}]
  %s11 = inlined_call_operand.vmem [shape: f32[192,32], index: 11, kind: input, shape index: {}]
  %s12 = inlined_call_operand.vmem [shape: f32[128,96], index: 12, kind: input, shape index: {}]
  %s13 = inlined_call_operand.vmem [shape: f32[4,96], index: 13, kind: input, shape index: {}]
  %s14 = inlined_call_operand.vmem [shape: f32[14,32], index: 14, kind: input, shape index: {}]
  %s15 = inlined_call_operand.vmem [shape: f32[2,2,4,32], index: 15, kind: output, shape index: {0}]
  %s16 = inlined_call_operand.vmem [shape: f32[2,2,1,32], index: 16, kind: output, shape index: {1}]
  %17 = xla_tuple %s15, %s16
  %s18 = sld [smem:[#allocation0]]
  $region105: #{forward.3} parent=0
    _
  %s20 = ssub.s32 1, %s18
  %s21 = scalar_select 0, %s20, %s18
  loop: start=0, step=1, limit=6
  $region2: #{forward.3} parent=0 // loop_pre_header
    _
  $region3: #{forward.3} parent=0 // loop_header
    %s23 = sphi 0, %s27
    %p24 = scmp.ge.s32.totalorder %s23, 6
    %s30 = sphi 0, %s42
    %s31 = sphi 0, %s38
    %s32 = sphi 0, %s30
    %s33 = sphi 0, %s31
    %s34 = sphi 0, %s32
    %s35 = sphi 0, %s33
    %s47 = sphi 0, %s49
    %s50 = sphi 0, %s47
    %s51 = sphi 0, %s50
    %s67 = sphi 0, %s51
    %s75 = sphi 0, %s77
    %s78 = sphi 0, %s75
    %s79 = sphi 0, %s78
    %s95 = sphi 0, %s79
    %s101 = sphi 0, %s103
    %s104 = sphi 0, %s101
    %s105 = sphi 0, %s104
    %s121 = sphi 0, %s105
    %s127 = sphi 0, %s129
    %s130 = sphi 0, %s127
    %s131 = sphi 0, %s130
    %s147 = sphi 0, %s131
    %s151 = sphi 0, %s151
    %s153 = sphi 0, %s151
    %s154 = sphi 0, %s153
    %s168 = sphi 0, %s154
    %s172 = sphi 0, %s172
    %s174 = sphi 0, %s172
    %s175 = sphi 0, %s174
    %s189 = sphi 0, %s175
    %s193 = sphi 0, %s193
    %s195 = sphi 0, %s193
    %s196 = sphi 0, %s195
    %s210 = sphi 0, %s196
    %s214 = sphi 0, %s214
    %s216 = sphi 0, %s214
    %s217 = sphi 0, %s216
    %s231 = sphi 0, %s217
    %s235 = sphi 0, %s235
    %s237 = sphi 0, %s235
    %s238 = sphi 0, %s237
    %s252 = sphi 0, %s238
    %s256 = sphi 0, %s256
    %s258 = sphi 0, %s256
    %s259 = sphi 0, %s258
    %s273 = sphi 0, %s259
    %s277 = sphi 0, %s277
    %s279 = sphi 0, %s277
    %s280 = sphi 0, %s279
    %s294 = sphi 0, %s280
    %s298 = sphi 0, %s298
    %s300 = sphi 0, %s298
    %s301 = sphi 0, %s300
    %s315 = sphi 0, %s301
    %s319 = sphi 0, %s319
    %s321 = sphi 0, %s319
    %s322 = sphi 0, %s321
    %s336 = sphi 0, %s322
    %s340 = sphi 0, %s340
    %s342 = sphi 0, %s340
    %s343 = sphi 0, %s342
    %s357 = sphi 0, %s343
    %s361 = sphi 0, %s361
    %s363 = sphi 0, %s361
    %s364 = sphi 0, %s363
    %s378 = sphi 0, %s364
    %s386 = sphi 0, %s388
    %s389 = sphi 0, %s386
    %s390 = sphi 0, %s389
    %s406 = sphi 0, %s390
    %s414 = sphi 0, %s416
    %s417 = sphi 0, %s414
    %s418 = sphi 0, %s417
    %s434 = sphi 0, %s418
  $region4: #{forward.3} parent=0 // loop_header_branch
    %26 = sbr.rel (%p24) target = $region8
  $region5: #{forward.3} parent=0 // loop_body
    %s28 = ssub.s32 %s23, 1
    %s29 = ssub.s32 %s23, 2
    %s36 = sadd.s32 1, %s31
    %p37 = scmp.ge.s32.totalorder %s36, 2
    %s38 = scalar_select %p37, 0, %s36
    %s39 = sadd.s32 1, %s30
    %s40 = scalar_select %p37, %s39, %s30
    %p41 = scmp.ge.s32.totalorder %s40, 2
    %s42 = scalar_select %p41, 0, %s40
    %s43 = ssub.s32 %s30, %s42
    %s44 = ssub.s32 %s31, %s38
    %s45 = sor.u32 %s43, %s44
    %p46 = scmp.eq.s32.totalorder %s45, 0
    %s48 = sadd.s32 %s47, 1
    %s49 = scalar_select %p46, %s47, %s48
    %p52 = pneg %p46
    %p53 = scmp.eq.s32.totalorder %s23, 3
    %p54 = por %p52, %p53
    %p55 = scmp.ne.s32.totalorder %s47, %s50
    %p56 = scmp.eq.s32.totalorder %s23, 0
    %p57 = por %p55, %p56
    %p58 = scmp.ne.s32.totalorder %s47, %s50
    %p59 = scmp.eq.s32.totalorder %s28, 3
    %p60 = por %p58, %p59
    %p61 = scmp.ne.s32.totalorder %s50, %s51
    %p62 = scmp.eq.s32.totalorder %s28, 0
    %p63 = por %p61, %p62
    %p64 = scmp.ne.s32.totalorder %s50, %s51
    %p65 = scmp.eq.s32.totalorder %s29, 3
    %p66 = por %p64, %p65
    %p68 = scmp.ne.s32.totalorder %s51, %s67
    %p69 = scmp.eq.s32.totalorder %s29, 0
    %p70 = por %p68, %p69
    %s71 = ssub.s32 %s30, %s42
    %s72 = ssub.s32 %s31, %s38
    %s73 = sor.u32 %s71, %s72
    %p74 = scmp.eq.s32.totalorder %s73, 0
    %s76 = sadd.s32 %s75, 1
    %s77 = scalar_select %p74, %s75, %s76
    %p80 = pneg %p74
    %p81 = scmp.eq.s32.totalorder %s23, 3
    %p82 = por %p80, %p81
    %p83 = scmp.ne.s32.totalorder %s75, %s78
    %p84 = scmp.eq.s32.totalorder %s23, 0
    %p85 = por %p83, %p84
    %p86 = scmp.ne.s32.totalorder %s75, %s78
    %p87 = scmp.eq.s32.totalorder %s28, 3
    %p88 = por %p86, %p87
    %p89 = scmp.ne.s32.totalorder %s78, %s79
    %p90 = scmp.eq.s32.totalorder %s28, 0
    %p91 = por %p89, %p90
    %p92 = scmp.ne.s32.totalorder %s78, %s79
    %p93 = scmp.eq.s32.totalorder %s29, 3
    %p94 = por %p92, %p93
    %p96 = scmp.ne.s32.totalorder %s79, %s95
    %p97 = scmp.eq.s32.totalorder %s29, 0
    %p98 = por %p96, %p97
    %s99 = ssub.s32 %s30, %s42
    %p100 = scmp.eq.s32.totalorder %s99, 0
    %s102 = sadd.s32 %s101, 1
    %s103 = scalar_select %p100, %s101, %s102
    %p106 = pneg %p100
    %p107 = scmp.eq.s32.totalorder %s23, 3
    %p108 = por %p106, %p107
    %p109 = scmp.ne.s32.totalorder %s101, %s104
    %p110 = scmp.eq.s32.totalorder %s23, 0
    %p111 = por %p109, %p110
    %p112 = scmp.ne.s32.totalorder %s101, %s104
    %p113 = scmp.eq.s32.totalorder %s28, 3
    %p114 = por %p112, %p113
    %p115 = scmp.ne.s32.totalorder %s104, %s105
    %p116 = scmp.eq.s32.totalorder %s28, 0
    %p117 = por %p115, %p116
    %p118 = scmp.ne.s32.totalorder %s104, %s105
    %p119 = scmp.eq.s32.totalorder %s29, 3
    %p120 = por %p118, %p119
    %p122 = scmp.ne.s32.totalorder %s105, %s121
    %p123 = scmp.eq.s32.totalorder %s29, 0
    %p124 = por %p122, %p123
    %s125 = ssub.s32 %s30, %s42
    %p126 = scmp.eq.s32.totalorder %s125, 0
    %s128 = sadd.s32 %s127, 1
    %s129 = scalar_select %p126, %s127, %s128
    %p132 = pneg %p126
    %p133 = scmp.eq.s32.totalorder %s23, 3
    %p134 = por %p132, %p133
    %p135 = scmp.ne.s32.totalorder %s127, %s130
    %p136 = scmp.eq.s32.totalorder %s23, 0
    %p137 = por %p135, %p136
    %p138 = scmp.ne.s32.totalorder %s127, %s130
    %p139 = scmp.eq.s32.totalorder %s28, 3
    %p140 = por %p138, %p139
    %p141 = scmp.ne.s32.totalorder %s130, %s131
    %p142 = scmp.eq.s32.totalorder %s28, 0
    %p143 = por %p141, %p142
    %p144 = scmp.ne.s32.totalorder %s130, %s131
    %p145 = scmp.eq.s32.totalorder %s29, 3
    %p146 = por %p144, %p145
    %p148 = scmp.ne.s32.totalorder %s131, %s147
    %p149 = scmp.eq.s32.totalorder %s29, 0
    %p150 = por %p148, %p149
    %s152 = sadd.s32 %s151, 1
    %p155 = scmp.eq.s32.totalorder %s23, 3
    %p156 = scmp.ne.s32.totalorder %s151, %s153
    %p157 = scmp.eq.s32.totalorder %s23, 0
    %p158 = por %p156, %p157
    %p159 = scmp.ne.s32.totalorder %s151, %s153
    %p160 = scmp.eq.s32.totalorder %s28, 3
    %p161 = por %p159, %p160
    %p162 = scmp.ne.s32.totalorder %s153, %s154
    %p163 = scmp.eq.s32.totalorder %s28, 0
    %p164 = por %p162, %p163
    %p165 = scmp.ne.s32.totalorder %s153, %s154
    %p166 = scmp.eq.s32.totalorder %s29, 3
    %p167 = por %p165, %p166
    %p169 = scmp.ne.s32.totalorder %s154, %s168
    %p170 = scmp.eq.s32.totalorder %s29, 0
    %p171 = por %p169, %p170
    %s173 = sadd.s32 %s172, 1
    %p176 = scmp.eq.s32.totalorder %s23, 3
    %p177 = scmp.ne.s32.totalorder %s172, %s174
    %p178 = scmp.eq.s32.totalorder %s23, 0
    %p179 = por %p177, %p178
    %p180 = scmp.ne.s32.totalorder %s172, %s174
    %p181 = scmp.eq.s32.totalorder %s28, 3
    %p182 = por %p180, %p181
    %p183 = scmp.ne.s32.totalorder %s174, %s175
    %p184 = scmp.eq.s32.totalorder %s28, 0
    %p185 = por %p183, %p184
    %p186 = scmp.ne.s32.totalorder %s174, %s175
    %p187 = scmp.eq.s32.totalorder %s29, 3
    %p188 = por %p186, %p187
    %p190 = scmp.ne.s32.totalorder %s175, %s189
    %p191 = scmp.eq.s32.totalorder %s29, 0
    %p192 = por %p190, %p191
    %s194 = sadd.s32 %s193, 1
    %p197 = scmp.eq.s32.totalorder %s23, 3
    %p198 = scmp.ne.s32.totalorder %s193, %s195
    %p199 = scmp.eq.s32.totalorder %s23, 0
    %p200 = por %p198, %p199
    %p201 = scmp.ne.s32.totalorder %s193, %s195
    %p202 = scmp.eq.s32.totalorder %s28, 3
    %p203 = por %p201, %p202
    %p204 = scmp.ne.s32.totalorder %s195, %s196
    %p205 = scmp.eq.s32.totalorder %s28, 0
    %p206 = por %p204, %p205
    %p207 = scmp.ne.s32.totalorder %s195, %s196
    %p208 = scmp.eq.s32.totalorder %s29, 3
    %p209 = por %p207, %p208
    %p211 = scmp.ne.s32.totalorder %s196, %s210
    %p212 = scmp.eq.s32.totalorder %s29, 0
    %p213 = por %p211, %p212
    %s215 = sadd.s32 %s214, 1
    %p218 = scmp.eq.s32.totalorder %s23, 3
    %p219 = scmp.ne.s32.totalorder %s214, %s216
    %p220 = scmp.eq.s32.totalorder %s23, 0
    %p221 = por %p219, %p220
    %p222 = scmp.ne.s32.totalorder %s214, %s216
    %p223 = scmp.eq.s32.totalorder %s28, 3
    %p224 = por %p222, %p223
    %p225 = scmp.ne.s32.totalorder %s216, %s217
    %p226 = scmp.eq.s32.totalorder %s28, 0
    %p227 = por %p225, %p226
    %p228 = scmp.ne.s32.totalorder %s216, %s217
    %p229 = scmp.eq.s32.totalorder %s29, 3
    %p230 = por %p228, %p229
    %p232 = scmp.ne.s32.totalorder %s217, %s231
    %p233 = scmp.eq.s32.totalorder %s29, 0
    %p234 = por %p232, %p233
    %s236 = sadd.s32 %s235, 1
    %p239 = scmp.eq.s32.totalorder %s23, 3
    %p240 = scmp.ne.s32.totalorder %s235, %s237
    %p241 = scmp.eq.s32.totalorder %s23, 0
    %p242 = por %p240, %p241
    %p243 = scmp.ne.s32.totalorder %s235, %s237
    %p244 = scmp.eq.s32.totalorder %s28, 3
    %p245 = por %p243, %p244
    %p246 = scmp.ne.s32.totalorder %s237, %s238
    %p247 = scmp.eq.s32.totalorder %s28, 0
    %p248 = por %p246, %p247
    %p249 = scmp.ne.s32.totalorder %s237, %s238
    %p250 = scmp.eq.s32.totalorder %s29, 3
    %p251 = por %p249, %p250
    %p253 = scmp.ne.s32.totalorder %s238, %s252
    %p254 = scmp.eq.s32.totalorder %s29, 0
    %p255 = por %p253, %p254
    %s257 = sadd.s32 %s256, 1
    %p260 = scmp.eq.s32.totalorder %s23, 3
    %p261 = scmp.ne.s32.totalorder %s256, %s258
    %p262 = scmp.eq.s32.totalorder %s23, 0
    %p263 = por %p261, %p262
    %p264 = scmp.ne.s32.totalorder %s256, %s258
    %p265 = scmp.eq.s32.totalorder %s28, 3
    %p266 = por %p264, %p265
    %p267 = scmp.ne.s32.totalorder %s258, %s259
    %p268 = scmp.eq.s32.totalorder %s28, 0
    %p269 = por %p267, %p268
    %p270 = scmp.ne.s32.totalorder %s258, %s259
    %p271 = scmp.eq.s32.totalorder %s29, 3
    %p272 = por %p270, %p271
    %p274 = scmp.ne.s32.totalorder %s259, %s273
    %p275 = scmp.eq.s32.totalorder %s29, 0
    %p276 = por %p274, %p275
    %s278 = sadd.s32 %s277, 1
    %p281 = scmp.eq.s32.totalorder %s23, 3
    %p282 = scmp.ne.s32.totalorder %s277, %s279
    %p283 = scmp.eq.s32.totalorder %s23, 0
    %p284 = por %p282, %p283
    %p285 = scmp.ne.s32.totalorder %s277, %s279
    %p286 = scmp.eq.s32.totalorder %s28, 3
    %p287 = por %p285, %p286
    %p288 = scmp.ne.s32.totalorder %s279, %s280
    %p289 = scmp.eq.s32.totalorder %s28, 0
    %p290 = por %p288, %p289
    %p291 = scmp.ne.s32.totalorder %s279, %s280
    %p292 = scmp.eq.s32.totalorder %s29, 3
    %p293 = por %p291, %p292
    %p295 = scmp.ne.s32.totalorder %s280, %s294
    %p296 = scmp.eq.s32.totalorder %s29, 0
    %p297 = por %p295, %p296
    %s299 = sadd.s32 %s298, 1
    %p302 = scmp.eq.s32.totalorder %s23, 3
    %p303 = scmp.ne.s32.totalorder %s298, %s300
    %p304 = scmp.eq.s32.totalorder %s23, 0
    %p305 = por %p303, %p304
    %p306 = scmp.ne.s32.totalorder %s298, %s300
    %p307 = scmp.eq.s32.totalorder %s28, 3
    %p308 = por %p306, %p307
    %p309 = scmp.ne.s32.totalorder %s300, %s301
    %p310 = scmp.eq.s32.totalorder %s28, 0
    %p311 = por %p309, %p310
    %p312 = scmp.ne.s32.totalorder %s300, %s301
    %p313 = scmp.eq.s32.totalorder %s29, 3
    %p314 = por %p312, %p313
    %p316 = scmp.ne.s32.totalorder %s301, %s315
    %p317 = scmp.eq.s32.totalorder %s29, 0
    %p318 = por %p316, %p317
    %s320 = sadd.s32 %s319, 1
    %p323 = scmp.eq.s32.totalorder %s23, 3
    %p324 = scmp.ne.s32.totalorder %s319, %s321
    %p325 = scmp.eq.s32.totalorder %s23, 0
    %p326 = por %p324, %p325
    %p327 = scmp.ne.s32.totalorder %s319, %s321
    %p328 = scmp.eq.s32.totalorder %s28, 3
    %p329 = por %p327, %p328
    %p330 = scmp.ne.s32.totalorder %s321, %s322
    %p331 = scmp.eq.s32.totalorder %s28, 0
    %p332 = por %p330, %p331
    %p333 = scmp.ne.s32.totalorder %s321, %s322
    %p334 = scmp.eq.s32.totalorder %s29, 3
    %p335 = por %p333, %p334
    %p337 = scmp.ne.s32.totalorder %s322, %s336
    %p338 = scmp.eq.s32.totalorder %s29, 0
    %p339 = por %p337, %p338
    %s341 = sadd.s32 %s340, 1
    %p344 = scmp.eq.s32.totalorder %s23, 3
    %p345 = scmp.ne.s32.totalorder %s340, %s342
    %p346 = scmp.eq.s32.totalorder %s23, 0
    %p347 = por %p345, %p346
    %p348 = scmp.ne.s32.totalorder %s340, %s342
    %p349 = scmp.eq.s32.totalorder %s28, 3
    %p350 = por %p348, %p349
    %p351 = scmp.ne.s32.totalorder %s342, %s343
    %p352 = scmp.eq.s32.totalorder %s28, 0
    %p353 = por %p351, %p352
    %p354 = scmp.ne.s32.totalorder %s342, %s343
    %p355 = scmp.eq.s32.totalorder %s29, 3
    %p356 = por %p354, %p355
    %p358 = scmp.ne.s32.totalorder %s343, %s357
    %p359 = scmp.eq.s32.totalorder %s29, 0
    %p360 = por %p358, %p359
    %s362 = sadd.s32 %s361, 1
    %p365 = scmp.eq.s32.totalorder %s23, 3
    %p366 = scmp.ne.s32.totalorder %s361, %s363
    %p367 = scmp.eq.s32.totalorder %s23, 0
    %p368 = por %p366, %p367
    %p369 = scmp.ne.s32.totalorder %s361, %s363
    %p370 = scmp.eq.s32.totalorder %s28, 3
    %p371 = por %p369, %p370
    %p372 = scmp.ne.s32.totalorder %s363, %s364
    %p373 = scmp.eq.s32.totalorder %s28, 0
    %p374 = por %p372, %p373
    %p375 = scmp.ne.s32.totalorder %s363, %s364
    %p376 = scmp.eq.s32.totalorder %s29, 3
    %p377 = por %p375, %p376
    %p379 = scmp.ne.s32.totalorder %s364, %s378
    %p380 = scmp.eq.s32.totalorder %s29, 0
    %p381 = por %p379, %p380
    %s382 = ssub.s32 %s30, %s42
    %s383 = ssub.s32 %s31, %s38
    %s384 = sor.u32 %s382, %s383
    %p385 = scmp.eq.s32.totalorder %s384, 0
    %s387 = sadd.s32 %s386, 1
    %s388 = scalar_select %p385, %s386, %s387
    %p391 = pneg %p385
    %p392 = scmp.eq.s32.totalorder %s23, 3
    %p393 = por %p391, %p392
    %p394 = scmp.ne.s32.totalorder %s386, %s389
    %p395 = scmp.eq.s32.totalorder %s23, 0
    %p396 = por %p394, %p395
    %p397 = scmp.ne.s32.totalorder %s386, %s389
    %p398 = scmp.eq.s32.totalorder %s28, 3
    %p399 = por %p397, %p398
    %p400 = scmp.ne.s32.totalorder %s389, %s390
    %p401 = scmp.eq.s32.totalorder %s28, 0
    %p402 = por %p400, %p401
    %p403 = scmp.ne.s32.totalorder %s389, %s390
    %p404 = scmp.eq.s32.totalorder %s29, 3
    %p405 = por %p403, %p404
    %p407 = scmp.ne.s32.totalorder %s390, %s406
    %p408 = scmp.eq.s32.totalorder %s29, 0
    %p409 = por %p407, %p408
    %s410 = ssub.s32 %s30, %s42
    %s411 = ssub.s32 %s31, %s38
    %s412 = sor.u32 %s410, %s411
    %p413 = scmp.eq.s32.totalorder %s412, 0
    %s415 = sadd.s32 %s414, 1
    %s416 = scalar_select %p413, %s414, %s415
    %p419 = pneg %p413
    %p420 = scmp.eq.s32.totalorder %s23, 3
    %p421 = por %p419, %p420
    %p422 = scmp.ne.s32.totalorder %s414, %s417
    %p423 = scmp.eq.s32.totalorder %s23, 0
    %p424 = por %p422, %p423
    %p425 = scmp.ne.s32.totalorder %s414, %s417
    %p426 = scmp.eq.s32.totalorder %s28, 3
    %p427 = por %p425, %p426
    %p428 = scmp.ne.s32.totalorder %s417, %s418
    %p429 = scmp.eq.s32.totalorder %s28, 0
    %p430 = por %p428, %p429
    %p431 = scmp.ne.s32.totalorder %s417, %s418
    %p432 = scmp.eq.s32.totalorder %s29, 3
    %p433 = por %p431, %p432
    %p435 = scmp.ne.s32.totalorder %s418, %s434
    %p436 = scmp.eq.s32.totalorder %s29, 0
    %p437 = por %p435, %p436
    %p438 = scmp.le.s32.totalorder 1, %s23
    %p439 = scmp.lt.s32.totalorder %s23, 5
    %p440 = pnand %p438, %p439
    %p441 = pneg %p440
    // Predicated region
    $region9: #{forward.3} parent=5 // pred_check
      _
    $region10: #{forward.3} parent=5 // pred_check_branch
      %443 = sbr.rel (%p440) target = $region12
    $region11: #{forward.3} parent=5 // pred_region
      %s444 = ssub.s32 %s23, 1
      // Predicated region
      $region13: #{forward.3} parent=11 // pred_check
        %p445 = pneg %p164
      $region14: #{forward.3} parent=11 // pred_check_branch
        %447 = sbr.rel (%p445) target = $region16
      $region15: #{forward.3} parent=11 // pred_region
        _
      $region16: #{forward.3} parent=11 // pred_fallthru
        _
      // Predicated region
      $region17: #{forward.3} parent=11 // pred_check
        %p448 = pneg %p185
      $region18: #{forward.3} parent=11 // pred_check_branch
        %450 = sbr.rel (%p448) target = $region20
      $region19: #{forward.3} parent=11 // pred_region
        _
      $region20: #{forward.3} parent=11 // pred_fallthru
        _
      // Predicated region
      $region21: #{forward.3} parent=11 // pred_check
        %p451 = pneg %p206
      $region22: #{forward.3} parent=11 // pred_check_branch
        %453 = sbr.rel (%p451) target = $region24
      $region23: #{forward.3} parent=11 // pred_region
        _
      $region24: #{forward.3} parent=11 // pred_fallthru
        _
      // Predicated region
      $region25: #{forward.3} parent=11 // pred_check
        %p454 = pneg %p227
      $region26: #{forward.3} parent=11 // pred_check_branch
        %456 = sbr.rel (%p454) target = $region28
      $region27: #{forward.3} parent=11 // pred_region
        _
      $region28: #{forward.3} parent=11 // pred_fallthru
        _
      // Predicated region
      $region29: #{forward.3} parent=11 // pred_check
        %p457 = pneg %p248
      $region30: #{forward.3} parent=11 // pred_check_branch
        %459 = sbr.rel (%p457) target = $region32
      $region31: #{forward.3} parent=11 // pred_region
        _
      $region32: #{forward.3} parent=11 // pred_fallthru
        _
      // Predicated region
      $region33: #{forward.3} parent=11 // pred_check
        %p460 = pneg %p269
      $region34: #{forward.3} parent=11 // pred_check_branch
        %462 = sbr.rel (%p460) target = $region36
      $region35: #{forward.3} parent=11 // pred_region
        _
      $region36: #{forward.3} parent=11 // pred_fallthru
        _
      // Predicated region
      $region37: #{forward.3} parent=11 // pred_check
        %p463 = pneg %p290
      $region38: #{forward.3} parent=11 // pred_check_branch
        %465 = sbr.rel (%p463) target = $region40
      $region39: #{forward.3} parent=11 // pred_region
        _
      $region40: #{forward.3} parent=11 // pred_fallthru
        _
      // Predicated region
      $region41: #{forward.3} parent=11 // pred_check
        %p466 = pneg %p311
      $region42: #{forward.3} parent=11 // pred_check_branch
        %468 = sbr.rel (%p466) target = $region44
      $region43: #{forward.3} parent=11 // pred_region
        _
      $region44: #{forward.3} parent=11 // pred_fallthru
        _
      // Predicated region
      $region45: #{forward.3} parent=11 // pred_check
        %p469 = pneg %p332
      $region46: #{forward.3} parent=11 // pred_check_branch
        %471 = sbr.rel (%p469) target = $region48
      $region47: #{forward.3} parent=11 // pred_region
        _
      $region48: #{forward.3} parent=11 // pred_fallthru
        _
      // Predicated region
      $region49: #{forward.3} parent=11 // pred_check
        %p472 = pneg %p353
      $region50: #{forward.3} parent=11 // pred_check_branch
        %474 = sbr.rel (%p472) target = $region52
      $region51: #{forward.3} parent=11 // pred_region
        _
      $region52: #{forward.3} parent=11 // pred_fallthru
        _
      // Predicated region
      $region53: #{forward.3} parent=11 // pred_check
        %p475 = pneg %p374
      $region54: #{forward.3} parent=11 // pred_check_branch
        %477 = sbr.rel (%p475) target = $region56
      $region55: #{forward.3} parent=11 // pred_region
        _
      $region56: #{forward.3} parent=11 // pred_fallthru
        _
    $region12: #{forward.3} parent=5 // pred_fallthru
      _
    %p478 = scmp.lt.s32.totalorder %s23, 4
    // Predicated region
    $region57: #{forward.3} parent=5 // pred_check
      %p479 = pneg %p478
    $region58: #{forward.3} parent=5 // pred_check_branch
      %481 = sbr.rel (%p479) target = $region60
    $region59: #{forward.3} parent=5 // pred_region
      // Predicated region
      $region61: #{forward.3} parent=59 // pred_check
        %p482 = pneg %p57
      $region62: #{forward.3} parent=59 // pred_check_branch
        %484 = sbr.rel (%p482) target = $region64
      $region63: #{forward.3} parent=59 // pred_region
        %p485 = scmp.lt.s32.totalorder %s30, 1
        %s486 = scalar_select %p485, %s30, 1
        %p487 = scmp.lt.s32.totalorder %s31, 1
        %s488 = scalar_select %p487, %s31, 1
        %s489 = smul.addr %s488, 4
        %s490 = smul.addr %s486, 8
        %s491 = sadd.s32 %s489, %s490
        %s492 = smul.addr %s491, 8
        %s493 = scalar_lea.vmem %s0, %s492
      $region64: #{forward.3} parent=59 // pred_fallthru
        _
      // Predicated region
      $region65: #{forward.3} parent=59 // pred_check
        %p494 = pneg %p85
      $region66: #{forward.3} parent=59 // pred_check_branch
        %496 = sbr.rel (%p494) target = $region68
      $region67: #{forward.3} parent=59 // pred_region
        %p497 = scmp.lt.s32.totalorder %s30, 1
        %s498 = scalar_select %p497, %s30, 1
        %p499 = scmp.lt.s32.totalorder %s31, 1
        %s500 = scalar_select %p499, %s31, 1
        %s501 = smul.addr %s500, 2
        %s502 = smul.addr %s498, 4
        %s503 = sadd.s32 %s501, %s502
        %s504 = smul.addr %s503, 4
        %s505 = scalar_lea.vmem %s1, %s504
      $region68: #{forward.3} parent=59 // pred_fallthru
        _
      // Predicated region
      $region69: #{forward.3} parent=59 // pred_check
        %p506 = pneg %p111
      $region70: #{forward.3} parent=59 // pred_check_branch
        %508 = sbr.rel (%p506) target = $region72
      $region71: #{forward.3} parent=59 // pred_region
        %p509 = scmp.lt.s32.totalorder %s30, 1
        %s510 = scalar_select %p509, %s30, 1
        %s511 = smul.addr %s510, 4
        %s512 = scalar_lea.vmem %s2, %s511
      $region72: #{forward.3} parent=59 // pred_fallthru
        _
      // Predicated region
      $region73: #{forward.3} parent=59 // pred_check
        %p513 = pneg %p137
      $region74: #{forward.3} parent=59 // pred_check_branch
        %515 = sbr.rel (%p513) target = $region76
      $region75: #{forward.3} parent=59 // pred_region
        %p516 = scmp.lt.s32.totalorder %s30, 1
        %s517 = scalar_select %p516, %s30, 1
        %s518 = scalar_lea.vmem %s3, %s517
      $region76: #{forward.3} parent=59 // pred_fallthru
        _
    $region60: #{forward.3} parent=5 // pred_fallthru
      _
    %p519 = scmp.le.s32.totalorder 1, %s23
    %p520 = scmp.lt.s32.totalorder %s23, 5
    %p521 = pnand %p519, %p520
    %p522 = pneg %p521
    // Predicated region
    $region77: #{forward.3} parent=5 // pred_check
      _
    $region78: #{forward.3} parent=5 // pred_check_branch
      %524 = sbr.rel (%p521) target = $region80
    $region79: #{forward.3} parent=5 // pred_region
      %s525 = ssub.s32 %s23, 1
      %p526 = scmp.lt.s32.totalorder %s32, 1
      %s527 = scalar_select %p526, %s32, 1
      %p528 = scmp.lt.s32.totalorder %s33, 1
      %s529 = scalar_select %p528, %s33, 1
      %s530 = smul.addr %s529, 4
      %s531 = smul.addr %s527, 8
      %s532 = sadd.s32 %s530, %s531
      %s533 = smul.addr %s532, 8
      %s534 = scalar_lea.vmem %s0, %s533
      %p535 = pneg %p63
      %p536 = pneg %p60
      %p537 = scmp.lt.s32.totalorder %s32, 1
      %s538 = scalar_select %p537, %s32, 1
      %p539 = scmp.lt.s32.totalorder %s33, 1
      %s540 = scalar_select %p539, %s33, 1
      %s541 = smul.addr %s540, 2
      %s542 = smul.addr %s538, 4
      %s543 = sadd.s32 %s541, %s542
      %s544 = smul.addr %s543, 4
      %s545 = scalar_lea.vmem %s1, %s544
      %p546 = pneg %p91
      %p547 = pneg %p88
      %p548 = scmp.lt.s32.totalorder %s32, 1
      %s549 = scalar_select %p548, %s32, 1
      %s550 = smul.addr %s549, 4
      %s551 = scalar_lea.vmem %s2, %s550
      %p552 = pneg %p117
      %p553 = pneg %p114
      %p554 = scmp.lt.s32.totalorder %s32, 1
      %s555 = scalar_select %p554, %s32, 1
      %s556 = scalar_lea.vmem %s3, %s555
      %p557 = pneg %p143
      %p558 = pneg %p140
      %p559 = pneg %p164
      %p560 = pneg %p161
      %p561 = pneg %p185
      %p562 = pneg %p182
      %p563 = pneg %p206
      %p564 = pneg %p203
      %p565 = pneg %p227
      %p566 = pneg %p224
      %p567 = pneg %p248
      %p568 = pneg %p245
      %p569 = pneg %p269
      %p570 = pneg %p266
      %p571 = pneg %p290
      %p572 = pneg %p287
      %p573 = pneg %p311
      %p574 = pneg %p308
      %p575 = pneg %p332
      %p576 = pneg %p329
      %p577 = pneg %p353
      %p578 = pneg %p350
      %p579 = pneg %p374
      %p580 = pneg %p371
      %p581 = pneg %p402
      %p582 = pneg %p399
      %p583 = scmp.lt.s32.totalorder %s32, 1
      %s584 = scalar_select %p583, %s32, 1
      %p585 = scmp.lt.s32.totalorder %s33, 1
      %s586 = scalar_select %p585, %s33, 1
      %s587 = smul.addr %s584, 2
      %s588 = sadd.s32 %s586, %s587
      %s589 = smul.addr %s588, 4
      %s590 = scalar_lea.vmem %s15, %s589
      %p591 = pneg %p430
      %p592 = pneg %p427
      %p593 = scmp.lt.s32.totalorder %s32, 1
      %s594 = scalar_select %p593, %s32, 1
      %p595 = scmp.lt.s32.totalorder %s33, 1
      %s596 = scalar_select %p595, %s33, 1
      %s597 = smul.addr %s594, 2
      %s598 = sadd.s32 %s596, %s597
      %s599 = scalar_lea.vmem %s16, %s598
      %p600 = scmp.lt.s32.totalorder %s32, 1
      %s601 = scalar_select %p600, %s32, 1
      %p602 = scmp.lt.s32.totalorder %s33, 1
      %s603 = scalar_select %p602, %s33, 1
      %s604 = smul.addr %s603, 4
      %s605 = smul.addr %s601, 8
      %s606 = sadd.s32 %s604, %s605
      %s607 = smul.addr %s606, 8
      %s608 = scalar_lea.vmem %s0, %s607
      %p609 = scmp.lt.s32.totalorder %s32, 1
      %s610 = scalar_select %p609, %s32, 1
      %p611 = scmp.lt.s32.totalorder %s33, 1
      %s612 = scalar_select %p611, %s33, 1
      %s613 = smul.addr %s612, 2
      %s614 = smul.addr %s610, 4
      %s615 = sadd.s32 %s613, %s614
      %s616 = smul.addr %s615, 4
      %s617 = scalar_lea.vmem %s1, %s616
      %p618 = scmp.lt.s32.totalorder %s32, 1
      %s619 = scalar_select %p618, %s32, 1
      %s620 = smul.addr %s619, 4
      %s621 = scalar_lea.vmem %s2, %s620
      %p622 = scmp.lt.s32.totalorder %s32, 1
      %s623 = scalar_select %p622, %s32, 1
      %s624 = scalar_lea.vmem %s3, %s623
      %p625 = scmp.lt.s32.totalorder %s32, 1
      %s626 = scalar_select %p625, %s32, 1
      %p627 = scmp.lt.s32.totalorder %s33, 1
      %s628 = scalar_select %p627, %s33, 1
      %s629 = smul.addr %s626, 2
      %s630 = sadd.s32 %s628, %s629
      %s631 = smul.addr %s630, 4
      %s632 = scalar_lea.vmem %s15, %s631
      %p633 = scmp.lt.s32.totalorder %s32, 1
      %s634 = scalar_select %p633, %s32, 1
      %p635 = scmp.lt.s32.totalorder %s33, 1
      %s636 = scalar_select %p635, %s33, 1
      %s637 = smul.addr %s634, 2
      %s638 = sadd.s32 %s636, %s637
      %s639 = scalar_lea.vmem %s16, %s638
      %v640 = vld [vmem:[%s608] sm:$0xff]
      %v641 = vld [vmem:[%s608 + $0x8] sm:$0xff]
      %v642 = vld [vmem:[%s608 + $0x10] sm:$0xff]
      %v643 = vld [vmem:[%s608 + $0x18] sm:$0xff]
      %v644 = vld [vmem:[%s617] sm:$0x77]
      %v645 = vld [vmem:[%s4] sm:$0xff]
      %v646 = vld [vmem:[%s4 + $0x8] sm:$0xff]
      %v647 = vld [vmem:[%s4 + $0x10] sm:$0xff]
      %v648 = vld [vmem:[%s4 + $0x18] sm:$0xff]
      %v649 = vld [vmem:[%s9] sm:$0xff]
      %v650 = vld [vmem:[%s9 + $0x8] sm:$0xff]
      %v651 = vld [vmem:[%s9 + $0x10] sm:$0xff]
      %v652 = vld [vmem:[%s9 + $0x18] sm:$0xff]
      %654 = vset.pattern.permute.xlu0 0
      %655 = vperm.xlu0 %654, %v649
      %v656 = vpop.permute.xlu0 %655
      %659 = vset.pattern.permute.xlu0 0
      %660 = vperm.xlu0 %659, %v650
      %v661 = vpop.permute.xlu0 %660
      %664 = vset.pattern.permute.xlu0 0
      %665 = vperm.xlu0 %664, %v651
      %v666 = vpop.permute.xlu0 %665
      %669 = vset.pattern.permute.xlu0 0
      %670 = vperm.xlu0 %669, %v652
      %v671 = vpop.permute.xlu0 %670
      %vm673 = vcmask 130048
      %v675 = vsel %vm673, %v645, 0
      %v678 = vsel %vm673, %v646, 0
      %v681 = vsel %vm673, %v647, 0
      %v684 = vsel %vm673, %v648, 0
      %686 = vmatprep.subr.mxu0 %v641
      %687 = vmatpush1.msra.mxu0 %v640
      %688 = vmatprep.subr.mxu0 %v643
      %689 = vmatpush1.msra.mxu0 %v642
      %690 = vmatprep.subr.mxu0 0.0
      %691 = vmatpush1.msra.mxu0 0.0
      %692 = vmatprep.subr.mxu0 0.0
      %693 = vmatpush1.msra.mxu0 0.0
      %694 = vmatprep.subr.mxu0 0.0
      %695 = vmatpush1.msra.mxu0 0.0
      %696 = vmatprep.subr.mxu0 0.0
      %697 = vmatpush1.msra.mxu0 0.0
      %698 = vmatprep.subr.mxu0 0.0
      %699 = vmatpush1.msra.mxu0 0.0
      %700 = vmatprep.subr.mxu0 0.0
      %701 = vmatpush1.msra.mxu0 0.0
      %702 = vmatprep.subr.mxu0 0.0
      %703 = vmatpush1.msra.mxu0 0.0
      %704 = vmatprep.subr.mxu0 0.0
      %705 = vmatpush1.msra.mxu0 0.0
      %706 = vmatprep.subr.mxu0 0.0
      %707 = vmatpush1.msra.mxu0 0.0
      %708 = vmatprep.subr.mxu0 0.0
      %709 = vmatpush1.msra.mxu0 0.0
      %710 = vmatprep.subr.mxu0 0.0
      %711 = vmatpush1.msra.mxu0 0.0
      %712 = vmatprep.subr.mxu0 0.0
      %713 = vmatpush1.msra.mxu0 0.0
      %714 = vmatprep.subr.mxu0 0.0
      %715 = vmatpush1.msra.mxu0 0.0
      %716 = vmatprep.subr.mxu0 0.0
      %717 = vmatpush1.msra.mxu0 0.0
      %718 = vmatprep.subr.mxu0 0.0
      %719 = vmatpush1.msra.mxu0 0.0
      %720 = vmatprep.subr.mxu0 0.0
      %721 = vmatpush1.msra.mxu0 0.0
      %722 = vmatprep.subr.mxu0 0.0
      %723 = vmatpush1.msra.mxu0 0.0
      %724 = vmatprep.subr.mxu0 0.0
      %725 = vmatpush1.msra.mxu0 0.0
      %726 = vmatprep.subr.mxu0 0.0
      %727 = vmatpush1.msra.mxu0 0.0
      %728 = vmatprep.subr.mxu0 0.0
      %729 = vmatpush1.msra.mxu0 0.0
      %730 = vmatprep.subr.mxu0 0.0
      %731 = vmatpush1.msra.mxu0 0.0
      %732 = vmatprep.subr.mxu0 0.0
      %733 = vmatpush1.msra.mxu0 0.0
      %734 = vmatprep.subr.mxu0 0.0
      %735 = vmatpush1.msra.mxu0 0.0
      %736 = vmatprep.subr.mxu0 0.0
      %737 = vmatpush1.msra.mxu0 0.0
      %738 = vmatprep.subr.mxu0 0.0
      %739 = vmatpush1.msra.mxu0 0.0
      %740 = vmatprep.subr.mxu0 0.0
      %741 = vmatpush1.msra.mxu0 0.0
      %742 = vmatprep.subr.mxu0 0.0
      %743 = vmatpush1.msra.mxu0 0.0
      %744 = vmatprep.subr.mxu0 0.0
      %745 = vmatpush1.msra.mxu0 0.0
      %746 = vmatprep.subr.mxu0 0.0
      %747 = vmatpush1.msra.mxu0 0.0
      %748 = vmatprep.subr.mxu0 0.0
      %749 = vmatpush1.msra.mxu0 0.0
      %750 = vmatprep.mubr.f32.mxu0 0.0
      %751 = vmatmul.mubr.f32.gmra.mrb[0].mxu0 %v675
      %v752 = vpop.f32.mrb[0].mxu0
      %v753 = vadd.f32 %v656, %v752
      %v754 = vpop.f32.mrb[0].mxu0
      %v755 = vadd.f32 %v656, %v754
      %756 = vmatprep.mubr.f32.mxu0 0.0
      %757 = vmatmul.mubr.f32.gmra.mrb[0].mxu0 %v678
      %v758 = vpop.f32.mrb[0].mxu0
      %v759 = vadd.f32 %v661, %v758
      %v760 = vpop.f32.mrb[0].mxu0
      %v761 = vadd.f32 %v661, %v760
      %762 = vmatprep.mubr.f32.mxu0 0.0
      %763 = vmatmul.mubr.f32.gmra.mrb[0].mxu0 %v681
      %v764 = vpop.f32.mrb[0].mxu0
      %v765 = vadd.f32 %v666, %v764
      %v766 = vpop.f32.mrb[0].mxu0
      %v767 = vadd.f32 %v666, %v766
      %768 = vmatprep.mubr.f32.mxu0 0.0
      %769 = vmatmul.mubr.f32.gmra.mrb[0].mxu0 %v684
      %v770 = vpop.f32.mrb[0].mxu0
      %v771 = vadd.f32 %v671, %v770
      %v772 = vpop.f32.mrb[0].mxu0
      %v773 = vadd.f32 %v671, %v772
      %774 = vdwg.mxu0
      %v775 = vmax.f32 %v753, 0.0
      %v776 = vmax.f32 %v755, 0.0
      %v777 = vmax.f32 %v759, 0.0
      %v778 = vmax.f32 %v761, 0.0
      %v779 = vmax.f32 %v765, 0.0
      %v780 = vmax.f32 %v767, 0.0
      %v781 = vmax.f32 %v771, 0.0
      %v782 = vmax.f32 %v773, 0.0
      %v783 = vld [vmem:[%s5] sm:$0xff]
      %v784 = vld [vmem:[%s5 + $0x8] sm:$0xff]
      %v785 = vld [vmem:[%s5 + $0x10] sm:$0xff]
      %v786 = vld [vmem:[%s5 + $0x18] sm:$0xff]
      %s787 = scalar_lea.vmem %s9, 32
      %v788 = vld [vmem:[%s787] sm:$0xff]
      %v789 = vld [vmem:[%s787 + $0x8] sm:$0xff]
      %v790 = vld [vmem:[%s787 + $0x10] sm:$0xff]
      %v791 = vld [vmem:[%s787 + $0x18] sm:$0xff]
      %793 = vset.pattern.permute.xlu0 0
      %794 = vperm.xlu0 %793, %v788
      %v795 = vpop.permute.xlu0 %794
      %798 = vset.pattern.permute.xlu0 0
      %799 = vperm.xlu0 %798, %v789
      %v800 = vpop.permute.xlu0 %799
      %803 = vset.pattern.permute.xlu0 0
      %804 = vperm.xlu0 %803, %v790
      %v805 = vpop.permute.xlu0 %804
      %808 = vset.pattern.permute.xlu0 0
      %809 = vperm.xlu0 %808, %v791
      %v810 = vpop.permute.xlu0 %809
      %vm812 = vcmask 261120
      %v814 = vsel %vm812, %v783, 0
      %v817 = vsel %vm812, %v784, 0
      %v820 = vsel %vm812, %v785, 0
      %v823 = vsel %vm812, %v786, 0
      %825 = vmatprep.subr.mxu0 %v776
      %826 = vmatpush1.msra.mxu0 %v775
      %827 = vmatprep.subr.mxu0 %v778
      %828 = vmatpush1.msra.mxu0 %v777
      %829 = vmatprep.subr.mxu0 %v780
      %830 = vmatpush1.msra.mxu0 %v779
      %831 = vmatprep.subr.mxu0 %v782
      %832 = vmatpush1.msra.mxu0 %v781
      %833 = vmatprep.subr.mxu0 0.0
      %834 = vmatpush1.msra.mxu0 0.0
      %835 = vmatprep.subr.mxu0 0.0
      %836 = vmatpush1.msra.mxu0 0.0
      %837 = vmatprep.subr.mxu0 0.0
      %838 = vmatpush1.msra.mxu0 0.0
      %839 = vmatprep.subr.mxu0 0.0
      %840 = vmatpush1.msra.mxu0 0.0
      %841 = vmatprep.subr.mxu0 0.0
      %842 = vmatpush1.msra.mxu0 0.0
      %843 = vmatprep.subr.mxu0 0.0
      %844 = vmatpush1.msra.mxu0 0.0
      %845 = vmatprep.subr.mxu0 0.0
      %846 = vmatpush1.msra.mxu0 0.0
      %847 = vmatprep.subr.mxu0 0.0
      %848 = vmatpush1.msra.mxu0 0.0
      %849 = vmatprep.subr.mxu0 0.0
      %850 = vmatpush1.msra.mxu0 0.0
      %851 = vmatprep.subr.mxu0 0.0
      %852 = vmatpush1.msra.mxu0 0.0
      %853 = vmatprep.subr.mxu0 0.0
      %854 = vmatpush1.msra.mxu0 0.0
      %855 = vmatprep.subr.mxu0 0.0
      %856 = vmatpush1.msra.mxu0 0.0
      %857 = vmatprep.subr.mxu0 0.0
      %858 = vmatpush1.msra.mxu0 0.0
      %859 = vmatprep.subr.mxu0 0.0
      %860 = vmatpush1.msra.mxu0 0.0
      %861 = vmatprep.subr.mxu0 0.0
      %862 = vmatpush1.msra.mxu0 0.0
      %863 = vmatprep.subr.mxu0 0.0
      %864 = vmatpush1.msra.mxu0 0.0
      %865 = vmatprep.subr.mxu0 0.0
      %866 = vmatpush1.msra.mxu0 0.0
      %867 = vmatprep.subr.mxu0 0.0
      %868 = vmatpush1.msra.mxu0 0.0
      %869 = vmatprep.subr.mxu0 0.0
      %870 = vmatpush1.msra.mxu0 0.0
      %871 = vmatprep.subr.mxu0 0.0
      %872 = vmatpush1.msra.mxu0 0.0
      %873 = vmatprep.subr.mxu0 0.0
      %874 = vmatpush1.msra.mxu0 0.0
      %875 = vmatprep.subr.mxu0 0.0
      %876 = vmatpush1.msra.mxu0 0.0
      %877 = vmatprep.subr.mxu0 0.0
      %878 = vmatpush1.msra.mxu0 0.0
      %879 = vmatprep.subr.mxu0 0.0
      %880 = vmatpush1.msra.mxu0 0.0
      %881 = vmatprep.subr.mxu0 0.0
      %882 = vmatpush1.msra.mxu0 0.0
      %883 = vmatprep.subr.mxu0 0.0
      %884 = vmatpush1.msra.mxu0 0.0
      %885 = vmatprep.subr.mxu0 0.0
      %886 = vmatpush1.msra.mxu0 0.0
      %887 = vmatprep.subr.mxu0 0.0
      %888 = vmatpush1.msra.mxu0 0.0
      %889 = vmatprep.mubr.f32.mxu0 0.0
      %890 = vmatmul.mubr.f32.gmra.mrb[0].mxu0 %v814
      %v891 = vpop.f32.mrb[0].mxu0
      %v892 = vadd.f32 %v795, %v891
      %v893 = vpop.f32.mrb[0].mxu0
      %v894 = vadd.f32 %v795, %v893
      %895 = vmatprep.mubr.f32.mxu0 0.0
      %896 = vmatmul.mubr.f32.gmra.mrb[0].mxu0 %v817
      %v897 = vpop.f32.mrb[0].mxu0
      %v898 = vadd.f32 %v800, %v897
      %v899 = vpop.f32.mrb[0].mxu0
      %v900 = vadd.f32 %v800, %v899
      %901 = vmatprep.mubr.f32.mxu0 0.0
      %902 = vmatmul.mubr.f32.gmra.mrb[0].mxu0 %v820
      %v903 = vpop.f32.mrb[0].mxu0
      %v904 = vadd.f32 %v805, %v903
      %v905 = vpop.f32.mrb[0].mxu0
      %v906 = vadd.f32 %v805, %v905
      %907 = vmatprep.mubr.f32.mxu0 0.0
      %908 = vmatmul.mubr.f32.gmra.mrb[0].mxu0 %v823
      %v909 = vpop.f32.mrb[0].mxu0
      %v910 = vadd.f32 %v810, %v909
      %v911 = vpop.f32.mrb[0].mxu0
      %v912 = vadd.f32 %v810, %v911
      %913 = vdwg.mxu0
      %v914 = vld [vmem:[%s6] sm:$0xff]
      %v915 = vld [vmem:[%s6 + $0x8] sm:$0xff]
      %v916 = vld [vmem:[%s6 + $0x10] sm:$0xff]
      %v917 = vld [vmem:[%s6 + $0x18] sm:$0xff]
      %v919 = vcombine.high %v644, %v644
      %vm920 = vcmask 23552
      %v922 = vsel %vm920, %v914, 0
      %v925 = vsel %vm920, %v915, 0
      %v928 = vsel %vm920, %v916, 0
      %v931 = vsel %vm920, %v917, 0
      %vm933 = vcmask 1042432
      %v934 = vsel %vm933, %v644, 0
      %v936 = vsel %vm933, %v919, 0
      %938 = vmatprep.subr.mxu0 %v936
      %939 = vmatpush1.msra.mxu0 %v934
      %940 = vmatprep.subr.mxu0 0.0
      %941 = vmatpush1.msra.mxu0 0.0
      %942 = vmatprep.subr.mxu0 0.0
      %943 = vmatpush1.msra.mxu0 0.0
      %944 = vmatprep.subr.mxu0 0.0
      %945 = vmatpush1.msra.mxu0 0.0
      %946 = vmatprep.subr.mxu0 0.0
      %947 = vmatpush1.msra.mxu0 0.0
      %948 = vmatprep.subr.mxu0 0.0
      %949 = vmatpush1.msra.mxu0 0.0
      %950 = vmatprep.subr.mxu0 0.0
      %951 = vmatpush1.msra.mxu0 0.0
      %952 = vmatprep.subr.mxu0 0.0
      %953 = vmatpush1.msra.mxu0 0.0
      %954 = vmatprep.subr.mxu0 0.0
      %955 = vmatpush1.msra.mxu0 0.0
      %956 = vmatprep.subr.mxu0 0.0
      %957 = vmatpush1.msra.mxu0 0.0
      %958 = vmatprep.subr.mxu0 0.0
      %959 = vmatpush1.msra.mxu0 0.0
      %960 = vmatprep.subr.mxu0 0.0
      %961 = vmatpush1.msra.mxu0 0.0
      %962 = vmatprep.subr.mxu0 0.0
      %963 = vmatpush1.msra.mxu0 0.0
      %964 = vmatprep.subr.mxu0 0.0
      %965 = vmatpush1.msra.mxu0 0.0
      %966 = vmatprep.subr.mxu0 0.0
      %967 = vmatpush1.msra.mxu0 0.0
      %968 = vmatprep.subr.mxu0 0.0
      %969 = vmatpush1.msra.mxu0 0.0
      %970 = vmatprep.subr.mxu0 0.0
      %971 = vmatpush1.msra.mxu0 0.0
      %972 = vmatprep.subr.mxu0 0.0
      %973 = vmatpush1.msra.mxu0 0.0
      %974 = vmatprep.subr.mxu0 0.0
      %975 = vmatpush1.msra.mxu0 0.0
      %976 = vmatprep.subr.mxu0 0.0
      %977 = vmatpush1.msra.mxu0 0.0
      %978 = vmatprep.subr.mxu0 0.0
      %979 = vmatpush1.msra.mxu0 0.0
      %980 = vmatprep.subr.mxu0 0.0
      %981 = vmatpush1.msra.mxu0 0.0
      %982 = vmatprep.subr.mxu0 0.0
      %983 = vmatpush1.msra.mxu0 0.0
      %984 = vmatprep.subr.mxu0 0.0
      %985 = vmatpush1.msra.mxu0 0.0
      %986 = vmatprep.subr.mxu0 0.0
      %987 = vmatpush1.msra.mxu0 0.0
      %988 = vmatprep.subr.mxu0 0.0
      %989 = vmatpush1.msra.mxu0 0.0
      %990 = vmatprep.subr.mxu0 0.0
      %991 = vmatpush1.msra.mxu0 0.0
      %992 = vmatprep.subr.mxu0 0.0
      %993 = vmatpush1.msra.mxu0 0.0
      %994 = vmatprep.subr.mxu0 0.0
      %995 = vmatpush1.msra.mxu0 0.0
      %996 = vmatprep.subr.mxu0 0.0
      %997 = vmatpush1.msra.mxu0 0.0
      %998 = vmatprep.subr.mxu0 0.0
      %999 = vmatpush1.msra.mxu0 0.0
      %1000 = vmatprep.subr.mxu0 0.0
      %1001 = vmatpush1.msra.mxu0 0.0
      %1002 = vmatprep.mubr.f32.mxu0 0.0
      %1003 = vmatmul.mubr.f32.gmra.mrb[0].mxu0 %v922
      %v1004 = vpop.f32.mrb[0].mxu0
      %v1005 = vadd.f32 0.0, %v1004
      %v1006 = vpop.f32.mrb[0].mxu0
      %v1007 = vadd.f32 0.0, %v1006
      %1008 = vmatprep.mubr.f32.mxu0 0.0
      %1009 = vmatmul.mubr.f32.gmra.mrb[0].mxu0 %v925
      %v1010 = vpop.f32.mrb[0].mxu0
      %v1011 = vadd.f32 0.0, %v1010
      %v1012 = vpop.f32.mrb[0].mxu0
      %v1013 = vadd.f32 0.0, %v1012
      %1014 = vmatprep.mubr.f32.mxu0 0.0
      %1015 = vmatmul.mubr.f32.gmra.mrb[0].mxu0 %v928
      %v1016 = vpop.f32.mrb[0].mxu0
      %v1017 = vadd.f32 0.0, %v1016
      %v1018 = vpop.f32.mrb[0].mxu0
      %v1019 = vadd.f32 0.0, %v1018
      %1020 = vmatprep.mubr.f32.mxu0 0.0
      %1021 = vmatmul.mubr.f32.gmra.mrb[0].mxu0 %v931
      %v1022 = vpop.f32.mrb[0].mxu0
      %v1023 = vadd.f32 0.0, %v1022
      %v1024 = vpop.f32.mrb[0].mxu0
      %v1025 = vadd.f32 0.0, %v1024
      %1026 = vdwg.mxu0
      %v1027 = vadd.f32 %v892, %v1005
      %v1028 = vadd.f32 %v894, %v1007
      %v1029 = vadd.f32 %v898, %v1011
      %v1030 = vadd.f32 %v900, %v1013
      %v1031 = vadd.f32 %v904, %v1017
      %v1032 = vadd.f32 %v906, %v1019
      %v1033 = vadd.f32 %v910, %v1023
      %v1034 = vadd.f32 %v912, %v1025
      %s1035 = scalar_lea.vmem %s9, 64
      %v1036 = vld [vmem:[%s1035] sm:$0xff]
      %v1037 = vld [vmem:[%s1035 + $0x8] sm:$0xff]
      %v1038 = vld [vmem:[%s1035 + $0x10] sm:$0xff]
      %v1039 = vld [vmem:[%s1035 + $0x18] sm:$0xff]
      %s1040 = scalar_lea.vmem %s9, 96
      %v1041 = vld [vmem:[%s1040] sm:$0xff]
      %v1042 = vld [vmem:[%s1040 + $0x8] sm:$0xff]
      %v1043 = vld [vmem:[%s1040 + $0x10] sm:$0xff]
      %v1044 = vld [vmem:[%s1040 + $0x18] sm:$0xff]
      %v1045 = vadd.f32 %v1027, %v1029
      %v1046 = vadd.f32 %v1045, %v1031
      %v1047 = vadd.f32 %v1046, %v1033
      %v1048 = vrot.slane %v1047, 4
      %v1049 = vadd.f32 %v1047, %v1048
      %v1050 = vrot.slane %v1049, 2
      %v1051 = vadd.f32 %v1049, %v1050
      %v1052 = vrot.slane %v1051, 1
      %v1053 = vadd.f32 %v1051, %v1052
      %v1054 = vadd.f32 %v1028, %v1030
      %v1055 = vadd.f32 %v1054, %v1032
      %v1056 = vadd.f32 %v1055, %v1034
      %v1057 = vrot.slane %v1056, 4
      %v1058 = vadd.f32 %v1056, %v1057
      %v1059 = vrot.slane %v1058, 2
      %v1060 = vadd.f32 %v1058, %v1059
      %v1061 = vrot.slane %v1060, 1
      %v1062 = vadd.f32 %v1060, %v1061
      %v1063 = vrcp.pop 32.0
      %v1064 = vmul.f32 %v1053, %v1063
      %v1065 = vmul.f32 %v1062, %v1063
      %v1066 = vsub.f32 %v1027, %v1064
      %v1067 = vsub.f32 %v1028, %v1065
      %v1068 = vsub.f32 %v1029, %v1064
      %v1069 = vsub.f32 %v1030, %v1065
      %v1070 = vsub.f32 %v1031, %v1064
      %v1071 = vsub.f32 %v1032, %v1065
      %v1072 = vsub.f32 %v1033, %v1064
      %v1073 = vsub.f32 %v1034, %v1065
      %v1074 = vmul.f32 %v1066, %v1066
      %v1075 = vmul.f32 %v1067, %v1067
      %v1076 = vmul.f32 %v1068, %v1068
      %v1077 = vmul.f32 %v1069, %v1069
      %v1078 = vmul.f32 %v1070, %v1070
      %v1079 = vmul.f32 %v1071, %v1071
      %v1080 = vmul.f32 %v1072, %v1072
      %v1081 = vmul.f32 %v1073, %v1073
      %v1082 = vadd.f32 %v1074, %v1076
      %v1083 = vadd.f32 %v1082, %v1078
      %v1084 = vadd.f32 %v1083, %v1080
      %v1085 = vrot.slane %v1084, 4
      %v1086 = vadd.f32 %v1084, %v1085
      %v1087 = vrot.slane %v1086, 2
      %v1088 = vadd.f32 %v1086, %v1087
      %v1089 = vrot.slane %v1088, 1
      %v1090 = vadd.f32 %v1088, %v1089
      %v1091 = vadd.f32 %v1075, %v1077
      %v1092 = vadd.f32 %v1091, %v1079
      %v1093 = vadd.f32 %v1092, %v1081
      %v1094 = vrot.slane %v1093, 4
      %v1095 = vadd.f32 %v1093, %v1094
      %v1096 = vrot.slane %v1095, 2
      %v1097 = vadd.f32 %v1095, %v1096
      %v1098 = vrot.slane %v1097, 1
      %v1099 = vadd.f32 %v1097, %v1098
      %v1100 = vmul.f32 %v1090, %v1063
      %v1101 = vmul.f32 %v1099, %v1063
      %v1102 = vadd.f32 %v1100, 1e-05
      %v1103 = vadd.f32 %v1101, 1e-05
      %v1104 = vrsqrt.pop %v1102
      %v1105 = vrsqrt.pop %v1103
      %v1106 = vmul.f32 %v1066, %v1104
      %v1107 = vmul.f32 %v1067, %v1105
      %v1108 = vmul.f32 %v1068, %v1104
      %v1109 = vmul.f32 %v1069, %v1105
      %v1110 = vmul.f32 %v1070, %v1104
      %v1111 = vmul.f32 %v1071, %v1105
      %v1112 = vmul.f32 %v1072, %v1104
      %v1113 = vmul.f32 %v1073, %v1105
      %1115 = vset.pattern.permute.xlu0 0
      %1116 = vperm.xlu0 %1115, %v1036
      %v1117 = vpop.permute.xlu0 %1116
      %1120 = vset.pattern.permute.xlu0 0
      %1121 = vperm.xlu0 %1120, %v1037
      %v1122 = vpop.permute.xlu0 %1121
      %1125 = vset.pattern.permute.xlu0 0
      %1126 = vperm.xlu0 %1125, %v1038
      %v1127 = vpop.permute.xlu0 %1126
      %1130 = vset.pattern.permute.xlu0 0
      %1131 = vperm.xlu0 %1130, %v1039
      %v1132 = vpop.permute.xlu0 %1131
      %v1134 = vmul.f32 %v1106, %v1117
      %v1135 = vmul.f32 %v1107, %v1117
      %v1136 = vmul.f32 %v1108, %v1122
      %v1137 = vmul.f32 %v1109, %v1122
      %v1138 = vmul.f32 %v1110, %v1127
      %v1139 = vmul.f32 %v1111, %v1127
      %v1140 = vmul.f32 %v1112, %v1132
      %v1141 = vmul.f32 %v1113, %v1132
      %1143 = vset.pattern.permute.xlu0 0
      %1144 = vperm.xlu0 %1143, %v1041
      %v1145 = vpop.permute.xlu0 %1144
      %1148 = vset.pattern.permute.xlu0 0
      %1149 = vperm.xlu0 %1148, %v1042
      %v1150 = vpop.permute.xlu0 %1149
      %1153 = vset.pattern.permute.xlu0 0
      %1154 = vperm.xlu0 %1153, %v1043
      %v1155 = vpop.permute.xlu0 %1154
      %1158 = vset.pattern.permute.xlu0 0
      %1159 = vperm.xlu0 %1158, %v1044
      %v1160 = vpop.permute.xlu0 %1159
      %v1162 = vadd.f32 %v1134, %v1145
      %v1163 = vadd.f32 %v1135, %v1145
      %v1164 = vadd.f32 %v1136, %v1150
      %v1165 = vadd.f32 %v1137, %v1150
      %v1166 = vadd.f32 %v1138, %v1155
      %v1167 = vadd.f32 %v1139, %v1155
      %v1168 = vadd.f32 %v1140, %v1160
      %v1169 = vadd.f32 %v1141, %v1160
      %v1170 = vld [vmem:[%s7] sm:$0xff]
      %v1171 = vld [vmem:[%s7 + $0x8] sm:$0xff]
      %v1172 = vld [vmem:[%s7 + $0x10] sm:$0xff]
      %v1173 = vld [vmem:[%s7 + $0x18] sm:$0xff]
      %s1174 = scalar_lea.vmem %s9, 128
      %v1175 = vld [vmem:[%s1174] sm:$0xff]
      %v1176 = vld [vmem:[%s1174 + $0x8] sm:$0xff]
      %v1177 = vld [vmem:[%s1174 + $0x10] sm:$0xff]
      %v1178 = vld [vmem:[%s1174 + $0x18] sm:$0xff]
      %1180 = vset.pattern.permute.xlu0 0
      %1181 = vperm.xlu0 %1180, %v1175
      %v1182 = vpop.permute.xlu0 %1181
      %1185 = vset.pattern.permute.xlu0 0
      %1186 = vperm.xlu0 %1185, %v1176
      %v1187 = vpop.permute.xlu0 %1186
      %1190 = vset.pattern.permute.xlu0 0
      %1191 = vperm.xlu0 %1190, %v1177
      %v1192 = vpop.permute.xlu0 %1191
      %1195 = vset.pattern.permute.xlu0 0
      %1196 = vperm.xlu0 %1195, %v1178
      %v1197 = vpop.permute.xlu0 %1196
      %v1200 = vsel %vm812, %v1170, 0
      %v1203 = vsel %vm812, %v1171, 0
      %v1206 = vsel %vm812, %v1172, 0
      %v1209 = vsel %vm812, %v1173, 0
      %1211 = vmatprep.subr.mxu0 %v1163
      %1212 = vmatpush1.msra.mxu0 %v1162
      %1213 = vmatprep.subr.mxu0 %v1165
      %1214 = vmatpush1.msra.mxu0 %v1164
      %1215 = vmatprep.subr.mxu0 %v1167
      %1216 = vmatpush1.msra.mxu0 %v1166
      %1217 = vmatprep.subr.mxu0 %v1169
      %1218 = vmatpush1.msra.mxu0 %v1168
      %1219 = vmatprep.subr.mxu0 0.0
      %1220 = vmatpush1.msra.mxu0 0.0
      %1221 = vmatprep.subr.mxu0 0.0
      %1222 = vmatpush1.msra.mxu0 0.0
      %1223 = vmatprep.subr.mxu0 0.0
      %1224 = vmatpush1.msra.mxu0 0.0
      %1225 = vmatprep.subr.mxu0 0.0
      %1226 = vmatpush1.msra.mxu0 0.0
      %1227 = vmatprep.subr.mxu0 0.0
      %1228 = vmatpush1.msra.mxu0 0.0
      %1229 = vmatprep.subr.mxu0 0.0
      %1230 = vmatpush1.msra.mxu0 0.0
      %1231 = vmatprep.subr.mxu0 0.0
      %1232 = vmatpush1.msra.mxu0 0.0
      %1233 = vmatprep.subr.mxu0 0.0
      %1234 = vmatpush1.msra.mxu0 0.0
      %1235 = vmatprep.subr.mxu0 0.0
      %1236 = vmatpush1.msra.mxu0 0.0
      %1237 = vmatprep.subr.mxu0 0.0
      %1238 = vmatpush1.msra.mxu0 0.0
      %1239 = vmatprep.subr.mxu0 0.0
      %1240 = vmatpush1.msra.mxu0 0.0
      %1241 = vmatprep.subr.mxu0 0.0
      %1242 = vmatpush1.msra.mxu0 0.0
      %1243 = vmatprep.subr.mxu0 0.0
      %1244 = vmatpush1.msra.mxu0 0.0
      %1245 = vmatprep.subr.mxu0 0.0
      %1246 = vmatpush1.msra.mxu0 0.0
      %1247 = vmatprep.subr.mxu0 0.0
      %1248 = vmatpush1.msra.mxu0 0.0
      %1249 = vmatprep.subr.mxu0 0.0
      %1250 = vmatpush1.msra.mxu0 0.0
      %1251 = vmatprep.subr.mxu0 0.0
      %1252 = vmatpush1.msra.mxu0 0.0
      %1253 = vmatprep.subr.mxu0 0.0
      %1254 = vmatpush1.msra.mxu0 0.0
      %1255 = vmatprep.subr.mxu0 0.0
      %1256 = vmatpush1.msra.mxu0 0.0
      %1257 = vmatprep.subr.mxu0 0.0
      %1258 = vmatpush1.msra.mxu0 0.0
      %1259 = vmatprep.subr.mxu0 0.0
      %1260 = vmatpush1.msra.mxu0 0.0
      %1261 = vmatprep.subr.mxu0 0.0
      %1262 = vmatpush1.msra.mxu0 0.0
      %1263 = vmatprep.subr.mxu0 0.0
      %1264 = vmatpush1.msra.mxu0 0.0
      %1265 = vmatprep.subr.mxu0 0.0
      %1266 = vmatpush1.msra.mxu0 0.0
      %1267 = vmatprep.subr.mxu0 0.0
      %1268 = vmatpush1.msra.mxu0 0.0
      %1269 = vmatprep.subr.mxu0 0.0
      %1270 = vmatpush1.msra.mxu0 0.0
      %1271 = vmatprep.subr.mxu0 0.0
      %1272 = vmatpush1.msra.mxu0 0.0
      %1273 = vmatprep.subr.mxu0 0.0
      %1274 = vmatpush1.msra.mxu0 0.0
      %1275 = vmatprep.mubr.f32.mxu0 0.0
      %1276 = vmatmul.mubr.f32.gmra.mrb[0].mxu0 %v1200
      %v1277 = vpop.f32.mrb[0].mxu0
      %v1278 = vadd.f32 %v1182, %v1277
      %v1279 = vpop.f32.mrb[0].mxu0
      %v1280 = vadd.f32 %v1182, %v1279
      %1281 = vmatprep.mubr.f32.mxu0 0.0
      %1282 = vmatmul.mubr.f32.gmra.mrb[0].mxu0 %v1203
      %v1283 = vpop.f32.mrb[0].mxu0
      %v1284 = vadd.f32 %v1187, %v1283
      %v1285 = vpop.f32.mrb[0].mxu0
      %v1286 = vadd.f32 %v1187, %v1285
      %1287 = vmatprep.mubr.f32.mxu0 0.0
      %1288 = vmatmul.mubr.f32.gmra.mrb[0].mxu0 %v1206
      %v1289 = vpop.f32.mrb[0].mxu0
      %v1290 = vadd.f32 %v1192, %v1289
      %v1291 = vpop.f32.mrb[0].mxu0
      %v1292 = vadd.f32 %v1192, %v1291
      %1293 = vmatprep.mubr.f32.mxu0 0.0
      %1294 = vmatmul.mubr.f32.gmra.mrb[0].mxu0 %v1209
      %v1295 = vpop.f32.mrb[0].mxu0
      %v1296 = vadd.f32 %v1197, %v1295
      %v1297 = vpop.f32.mrb[0].mxu0
      %v1298 = vadd.f32 %v1197, %v1297
      %1299 = vdwg.mxu0
      %v1300 = vmax.f32 %v1278, 0.0
      %v1301 = vmax.f32 %v1280, 0.0
      %v1302 = vmax.f32 %v1284, 0.0
      %v1303 = vmax.f32 %v1286, 0.0
      %v1304 = vmax.f32 %v1290, 0.0
      %v1305 = vmax.f32 %v1292, 0.0
      %v1306 = vmax.f32 %v1296, 0.0
      %v1307 = vmax.f32 %v1298, 0.0
      %v1308 = vld [vmem:[%s8] sm:$0xff]
      %v1309 = vld [vmem:[%s8 + $0x8] sm:$0xff]
      %v1310 = vld [vmem:[%s8 + $0x10] sm:$0xff]
      %v1311 = vld [vmem:[%s8 + $0x18] sm:$0xff]
      %s1312 = scalar_lea.vmem %s9, 160
      %v1313 = vld [vmem:[%s1312] sm:$0xff]
      %v1314 = vld [vmem:[%s1312 + $0x8] sm:$0xff]
      %v1315 = vld [vmem:[%s1312 + $0x10] sm:$0xff]
      %v1316 = vld [vmem:[%s1312 + $0x18] sm:$0xff]
      %1318 = vset.pattern.permute.xlu0 0
      %1319 = vperm.xlu0 %1318, %v1313
      %v1320 = vpop.permute.xlu0 %1319
      %1323 = vset.pattern.permute.xlu0 0
      %1324 = vperm.xlu0 %1323, %v1314
      %v1325 = vpop.permute.xlu0 %1324
      %1328 = vset.pattern.permute.xlu0 0
      %1329 = vperm.xlu0 %1328, %v1315
      %v1330 = vpop.permute.xlu0 %1329
      %1333 = vset.pattern.permute.xlu0 0
      %1334 = vperm.xlu0 %1333, %v1316
      %v1335 = vpop.permute.xlu0 %1334
      %v1338 = vsel %vm812, %v1308, 0
      %v1341 = vsel %vm812, %v1309, 0
      %v1344 = vsel %vm812, %v1310, 0
      %v1347 = vsel %vm812, %v1311, 0
      %1349 = vmatprep.subr.mxu0 %v1301
      %1350 = vmatpush1.msra.mxu0 %v1300
      %1351 = vmatprep.subr.mxu0 %v1303
      %1352 = vmatpush1.msra.mxu0 %v1302
      %1353 = vmatprep.subr.mxu0 %v1305
      %1354 = vmatpush1.msra.mxu0 %v1304
      %1355 = vmatprep.subr.mxu0 %v1307
      %1356 = vmatpush1.msra.mxu0 %v1306
      %1357 = vmatprep.subr.mxu0 0.0
      %1358 = vmatpush1.msra.mxu0 0.0
      %1359 = vmatprep.subr.mxu0 0.0
      %1360 = vmatpush1.msra.mxu0 0.0
      %1361 = vmatprep.subr.mxu0 0.0
      %1362 = vmatpush1.msra.mxu0 0.0
      %1363 = vmatprep.subr.mxu0 0.0
      %1364 = vmatpush1.msra.mxu0 0.0
      %1365 = vmatprep.subr.mxu0 0.0
      %1366 = vmatpush1.msra.mxu0 0.0
      %1367 = vmatprep.subr.mxu0 0.0
      %1368 = vmatpush1.msra.mxu0 0.0
      %1369 = vmatprep.subr.mxu0 0.0
      %1370 = vmatpush1.msra.mxu0 0.0
      %1371 = vmatprep.subr.mxu0 0.0
      %1372 = vmatpush1.msra.mxu0 0.0
      %1373 = vmatprep.subr.mxu0 0.0
      %1374 = vmatpush1.msra.mxu0 0.0
      %1375 = vmatprep.subr.mxu0 0.0
      %1376 = vmatpush1.msra.mxu0 0.0
      %1377 = vmatprep.subr.mxu0 0.0
      %1378 = vmatpush1.msra.mxu0 0.0
      %1379 = vmatprep.subr.mxu0 0.0
      %1380 = vmatpush1.msra.mxu0 0.0
      %1381 = vmatprep.subr.mxu0 0.0
      %1382 = vmatpush1.msra.mxu0 0.0
      %1383 = vmatprep.subr.mxu0 0.0
      %1384 = vmatpush1.msra.mxu0 0.0
      %1385 = vmatprep.subr.mxu0 0.0
      %1386 = vmatpush1.msra.mxu0 0.0
      %1387 = vmatprep.subr.mxu0 0.0
      %1388 = vmatpush1.msra.mxu0 0.0
      %1389 = vmatprep.subr.mxu0 0.0
      %1390 = vmatpush1.msra.mxu0 0.0
      %1391 = vmatprep.subr.mxu0 0.0
      %1392 = vmatpush1.msra.mxu0 0.0
      %1393 = vmatprep.subr.mxu0 0.0
      %1394 = vmatpush1.msra.mxu0 0.0
      %1395 = vmatprep.subr.mxu0 0.0
      %1396 = vmatpush1.msra.mxu0 0.0
      %1397 = vmatprep.subr.mxu0 0.0
      %1398 = vmatpush1.msra.mxu0 0.0
      %1399 = vmatprep.subr.mxu0 0.0
      %1400 = vmatpush1.msra.mxu0 0.0
      %1401 = vmatprep.subr.mxu0 0.0
      %1402 = vmatpush1.msra.mxu0 0.0
      %1403 = vmatprep.subr.mxu0 0.0
      %1404 = vmatpush1.msra.mxu0 0.0
      %1405 = vmatprep.subr.mxu0 0.0
      %1406 = vmatpush1.msra.mxu0 0.0
      %1407 = vmatprep.subr.mxu0 0.0
      %1408 = vmatpush1.msra.mxu0 0.0
      %1409 = vmatprep.subr.mxu0 0.0
      %1410 = vmatpush1.msra.mxu0 0.0
      %1411 = vmatprep.subr.mxu0 0.0
      %1412 = vmatpush1.msra.mxu0 0.0
      %1413 = vmatprep.mubr.f32.mxu0 0.0
      %1414 = vmatmul.mubr.f32.gmra.mrb[0].mxu0 %v1338
      %v1415 = vpop.f32.mrb[0].mxu0
      %v1416 = vadd.f32 %v1320, %v1415
      %v1417 = vpop.f32.mrb[0].mxu0
      %v1418 = vadd.f32 %v1320, %v1417
      %1419 = vmatprep.mubr.f32.mxu0 0.0
      %1420 = vmatmul.mubr.f32.gmra.mrb[0].mxu0 %v1341
      %v1421 = vpop.f32.mrb[0].mxu0
      %v1422 = vadd.f32 %v1325, %v1421
      %v1423 = vpop.f32.mrb[0].mxu0
      %v1424 = vadd.f32 %v1325, %v1423
      %1425 = vmatprep.mubr.f32.mxu0 0.0
      %1426 = vmatmul.mubr.f32.gmra.mrb[0].mxu0 %v1344
      %v1427 = vpop.f32.mrb[0].mxu0
      %v1428 = vadd.f32 %v1330, %v1427
      %v1429 = vpop.f32.mrb[0].mxu0
      %v1430 = vadd.f32 %v1330, %v1429
      %1431 = vmatprep.mubr.f32.mxu0 0.0
      %1432 = vmatmul.mubr.f32.gmra.mrb[0].mxu0 %v1347
      %v1433 = vpop.f32.mrb[0].mxu0
      %v1434 = vadd.f32 %v1335, %v1433
      %v1435 = vpop.f32.mrb[0].mxu0
      %v1436 = vadd.f32 %v1335, %v1435
      %1437 = vdwg.mxu0
      %s1438 = scalar_lea.vmem %s9, 192
      %v1439 = vld [vmem:[%s1438] sm:$0xff]
      %v1440 = vld [vmem:[%s1438 + $0x8] sm:$0xff]
      %v1441 = vld [vmem:[%s1438 + $0x10] sm:$0xff]
      %v1442 = vld [vmem:[%s1438 + $0x18] sm:$0xff]
      %s1443 = scalar_lea.vmem %s9, 224
      %v1444 = vld [vmem:[%s1443] sm:$0xff]
      %v1445 = vld [vmem:[%s1443 + $0x8] sm:$0xff]
      %v1446 = vld [vmem:[%s1443 + $0x10] sm:$0xff]
      %v1447 = vld [vmem:[%s1443 + $0x18] sm:$0xff]
      %v1448 = vadd.f32 %v1416, %v1422
      %v1449 = vadd.f32 %v1448, %v1428
      %v1450 = vadd.f32 %v1449, %v1434
      %v1451 = vrot.slane %v1450, 4
      %v1452 = vadd.f32 %v1450, %v1451
      %v1453 = vrot.slane %v1452, 2
      %v1454 = vadd.f32 %v1452, %v1453
      %v1455 = vrot.slane %v1454, 1
      %v1456 = vadd.f32 %v1454, %v1455
      %v1457 = vadd.f32 %v1418, %v1424
      %v1458 = vadd.f32 %v1457, %v1430
      %v1459 = vadd.f32 %v1458, %v1436
      %v1460 = vrot.slane %v1459, 4
      %v1461 = vadd.f32 %v1459, %v1460
      %v1462 = vrot.slane %v1461, 2
      %v1463 = vadd.f32 %v1461, %v1462
      %v1464 = vrot.slane %v1463, 1
      %v1465 = vadd.f32 %v1463, %v1464
      %v1466 = vmul.f32 %v1456, %v1063
      %v1467 = vmul.f32 %v1465, %v1063
      %v1468 = vsub.f32 %v1416, %v1466
      %v1469 = vsub.f32 %v1418, %v1467
      %v1470 = vsub.f32 %v1422, %v1466
      %v1471 = vsub.f32 %v1424, %v1467
      %v1472 = vsub.f32 %v1428, %v1466
      %v1473 = vsub.f32 %v1430, %v1467
      %v1474 = vsub.f32 %v1434, %v1466
      %v1475 = vsub.f32 %v1436, %v1467
      %v1476 = vmul.f32 %v1468, %v1468
      %v1477 = vmul.f32 %v1469, %v1469
      %v1478 = vmul.f32 %v1470, %v1470
      %v1479 = vmul.f32 %v1471, %v1471
      %v1480 = vmul.f32 %v1472, %v1472
      %v1481 = vmul.f32 %v1473, %v1473
      %v1482 = vmul.f32 %v1474, %v1474
      %v1483 = vmul.f32 %v1475, %v1475
      %v1484 = vadd.f32 %v1476, %v1478
      %v1485 = vadd.f32 %v1484, %v1480
      %v1486 = vadd.f32 %v1485, %v1482
      %v1487 = vrot.slane %v1486, 4
      %v1488 = vadd.f32 %v1486, %v1487
      %v1489 = vrot.slane %v1488, 2
      %v1490 = vadd.f32 %v1488, %v1489
      %v1491 = vrot.slane %v1490, 1
      %v1492 = vadd.f32 %v1490, %v1491
      %v1493 = vadd.f32 %v1477, %v1479
      %v1494 = vadd.f32 %v1493, %v1481
      %v1495 = vadd.f32 %v1494, %v1483
      %v1496 = vrot.slane %v1495, 4
      %v1497 = vadd.f32 %v1495, %v1496
      %v1498 = vrot.slane %v1497, 2
      %v1499 = vadd.f32 %v1497, %v1498
      %v1500 = vrot.slane %v1499, 1
      %v1501 = vadd.f32 %v1499, %v1500
      %v1502 = vmul.f32 %v1492, %v1063
      %v1503 = vmul.f32 %v1501, %v1063
      %v1504 = vadd.f32 %v1502, 1e-05
      %v1505 = vadd.f32 %v1503, 1e-05
      %v1506 = vrsqrt.pop %v1504
      %v1507 = vrsqrt.pop %v1505
      %v1508 = vmul.f32 %v1468, %v1506
      %v1509 = vmul.f32 %v1469, %v1507
      %v1510 = vmul.f32 %v1470, %v1506
      %v1511 = vmul.f32 %v1471, %v1507
      %v1512 = vmul.f32 %v1472, %v1506
      %v1513 = vmul.f32 %v1473, %v1507
      %v1514 = vmul.f32 %v1474, %v1506
      %v1515 = vmul.f32 %v1475, %v1507
      %1517 = vset.pattern.permute.xlu0 0
      %1518 = vperm.xlu0 %1517, %v1439
      %v1519 = vpop.permute.xlu0 %1518
      %1522 = vset.pattern.permute.xlu0 0
      %1523 = vperm.xlu0 %1522, %v1440
      %v1524 = vpop.permute.xlu0 %1523
      %1527 = vset.pattern.permute.xlu0 0
      %1528 = vperm.xlu0 %1527, %v1441
      %v1529 = vpop.permute.xlu0 %1528
      %1532 = vset.pattern.permute.xlu0 0
      %1533 = vperm.xlu0 %1532, %v1442
      %v1534 = vpop.permute.xlu0 %1533
      %v1536 = vmul.f32 %v1508, %v1519
      %v1537 = vmul.f32 %v1509, %v1519
      %v1538 = vmul.f32 %v1510, %v1524
      %v1539 = vmul.f32 %v1511, %v1524
      %v1540 = vmul.f32 %v1512, %v1529
      %v1541 = vmul.f32 %v1513, %v1529
      %v1542 = vmul.f32 %v1514, %v1534
      %v1543 = vmul.f32 %v1515, %v1534
      %1545 = vset.pattern.permute.xlu0 0
      %1546 = vperm.xlu0 %1545, %v1444
      %v1547 = vpop.permute.xlu0 %1546
      %1550 = vset.pattern.permute.xlu0 0
      %1551 = vperm.xlu0 %1550, %v1445
      %v1552 = vpop.permute.xlu0 %1551
      %1555 = vset.pattern.permute.xlu0 0
      %1556 = vperm.xlu0 %1555, %v1446
      %v1557 = vpop.permute.xlu0 %1556
      %1560 = vset.pattern.permute.xlu0 0
      %1561 = vperm.xlu0 %1560, %v1447
      %v1562 = vpop.permute.xlu0 %1561
      %v1564 = vadd.f32 %v1536, %v1547
      %v1565 = vadd.f32 %v1537, %v1547
      %v1566 = vadd.f32 %v1538, %v1552
      %v1567 = vadd.f32 %v1539, %v1552
      %v1568 = vadd.f32 %v1540, %v1557
      %v1569 = vadd.f32 %v1541, %v1557
      %v1570 = vadd.f32 %v1542, %v1562
      %v1571 = vadd.f32 %v1543, %v1562
      %v1572 = vld [vmem:[%s10] sm:$0xff]
      %v1573 = vld [vmem:[%s10 + $0x8] sm:$0xff]
      %v1574 = vld [vmem:[%s10 + $0x10] sm:$0xff]
      %v1575 = vld [vmem:[%s10 + $0x18] sm:$0xff]
      %v1576 = vld [vmem:[%s10 + $0x20] sm:$0xff]
      %v1577 = vld [vmem:[%s10 + $0x28] sm:$0xff]
      %v1578 = vld [vmem:[%s10 + $0x30] sm:$0xff]
      %v1579 = vld [vmem:[%s10 + $0x38] sm:$0xff]
      %v1580 = vld [vmem:[%s10 + $0x40] sm:$0xff]
      %v1581 = vld [vmem:[%s10 + $0x48] sm:$0xff]
      %v1582 = vld [vmem:[%s10 + $0x50] sm:$0xff]
      %v1583 = vld [vmem:[%s10 + $0x58] sm:$0xff]
      %v1585 = vsel %vm812, %v1572, 0
      %v1588 = vsel %vm812, %v1573, 0
      %v1591 = vsel %vm812, %v1574, 0
      %v1594 = vsel %vm812, %v1575, 0
      %v1597 = vsel %vm812, %v1576, 0
      %v1600 = vsel %vm812, %v1577, 0
      %v1603 = vsel %vm812, %v1578, 0
      %v1606 = vsel %vm812, %v1579, 0
      %v1609 = vsel %vm812, %v1580, 0
      %v1612 = vsel %vm812, %v1581, 0
      %v1615 = vsel %vm812, %v1582, 0
      %v1618 = vsel %vm812, %v1583, 0
      %1620 = vmatprep.subr.mxu0 %v1565
      %1621 = vmatpush1.msra.mxu0 %v1564
      %1622 = vmatprep.subr.mxu0 %v1567
      %1623 = vmatpush1.msra.mxu0 %v1566
      %1624 = vmatprep.subr.mxu0 %v1569
      %1625 = vmatpush1.msra.mxu0 %v1568
      %1626 = vmatprep.subr.mxu0 %v1571
      %1627 = vmatpush1.msra.mxu0 %v1570
      %1628 = vmatprep.subr.mxu0 0.0
      %1629 = vmatpush1.msra.mxu0 0.0
      %1630 = vmatprep.subr.mxu0 0.0
      %1631 = vmatpush1.msra.mxu0 0.0
      %1632 = vmatprep.subr.mxu0 0.0
      %1633 = vmatpush1.msra.mxu0 0.0
      %1634 = vmatprep.subr.mxu0 0.0
      %1635 = vmatpush1.msra.mxu0 0.0
      %1636 = vmatprep.subr.mxu0 0.0
      %1637 = vmatpush1.msra.mxu0 0.0
      %1638 = vmatprep.subr.mxu0 0.0
      %1639 = vmatpush1.msra.mxu0 0.0
      %1640 = vmatprep.subr.mxu0 0.0
      %1641 = vmatpush1.msra.mxu0 0.0
      %1642 = vmatprep.subr.mxu0 0.0
      %1643 = vmatpush1.msra.mxu0 0.0
      %1644 = vmatprep.subr.mxu0 0.0
      %1645 = vmatpush1.msra.mxu0 0.0
      %1646 = vmatprep.subr.mxu0 0.0
      %1647 = vmatpush1.msra.mxu0 0.0
      %1648 = vmatprep.subr.mxu0 0.0
      %1649 = vmatpush1.msra.mxu0 0.0
      %1650 = vmatprep.subr.mxu0 0.0
      %1651 = vmatpush1.msra.mxu0 0.0
      %1652 = vmatprep.subr.mxu0 0.0
      %1653 = vmatpush1.msra.mxu0 0.0
      %1654 = vmatprep.subr.mxu0 0.0
      %1655 = vmatpush1.msra.mxu0 0.0
      %1656 = vmatprep.subr.mxu0 0.0
      %1657 = vmatpush1.msra.mxu0 0.0
      %1658 = vmatprep.subr.mxu0 0.0
      %1659 = vmatpush1.msra.mxu0 0.0
      %1660 = vmatprep.subr.mxu0 0.0
      %1661 = vmatpush1.msra.mxu0 0.0
      %1662 = vmatprep.subr.mxu0 0.0
      %1663 = vmatpush1.msra.mxu0 0.0
      %1664 = vmatprep.subr.mxu0 0.0
      %1665 = vmatpush1.msra.mxu0 0.0
      %1666 = vmatprep.subr.mxu0 0.0
      %1667 = vmatpush1.msra.mxu0 0.0
      %1668 = vmatprep.subr.mxu0 0.0
      %1669 = vmatpush1.msra.mxu0 0.0
      %1670 = vmatprep.subr.mxu0 0.0
      %1671 = vmatpush1.msra.mxu0 0.0
      %1672 = vmatprep.subr.mxu0 0.0
      %1673 = vmatpush1.msra.mxu0 0.0
      %1674 = vmatprep.subr.mxu0 0.0
      %1675 = vmatpush1.msra.mxu0 0.0
      %1676 = vmatprep.subr.mxu0 0.0
      %1677 = vmatpush1.msra.mxu0 0.0
      %1678 = vmatprep.subr.mxu0 0.0
      %1679 = vmatpush1.msra.mxu0 0.0
      %1680 = vmatprep.subr.mxu0 0.0
      %1681 = vmatpush1.msra.mxu0 0.0
      %1682 = vmatprep.subr.mxu0 0.0
      %1683 = vmatpush1.msra.mxu0 0.0
      %1684 = vmatprep.mubr.f32.mxu0 0.0
      %1685 = vmatmul.mubr.f32.gmra.mrb[0].mxu0 %v1585
      %v1686 = vpop.f32.mrb[0].mxu0
      %v1687 = vadd.f32 0.0, %v1686
      %v1688 = vpop.f32.mrb[0].mxu0
      %v1689 = vadd.f32 0.0, %v1688
      %1690 = vmatprep.mubr.f32.mxu0 0.0
      %1691 = vmatmul.mubr.f32.gmra.mrb[0].mxu0 %v1588
      %v1692 = vpop.f32.mrb[0].mxu0
      %v1693 = vadd.f32 0.0, %v1692
      %v1694 = vpop.f32.mrb[0].mxu0
      %v1695 = vadd.f32 0.0, %v1694
      %1696 = vmatprep.mubr.f32.mxu0 0.0
      %1697 = vmatmul.mubr.f32.gmra.mrb[0].mxu0 %v1591
      %v1698 = vpop.f32.mrb[0].mxu0
      %v1699 = vadd.f32 0.0, %v1698
      %v1700 = vpop.f32.mrb[0].mxu0
      %v1701 = vadd.f32 0.0, %v1700
      %1702 = vmatprep.mubr.f32.mxu0 0.0
      %1703 = vmatmul.mubr.f32.gmra.mrb[0].mxu0 %v1594
      %v1704 = vpop.f32.mrb[0].mxu0
      %v1705 = vadd.f32 0.0, %v1704
      %v1706 = vpop.f32.mrb[0].mxu0
      %v1707 = vadd.f32 0.0, %v1706
      %1708 = vmatprep.mubr.f32.mxu0 0.0
      %1709 = vmatmul.mubr.f32.gmra.mrb[0].mxu0 %v1597
      %v1710 = vpop.f32.mrb[0].mxu0
      %v1711 = vadd.f32 0.0, %v1710
      %v1712 = vpop.f32.mrb[0].mxu0
      %v1713 = vadd.f32 0.0, %v1712
      %1714 = vmatprep.mubr.f32.mxu0 0.0
      %1715 = vmatmul.mubr.f32.gmra.mrb[0].mxu0 %v1600
      %v1716 = vpop.f32.mrb[0].mxu0
      %v1717 = vadd.f32 0.0, %v1716
      %v1718 = vpop.f32.mrb[0].mxu0
      %v1719 = vadd.f32 0.0, %v1718
      %1720 = vmatprep.mubr.f32.mxu0 0.0
      %1721 = vmatmul.mubr.f32.gmra.mrb[0].mxu0 %v1603
      %v1722 = vpop.f32.mrb[0].mxu0
      %v1723 = vadd.f32 0.0, %v1722
      %v1724 = vpop.f32.mrb[0].mxu0
      %v1725 = vadd.f32 0.0, %v1724
      %1726 = vmatprep.mubr.f32.mxu0 0.0
      %1727 = vmatmul.mubr.f32.gmra.mrb[0].mxu0 %v1606
      %v1728 = vpop.f32.mrb[0].mxu0
      %v1729 = vadd.f32 0.0, %v1728
      %v1730 = vpop.f32.mrb[0].mxu0
      %v1731 = vadd.f32 0.0, %v1730
      %1732 = vmatprep.mubr.f32.mxu0 0.0
      %1733 = vmatmul.mubr.f32.gmra.mrb[0].mxu0 %v1609
      %v1734 = vpop.f32.mrb[0].mxu0
      %v1735 = vadd.f32 0.0, %v1734
      %v1736 = vpop.f32.mrb[0].mxu0
      %v1737 = vadd.f32 0.0, %v1736
      %1738 = vmatprep.mubr.f32.mxu0 0.0
      %1739 = vmatmul.mubr.f32.gmra.mrb[0].mxu0 %v1612
      %v1740 = vpop.f32.mrb[0].mxu0
      %v1741 = vadd.f32 0.0, %v1740
      %v1742 = vpop.f32.mrb[0].mxu0
      %v1743 = vadd.f32 0.0, %v1742
      %1744 = vmatprep.mubr.f32.mxu0 0.0
      %1745 = vmatmul.mubr.f32.gmra.mrb[0].mxu0 %v1615
      %v1746 = vpop.f32.mrb[0].mxu0
      %v1747 = vadd.f32 0.0, %v1746
      %v1748 = vpop.f32.mrb[0].mxu0
      %v1749 = vadd.f32 0.0, %v1748
      %1750 = vmatprep.mubr.f32.mxu0 0.0
      %1751 = vmatmul.mubr.f32.gmra.mrb[0].mxu0 %v1618
      %v1752 = vpop.f32.mrb[0].mxu0
      %v1753 = vadd.f32 0.0, %v1752
      %v1754 = vpop.f32.mrb[0].mxu0
      %v1755 = vadd.f32 0.0, %v1754
      %1756 = vdwg.mxu0
      %s1757 = scalar_lea.vmem %s9, 256
      %v1758 = vld [vmem:[%s1757] sm:$0xff]
      %v1759 = vld [vmem:[%s1757 + $0x8] sm:$0xff]
      %v1760 = vld [vmem:[%s1757 + $0x10] sm:$0xff]
      %v1761 = vld [vmem:[%s1757 + $0x18] sm:$0xff]
      %1763 = vset.pattern.permute.xlu0 0
      %1764 = vperm.xlu0 %1763, %v1758
      %v1765 = vpop.permute.xlu0 %1764
      %1768 = vset.pattern.permute.xlu0 0
      %1769 = vperm.xlu0 %1768, %v1759
      %v1770 = vpop.permute.xlu0 %1769
      %1773 = vset.pattern.permute.xlu0 0
      %1774 = vperm.xlu0 %1773, %v1760
      %v1775 = vpop.permute.xlu0 %1774
      %1778 = vset.pattern.permute.xlu0 0
      %1779 = vperm.xlu0 %1778, %v1761
      %v1780 = vpop.permute.xlu0 %1779
      %v1782 = vadd.f32 %v1687, %v1765
      %v1783 = vadd.f32 %v1689, %v1765
      %v1784 = vadd.f32 %v1693, %v1770
      %v1785 = vadd.f32 %v1695, %v1770
      %v1786 = vadd.f32 %v1699, %v1775
      %v1787 = vadd.f32 %v1701, %v1775
      %v1788 = vadd.f32 %v1705, %v1780
      %v1789 = vadd.f32 %v1707, %v1780
      %s1790 = scalar_lea.vmem %s9, 288
      %v1791 = vld [vmem:[%s1790] sm:$0xff]
      %v1792 = vld [vmem:[%s1790 + $0x8] sm:$0xff]
      %v1793 = vld [vmem:[%s1790 + $0x10] sm:$0xff]
      %v1794 = vld [vmem:[%s1790 + $0x18] sm:$0xff]
      %1796 = vset.pattern.permute.xlu0 0
      %1797 = vperm.xlu0 %1796, %v1791
      %v1798 = vpop.permute.xlu0 %1797
      %1801 = vset.pattern.permute.xlu0 0
      %1802 = vperm.xlu0 %1801, %v1792
      %v1803 = vpop.permute.xlu0 %1802
      %1806 = vset.pattern.permute.xlu0 0
      %1807 = vperm.xlu0 %1806, %v1793
      %v1808 = vpop.permute.xlu0 %1807
      %1811 = vset.pattern.permute.xlu0 0
      %1812 = vperm.xlu0 %1811, %v1794
      %v1813 = vpop.permute.xlu0 %1812
      %v1815 = vadd.f32 %v1711, %v1798
      %v1816 = vadd.f32 %v1713, %v1798
      %v1817 = vadd.f32 %v1717, %v1803
      %v1818 = vadd.f32 %v1719, %v1803
      %v1819 = vadd.f32 %v1723, %v1808
      %v1820 = vadd.f32 %v1725, %v1808
      %v1821 = vadd.f32 %v1729, %v1813
      %v1822 = vadd.f32 %v1731, %v1813
      %s1823 = scalar_lea.vmem %s9, 320
      %v1824 = vld [vmem:[%s1823] sm:$0xff]
      %v1825 = vld [vmem:[%s1823 + $0x8] sm:$0xff]
      %v1826 = vld [vmem:[%s1823 + $0x10] sm:$0xff]
      %v1827 = vld [vmem:[%s1823 + $0x18] sm:$0xff]
      %1829 = vset.pattern.permute.xlu0 0
      %1830 = vperm.xlu0 %1829, %v1824
      %v1831 = vpop.permute.xlu0 %1830
      %1834 = vset.pattern.permute.xlu0 0
      %1835 = vperm.xlu0 %1834, %v1825
      %v1836 = vpop.permute.xlu0 %1835
      %1839 = vset.pattern.permute.xlu0 0
      %1840 = vperm.xlu0 %1839, %v1826
      %v1841 = vpop.permute.xlu0 %1840
      %1844 = vset.pattern.permute.xlu0 0
      %1845 = vperm.xlu0 %1844, %v1827
      %v1846 = vpop.permute.xlu0 %1845
      %v1848 = vadd.f32 %v1735, %v1831
      %v1849 = vadd.f32 %v1737, %v1831
      %v1850 = vadd.f32 %v1741, %v1836
      %v1851 = vadd.f32 %v1743, %v1836
      %v1852 = vadd.f32 %v1747, %v1841
      %v1853 = vadd.f32 %v1749, %v1841
      %v1854 = vadd.f32 %v1753, %v1846
      %v1855 = vadd.f32 %v1755, %v1846
      %p1856 = scmp.eq.s32.totalorder %s33, 0
      // Predicated region
      $region81: #{forward.3} parent=79 // pred_check
        %p1857 = pneg %p1856
      $region82: #{forward.3} parent=79 // pred_check_branch
        %1859 = sbr.rel (%p1857) target = $region84
      $region83: #{forward.3} parent=79 // pred_region
        %v1860 = vld [vmem:[%s621] sm:$0xf]
        %vm1861 = vcmask 257024
        %1862 = vst.msk [vmem:[#allocation2] sm:$0xf] %vm1861, %v1860
        %v1863 = vld [vmem:[%s624] sm:$0x1]
        %vm1864 = vcmask 253952
        %1865 = vst.msk [vmem:[#allocation3] sm:$0x1] %vm1864, %v1863
      $region84: #{forward.3} parent=79 // pred_fallthru
        _
      %v1866 = vld [vmem:[#allocation2] sm:$0xf]
      %v1867 = vld [vmem:[#allocation3] sm:$0x1]
      %v1868 = vld [vmem:[%s14] sm:$0x1]
      %v1869 = vld [vmem:[%s14 + $0x1] sm:$0x1]
      %v1870 = vld [vmem:[%s14 + $0x2] sm:$0x1]
      %v1871 = vld [vmem:[%s14 + $0x3] sm:$0x1]
      %v1872 = vld [vmem:[%s14 + $0x4] sm:$0x1]
      %v1873 = vld [vmem:[%s14 + $0x5] sm:$0x1]
      %v1874 = vld [vmem:[%s14 + $0x6] sm:$0x1]
      %v1875 = vld [vmem:[%s14 + $0x7] sm:$0x1]
      %v1876 = vld [vmem:[%s14 + $0x8] sm:$0x1]
      %v1877 = vld [vmem:[%s14 + $0x9] sm:$0x1]
      %v1878 = vld [vmem:[%s14 + $0xa] sm:$0x1]
      %v1879 = vld [vmem:[%s14 + $0xb] sm:$0x1]
      %v1880 = vld [vmem:[%s14 + $0xc] sm:$0x1]
      %v1881 = vld [vmem:[%s14 + $0xd] sm:$0x1]
      %v1882 = vld [vmem:[%s13] sm:$0x1]
      %v1883 = vld [vmem:[%s13 + $0x1] sm:$0x1]
      %v1884 = vld [vmem:[%s13 + $0x2] sm:$0x1]
      %v1885 = vld [vmem:[%s13 + $0x3] sm:$0x1]
      %vm1886 = vcmask 257024
      %v1887 = vsel %vm1886, %v1866, 0.0
      %1888 = vadd.xlane.f32.xlu0 %v1887
      %v1889 = vpop.xlane.xlu0 %1888
      %v1890 = vmul.f32 %v1889, %v1063
      %v1891 = vsub.f32 %v1866, %v1890
      %v1892 = vmul.f32 %v1891, %v1891
      %v1893 = vsel %vm1886, %v1892, 0.0
      %1894 = vadd.xlane.f32.xlu0 %v1893
      %v1895 = vpop.xlane.xlu0 %1894
      %v1896 = vmul.f32 %v1895, %v1063
      %v1897 = vadd.f32 %v1896, 1e-05
      %v1898 = vrsqrt.pop %v1897
      %v1899 = vmul.f32 %v1891, %v1898
      %v1900 = vlaneseq
      %v1901 = vshrl.u32 %v1900, 7
      %v1902 = vsub.s32 0, %v1901
      %v1903 = vrot.slane %v1874, %v1902
      %v1904 = vmul.f32 %v1899, %v1903
      %v1905 = vlaneseq
      %v1906 = vshrl.u32 %v1905, 7
      %v1907 = vsub.s32 0, %v1906
      %v1908 = vrot.slane %v1875, %v1907
      %v1909 = vadd.f32 %v1904, %v1908
      %vm1910 = vcmask 253952
      %v1911 = vsel %vm1910, %v1867, 0.0
      %1912 = vadd.xlane.f32.xlu0 %v1911
      %v1913 = vpop.xlane.xlu0 %1912
      %v1914 = vmul.f32 %v1913, %v1063
      %v1915 = vsub.f32 %v1867, %v1914
      %v1916 = vmul.f32 %v1915, %v1915
      %v1917 = vsel %vm1910, %v1916, 0.0
      %1918 = vadd.xlane.f32.xlu0 %v1917
      %v1919 = vpop.xlane.xlu0 %1918
      %v1920 = vmul.f32 %v1919, %v1063
      %v1921 = vadd.f32 %v1920, 1e-05
      %v1922 = vrsqrt.pop %v1921
      %v1923 = vmul.f32 %v1915, %v1922
      %v1924 = vmul.f32 %v1923, %v1876
      %v1925 = vadd.f32 %v1924, %v1877
      %v1926 = vld [vmem:[%s11] sm:$0xff]
      %v1927 = vld [vmem:[%s11 + $0x8] sm:$0xff]
      %v1928 = vld [vmem:[%s11 + $0x10] sm:$0xff]
      %v1929 = vld [vmem:[%s11 + $0x18] sm:$0xff]
      %v1930 = vlaneseq
      %v1931 = vshrl.u32 %v1930, 7
      %v1932 = vsub.s32 0, %v1931
      %v1933 = vrot.slane %v1868, %v1932
      %v1935 = vsel %vm812, %v1909, 0
      %1937 = vmatprep.subr.mxu0 0.0
      %1938 = vmatpush1.msra.mxu0 %v1926
      %1939 = vmatprep.subr.mxu0 0.0
      %1940 = vmatpush1.msra.mxu0 %v1927
      %1941 = vmatprep.subr.mxu0 0.0
      %1942 = vmatpush1.msra.mxu0 %v1928
      %1943 = vmatprep.subr.mxu0 0.0
      %1944 = vmatpush1.msra.mxu0 %v1929
      %1945 = vmatprep.subr.mxu0 0.0
      %1946 = vmatpush1.msra.mxu0 0.0
      %1947 = vmatprep.subr.mxu0 0.0
      %1948 = vmatpush1.msra.mxu0 0.0
      %1949 = vmatprep.subr.mxu0 0.0
      %1950 = vmatpush1.msra.mxu0 0.0
      %1951 = vmatprep.subr.mxu0 0.0
      %1952 = vmatpush1.msra.mxu0 0.0
      %1953 = vmatprep.subr.mxu0 0.0
      %1954 = vmatpush1.msra.mxu0 0.0
      %1955 = vmatprep.subr.mxu0 0.0
      %1956 = vmatpush1.msra.mxu0 0.0
      %1957 = vmatprep.subr.mxu0 0.0
      %1958 = vmatpush1.msra.mxu0 0.0
      %1959 = vmatprep.subr.mxu0 0.0
      %1960 = vmatpush1.msra.mxu0 0.0
      %1961 = vmatprep.subr.mxu0 0.0
      %1962 = vmatpush1.msra.mxu0 0.0
      %1963 = vmatprep.subr.mxu0 0.0
      %1964 = vmatpush1.msra.mxu0 0.0
      %1965 = vmatprep.subr.mxu0 0.0
      %1966 = vmatpush1.msra.mxu0 0.0
      %1967 = vmatprep.subr.mxu0 0.0
      %1968 = vmatpush1.msra.mxu0 0.0
      %1969 = vmatprep.subr.mxu0 0.0
      %1970 = vmatpush1.msra.mxu0 0.0
      %1971 = vmatprep.subr.mxu0 0.0
      %1972 = vmatpush1.msra.mxu0 0.0
      %1973 = vmatprep.subr.mxu0 0.0
      %1974 = vmatpush1.msra.mxu0 0.0
      %1975 = vmatprep.subr.mxu0 0.0
      %1976 = vmatpush1.msra.mxu0 0.0
      %1977 = vmatprep.subr.mxu0 0.0
      %1978 = vmatpush1.msra.mxu0 0.0
      %1979 = vmatprep.subr.mxu0 0.0
      %1980 = vmatpush1.msra.mxu0 0.0
      %1981 = vmatprep.subr.mxu0 0.0
      %1982 = vmatpush1.msra.mxu0 0.0
      %1983 = vmatprep.subr.mxu0 0.0
      %1984 = vmatpush1.msra.mxu0 0.0
      %1985 = vmatprep.subr.mxu0 0.0
      %1986 = vmatpush1.msra.mxu0 0.0
      %1987 = vmatprep.subr.mxu0 0.0
      %1988 = vmatpush1.msra.mxu0 0.0
      %1989 = vmatprep.subr.mxu0 0.0
      %1990 = vmatpush1.msra.mxu0 0.0
      %1991 = vmatprep.subr.mxu0 0.0
      %1992 = vmatpush1.msra.mxu0 0.0
      %1993 = vmatprep.subr.mxu0 0.0
      %1994 = vmatpush1.msra.mxu0 0.0
      %1995 = vmatprep.subr.mxu0 0.0
      %1996 = vmatpush1.msra.mxu0 0.0
      %1997 = vmatprep.subr.mxu0 0.0
      %1998 = vmatpush1.msra.mxu0 0.0
      %1999 = vmatprep.subr.mxu0 0.0
      %2000 = vmatpush1.msra.mxu0 0.0
      %2001 = vmatprep.mubr.f32.mxu0 0.0
      %2002 = vmatmul.mubr.f32.gmra.mrb[0].mxu0 %v1935
      %v2003 = vpop.f32.mrb[0].mxu0
      %v2004 = vadd.f32 %v1933, %v2003
      %v2005 = vpop.f32.mrb[0].mxu0
      %2006 = vdwg.mxu0
      %v2007 = vld [vmem:[%s11 + $0x20] sm:$0xff]
      %v2008 = vld [vmem:[%s11 + $0x28] sm:$0xff]
      %v2009 = vld [vmem:[%s11 + $0x30] sm:$0xff]
      %v2010 = vld [vmem:[%s11 + $0x38] sm:$0xff]
      %v2012 = vsel %vm812, %v1925, 0
      %2014 = vmatprep.subr.mxu0 0.0
      %2015 = vmatpush1.msra.mxu0 %v2007
      %2016 = vmatprep.subr.mxu0 0.0
      %2017 = vmatpush1.msra.mxu0 %v2008
      %2018 = vmatprep.subr.mxu0 0.0
      %2019 = vmatpush1.msra.mxu0 %v2009
      %2020 = vmatprep.subr.mxu0 0.0
      %2021 = vmatpush1.msra.mxu0 %v2010
      %2022 = vmatprep.subr.mxu0 0.0
      %2023 = vmatpush1.msra.mxu0 0.0
      %2024 = vmatprep.subr.mxu0 0.0
      %2025 = vmatpush1.msra.mxu0 0.0
      %2026 = vmatprep.subr.mxu0 0.0
      %2027 = vmatpush1.msra.mxu0 0.0
      %2028 = vmatprep.subr.mxu0 0.0
      %2029 = vmatpush1.msra.mxu0 0.0
      %2030 = vmatprep.subr.mxu0 0.0
      %2031 = vmatpush1.msra.mxu0 0.0
      %2032 = vmatprep.subr.mxu0 0.0
      %2033 = vmatpush1.msra.mxu0 0.0
      %2034 = vmatprep.subr.mxu0 0.0
      %2035 = vmatpush1.msra.mxu0 0.0
      %2036 = vmatprep.subr.mxu0 0.0
      %2037 = vmatpush1.msra.mxu0 0.0
      %2038 = vmatprep.subr.mxu0 0.0
      %2039 = vmatpush1.msra.mxu0 0.0
      %2040 = vmatprep.subr.mxu0 0.0
      %2041 = vmatpush1.msra.mxu0 0.0
      %2042 = vmatprep.subr.mxu0 0.0
      %2043 = vmatpush1.msra.mxu0 0.0
      %2044 = vmatprep.subr.mxu0 0.0
      %2045 = vmatpush1.msra.mxu0 0.0
      %2046 = vmatprep.subr.mxu0 0.0
      %2047 = vmatpush1.msra.mxu0 0.0
      %2048 = vmatprep.subr.mxu0 0.0
      %2049 = vmatpush1.msra.mxu0 0.0
      %2050 = vmatprep.subr.mxu0 0.0
      %2051 = vmatpush1.msra.mxu0 0.0
      %2052 = vmatprep.subr.mxu0 0.0
      %2053 = vmatpush1.msra.mxu0 0.0
      %2054 = vmatprep.subr.mxu0 0.0
      %2055 = vmatpush1.msra.mxu0 0.0
      %2056 = vmatprep.subr.mxu0 0.0
      %2057 = vmatpush1.msra.mxu0 0.0
      %2058 = vmatprep.subr.mxu0 0.0
      %2059 = vmatpush1.msra.mxu0 0.0
      %2060 = vmatprep.subr.mxu0 0.0
      %2061 = vmatpush1.msra.mxu0 0.0
      %2062 = vmatprep.subr.mxu0 0.0
      %2063 = vmatpush1.msra.mxu0 0.0
      %2064 = vmatprep.subr.mxu0 0.0
      %2065 = vmatpush1.msra.mxu0 0.0
      %2066 = vmatprep.subr.mxu0 0.0
      %2067 = vmatpush1.msra.mxu0 0.0
      %2068 = vmatprep.subr.mxu0 0.0
      %2069 = vmatpush1.msra.mxu0 0.0
      %2070 = vmatprep.subr.mxu0 0.0
      %2071 = vmatpush1.msra.mxu0 0.0
      %2072 = vmatprep.subr.mxu0 0.0
      %2073 = vmatpush1.msra.mxu0 0.0
      %2074 = vmatprep.subr.mxu0 0.0
      %2075 = vmatpush1.msra.mxu0 0.0
      %2076 = vmatprep.subr.mxu0 0.0
      %2077 = vmatpush1.msra.mxu0 0.0
      %2078 = vmatprep.mubr.f32.mxu0 0.0
      %2079 = vmatmul.mubr.f32.gmra.mrb[0].mxu0 %v2012
      %v2080 = vpop.f32.mrb[0].mxu0
      %v2081 = vadd.f32 %v1869, %v2080
      %v2082 = vpop.f32.mrb[0].mxu0
      %2083 = vdwg.mxu0
      %v2085 = vrot.slane %v2004, 7
      %vm2087 = vcmask 1040384
      %v2088 = vsel %vm2087, %v2081, %v2085
      %v2090 = vsel %vm812, %v2088, 0
      %2092 = vmatprep.subr.mxu0 %v1783
      %2093 = vmatpush1.msra.mxu0 %v1782
      %2094 = vmatprep.subr.mxu0 %v1785
      %2095 = vmatpush1.msra.mxu0 %v1784
      %2096 = vmatprep.subr.mxu0 %v1787
      %2097 = vmatpush1.msra.mxu0 %v1786
      %2098 = vmatprep.subr.mxu0 %v1789
      %2099 = vmatpush1.msra.mxu0 %v1788
      %2100 = vmatprep.subr.mxu0 0.0
      %2101 = vmatpush1.msra.mxu0 0.0
      %2102 = vmatprep.subr.mxu0 0.0
      %2103 = vmatpush1.msra.mxu0 0.0
      %2104 = vmatprep.subr.mxu0 0.0
      %2105 = vmatpush1.msra.mxu0 0.0
      %2106 = vmatprep.subr.mxu0 0.0
      %2107 = vmatpush1.msra.mxu0 0.0
      %2108 = vmatprep.subr.mxu0 0.0
      %2109 = vmatpush1.msra.mxu0 0.0
      %2110 = vmatprep.subr.mxu0 0.0
      %2111 = vmatpush1.msra.mxu0 0.0
      %2112 = vmatprep.subr.mxu0 0.0
      %2113 = vmatpush1.msra.mxu0 0.0
      %2114 = vmatprep.subr.mxu0 0.0
      %2115 = vmatpush1.msra.mxu0 0.0
      %2116 = vmatprep.subr.mxu0 0.0
      %2117 = vmatpush1.msra.mxu0 0.0
      %2118 = vmatprep.subr.mxu0 0.0
      %2119 = vmatpush1.msra.mxu0 0.0
      %2120 = vmatprep.subr.mxu0 0.0
      %2121 = vmatpush1.msra.mxu0 0.0
      %2122 = vmatprep.subr.mxu0 0.0
      %2123 = vmatpush1.msra.mxu0 0.0
      %2124 = vmatprep.subr.mxu0 0.0
      %2125 = vmatpush1.msra.mxu0 0.0
      %2126 = vmatprep.subr.mxu0 0.0
      %2127 = vmatpush1.msra.mxu0 0.0
      %2128 = vmatprep.subr.mxu0 0.0
      %2129 = vmatpush1.msra.mxu0 0.0
      %2130 = vmatprep.subr.mxu0 0.0
      %2131 = vmatpush1.msra.mxu0 0.0
      %2132 = vmatprep.subr.mxu0 0.0
      %2133 = vmatpush1.msra.mxu0 0.0
      %2134 = vmatprep.subr.mxu0 0.0
      %2135 = vmatpush1.msra.mxu0 0.0
      %2136 = vmatprep.subr.mxu0 0.0
      %2137 = vmatpush1.msra.mxu0 0.0
      %2138 = vmatprep.subr.mxu0 0.0
      %2139 = vmatpush1.msra.mxu0 0.0
      %2140 = vmatprep.subr.mxu0 0.0
      %2141 = vmatpush1.msra.mxu0 0.0
      %2142 = vmatprep.subr.mxu0 0.0
      %2143 = vmatpush1.msra.mxu0 0.0
      %2144 = vmatprep.subr.mxu0 0.0
      %2145 = vmatpush1.msra.mxu0 0.0
      %2146 = vmatprep.subr.mxu0 0.0
      %2147 = vmatpush1.msra.mxu0 0.0
      %2148 = vmatprep.subr.mxu0 0.0
      %2149 = vmatpush1.msra.mxu0 0.0
      %2150 = vmatprep.subr.mxu0 0.0
      %2151 = vmatpush1.msra.mxu0 0.0
      %2152 = vmatprep.subr.mxu0 0.0
      %2153 = vmatpush1.msra.mxu0 0.0
      %2154 = vmatprep.subr.mxu0 0.0
      %2155 = vmatpush1.msra.mxu0 0.0
      %2156 = vmatprep.mubr.f32.mxu0 0.0
      %2157 = vmatmul.mubr.f32.gmra.mrb[0].mxu0 %v2090
      %v2158 = vpop.f32.mrb[0].mxu0
      %v2159 = vadd.f32 0.0, %v2158
      %v2160 = vpop.f32.mrb[0].mxu0
      %v2161 = vadd.f32 0.0, %v2160
      %2162 = vdwg.mxu0
      %v2163 = vmul.f32 %v2159, 0.17677669
      %v2164 = vmul.f32 %v2161, 0.17677669
      %vm2165 = vcmask 1044480
      %v2166 = vsel %vm2165, %v2163, -inf
      %v2167 = vrot.slane %v2166, 4
      %v2168 = vmax.f32 %v2166, %v2167
      %v2169 = vrot.slane %v2168, 2
      %v2170 = vmax.f32 %v2168, %v2169
      %v2171 = vrot.slane %v2170, 1
      %v2172 = vmax.f32 %v2170, %v2171
      %v2173 = vsel %vm2165, %v2164, -inf
      %v2174 = vrot.slane %v2173, 4
      %v2175 = vmax.f32 %v2173, %v2174
      %v2176 = vrot.slane %v2175, 2
      %v2177 = vmax.f32 %v2175, %v2176
      %v2178 = vrot.slane %v2177, 1
      %v2179 = vmax.f32 %v2177, %v2178
      %v2180 = vsub.f32 %v2163, %v2172
      %v2181 = vsub.f32 %v2164, %v2179
      %v2182 = vmul.f32 %v2180, 1.442695
      %v2183 = vpow.pop %v2182
      %v2184 = vmul.f32 %v2181, 1.442695
      %v2185 = vpow.pop %v2184
      %v2186 = vsel %vm2165, %v2183, 0.0
      %v2187 = vrot.slane %v2186, 4
      %v2188 = vadd.f32 %v2186, %v2187
      %v2189 = vrot.slane %v2188, 2
      %v2190 = vadd.f32 %v2188, %v2189
      %v2191 = vrot.slane %v2190, 1
      %v2192 = vadd.f32 %v2190, %v2191
      %v2193 = vsel %vm2165, %v2185, 0.0
      %v2194 = vrot.slane %v2193, 4
      %v2195 = vadd.f32 %v2193, %v2194
      %v2196 = vrot.slane %v2195, 2
      %v2197 = vadd.f32 %v2195, %v2196
      %v2198 = vrot.slane %v2197, 1
      %v2199 = vadd.f32 %v2197, %v2198
      %v2200 = vrcp.pop %v2192
      %v2201 = vrcp.pop %v2199
      %v2202 = vmul.f32 %v2183, %v2200
      %v2203 = vmul.f32 %v2185, %v2201
      %v2204 = vadd.f32 %v2202, 1e-08
      %v2205 = vadd.f32 %v2203, 1e-08
      %v2206 = vsel %vm2165, %v2204, 0.0
      %v2207 = vsel %vm2165, %v2205, 0.0
      %v2208 = vadd.f32 %v2206, %v2207
      %2209 = vadd.xlane.f32.xlu0 %v2208
      %v2210 = vpop.xlane.xlu0 %2209
      %v2211 = vrcp.pop %v2210
      %v2212 = vmul.f32 %v2204, %v2211
      %v2213 = vmul.f32 %v2205, %v2211
      %v2216 = vrot.slane %v2212, 1
      %v2217 = vrot.slane %v2213, 1
      %2220 = vmatprep.subr.mxu0 %v1816
      %2221 = vmatpush1.xpose.msra.mxu0 %v1815
      %2222 = vmatprep.subr.mxu0 %v1818
      %2223 = vmatpush1.xpose.msra.mxu0 %v1817
      %2224 = vmatprep.subr.mxu0 %v1820
      %2225 = vmatpush1.xpose.msra.mxu0 %v1819
      %2226 = vmatprep.subr.mxu0 %v1822
      %2227 = vmatpush1.xpose.msra.mxu0 %v1821
      %2228 = vmatprep.subr.mxu0 0.0
      %2229 = vmatpush1.xpose.msra.mxu0 0.0
      %2230 = vmatprep.subr.mxu0 0.0
      %2231 = vmatpush1.xpose.msra.mxu0 0.0
      %2232 = vmatprep.subr.mxu0 0.0
      %2233 = vmatpush1.xpose.msra.mxu0 0.0
      %2234 = vmatprep.subr.mxu0 0.0
      %2235 = vmatpush1.xpose.msra.mxu0 0.0
      %2236 = vmatprep.subr.mxu0 0.0
      %2237 = vmatpush1.xpose.msra.mxu0 0.0
      %2238 = vmatprep.subr.mxu0 0.0
      %2239 = vmatpush1.xpose.msra.mxu0 0.0
      %2240 = vmatprep.subr.mxu0 0.0
      %2241 = vmatpush1.xpose.msra.mxu0 0.0
      %2242 = vmatprep.subr.mxu0 0.0
      %2243 = vmatpush1.xpose.msra.mxu0 0.0
      %2244 = vmatprep.subr.mxu0 0.0
      %2245 = vmatpush1.xpose.msra.mxu0 0.0
      %2246 = vmatprep.subr.mxu0 0.0
      %2247 = vmatpush1.xpose.msra.mxu0 0.0
      %2248 = vmatprep.subr.mxu0 0.0
      %2249 = vmatpush1.xpose.msra.mxu0 0.0
      %2250 = vmatprep.subr.mxu0 0.0
      %2251 = vmatpush1.xpose.msra.mxu0 0.0
      %2252 = vmatprep.subr.mxu0 0.0
      %2253 = vmatpush1.xpose.msra.mxu0 0.0
      %2254 = vmatprep.subr.mxu0 0.0
      %2255 = vmatpush1.xpose.msra.mxu0 0.0
      %2256 = vmatprep.subr.mxu0 0.0
      %2257 = vmatpush1.xpose.msra.mxu0 0.0
      %2258 = vmatprep.subr.mxu0 0.0
      %2259 = vmatpush1.xpose.msra.mxu0 0.0
      %2260 = vmatprep.subr.mxu0 0.0
      %2261 = vmatpush1.xpose.msra.mxu0 0.0
      %2262 = vmatprep.subr.mxu0 0.0
      %2263 = vmatpush1.xpose.msra.mxu0 0.0
      %2264 = vmatprep.subr.mxu0 0.0
      %2265 = vmatpush1.xpose.msra.mxu0 0.0
      %2266 = vmatprep.subr.mxu0 0.0
      %2267 = vmatpush1.xpose.msra.mxu0 0.0
      %2268 = vmatprep.subr.mxu0 0.0
      %2269 = vmatpush1.xpose.msra.mxu0 0.0
      %2270 = vmatprep.subr.mxu0 0.0
      %2271 = vmatpush1.xpose.msra.mxu0 0.0
      %2272 = vmatprep.subr.mxu0 0.0
      %2273 = vmatpush1.xpose.msra.mxu0 0.0
      %2274 = vmatprep.subr.mxu0 0.0
      %2275 = vmatpush1.xpose.msra.mxu0 0.0
      %2276 = vmatprep.subr.mxu0 0.0
      %2277 = vmatpush1.xpose.msra.mxu0 0.0
      %2278 = vmatprep.subr.mxu0 0.0
      %2279 = vmatpush1.xpose.msra.mxu0 0.0
      %2280 = vmatprep.subr.mxu0 0.0
      %2281 = vmatpush1.xpose.msra.mxu0 0.0
      %2282 = vmatprep.subr.mxu0 0.0
      %2283 = vmatpush1.xpose.msra.mxu0 0.0
      %2284 = vmatprep.mubr.f32.mxu0 %v2217
      %2285 = vmatmul.mubr.f32.gmra.mrb[0].mxu0 %v2216
      %v2286 = vpop.f32.mrb[0].mxu0
      %v2287 = vadd.f32 0.0, %v2286
      %v2288 = vpop.f32.mrb[0].mxu0
      %2289 = vdwg.mxu0
      %2290 = vmatprep.subr.mxu0 %v1849
      %2291 = vmatpush1.xpose.msra.mxu0 %v1848
      %2292 = vmatprep.subr.mxu0 %v1851
      %2293 = vmatpush1.xpose.msra.mxu0 %v1850
      %2294 = vmatprep.subr.mxu0 %v1853
      %2295 = vmatpush1.xpose.msra.mxu0 %v1852
      %2296 = vmatprep.subr.mxu0 %v1855
      %2297 = vmatpush1.xpose.msra.mxu0 %v1854
      %2298 = vmatprep.subr.mxu0 0.0
      %2299 = vmatpush1.xpose.msra.mxu0 0.0
      %2300 = vmatprep.subr.mxu0 0.0
      %2301 = vmatpush1.xpose.msra.mxu0 0.0
      %2302 = vmatprep.subr.mxu0 0.0
      %2303 = vmatpush1.xpose.msra.mxu0 0.0
      %2304 = vmatprep.subr.mxu0 0.0
      %2305 = vmatpush1.xpose.msra.mxu0 0.0
      %2306 = vmatprep.subr.mxu0 0.0
      %2307 = vmatpush1.xpose.msra.mxu0 0.0
      %2308 = vmatprep.subr.mxu0 0.0
      %2309 = vmatpush1.xpose.msra.mxu0 0.0
      %2310 = vmatprep.subr.mxu0 0.0
      %2311 = vmatpush1.xpose.msra.mxu0 0.0
      %2312 = vmatprep.subr.mxu0 0.0
      %2313 = vmatpush1.xpose.msra.mxu0 0.0
      %2314 = vmatprep.subr.mxu0 0.0
      %2315 = vmatpush1.xpose.msra.mxu0 0.0
      %2316 = vmatprep.subr.mxu0 0.0
      %2317 = vmatpush1.xpose.msra.mxu0 0.0
      %2318 = vmatprep.subr.mxu0 0.0
      %2319 = vmatpush1.xpose.msra.mxu0 0.0
      %2320 = vmatprep.subr.mxu0 0.0
      %2321 = vmatpush1.xpose.msra.mxu0 0.0
      %2322 = vmatprep.subr.mxu0 0.0
      %2323 = vmatpush1.xpose.msra.mxu0 0.0
      %2324 = vmatprep.subr.mxu0 0.0
      %2325 = vmatpush1.xpose.msra.mxu0 0.0
      %2326 = vmatprep.subr.mxu0 0.0
      %2327 = vmatpush1.xpose.msra.mxu0 0.0
      %2328 = vmatprep.subr.mxu0 0.0
      %2329 = vmatpush1.xpose.msra.mxu0 0.0
      %2330 = vmatprep.subr.mxu0 0.0
      %2331 = vmatpush1.xpose.msra.mxu0 0.0
      %2332 = vmatprep.subr.mxu0 0.0
      %2333 = vmatpush1.xpose.msra.mxu0 0.0
      %2334 = vmatprep.subr.mxu0 0.0
      %2335 = vmatpush1.xpose.msra.mxu0 0.0
      %2336 = vmatprep.subr.mxu0 0.0
      %2337 = vmatpush1.xpose.msra.mxu0 0.0
      %2338 = vmatprep.subr.mxu0 0.0
      %2339 = vmatpush1.xpose.msra.mxu0 0.0
      %2340 = vmatprep.subr.mxu0 0.0
      %2341 = vmatpush1.xpose.msra.mxu0 0.0
      %2342 = vmatprep.subr.mxu0 0.0
      %2343 = vmatpush1.xpose.msra.mxu0 0.0
      %2344 = vmatprep.subr.mxu0 0.0
      %2345 = vmatpush1.xpose.msra.mxu0 0.0
      %2346 = vmatprep.subr.mxu0 0.0
      %2347 = vmatpush1.xpose.msra.mxu0 0.0
      %2348 = vmatprep.subr.mxu0 0.0
      %2349 = vmatpush1.xpose.msra.mxu0 0.0
      %2350 = vmatprep.subr.mxu0 0.0
      %2351 = vmatpush1.xpose.msra.mxu0 0.0
      %2352 = vmatprep.subr.mxu0 0.0
      %2353 = vmatpush1.xpose.msra.mxu0 0.0
      %2354 = vmatprep.mubr.f32.mxu0 %v2213
      %2355 = vmatmul.mubr.f32.gmra.mrb[0].mxu0 %v2212
      %v2356 = vpop.f32.mrb[0].mxu0
      %v2357 = vadd.f32 0.0, %v2356
      %v2358 = vpop.f32.mrb[0].mxu0
      %2359 = vdwg.mxu0
      %v2360 = vld [vmem:[%s12] sm:$0xff]
      %v2361 = vld [vmem:[%s12 + $0x8] sm:$0xff]
      %v2362 = vld [vmem:[%s12 + $0x10] sm:$0xff]
      %v2363 = vld [vmem:[%s12 + $0x18] sm:$0xff]
      %v2364 = vld [vmem:[%s12 + $0x20] sm:$0xff]
      %v2365 = vld [vmem:[%s12 + $0x28] sm:$0xff]
      %v2366 = vld [vmem:[%s12 + $0x30] sm:$0xff]
      %v2367 = vld [vmem:[%s12 + $0x38] sm:$0xff]
      %v2368 = vlaneseq
      %v2369 = vshrl.u32 %v2368, 7
      %v2370 = vsub.s32 0, %v2369
      %v2371 = vrot.slane %v1882, %v2370
      %v2373 = vsel %vm812, %v2287, 0
      %2375 = vmatprep.subr.mxu0 0.0
      %2376 = vmatpush1.msra.mxu0 %v2360
      %2377 = vmatprep.subr.mxu0 0.0
      %2378 = vmatpush1.msra.mxu0 %v2361
      %2379 = vmatprep.subr.mxu0 0.0
      %2380 = vmatpush1.msra.mxu0 %v2362
      %2381 = vmatprep.subr.mxu0 0.0
      %2382 = vmatpush1.msra.mxu0 %v2363
      %2383 = vmatprep.subr.mxu0 0.0
      %2384 = vmatpush1.msra.mxu0 0.0
      %2385 = vmatprep.subr.mxu0 0.0
      %2386 = vmatpush1.msra.mxu0 0.0
      %2387 = vmatprep.subr.mxu0 0.0
      %2388 = vmatpush1.msra.mxu0 0.0
      %2389 = vmatprep.subr.mxu0 0.0
      %2390 = vmatpush1.msra.mxu0 0.0
      %2391 = vmatprep.subr.mxu0 0.0
      %2392 = vmatpush1.msra.mxu0 0.0
      %2393 = vmatprep.subr.mxu0 0.0
      %2394 = vmatpush1.msra.mxu0 0.0
      %2395 = vmatprep.subr.mxu0 0.0
      %2396 = vmatpush1.msra.mxu0 0.0
      %2397 = vmatprep.subr.mxu0 0.0
      %2398 = vmatpush1.msra.mxu0 0.0
      %2399 = vmatprep.subr.mxu0 0.0
      %2400 = vmatpush1.msra.mxu0 0.0
      %2401 = vmatprep.subr.mxu0 0.0
      %2402 = vmatpush1.msra.mxu0 0.0
      %2403 = vmatprep.subr.mxu0 0.0
      %2404 = vmatpush1.msra.mxu0 0.0
      %2405 = vmatprep.subr.mxu0 0.0
      %2406 = vmatpush1.msra.mxu0 0.0
      %2407 = vmatprep.subr.mxu0 0.0
      %2408 = vmatpush1.msra.mxu0 0.0
      %2409 = vmatprep.subr.mxu0 0.0
      %2410 = vmatpush1.msra.mxu0 0.0
      %2411 = vmatprep.subr.mxu0 0.0
      %2412 = vmatpush1.msra.mxu0 0.0
      %2413 = vmatprep.subr.mxu0 0.0
      %2414 = vmatpush1.msra.mxu0 0.0
      %2415 = vmatprep.subr.mxu0 0.0
      %2416 = vmatpush1.msra.mxu0 0.0
      %2417 = vmatprep.subr.mxu0 0.0
      %2418 = vmatpush1.msra.mxu0 0.0
      %2419 = vmatprep.subr.mxu0 0.0
      %2420 = vmatpush1.msra.mxu0 0.0
      %2421 = vmatprep.subr.mxu0 0.0
      %2422 = vmatpush1.msra.mxu0 0.0
      %2423 = vmatprep.subr.mxu0 0.0
      %2424 = vmatpush1.msra.mxu0 0.0
      %2425 = vmatprep.subr.mxu0 0.0
      %2426 = vmatpush1.msra.mxu0 0.0
      %2427 = vmatprep.subr.mxu0 0.0
      %2428 = vmatpush1.msra.mxu0 0.0
      %2429 = vmatprep.subr.mxu0 0.0
      %2430 = vmatpush1.msra.mxu0 0.0
      %2431 = vmatprep.subr.mxu0 0.0
      %2432 = vmatpush1.msra.mxu0 0.0
      %2433 = vmatprep.subr.mxu0 0.0
      %2434 = vmatpush1.msra.mxu0 0.0
      %2435 = vmatprep.subr.mxu0 0.0
      %2436 = vmatpush1.msra.mxu0 0.0
      %2437 = vmatprep.subr.mxu0 0.0
      %2438 = vmatpush1.msra.mxu0 0.0
      %2439 = vmatprep.mubr.f32.mxu0 0.0
      %2440 = vmatmul.mubr.f32.gmra.mrb[0].mxu0 %v2373
      %v2441 = vpop.f32.mrb[0].mxu0
      %v2442 = vadd.f32 %v2371, %v2441
      %v2443 = vpop.f32.mrb[0].mxu0
      %2444 = vdwg.mxu0
      %v2445 = vlaneseq
      %v2446 = vshrl.u32 %v2445, 7
      %v2447 = vsub.s32 0, %v2446
      %v2448 = vrot.slane %v1883, %v2447
      %v2450 = vsel %vm812, %v1866, 0
      %2452 = vmatprep.subr.mxu0 0.0
      %2453 = vmatpush1.msra.mxu0 %v2364
      %2454 = vmatprep.subr.mxu0 0.0
      %2455 = vmatpush1.msra.mxu0 %v2365
      %2456 = vmatprep.subr.mxu0 0.0
      %2457 = vmatpush1.msra.mxu0 %v2366
      %2458 = vmatprep.subr.mxu0 0.0
      %2459 = vmatpush1.msra.mxu0 %v2367
      %2460 = vmatprep.subr.mxu0 0.0
      %2461 = vmatpush1.msra.mxu0 0.0
      %2462 = vmatprep.subr.mxu0 0.0
      %2463 = vmatpush1.msra.mxu0 0.0
      %2464 = vmatprep.subr.mxu0 0.0
      %2465 = vmatpush1.msra.mxu0 0.0
      %2466 = vmatprep.subr.mxu0 0.0
      %2467 = vmatpush1.msra.mxu0 0.0
      %2468 = vmatprep.subr.mxu0 0.0
      %2469 = vmatpush1.msra.mxu0 0.0
      %2470 = vmatprep.subr.mxu0 0.0
      %2471 = vmatpush1.msra.mxu0 0.0
      %2472 = vmatprep.subr.mxu0 0.0
      %2473 = vmatpush1.msra.mxu0 0.0
      %2474 = vmatprep.subr.mxu0 0.0
      %2475 = vmatpush1.msra.mxu0 0.0
      %2476 = vmatprep.subr.mxu0 0.0
      %2477 = vmatpush1.msra.mxu0 0.0
      %2478 = vmatprep.subr.mxu0 0.0
      %2479 = vmatpush1.msra.mxu0 0.0
      %2480 = vmatprep.subr.mxu0 0.0
      %2481 = vmatpush1.msra.mxu0 0.0
      %2482 = vmatprep.subr.mxu0 0.0
      %2483 = vmatpush1.msra.mxu0 0.0
      %2484 = vmatprep.subr.mxu0 0.0
      %2485 = vmatpush1.msra.mxu0 0.0
      %2486 = vmatprep.subr.mxu0 0.0
      %2487 = vmatpush1.msra.mxu0 0.0
      %2488 = vmatprep.subr.mxu0 0.0
      %2489 = vmatpush1.msra.mxu0 0.0
      %2490 = vmatprep.subr.mxu0 0.0
      %2491 = vmatpush1.msra.mxu0 0.0
      %2492 = vmatprep.subr.mxu0 0.0
      %2493 = vmatpush1.msra.mxu0 0.0
      %2494 = vmatprep.subr.mxu0 0.0
      %2495 = vmatpush1.msra.mxu0 0.0
      %2496 = vmatprep.subr.mxu0 0.0
      %2497 = vmatpush1.msra.mxu0 0.0
      %2498 = vmatprep.subr.mxu0 0.0
      %2499 = vmatpush1.msra.mxu0 0.0
      %2500 = vmatprep.subr.mxu0 0.0
      %2501 = vmatpush1.msra.mxu0 0.0
      %2502 = vmatprep.subr.mxu0 0.0
      %2503 = vmatpush1.msra.mxu0 0.0
      %2504 = vmatprep.subr.mxu0 0.0
      %2505 = vmatpush1.msra.mxu0 0.0
      %2506 = vmatprep.subr.mxu0 0.0
      %2507 = vmatpush1.msra.mxu0 0.0
      %2508 = vmatprep.subr.mxu0 0.0
      %2509 = vmatpush1.msra.mxu0 0.0
      %2510 = vmatprep.subr.mxu0 0.0
      %2511 = vmatpush1.msra.mxu0 0.0
      %2512 = vmatprep.subr.mxu0 0.0
      %2513 = vmatpush1.msra.mxu0 0.0
      %2514 = vmatprep.subr.mxu0 0.0
      %2515 = vmatpush1.msra.mxu0 0.0
      %2516 = vmatprep.mubr.f32.mxu0 0.0
      %2517 = vmatmul.mubr.f32.gmra.mrb[0].mxu0 %v2450
      %v2518 = vpop.f32.mrb[0].mxu0
      %v2519 = vadd.f32 %v2448, %v2518
      %v2520 = vpop.f32.mrb[0].mxu0
      %2521 = vdwg.mxu0
      %v2522 = vadd.f32 %v2442, %v2519
      %v2523 = vxor.u32 %v2522, 2147483648
      %v2524 = vmul.f32 %v2523, 1.442695
      %v2525 = vpow.pop %v2524
      %v2526 = vadd.f32 %v2525, 1.0
      %v2527 = vrcp.pop %v2526
      %v2528 = vmul.f32 1.0, %v2527
      %2530 = vrot.lane.b32.xlu0 %v2519, 64
      %v2531 = vpop.permute.xlu0 %2530
      %v2533 = vmul.f32 %v2528, %v2531
      %2535 = vrot.lane.b32.xlu0 %v2533, 64
      %v2536 = vpop.permute.xlu0 %2535
      %v2538 = vadd.f32 %v2442, %v2536
      %v2539 = vtanh.pop %v2538
      %v2540 = vsub.f32 1.0, %v2528
      %2542 = vrot.lane.b32.xlu0 %v2539, 96
      %v2543 = vpop.permute.xlu0 %2542
      %v2545 = vmul.f32 %v2540, %v2543
      %2546 = vrot.lane.b32.xlu0 %v1866, 32
      %v2547 = vpop.permute.xlu0 %2546
      %v2549 = vmul.f32 %v2528, %v2547
      %v2550 = vadd.f32 %v2545, %v2549
      %v2551 = vld [vmem:[%s12 + $0x40] sm:$0xff]
      %v2552 = vld [vmem:[%s12 + $0x48] sm:$0xff]
      %v2553 = vld [vmem:[%s12 + $0x50] sm:$0xff]
      %v2554 = vld [vmem:[%s12 + $0x58] sm:$0xff]
      %v2555 = vld [vmem:[%s12 + $0x60] sm:$0xff]
      %v2556 = vld [vmem:[%s12 + $0x68] sm:$0xff]
      %v2557 = vld [vmem:[%s12 + $0x70] sm:$0xff]
      %v2558 = vld [vmem:[%s12 + $0x78] sm:$0xff]
      %v2560 = vsel %vm812, %v2357, 0
      %2562 = vmatprep.subr.mxu0 0.0
      %2563 = vmatpush1.msra.mxu0 %v2551
      %2564 = vmatprep.subr.mxu0 0.0
      %2565 = vmatpush1.msra.mxu0 %v2552
      %2566 = vmatprep.subr.mxu0 0.0
      %2567 = vmatpush1.msra.mxu0 %v2553
      %2568 = vmatprep.subr.mxu0 0.0
      %2569 = vmatpush1.msra.mxu0 %v2554
      %2570 = vmatprep.subr.mxu0 0.0
      %2571 = vmatpush1.msra.mxu0 0.0
      %2572 = vmatprep.subr.mxu0 0.0
      %2573 = vmatpush1.msra.mxu0 0.0
      %2574 = vmatprep.subr.mxu0 0.0
      %2575 = vmatpush1.msra.mxu0 0.0
      %2576 = vmatprep.subr.mxu0 0.0
      %2577 = vmatpush1.msra.mxu0 0.0
      %2578 = vmatprep.subr.mxu0 0.0
      %2579 = vmatpush1.msra.mxu0 0.0
      %2580 = vmatprep.subr.mxu0 0.0
      %2581 = vmatpush1.msra.mxu0 0.0
      %2582 = vmatprep.subr.mxu0 0.0
      %2583 = vmatpush1.msra.mxu0 0.0
      %2584 = vmatprep.subr.mxu0 0.0
      %2585 = vmatpush1.msra.mxu0 0.0
      %2586 = vmatprep.subr.mxu0 0.0
      %2587 = vmatpush1.msra.mxu0 0.0
      %2588 = vmatprep.subr.mxu0 0.0
      %2589 = vmatpush1.msra.mxu0 0.0
      %2590 = vmatprep.subr.mxu0 0.0
      %2591 = vmatpush1.msra.mxu0 0.0
      %2592 = vmatprep.subr.mxu0 0.0
      %2593 = vmatpush1.msra.mxu0 0.0
      %2594 = vmatprep.subr.mxu0 0.0
      %2595 = vmatpush1.msra.mxu0 0.0
      %2596 = vmatprep.subr.mxu0 0.0
      %2597 = vmatpush1.msra.mxu0 0.0
      %2598 = vmatprep.subr.mxu0 0.0
      %2599 = vmatpush1.msra.mxu0 0.0
      %2600 = vmatprep.subr.mxu0 0.0
      %2601 = vmatpush1.msra.mxu0 0.0
      %2602 = vmatprep.subr.mxu0 0.0
      %2603 = vmatpush1.msra.mxu0 0.0
      %2604 = vmatprep.subr.mxu0 0.0
      %2605 = vmatpush1.msra.mxu0 0.0
      %2606 = vmatprep.subr.mxu0 0.0
      %2607 = vmatpush1.msra.mxu0 0.0
      %2608 = vmatprep.subr.mxu0 0.0
      %2609 = vmatpush1.msra.mxu0 0.0
      %2610 = vmatprep.subr.mxu0 0.0
      %2611 = vmatpush1.msra.mxu0 0.0
      %2612 = vmatprep.subr.mxu0 0.0
      %2613 = vmatpush1.msra.mxu0 0.0
      %2614 = vmatprep.subr.mxu0 0.0
      %2615 = vmatpush1.msra.mxu0 0.0
      %2616 = vmatprep.subr.mxu0 0.0
      %2617 = vmatpush1.msra.mxu0 0.0
      %2618 = vmatprep.subr.mxu0 0.0
      %2619 = vmatpush1.msra.mxu0 0.0
      %2620 = vmatprep.subr.mxu0 0.0
      %2621 = vmatpush1.msra.mxu0 0.0
      %2622 = vmatprep.subr.mxu0 0.0
      %2623 = vmatpush1.msra.mxu0 0.0
      %2624 = vmatprep.subr.mxu0 0.0
      %2625 = vmatpush1.msra.mxu0 0.0
      %2626 = vmatprep.mubr.f32.mxu0 0.0
      %2627 = vmatmul.mubr.f32.gmra.mrb[0].mxu0 %v2560
      %v2628 = vpop.f32.mrb[0].mxu0
      %v2629 = vadd.f32 %v1884, %v2628
      %v2630 = vpop.f32.mrb[0].mxu0
      %2631 = vdwg.mxu0
      %v2633 = vsel %vm812, %v1867, 0
      %2635 = vmatprep.subr.mxu0 0.0
      %2636 = vmatpush1.msra.mxu0 %v2555
      %2637 = vmatprep.subr.mxu0 0.0
      %2638 = vmatpush1.msra.mxu0 %v2556
      %2639 = vmatprep.subr.mxu0 0.0
      %2640 = vmatpush1.msra.mxu0 %v2557
      %2641 = vmatprep.subr.mxu0 0.0
      %2642 = vmatpush1.msra.mxu0 %v2558
      %2643 = vmatprep.subr.mxu0 0.0
      %2644 = vmatpush1.msra.mxu0 0.0
      %2645 = vmatprep.subr.mxu0 0.0
      %2646 = vmatpush1.msra.mxu0 0.0
      %2647 = vmatprep.subr.mxu0 0.0
      %2648 = vmatpush1.msra.mxu0 0.0
      %2649 = vmatprep.subr.mxu0 0.0
      %2650 = vmatpush1.msra.mxu0 0.0
      %2651 = vmatprep.subr.mxu0 0.0
      %2652 = vmatpush1.msra.mxu0 0.0
      %2653 = vmatprep.subr.mxu0 0.0
      %2654 = vmatpush1.msra.mxu0 0.0
      %2655 = vmatprep.subr.mxu0 0.0
      %2656 = vmatpush1.msra.mxu0 0.0
      %2657 = vmatprep.subr.mxu0 0.0
      %2658 = vmatpush1.msra.mxu0 0.0
      %2659 = vmatprep.subr.mxu0 0.0
      %2660 = vmatpush1.msra.mxu0 0.0
      %2661 = vmatprep.subr.mxu0 0.0
      %2662 = vmatpush1.msra.mxu0 0.0
      %2663 = vmatprep.subr.mxu0 0.0
      %2664 = vmatpush1.msra.mxu0 0.0
      %2665 = vmatprep.subr.mxu0 0.0
      %2666 = vmatpush1.msra.mxu0 0.0
      %2667 = vmatprep.subr.mxu0 0.0
      %2668 = vmatpush1.msra.mxu0 0.0
      %2669 = vmatprep.subr.mxu0 0.0
      %2670 = vmatpush1.msra.mxu0 0.0
      %2671 = vmatprep.subr.mxu0 0.0
      %2672 = vmatpush1.msra.mxu0 0.0
      %2673 = vmatprep.subr.mxu0 0.0
      %2674 = vmatpush1.msra.mxu0 0.0
      %2675 = vmatprep.subr.mxu0 0.0
      %2676 = vmatpush1.msra.mxu0 0.0
      %2677 = vmatprep.subr.mxu0 0.0
      %2678 = vmatpush1.msra.mxu0 0.0
      %2679 = vmatprep.subr.mxu0 0.0
      %2680 = vmatpush1.msra.mxu0 0.0
      %2681 = vmatprep.subr.mxu0 0.0
      %2682 = vmatpush1.msra.mxu0 0.0
      %2683 = vmatprep.subr.mxu0 0.0
      %2684 = vmatpush1.msra.mxu0 0.0
      %2685 = vmatprep.subr.mxu0 0.0
      %2686 = vmatpush1.msra.mxu0 0.0
      %2687 = vmatprep.subr.mxu0 0.0
      %2688 = vmatpush1.msra.mxu0 0.0
      %2689 = vmatprep.subr.mxu0 0.0
      %2690 = vmatpush1.msra.mxu0 0.0
      %2691 = vmatprep.subr.mxu0 0.0
      %2692 = vmatpush1.msra.mxu0 0.0
      %2693 = vmatprep.subr.mxu0 0.0
      %2694 = vmatpush1.msra.mxu0 0.0
      %2695 = vmatprep.subr.mxu0 0.0
      %2696 = vmatpush1.msra.mxu0 0.0
      %2697 = vmatprep.subr.mxu0 0.0
      %2698 = vmatpush1.msra.mxu0 0.0
      %2699 = vmatprep.mubr.f32.mxu0 0.0
      %2700 = vmatmul.mubr.f32.gmra.mrb[0].mxu0 %v2633
      %v2701 = vpop.f32.mrb[0].mxu0
      %v2702 = vadd.f32 %v1885, %v2701
      %v2703 = vpop.f32.mrb[0].mxu0
      %2704 = vdwg.mxu0
      %v2705 = vadd.f32 %v2629, %v2702
      %v2706 = vxor.u32 %v2705, 2147483648
      %v2707 = vmul.f32 %v2706, 1.442695
      %v2708 = vpow.pop %v2707
      %v2709 = vadd.f32 %v2708, 1.0
      %v2710 = vrcp.pop %v2709
      %v2711 = vmul.f32 1.0, %v2710
      %2713 = vrot.lane.b32.xlu0 %v2702, 64
      %v2714 = vpop.permute.xlu0 %2713
      %v2716 = vmul.f32 %v2711, %v2714
      %2718 = vrot.lane.b32.xlu0 %v2716, 64
      %v2719 = vpop.permute.xlu0 %2718
      %v2721 = vadd.f32 %v2629, %v2719
      %v2722 = vtanh.pop %v2721
      %v2723 = vsub.f32 1.0, %v2711
      %2725 = vrot.lane.b32.xlu0 %v2722, 96
      %v2726 = vpop.permute.xlu0 %2725
      %v2728 = vmul.f32 %v2723, %v2726
      %v2729 = vlaneseq
      %v2730 = vshrl.u32 %v2729, 7
      %v2731 = vsub.s32 0, %v2730
      %v2732 = vrot.slane %v1867, %v2731
      %2733 = vrot.lane.b32.xlu0 %v2732, 32
      %v2734 = vpop.permute.xlu0 %2733
      %v2736 = vmul.f32 %v2711, %v2734
      %v2737 = vadd.f32 %v2728, %v2736
      %2739 = vrot.lane.b32.xlu0 %v2550, 96
      %v2740 = vpop.permute.xlu0 %2739
      %v2742 = vsel %vm1886, %v2740, 0.0
      %2743 = vadd.xlane.f32.xlu0 %v2742
      %v2744 = vpop.xlane.xlu0 %2743
      %v2745 = vmul.f32 %v2744, %v1063
      %v2746 = vsub.f32 %v2550, %v2745
      %v2747 = vmul.f32 %v2746, %v2746
      %2749 = vrot.lane.b32.xlu0 %v2747, 96
      %v2750 = vpop.permute.xlu0 %2749
      %v2752 = vsel %vm1886, %v2750, 0.0
      %2753 = vadd.xlane.f32.xlu0 %v2752
      %v2754 = vpop.xlane.xlu0 %2753
      %v2755 = vmul.f32 %v2754, %v1063
      %v2756 = vadd.f32 %v2755, 1e-05
      %v2757 = vrsqrt.pop %v2756
      %v2758 = vmul.f32 %v2746, %v2757
      %v2759 = vlaneseq
      %v2760 = vshrl.u32 %v2759, 7
      %v2761 = vsub.s32 0, %v2760
      %v2762 = vrot.slane %v1878, %v2761
      %2764 = vrot.lane.b32.xlu0 %v2762, 32
      %v2765 = vpop.permute.xlu0 %2764
      %v2767 = vmul.f32 %v2758, %v2765
      %v2768 = vlaneseq
      %v2769 = vshrl.u32 %v2768, 7
      %v2770 = vsub.s32 0, %v2769
      %v2771 = vrot.slane %v1879, %v2770
      %2773 = vrot.lane.b32.xlu0 %v2771, 32
      %v2774 = vpop.permute.xlu0 %2773
      %v2776 = vadd.f32 %v2767, %v2774
      %v2777 = vld [vmem:[%s11 + $0x40] sm:$0xff]
      %v2778 = vld [vmem:[%s11 + $0x48] sm:$0xff]
      %v2779 = vld [vmem:[%s11 + $0x50] sm:$0xff]
      %v2780 = vld [vmem:[%s11 + $0x58] sm:$0xff]
      %v2781 = vlaneseq
      %v2782 = vshrl.u32 %v2781, 7
      %v2783 = vsub.s32 0, %v2782
      %v2784 = vrot.slane %v1870, %v2783
      %2786 = vrot.lane.b32.xlu0 %v2776, 96
      %v2787 = vpop.permute.xlu0 %2786
      %v2788 = vsel %vm812, %v2787, 0
      %2790 = vmatprep.subr.mxu0 0.0
      %2791 = vmatpush1.msra.mxu0 %v2777
      %2792 = vmatprep.subr.mxu0 0.0
      %2793 = vmatpush1.msra.mxu0 %v2778
      %2794 = vmatprep.subr.mxu0 0.0
      %2795 = vmatpush1.msra.mxu0 %v2779
      %2796 = vmatprep.subr.mxu0 0.0
      %2797 = vmatpush1.msra.mxu0 %v2780
      %2798 = vmatprep.subr.mxu0 0.0
      %2799 = vmatpush1.msra.mxu0 0.0
      %2800 = vmatprep.subr.mxu0 0.0
      %2801 = vmatpush1.msra.mxu0 0.0
      %2802 = vmatprep.subr.mxu0 0.0
      %2803 = vmatpush1.msra.mxu0 0.0
      %2804 = vmatprep.subr.mxu0 0.0
      %2805 = vmatpush1.msra.mxu0 0.0
      %2806 = vmatprep.subr.mxu0 0.0
      %2807 = vmatpush1.msra.mxu0 0.0
      %2808 = vmatprep.subr.mxu0 0.0
      %2809 = vmatpush1.msra.mxu0 0.0
      %2810 = vmatprep.subr.mxu0 0.0
      %2811 = vmatpush1.msra.mxu0 0.0
      %2812 = vmatprep.subr.mxu0 0.0
      %2813 = vmatpush1.msra.mxu0 0.0
      %2814 = vmatprep.subr.mxu0 0.0
      %2815 = vmatpush1.msra.mxu0 0.0
      %2816 = vmatprep.subr.mxu0 0.0
      %2817 = vmatpush1.msra.mxu0 0.0
      %2818 = vmatprep.subr.mxu0 0.0
      %2819 = vmatpush1.msra.mxu0 0.0
      %2820 = vmatprep.subr.mxu0 0.0
      %2821 = vmatpush1.msra.mxu0 0.0
      %2822 = vmatprep.subr.mxu0 0.0
      %2823 = vmatpush1.msra.mxu0 0.0
      %2824 = vmatprep.subr.mxu0 0.0
      %2825 = vmatpush1.msra.mxu0 0.0
      %2826 = vmatprep.subr.mxu0 0.0
      %2827 = vmatpush1.msra.mxu0 0.0
      %2828 = vmatprep.subr.mxu0 0.0
      %2829 = vmatpush1.msra.mxu0 0.0
      %2830 = vmatprep.subr.mxu0 0.0
      %2831 = vmatpush1.msra.mxu0 0.0
      %2832 = vmatprep.subr.mxu0 0.0
      %2833 = vmatpush1.msra.mxu0 0.0
      %2834 = vmatprep.subr.mxu0 0.0
      %2835 = vmatpush1.msra.mxu0 0.0
      %2836 = vmatprep.subr.mxu0 0.0
      %2837 = vmatpush1.msra.mxu0 0.0
      %2838 = vmatprep.subr.mxu0 0.0
      %2839 = vmatpush1.msra.mxu0 0.0
      %2840 = vmatprep.subr.mxu0 0.0
      %2841 = vmatpush1.msra.mxu0 0.0
      %2842 = vmatprep.subr.mxu0 0.0
      %2843 = vmatpush1.msra.mxu0 0.0
      %2844 = vmatprep.subr.mxu0 0.0
      %2845 = vmatpush1.msra.mxu0 0.0
      %2846 = vmatprep.subr.mxu0 0.0
      %2847 = vmatpush1.msra.mxu0 0.0
      %2848 = vmatprep.subr.mxu0 0.0
      %2849 = vmatpush1.msra.mxu0 0.0
      %2850 = vmatprep.subr.mxu0 0.0
      %2851 = vmatpush1.msra.mxu0 0.0
      %2852 = vmatprep.subr.mxu0 0.0
      %2853 = vmatpush1.msra.mxu0 0.0
      %2854 = vmatprep.mubr.f32.mxu0 0.0
      %2855 = vmatmul.mubr.f32.gmra.mrb[0].mxu0 %v2788
      %v2856 = vpop.f32.mrb[0].mxu0
      %v2857 = vadd.f32 %v2784, %v2856
      %v2858 = vpop.f32.mrb[0].mxu0
      %2859 = vdwg.mxu0
      %v2860 = vmax.f32 %v2857, 0.0
      %v2861 = vld [vmem:[%s11 + $0x60] sm:$0xff]
      %v2862 = vld [vmem:[%s11 + $0x68] sm:$0xff]
      %v2863 = vld [vmem:[%s11 + $0x70] sm:$0xff]
      %v2864 = vld [vmem:[%s11 + $0x78] sm:$0xff]
      %v2866 = vsel %vm812, %v2860, 0
      %2868 = vmatprep.subr.mxu0 0.0
      %2869 = vmatpush1.msra.mxu0 %v2861
      %2870 = vmatprep.subr.mxu0 0.0
      %2871 = vmatpush1.msra.mxu0 %v2862
      %2872 = vmatprep.subr.mxu0 0.0
      %2873 = vmatpush1.msra.mxu0 %v2863
      %2874 = vmatprep.subr.mxu0 0.0
      %2875 = vmatpush1.msra.mxu0 %v2864
      %2876 = vmatprep.subr.mxu0 0.0
      %2877 = vmatpush1.msra.mxu0 0.0
      %2878 = vmatprep.subr.mxu0 0.0
      %2879 = vmatpush1.msra.mxu0 0.0
      %2880 = vmatprep.subr.mxu0 0.0
      %2881 = vmatpush1.msra.mxu0 0.0
      %2882 = vmatprep.subr.mxu0 0.0
      %2883 = vmatpush1.msra.mxu0 0.0
      %2884 = vmatprep.subr.mxu0 0.0
      %2885 = vmatpush1.msra.mxu0 0.0
      %2886 = vmatprep.subr.mxu0 0.0
      %2887 = vmatpush1.msra.mxu0 0.0
      %2888 = vmatprep.subr.mxu0 0.0
      %2889 = vmatpush1.msra.mxu0 0.0
      %2890 = vmatprep.subr.mxu0 0.0
      %2891 = vmatpush1.msra.mxu0 0.0
      %2892 = vmatprep.subr.mxu0 0.0
      %2893 = vmatpush1.msra.mxu0 0.0
      %2894 = vmatprep.subr.mxu0 0.0
      %2895 = vmatpush1.msra.mxu0 0.0
      %2896 = vmatprep.subr.mxu0 0.0
      %2897 = vmatpush1.msra.mxu0 0.0
      %2898 = vmatprep.subr.mxu0 0.0
      %2899 = vmatpush1.msra.mxu0 0.0
      %2900 = vmatprep.subr.mxu0 0.0
      %2901 = vmatpush1.msra.mxu0 0.0
      %2902 = vmatprep.subr.mxu0 0.0
      %2903 = vmatpush1.msra.mxu0 0.0
      %2904 = vmatprep.subr.mxu0 0.0
      %2905 = vmatpush1.msra.mxu0 0.0
      %2906 = vmatprep.subr.mxu0 0.0
      %2907 = vmatpush1.msra.mxu0 0.0
      %2908 = vmatprep.subr.mxu0 0.0
      %2909 = vmatpush1.msra.mxu0 0.0
      %2910 = vmatprep.subr.mxu0 0.0
      %2911 = vmatpush1.msra.mxu0 0.0
      %2912 = vmatprep.subr.mxu0 0.0
      %2913 = vmatpush1.msra.mxu0 0.0
      %2914 = vmatprep.subr.mxu0 0.0
      %2915 = vmatpush1.msra.mxu0 0.0
      %2916 = vmatprep.subr.mxu0 0.0
      %2917 = vmatpush1.msra.mxu0 0.0
      %2918 = vmatprep.subr.mxu0 0.0
      %2919 = vmatpush1.msra.mxu0 0.0
      %2920 = vmatprep.subr.mxu0 0.0
      %2921 = vmatpush1.msra.mxu0 0.0
      %2922 = vmatprep.subr.mxu0 0.0
      %2923 = vmatpush1.msra.mxu0 0.0
      %2924 = vmatprep.subr.mxu0 0.0
      %2925 = vmatpush1.msra.mxu0 0.0
      %2926 = vmatprep.subr.mxu0 0.0
      %2927 = vmatpush1.msra.mxu0 0.0
      %2928 = vmatprep.subr.mxu0 0.0
      %2929 = vmatpush1.msra.mxu0 0.0
      %2930 = vmatprep.subr.mxu0 0.0
      %2931 = vmatpush1.msra.mxu0 0.0
      %2932 = vmatprep.mubr.f32.mxu0 0.0
      %2933 = vmatmul.mubr.f32.gmra.mrb[0].mxu0 %v2866
      %v2934 = vpop.f32.mrb[0].mxu0
      %v2935 = vadd.f32 0.0, %v2934
      %v2936 = vpop.f32.mrb[0].mxu0
      %2937 = vdwg.mxu0
      %2939 = vrot.lane.b32.xlu0 %v2935, 32
      %v2940 = vpop.permute.xlu0 %2939
      %v2942 = vadd.f32 %v2550, %v2940
      %v2943 = vlaneseq
      %v2944 = vshrl.u32 %v2943, 7
      %v2945 = vsub.s32 0, %v2944
      %v2946 = vrot.slane %v1871, %v2945
      %2948 = vrot.lane.b32.xlu0 %v2946, 32
      %v2949 = vpop.permute.xlu0 %2948
      %v2951 = vadd.f32 %v2942, %v2949
      %2953 = vrot.lane.b32.xlu0 %v2737, 96
      %v2954 = vpop.permute.xlu0 %2953
      %v2956 = vsel %vm1910, %v2954, 0.0
      %2957 = vadd.xlane.f32.xlu0 %v2956
      %v2958 = vpop.xlane.xlu0 %2957
      %v2959 = vmul.f32 %v2958, %v1063
      %v2960 = vsub.f32 %v2737, %v2959
      %v2961 = vmul.f32 %v2960, %v2960
      %2963 = vrot.lane.b32.xlu0 %v2961, 96
      %v2964 = vpop.permute.xlu0 %2963
      %v2966 = vsel %vm1910, %v2964, 0.0
      %2967 = vadd.xlane.f32.xlu0 %v2966
      %v2968 = vpop.xlane.xlu0 %2967
      %v2969 = vmul.f32 %v2968, %v1063
      %v2970 = vadd.f32 %v2969, 1e-05
      %v2971 = vrsqrt.pop %v2970
      %v2972 = vmul.f32 %v2960, %v2971
      %2974 = vrot.lane.b32.xlu0 %v1880, 32
      %v2975 = vpop.permute.xlu0 %2974
      %v2977 = vmul.f32 %v2972, %v2975
      %2979 = vrot.lane.b32.xlu0 %v1881, 32
      %v2980 = vpop.permute.xlu0 %2979
      %v2982 = vadd.f32 %v2977, %v2980
      %v2983 = vld [vmem:[%s11 + $0x80] sm:$0xff]
      %v2984 = vld [vmem:[%s11 + $0x88] sm:$0xff]
      %v2985 = vld [vmem:[%s11 + $0x90] sm:$0xff]
      %v2986 = vld [vmem:[%s11 + $0x98] sm:$0xff]
      %2988 = vrot.lane.b32.xlu0 %v2982, 96
      %v2989 = vpop.permute.xlu0 %2988
      %v2990 = vsel %vm812, %v2989, 0
      %2992 = vmatprep.subr.mxu0 0.0
      %2993 = vmatpush1.msra.mxu0 %v2983
      %2994 = vmatprep.subr.mxu0 0.0
      %2995 = vmatpush1.msra.mxu0 %v2984
      %2996 = vmatprep.subr.mxu0 0.0
      %2997 = vmatpush1.msra.mxu0 %v2985
      %2998 = vmatprep.subr.mxu0 0.0
      %2999 = vmatpush1.msra.mxu0 %v2986
      %3000 = vmatprep.subr.mxu0 0.0
      %3001 = vmatpush1.msra.mxu0 0.0
      %3002 = vmatprep.subr.mxu0 0.0
      %3003 = vmatpush1.msra.mxu0 0.0
      %3004 = vmatprep.subr.mxu0 0.0
      %3005 = vmatpush1.msra.mxu0 0.0
      %3006 = vmatprep.subr.mxu0 0.0
      %3007 = vmatpush1.msra.mxu0 0.0
      %3008 = vmatprep.subr.mxu0 0.0
      %3009 = vmatpush1.msra.mxu0 0.0
      %3010 = vmatprep.subr.mxu0 0.0
      %3011 = vmatpush1.msra.mxu0 0.0
      %3012 = vmatprep.subr.mxu0 0.0
      %3013 = vmatpush1.msra.mxu0 0.0
      %3014 = vmatprep.subr.mxu0 0.0
      %3015 = vmatpush1.msra.mxu0 0.0
      %3016 = vmatprep.subr.mxu0 0.0
      %3017 = vmatpush1.msra.mxu0 0.0
      %3018 = vmatprep.subr.mxu0 0.0
      %3019 = vmatpush1.msra.mxu0 0.0
      %3020 = vmatprep.subr.mxu0 0.0
      %3021 = vmatpush1.msra.mxu0 0.0
      %3022 = vmatprep.subr.mxu0 0.0
      %3023 = vmatpush1.msra.mxu0 0.0
      %3024 = vmatprep.subr.mxu0 0.0
      %3025 = vmatpush1.msra.mxu0 0.0
      %3026 = vmatprep.subr.mxu0 0.0
      %3027 = vmatpush1.msra.mxu0 0.0
      %3028 = vmatprep.subr.mxu0 0.0
      %3029 = vmatpush1.msra.mxu0 0.0
      %3030 = vmatprep.subr.mxu0 0.0
      %3031 = vmatpush1.msra.mxu0 0.0
      %3032 = vmatprep.subr.mxu0 0.0
      %3033 = vmatpush1.msra.mxu0 0.0
      %3034 = vmatprep.subr.mxu0 0.0
      %3035 = vmatpush1.msra.mxu0 0.0
      %3036 = vmatprep.subr.mxu0 0.0
      %3037 = vmatpush1.msra.mxu0 0.0
      %3038 = vmatprep.subr.mxu0 0.0
      %3039 = vmatpush1.msra.mxu0 0.0
      %3040 = vmatprep.subr.mxu0 0.0
      %3041 = vmatpush1.msra.mxu0 0.0
      %3042 = vmatprep.subr.mxu0 0.0
      %3043 = vmatpush1.msra.mxu0 0.0
      %3044 = vmatprep.subr.mxu0 0.0
      %3045 = vmatpush1.msra.mxu0 0.0
      %3046 = vmatprep.subr.mxu0 0.0
      %3047 = vmatpush1.msra.mxu0 0.0
      %3048 = vmatprep.subr.mxu0 0.0
      %3049 = vmatpush1.msra.mxu0 0.0
      %3050 = vmatprep.subr.mxu0 0.0
      %3051 = vmatpush1.msra.mxu0 0.0
      %3052 = vmatprep.subr.mxu0 0.0
      %3053 = vmatpush1.msra.mxu0 0.0
      %3054 = vmatprep.subr.mxu0 0.0
      %3055 = vmatpush1.msra.mxu0 0.0
      %3056 = vmatprep.mubr.f32.mxu0 0.0
      %3057 = vmatmul.mubr.f32.gmra.mrb[0].mxu0 %v2990
      %v3058 = vpop.f32.mrb[0].mxu0
      %v3059 = vadd.f32 %v1872, %v3058
      %v3060 = vpop.f32.mrb[0].mxu0
      %3061 = vdwg.mxu0
      %v3062 = vmax.f32 %v3059, 0.0
      %v3063 = vld [vmem:[%s11 + $0xa0] sm:$0xff]
      %v3064 = vld [vmem:[%s11 + $0xa8] sm:$0xff]
      %v3065 = vld [vmem:[%s11 + $0xb0] sm:$0xff]
      %v3066 = vld [vmem:[%s11 + $0xb8] sm:$0xff]
      %v3068 = vsel %vm812, %v3062, 0
      %3070 = vmatprep.subr.mxu0 0.0
      %3071 = vmatpush1.msra.mxu0 %v3063
      %3072 = vmatprep.subr.mxu0 0.0
      %3073 = vmatpush1.msra.mxu0 %v3064
      %3074 = vmatprep.subr.mxu0 0.0
      %3075 = vmatpush1.msra.mxu0 %v3065
      %3076 = vmatprep.subr.mxu0 0.0
      %3077 = vmatpush1.msra.mxu0 %v3066
      %3078 = vmatprep.subr.mxu0 0.0
      %3079 = vmatpush1.msra.mxu0 0.0
      %3080 = vmatprep.subr.mxu0 0.0
      %3081 = vmatpush1.msra.mxu0 0.0
      %3082 = vmatprep.subr.mxu0 0.0
      %3083 = vmatpush1.msra.mxu0 0.0
      %3084 = vmatprep.subr.mxu0 0.0
      %3085 = vmatpush1.msra.mxu0 0.0
      %3086 = vmatprep.subr.mxu0 0.0
      %3087 = vmatpush1.msra.mxu0 0.0
      %3088 = vmatprep.subr.mxu0 0.0
      %3089 = vmatpush1.msra.mxu0 0.0
      %3090 = vmatprep.subr.mxu0 0.0
      %3091 = vmatpush1.msra.mxu0 0.0
      %3092 = vmatprep.subr.mxu0 0.0
      %3093 = vmatpush1.msra.mxu0 0.0
      %3094 = vmatprep.subr.mxu0 0.0
      %3095 = vmatpush1.msra.mxu0 0.0
      %3096 = vmatprep.subr.mxu0 0.0
      %3097 = vmatpush1.msra.mxu0 0.0
      %3098 = vmatprep.subr.mxu0 0.0
      %3099 = vmatpush1.msra.mxu0 0.0
      %3100 = vmatprep.subr.mxu0 0.0
      %3101 = vmatpush1.msra.mxu0 0.0
      %3102 = vmatprep.subr.mxu0 0.0
      %3103 = vmatpush1.msra.mxu0 0.0
      %3104 = vmatprep.subr.mxu0 0.0
      %3105 = vmatpush1.msra.mxu0 0.0
      %3106 = vmatprep.subr.mxu0 0.0
      %3107 = vmatpush1.msra.mxu0 0.0
      %3108 = vmatprep.subr.mxu0 0.0
      %3109 = vmatpush1.msra.mxu0 0.0
      %3110 = vmatprep.subr.mxu0 0.0
      %3111 = vmatpush1.msra.mxu0 0.0
      %3112 = vmatprep.subr.mxu0 0.0
      %3113 = vmatpush1.msra.mxu0 0.0
      %3114 = vmatprep.subr.mxu0 0.0
      %3115 = vmatpush1.msra.mxu0 0.0
      %3116 = vmatprep.subr.mxu0 0.0
      %3117 = vmatpush1.msra.mxu0 0.0
      %3118 = vmatprep.subr.mxu0 0.0
      %3119 = vmatpush1.msra.mxu0 0.0
      %3120 = vmatprep.subr.mxu0 0.0
      %3121 = vmatpush1.msra.mxu0 0.0
      %3122 = vmatprep.subr.mxu0 0.0
      %3123 = vmatpush1.msra.mxu0 0.0
      %3124 = vmatprep.subr.mxu0 0.0
      %3125 = vmatpush1.msra.mxu0 0.0
      %3126 = vmatprep.subr.mxu0 0.0
      %3127 = vmatpush1.msra.mxu0 0.0
      %3128 = vmatprep.subr.mxu0 0.0
      %3129 = vmatpush1.msra.mxu0 0.0
      %3130 = vmatprep.subr.mxu0 0.0
      %3131 = vmatpush1.msra.mxu0 0.0
      %3132 = vmatprep.subr.mxu0 0.0
      %3133 = vmatpush1.msra.mxu0 0.0
      %3134 = vmatprep.mubr.f32.mxu0 0.0
      %3135 = vmatmul.mubr.f32.gmra.mrb[0].mxu0 %v3068
      %v3136 = vpop.f32.mrb[0].mxu0
      %v3137 = vadd.f32 0.0, %v3136
      %v3138 = vpop.f32.mrb[0].mxu0
      %3139 = vdwg.mxu0
      %3141 = vrot.lane.b32.xlu0 %v3137, 32
      %v3142 = vpop.permute.xlu0 %3141
      %v3144 = vadd.f32 %v2737, %v3142
      %3146 = vrot.lane.b32.xlu0 %v1873, 32
      %v3147 = vpop.permute.xlu0 %3146
      %v3149 = vadd.f32 %v3144, %v3147
      %3151 = vrot.lane.b32.xlu0 %v2951, 96
      %v3152 = vpop.permute.xlu0 %3151
      %v3154 = vsel %vm1886, %v3152, 0.0
      %3155 = vadd.xlane.f32.xlu0 %v3154
      %v3156 = vpop.xlane.xlu0 %3155
      %v3157 = vmul.f32 %v3156, %v1063
      %v3158 = vsub.f32 %v2951, %v3157
      %v3159 = vmul.f32 %v3158, %v3158
      %3161 = vrot.lane.b32.xlu0 %v3159, 96
      %v3162 = vpop.permute.xlu0 %3161
      %v3164 = vsel %vm1886, %v3162, 0.0
      %3165 = vadd.xlane.f32.xlu0 %v3164
      %v3166 = vpop.xlane.xlu0 %3165
      %v3167 = vmul.f32 %v3166, %v1063
      %v3168 = vadd.f32 %v3167, 1e-05
      %v3169 = vrsqrt.pop %v3168
      %v3170 = vmul.f32 %v3158, %v3169
      %3172 = vrot.lane.b32.xlu0 %v1903, 32
      %v3173 = vpop.permute.xlu0 %3172
      %v3175 = vmul.f32 %v3170, %v3173
      %3177 = vrot.lane.b32.xlu0 %v1908, 32
      %v3178 = vpop.permute.xlu0 %3177
      %v3180 = vadd.f32 %v3175, %v3178
      %3182 = vrot.lane.b32.xlu0 %v3149, 96
      %v3183 = vpop.permute.xlu0 %3182
      %v3185 = vsel %vm1910, %v3183, 0.0
      %3186 = vadd.xlane.f32.xlu0 %v3185
      %v3187 = vpop.xlane.xlu0 %3186
      %v3188 = vmul.f32 %v3187, %v1063
      %v3189 = vsub.f32 %v3149, %v3188
      %v3190 = vmul.f32 %v3189, %v3189
      %3192 = vrot.lane.b32.xlu0 %v3190, 96
      %v3193 = vpop.permute.xlu0 %3192
      %v3195 = vsel %vm1910, %v3193, 0.0
      %3196 = vadd.xlane.f32.xlu0 %v3195
      %v3197 = vpop.xlane.xlu0 %3196
      %v3198 = vmul.f32 %v3197, %v1063
      %v3199 = vadd.f32 %v3198, 1e-05
      %v3200 = vrsqrt.pop %v3199
      %v3201 = vmul.f32 %v3189, %v3200
      %3203 = vrot.lane.b32.xlu0 %v1876, 32
      %v3204 = vpop.permute.xlu0 %3203
      %v3206 = vmul.f32 %v3201, %v3204
      %3208 = vrot.lane.b32.xlu0 %v1877, 32
      %v3209 = vpop.permute.xlu0 %3208
      %v3211 = vadd.f32 %v3206, %v3209
      %3213 = vrot.lane.b32.xlu0 %v3180, 96
      %v3214 = vpop.permute.xlu0 %3213
      %v3215 = vsel %vm812, %v3214, 0
      %3217 = vmatprep.subr.mxu0 0.0
      %3218 = vmatpush1.msra.mxu0 %v1926
      %3219 = vmatprep.subr.mxu0 0.0
      %3220 = vmatpush1.msra.mxu0 %v1927
      %3221 = vmatprep.subr.mxu0 0.0
      %3222 = vmatpush1.msra.mxu0 %v1928
      %3223 = vmatprep.subr.mxu0 0.0
      %3224 = vmatpush1.msra.mxu0 %v1929
      %3225 = vmatprep.subr.mxu0 0.0
      %3226 = vmatpush1.msra.mxu0 0.0
      %3227 = vmatprep.subr.mxu0 0.0
      %3228 = vmatpush1.msra.mxu0 0.0
      %3229 = vmatprep.subr.mxu0 0.0
      %3230 = vmatpush1.msra.mxu0 0.0
      %3231 = vmatprep.subr.mxu0 0.0
      %3232 = vmatpush1.msra.mxu0 0.0
      %3233 = vmatprep.subr.mxu0 0.0
      %3234 = vmatpush1.msra.mxu0 0.0
      %3235 = vmatprep.subr.mxu0 0.0
      %3236 = vmatpush1.msra.mxu0 0.0
      %3237 = vmatprep.subr.mxu0 0.0
      %3238 = vmatpush1.msra.mxu0 0.0
      %3239 = vmatprep.subr.mxu0 0.0
      %3240 = vmatpush1.msra.mxu0 0.0
      %3241 = vmatprep.subr.mxu0 0.0
      %3242 = vmatpush1.msra.mxu0 0.0
      %3243 = vmatprep.subr.mxu0 0.0
      %3244 = vmatpush1.msra.mxu0 0.0
      %3245 = vmatprep.subr.mxu0 0.0
      %3246 = vmatpush1.msra.mxu0 0.0
      %3247 = vmatprep.subr.mxu0 0.0
      %3248 = vmatpush1.msra.mxu0 0.0
      %3249 = vmatprep.subr.mxu0 0.0
      %3250 = vmatpush1.msra.mxu0 0.0
      %3251 = vmatprep.subr.mxu0 0.0
      %3252 = vmatpush1.msra.mxu0 0.0
      %3253 = vmatprep.subr.mxu0 0.0
      %3254 = vmatpush1.msra.mxu0 0.0
      %3255 = vmatprep.subr.mxu0 0.0
      %3256 = vmatpush1.msra.mxu0 0.0
      %3257 = vmatprep.subr.mxu0 0.0
      %3258 = vmatpush1.msra.mxu0 0.0
      %3259 = vmatprep.subr.mxu0 0.0
      %3260 = vmatpush1.msra.mxu0 0.0
      %3261 = vmatprep.subr.mxu0 0.0
      %3262 = vmatpush1.msra.mxu0 0.0
      %3263 = vmatprep.subr.mxu0 0.0
      %3264 = vmatpush1.msra.mxu0 0.0
      %3265 = vmatprep.subr.mxu0 0.0
      %3266 = vmatpush1.msra.mxu0 0.0
      %3267 = vmatprep.subr.mxu0 0.0
      %3268 = vmatpush1.msra.mxu0 0.0
      %3269 = vmatprep.subr.mxu0 0.0
      %3270 = vmatpush1.msra.mxu0 0.0
      %3271 = vmatprep.subr.mxu0 0.0
      %3272 = vmatpush1.msra.mxu0 0.0
      %3273 = vmatprep.subr.mxu0 0.0
      %3274 = vmatpush1.msra.mxu0 0.0
      %3275 = vmatprep.subr.mxu0 0.0
      %3276 = vmatpush1.msra.mxu0 0.0
      %3277 = vmatprep.subr.mxu0 0.0
      %3278 = vmatpush1.msra.mxu0 0.0
      %3279 = vmatprep.subr.mxu0 0.0
      %3280 = vmatpush1.msra.mxu0 0.0
      %3281 = vmatprep.mubr.f32.mxu0 0.0
      %3282 = vmatmul.mubr.f32.gmra.mrb[0].mxu0 %v3215
      %v3283 = vpop.f32.mrb[0].mxu0
      %v3284 = vadd.f32 %v1933, %v3283
      %v3285 = vpop.f32.mrb[0].mxu0
      %3286 = vdwg.mxu0
      %3288 = vrot.lane.b32.xlu0 %v3211, 96
      %v3289 = vpop.permute.xlu0 %3288
      %v3290 = vsel %vm812, %v3289, 0
      %3292 = vmatprep.subr.mxu0 0.0
      %3293 = vmatpush1.msra.mxu0 %v2007
      %3294 = vmatprep.subr.mxu0 0.0
      %3295 = vmatpush1.msra.mxu0 %v2008
      %3296 = vmatprep.subr.mxu0 0.0
      %3297 = vmatpush1.msra.mxu0 %v2009
      %3298 = vmatprep.subr.mxu0 0.0
      %3299 = vmatpush1.msra.mxu0 %v2010
      %3300 = vmatprep.subr.mxu0 0.0
      %3301 = vmatpush1.msra.mxu0 0.0
      %3302 = vmatprep.subr.mxu0 0.0
      %3303 = vmatpush1.msra.mxu0 0.0
      %3304 = vmatprep.subr.mxu0 0.0
      %3305 = vmatpush1.msra.mxu0 0.0
      %3306 = vmatprep.subr.mxu0 0.0
      %3307 = vmatpush1.msra.mxu0 0.0
      %3308 = vmatprep.subr.mxu0 0.0
      %3309 = vmatpush1.msra.mxu0 0.0
      %3310 = vmatprep.subr.mxu0 0.0
      %3311 = vmatpush1.msra.mxu0 0.0
      %3312 = vmatprep.subr.mxu0 0.0
      %3313 = vmatpush1.msra.mxu0 0.0
      %3314 = vmatprep.subr.mxu0 0.0
      %3315 = vmatpush1.msra.mxu0 0.0
      %3316 = vmatprep.subr.mxu0 0.0
      %3317 = vmatpush1.msra.mxu0 0.0
      %3318 = vmatprep.subr.mxu0 0.0
      %3319 = vmatpush1.msra.mxu0 0.0
      %3320 = vmatprep.subr.mxu0 0.0
      %3321 = vmatpush1.msra.mxu0 0.0
      %3322 = vmatprep.subr.mxu0 0.0
      %3323 = vmatpush1.msra.mxu0 0.0
      %3324 = vmatprep.subr.mxu0 0.0
      %3325 = vmatpush1.msra.mxu0 0.0
      %3326 = vmatprep.subr.mxu0 0.0
      %3327 = vmatpush1.msra.mxu0 0.0
      %3328 = vmatprep.subr.mxu0 0.0
      %3329 = vmatpush1.msra.mxu0 0.0
      %3330 = vmatprep.subr.mxu0 0.0
      %3331 = vmatpush1.msra.mxu0 0.0
      %3332 = vmatprep.subr.mxu0 0.0
      %3333 = vmatpush1.msra.mxu0 0.0
      %3334 = vmatprep.subr.mxu0 0.0
      %3335 = vmatpush1.msra.mxu0 0.0
      %3336 = vmatprep.subr.mxu0 0.0
      %3337 = vmatpush1.msra.mxu0 0.0
      %3338 = vmatprep.subr.mxu0 0.0
      %3339 = vmatpush1.msra.mxu0 0.0
      %3340 = vmatprep.subr.mxu0 0.0
      %3341 = vmatpush1.msra.mxu0 0.0
      %3342 = vmatprep.subr.mxu0 0.0
      %3343 = vmatpush1.msra.mxu0 0.0
      %3344 = vmatprep.subr.mxu0 0.0
      %3345 = vmatpush1.msra.mxu0 0.0
      %3346 = vmatprep.subr.mxu0 0.0
      %3347 = vmatpush1.msra.mxu0 0.0
      %3348 = vmatprep.subr.mxu0 0.0
      %3349 = vmatpush1.msra.mxu0 0.0
      %3350 = vmatprep.subr.mxu0 0.0
      %3351 = vmatpush1.msra.mxu0 0.0
      %3352 = vmatprep.subr.mxu0 0.0
      %3353 = vmatpush1.msra.mxu0 0.0
      %3354 = vmatprep.subr.mxu0 0.0
      %3355 = vmatpush1.msra.mxu0 0.0
      %3356 = vmatprep.mubr.f32.mxu0 0.0
      %3357 = vmatmul.mubr.f32.gmra.mrb[0].mxu0 %v3290
      %v3358 = vpop.f32.mrb[0].mxu0
      %v3359 = vadd.f32 %v1869, %v3358
      %v3360 = vpop.f32.mrb[0].mxu0
      %3361 = vdwg.mxu0
      %v3363 = vrot.slane %v3284, 7
      %v3365 = vsel %vm2087, %v3359, %v3363
      %v3367 = vsel %vm812, %v3365, 0
      %3369 = vmatprep.subr.mxu0 %v1783
      %3370 = vmatpush1.msra.mxu0 %v1782
      %3371 = vmatprep.subr.mxu0 %v1785
      %3372 = vmatpush1.msra.mxu0 %v1784
      %3373 = vmatprep.subr.mxu0 %v1787
      %3374 = vmatpush1.msra.mxu0 %v1786
      %3375 = vmatprep.subr.mxu0 %v1789
      %3376 = vmatpush1.msra.mxu0 %v1788
      %3377 = vmatprep.subr.mxu0 0.0
      %3378 = vmatpush1.msra.mxu0 0.0
      %3379 = vmatprep.subr.mxu0 0.0
      %3380 = vmatpush1.msra.mxu0 0.0
      %3381 = vmatprep.subr.mxu0 0.0
      %3382 = vmatpush1.msra.mxu0 0.0
      %3383 = vmatprep.subr.mxu0 0.0
      %3384 = vmatpush1.msra.mxu0 0.0
      %3385 = vmatprep.subr.mxu0 0.0
      %3386 = vmatpush1.msra.mxu0 0.0
      %3387 = vmatprep.subr.mxu0 0.0
      %3388 = vmatpush1.msra.mxu0 0.0
      %3389 = vmatprep.subr.mxu0 0.0
      %3390 = vmatpush1.msra.mxu0 0.0
      %3391 = vmatprep.subr.mxu0 0.0
      %3392 = vmatpush1.msra.mxu0 0.0
      %3393 = vmatprep.subr.mxu0 0.0
      %3394 = vmatpush1.msra.mxu0 0.0
      %3395 = vmatprep.subr.mxu0 0.0
      %3396 = vmatpush1.msra.mxu0 0.0
      %3397 = vmatprep.subr.mxu0 0.0
      %3398 = vmatpush1.msra.mxu0 0.0
      %3399 = vmatprep.subr.mxu0 0.0
      %3400 = vmatpush1.msra.mxu0 0.0
      %3401 = vmatprep.subr.mxu0 0.0
      %3402 = vmatpush1.msra.mxu0 0.0
      %3403 = vmatprep.subr.mxu0 0.0
      %3404 = vmatpush1.msra.mxu0 0.0
      %3405 = vmatprep.subr.mxu0 0.0
      %3406 = vmatpush1.msra.mxu0 0.0
      %3407 = vmatprep.subr.mxu0 0.0
      %3408 = vmatpush1.msra.mxu0 0.0
      %3409 = vmatprep.subr.mxu0 0.0
      %3410 = vmatpush1.msra.mxu0 0.0
      %3411 = vmatprep.subr.mxu0 0.0
      %3412 = vmatpush1.msra.mxu0 0.0
      %3413 = vmatprep.subr.mxu0 0.0
      %3414 = vmatpush1.msra.mxu0 0.0
      %3415 = vmatprep.subr.mxu0 0.0
      %3416 = vmatpush1.msra.mxu0 0.0
      %3417 = vmatprep.subr.mxu0 0.0
      %3418 = vmatpush1.msra.mxu0 0.0
      %3419 = vmatprep.subr.mxu0 0.0
      %3420 = vmatpush1.msra.mxu0 0.0
      %3421 = vmatprep.subr.mxu0 0.0
      %3422 = vmatpush1.msra.mxu0 0.0
      %3423 = vmatprep.subr.mxu0 0.0
      %3424 = vmatpush1.msra.mxu0 0.0
      %3425 = vmatprep.subr.mxu0 0.0
      %3426 = vmatpush1.msra.mxu0 0.0
      %3427 = vmatprep.subr.mxu0 0.0
      %3428 = vmatpush1.msra.mxu0 0.0
      %3429 = vmatprep.subr.mxu0 0.0
      %3430 = vmatpush1.msra.mxu0 0.0
      %3431 = vmatprep.subr.mxu0 0.0
      %3432 = vmatpush1.msra.mxu0 0.0
      %3433 = vmatprep.mubr.f32.mxu0 0.0
      %3434 = vmatmul.mubr.f32.gmra.mrb[0].mxu0 %v3367
      %v3435 = vpop.f32.mrb[0].mxu0
      %v3436 = vadd.f32 0.0, %v3435
      %v3437 = vpop.f32.mrb[0].mxu0
      %v3438 = vadd.f32 0.0, %v3437
      %3439 = vdwg.mxu0
      %v3440 = vmul.f32 %v3436, 0.17677669
      %v3441 = vmul.f32 %v3438, 0.17677669
      %v3442 = vsel %vm2165, %v3440, -inf
      %v3443 = vrot.slane %v3442, 4
      %v3444 = vmax.f32 %v3442, %v3443
      %v3445 = vrot.slane %v3444, 2
      %v3446 = vmax.f32 %v3444, %v3445
      %v3447 = vrot.slane %v3446, 1
      %v3448 = vmax.f32 %v3446, %v3447
      %v3449 = vsel %vm2165, %v3441, -inf
      %v3450 = vrot.slane %v3449, 4
      %v3451 = vmax.f32 %v3449, %v3450
      %v3452 = vrot.slane %v3451, 2
      %v3453 = vmax.f32 %v3451, %v3452
      %v3454 = vrot.slane %v3453, 1
      %v3455 = vmax.f32 %v3453, %v3454
      %v3456 = vsub.f32 %v3440, %v3448
      %v3457 = vsub.f32 %v3441, %v3455
      %v3458 = vmul.f32 %v3456, 1.442695
      %v3459 = vpow.pop %v3458
      %v3460 = vmul.f32 %v3457, 1.442695
      %v3461 = vpow.pop %v3460
      %v3462 = vsel %vm2165, %v3459, 0.0
      %v3463 = vrot.slane %v3462, 4
      %v3464 = vadd.f32 %v3462, %v3463
      %v3465 = vrot.slane %v3464, 2
      %v3466 = vadd.f32 %v3464, %v3465
      %v3467 = vrot.slane %v3466, 1
      %v3468 = vadd.f32 %v3466, %v3467
      %v3469 = vsel %vm2165, %v3461, 0.0
      %v3470 = vrot.slane %v3469, 4
      %v3471 = vadd.f32 %v3469, %v3470
      %v3472 = vrot.slane %v3471, 2
      %v3473 = vadd.f32 %v3471, %v3472
      %v3474 = vrot.slane %v3473, 1
      %v3475 = vadd.f32 %v3473, %v3474
      %v3476 = vrcp.pop %v3468
      %v3477 = vrcp.pop %v3475
      %v3478 = vmul.f32 %v3459, %v3476
      %v3479 = vmul.f32 %v3461, %v3477
      %v3480 = vadd.f32 %v3478, 1e-08
      %v3481 = vadd.f32 %v3479, 1e-08
      %v3482 = vsel %vm2165, %v3480, 0.0
      %v3483 = vsel %vm2165, %v3481, 0.0
      %v3484 = vadd.f32 %v3482, %v3483
      %3485 = vadd.xlane.f32.xlu0 %v3484
      %v3486 = vpop.xlane.xlu0 %3485
      %v3487 = vrcp.pop %v3486
      %v3488 = vmul.f32 %v3480, %v3487
      %v3489 = vmul.f32 %v3481, %v3487
      %v3492 = vrot.slane %v3488, 1
      %v3493 = vrot.slane %v3489, 1
      %3496 = vmatprep.subr.mxu0 %v1816
      %3497 = vmatpush1.xpose.msra.mxu0 %v1815
      %3498 = vmatprep.subr.mxu0 %v1818
      %3499 = vmatpush1.xpose.msra.mxu0 %v1817
      %3500 = vmatprep.subr.mxu0 %v1820
      %3501 = vmatpush1.xpose.msra.mxu0 %v1819
      %3502 = vmatprep.subr.mxu0 %v1822
      %3503 = vmatpush1.xpose.msra.mxu0 %v1821
      %3504 = vmatprep.subr.mxu0 0.0
      %3505 = vmatpush1.xpose.msra.mxu0 0.0
      %3506 = vmatprep.subr.mxu0 0.0
      %3507 = vmatpush1.xpose.msra.mxu0 0.0
      %3508 = vmatprep.subr.mxu0 0.0
      %3509 = vmatpush1.xpose.msra.mxu0 0.0
      %3510 = vmatprep.subr.mxu0 0.0
      %3511 = vmatpush1.xpose.msra.mxu0 0.0
      %3512 = vmatprep.subr.mxu0 0.0
      %3513 = vmatpush1.xpose.msra.mxu0 0.0
      %3514 = vmatprep.subr.mxu0 0.0
      %3515 = vmatpush1.xpose.msra.mxu0 0.0
      %3516 = vmatprep.subr.mxu0 0.0
      %3517 = vmatpush1.xpose.msra.mxu0 0.0
      %3518 = vmatprep.subr.mxu0 0.0
      %3519 = vmatpush1.xpose.msra.mxu0 0.0
      %3520 = vmatprep.subr.mxu0 0.0
      %3521 = vmatpush1.xpose.msra.mxu0 0.0
      %3522 = vmatprep.subr.mxu0 0.0
      %3523 = vmatpush1.xpose.msra.mxu0 0.0
      %3524 = vmatprep.subr.mxu0 0.0
      %3525 = vmatpush1.xpose.msra.mxu0 0.0
      %3526 = vmatprep.subr.mxu0 0.0
      %3527 = vmatpush1.xpose.msra.mxu0 0.0
      %3528 = vmatprep.subr.mxu0 0.0
      %3529 = vmatpush1.xpose.msra.mxu0 0.0
      %3530 = vmatprep.subr.mxu0 0.0
      %3531 = vmatpush1.xpose.msra.mxu0 0.0
      %3532 = vmatprep.subr.mxu0 0.0
      %3533 = vmatpush1.xpose.msra.mxu0 0.0
      %3534 = vmatprep.subr.mxu0 0.0
      %3535 = vmatpush1.xpose.msra.mxu0 0.0
      %3536 = vmatprep.subr.mxu0 0.0
      %3537 = vmatpush1.xpose.msra.mxu0 0.0
      %3538 = vmatprep.subr.mxu0 0.0
      %3539 = vmatpush1.xpose.msra.mxu0 0.0
      %3540 = vmatprep.subr.mxu0 0.0
      %3541 = vmatpush1.xpose.msra.mxu0 0.0
      %3542 = vmatprep.subr.mxu0 0.0
      %3543 = vmatpush1.xpose.msra.mxu0 0.0
      %3544 = vmatprep.subr.mxu0 0.0
      %3545 = vmatpush1.xpose.msra.mxu0 0.0
      %3546 = vmatprep.subr.mxu0 0.0
      %3547 = vmatpush1.xpose.msra.mxu0 0.0
      %3548 = vmatprep.subr.mxu0 0.0
      %3549 = vmatpush1.xpose.msra.mxu0 0.0
      %3550 = vmatprep.subr.mxu0 0.0
      %3551 = vmatpush1.xpose.msra.mxu0 0.0
      %3552 = vmatprep.subr.mxu0 0.0
      %3553 = vmatpush1.xpose.msra.mxu0 0.0
      %3554 = vmatprep.subr.mxu0 0.0
      %3555 = vmatpush1.xpose.msra.mxu0 0.0
      %3556 = vmatprep.subr.mxu0 0.0
      %3557 = vmatpush1.xpose.msra.mxu0 0.0
      %3558 = vmatprep.subr.mxu0 0.0
      %3559 = vmatpush1.xpose.msra.mxu0 0.0
      %3560 = vmatprep.mubr.f32.mxu0 %v3493
      %3561 = vmatmul.mubr.f32.gmra.mrb[0].mxu0 %v3492
      %v3562 = vpop.f32.mrb[0].mxu0
      %v3563 = vadd.f32 0.0, %v3562
      %v3564 = vpop.f32.mrb[0].mxu0
      %3565 = vdwg.mxu0
      %3566 = vmatprep.subr.mxu0 %v1849
      %3567 = vmatpush1.xpose.msra.mxu0 %v1848
      %3568 = vmatprep.subr.mxu0 %v1851
      %3569 = vmatpush1.xpose.msra.mxu0 %v1850
      %3570 = vmatprep.subr.mxu0 %v1853
      %3571 = vmatpush1.xpose.msra.mxu0 %v1852
      %3572 = vmatprep.subr.mxu0 %v1855
      %3573 = vmatpush1.xpose.msra.mxu0 %v1854
      %3574 = vmatprep.subr.mxu0 0.0
      %3575 = vmatpush1.xpose.msra.mxu0 0.0
      %3576 = vmatprep.subr.mxu0 0.0
      %3577 = vmatpush1.xpose.msra.mxu0 0.0
      %3578 = vmatprep.subr.mxu0 0.0
      %3579 = vmatpush1.xpose.msra.mxu0 0.0
      %3580 = vmatprep.subr.mxu0 0.0
      %3581 = vmatpush1.xpose.msra.mxu0 0.0
      %3582 = vmatprep.subr.mxu0 0.0
      %3583 = vmatpush1.xpose.msra.mxu0 0.0
      %3584 = vmatprep.subr.mxu0 0.0
      %3585 = vmatpush1.xpose.msra.mxu0 0.0
      %3586 = vmatprep.subr.mxu0 0.0
      %3587 = vmatpush1.xpose.msra.mxu0 0.0
      %3588 = vmatprep.subr.mxu0 0.0
      %3589 = vmatpush1.xpose.msra.mxu0 0.0
      %3590 = vmatprep.subr.mxu0 0.0
      %3591 = vmatpush1.xpose.msra.mxu0 0.0
      %3592 = vmatprep.subr.mxu0 0.0
      %3593 = vmatpush1.xpose.msra.mxu0 0.0
      %3594 = vmatprep.subr.mxu0 0.0
      %3595 = vmatpush1.xpose.msra.mxu0 0.0
      %3596 = vmatprep.subr.mxu0 0.0
      %3597 = vmatpush1.xpose.msra.mxu0 0.0
      %3598 = vmatprep.subr.mxu0 0.0
      %3599 = vmatpush1.xpose.msra.mxu0 0.0
      %3600 = vmatprep.subr.mxu0 0.0
      %3601 = vmatpush1.xpose.msra.mxu0 0.0
      %3602 = vmatprep.subr.mxu0 0.0
      %3603 = vmatpush1.xpose.msra.mxu0 0.0
      %3604 = vmatprep.subr.mxu0 0.0
      %3605 = vmatpush1.xpose.msra.mxu0 0.0
      %3606 = vmatprep.subr.mxu0 0.0
      %3607 = vmatpush1.xpose.msra.mxu0 0.0
      %3608 = vmatprep.subr.mxu0 0.0
      %3609 = vmatpush1.xpose.msra.mxu0 0.0
      %3610 = vmatprep.subr.mxu0 0.0
      %3611 = vmatpush1.xpose.msra.mxu0 0.0
      %3612 = vmatprep.subr.mxu0 0.0
      %3613 = vmatpush1.xpose.msra.mxu0 0.0
      %3614 = vmatprep.subr.mxu0 0.0
      %3615 = vmatpush1.xpose.msra.mxu0 0.0
      %3616 = vmatprep.subr.mxu0 0.0
      %3617 = vmatpush1.xpose.msra.mxu0 0.0
      %3618 = vmatprep.subr.mxu0 0.0
      %3619 = vmatpush1.xpose.msra.mxu0 0.0
      %3620 = vmatprep.subr.mxu0 0.0
      %3621 = vmatpush1.xpose.msra.mxu0 0.0
      %3622 = vmatprep.subr.mxu0 0.0
      %3623 = vmatpush1.xpose.msra.mxu0 0.0
      %3624 = vmatprep.subr.mxu0 0.0
      %3625 = vmatpush1.xpose.msra.mxu0 0.0
      %3626 = vmatprep.subr.mxu0 0.0
      %3627 = vmatpush1.xpose.msra.mxu0 0.0
      %3628 = vmatprep.subr.mxu0 0.0
      %3629 = vmatpush1.xpose.msra.mxu0 0.0
      %3630 = vmatprep.mubr.f32.mxu0 %v3489
      %3631 = vmatmul.mubr.f32.gmra.mrb[0].mxu0 %v3488
      %v3632 = vpop.f32.mrb[0].mxu0
      %v3633 = vadd.f32 0.0, %v3632
      %v3634 = vpop.f32.mrb[0].mxu0
      %3635 = vdwg.mxu0
      %v3637 = vsel %vm812, %v3563, 0
      %3639 = vmatprep.subr.mxu0 0.0
      %3640 = vmatpush1.msra.mxu0 %v2360
      %3641 = vmatprep.subr.mxu0 0.0
      %3642 = vmatpush1.msra.mxu0 %v2361
      %3643 = vmatprep.subr.mxu0 0.0
      %3644 = vmatpush1.msra.mxu0 %v2362
      %3645 = vmatprep.subr.mxu0 0.0
      %3646 = vmatpush1.msra.mxu0 %v2363
      %3647 = vmatprep.subr.mxu0 0.0
      %3648 = vmatpush1.msra.mxu0 0.0
      %3649 = vmatprep.subr.mxu0 0.0
      %3650 = vmatpush1.msra.mxu0 0.0
      %3651 = vmatprep.subr.mxu0 0.0
      %3652 = vmatpush1.msra.mxu0 0.0
      %3653 = vmatprep.subr.mxu0 0.0
      %3654 = vmatpush1.msra.mxu0 0.0
      %3655 = vmatprep.subr.mxu0 0.0
      %3656 = vmatpush1.msra.mxu0 0.0
      %3657 = vmatprep.subr.mxu0 0.0
      %3658 = vmatpush1.msra.mxu0 0.0
      %3659 = vmatprep.subr.mxu0 0.0
      %3660 = vmatpush1.msra.mxu0 0.0
      %3661 = vmatprep.subr.mxu0 0.0
      %3662 = vmatpush1.msra.mxu0 0.0
      %3663 = vmatprep.subr.mxu0 0.0
      %3664 = vmatpush1.msra.mxu0 0.0
      %3665 = vmatprep.subr.mxu0 0.0
      %3666 = vmatpush1.msra.mxu0 0.0
      %3667 = vmatprep.subr.mxu0 0.0
      %3668 = vmatpush1.msra.mxu0 0.0
      %3669 = vmatprep.subr.mxu0 0.0
      %3670 = vmatpush1.msra.mxu0 0.0
      %3671 = vmatprep.subr.mxu0 0.0
      %3672 = vmatpush1.msra.mxu0 0.0
      %3673 = vmatprep.subr.mxu0 0.0
      %3674 = vmatpush1.msra.mxu0 0.0
      %3675 = vmatprep.subr.mxu0 0.0
      %3676 = vmatpush1.msra.mxu0 0.0
      %3677 = vmatprep.subr.mxu0 0.0
      %3678 = vmatpush1.msra.mxu0 0.0
      %3679 = vmatprep.subr.mxu0 0.0
      %3680 = vmatpush1.msra.mxu0 0.0
      %3681 = vmatprep.subr.mxu0 0.0
      %3682 = vmatpush1.msra.mxu0 0.0
      %3683 = vmatprep.subr.mxu0 0.0
      %3684 = vmatpush1.msra.mxu0 0.0
      %3685 = vmatprep.subr.mxu0 0.0
      %3686 = vmatpush1.msra.mxu0 0.0
      %3687 = vmatprep.subr.mxu0 0.0
      %3688 = vmatpush1.msra.mxu0 0.0
      %3689 = vmatprep.subr.mxu0 0.0
      %3690 = vmatpush1.msra.mxu0 0.0
      %3691 = vmatprep.subr.mxu0 0.0
      %3692 = vmatpush1.msra.mxu0 0.0
      %3693 = vmatprep.subr.mxu0 0.0
      %3694 = vmatpush1.msra.mxu0 0.0
      %3695 = vmatprep.subr.mxu0 0.0
      %3696 = vmatpush1.msra.mxu0 0.0
      %3697 = vmatprep.subr.mxu0 0.0
      %3698 = vmatpush1.msra.mxu0 0.0
      %3699 = vmatprep.subr.mxu0 0.0
      %3700 = vmatpush1.msra.mxu0 0.0
      %3701 = vmatprep.subr.mxu0 0.0
      %3702 = vmatpush1.msra.mxu0 0.0
      %3703 = vmatprep.mubr.f32.mxu0 0.0
      %3704 = vmatmul.mubr.f32.gmra.mrb[0].mxu0 %v3637
      %v3705 = vpop.f32.mrb[0].mxu0
      %v3706 = vadd.f32 %v2371, %v3705
      %v3707 = vpop.f32.mrb[0].mxu0
      %3708 = vdwg.mxu0
      %v3709 = vsel %vm812, %v3152, 0
      %3711 = vmatprep.subr.mxu0 0.0
      %3712 = vmatpush1.msra.mxu0 %v2364
      %3713 = vmatprep.subr.mxu0 0.0
      %3714 = vmatpush1.msra.mxu0 %v2365
      %3715 = vmatprep.subr.mxu0 0.0
      %3716 = vmatpush1.msra.mxu0 %v2366
      %3717 = vmatprep.subr.mxu0 0.0
      %3718 = vmatpush1.msra.mxu0 %v2367
      %3719 = vmatprep.subr.mxu0 0.0
      %3720 = vmatpush1.msra.mxu0 0.0
      %3721 = vmatprep.subr.mxu0 0.0
      %3722 = vmatpush1.msra.mxu0 0.0
      %3723 = vmatprep.subr.mxu0 0.0
      %3724 = vmatpush1.msra.mxu0 0.0
      %3725 = vmatprep.subr.mxu0 0.0
      %3726 = vmatpush1.msra.mxu0 0.0
      %3727 = vmatprep.subr.mxu0 0.0
      %3728 = vmatpush1.msra.mxu0 0.0
      %3729 = vmatprep.subr.mxu0 0.0
      %3730 = vmatpush1.msra.mxu0 0.0
      %3731 = vmatprep.subr.mxu0 0.0
      %3732 = vmatpush1.msra.mxu0 0.0
      %3733 = vmatprep.subr.mxu0 0.0
      %3734 = vmatpush1.msra.mxu0 0.0
      %3735 = vmatprep.subr.mxu0 0.0
      %3736 = vmatpush1.msra.mxu0 0.0
      %3737 = vmatprep.subr.mxu0 0.0
      %3738 = vmatpush1.msra.mxu0 0.0
      %3739 = vmatprep.subr.mxu0 0.0
      %3740 = vmatpush1.msra.mxu0 0.0
      %3741 = vmatprep.subr.mxu0 0.0
      %3742 = vmatpush1.msra.mxu0 0.0
      %3743 = vmatprep.subr.mxu0 0.0
      %3744 = vmatpush1.msra.mxu0 0.0
      %3745 = vmatprep.subr.mxu0 0.0
      %3746 = vmatpush1.msra.mxu0 0.0
      %3747 = vmatprep.subr.mxu0 0.0
      %3748 = vmatpush1.msra.mxu0 0.0
      %3749 = vmatprep.subr.mxu0 0.0
      %3750 = vmatpush1.msra.mxu0 0.0
      %3751 = vmatprep.subr.mxu0 0.0
      %3752 = vmatpush1.msra.mxu0 0.0
      %3753 = vmatprep.subr.mxu0 0.0
      %3754 = vmatpush1.msra.mxu0 0.0
      %3755 = vmatprep.subr.mxu0 0.0
      %3756 = vmatpush1.msra.mxu0 0.0
      %3757 = vmatprep.subr.mxu0 0.0
      %3758 = vmatpush1.msra.mxu0 0.0
      %3759 = vmatprep.subr.mxu0 0.0
      %3760 = vmatpush1.msra.mxu0 0.0
      %3761 = vmatprep.subr.mxu0 0.0
      %3762 = vmatpush1.msra.mxu0 0.0
      %3763 = vmatprep.subr.mxu0 0.0
      %3764 = vmatpush1.msra.mxu0 0.0
      %3765 = vmatprep.subr.mxu0 0.0
      %3766 = vmatpush1.msra.mxu0 0.0
      %3767 = vmatprep.subr.mxu0 0.0
      %3768 = vmatpush1.msra.mxu0 0.0
      %3769 = vmatprep.subr.mxu0 0.0
      %3770 = vmatpush1.msra.mxu0 0.0
      %3771 = vmatprep.subr.mxu0 0.0
      %3772 = vmatpush1.msra.mxu0 0.0
      %3773 = vmatprep.subr.mxu0 0.0
      %3774 = vmatpush1.msra.mxu0 0.0
      %3775 = vmatprep.mubr.f32.mxu0 0.0
      %3776 = vmatmul.mubr.f32.gmra.mrb[0].mxu0 %v3709
      %v3777 = vpop.f32.mrb[0].mxu0
      %v3778 = vadd.f32 %v2448, %v3777
      %v3779 = vpop.f32.mrb[0].mxu0
      %3780 = vdwg.mxu0
      %v3781 = vadd.f32 %v3706, %v3778
      %v3782 = vxor.u32 %v3781, 2147483648
      %v3783 = vmul.f32 %v3782, 1.442695
      %v3784 = vpow.pop %v3783
      %v3785 = vadd.f32 %v3784, 1.0
      %v3786 = vrcp.pop %v3785
      %v3787 = vmul.f32 1.0, %v3786
      %3789 = vrot.lane.b32.xlu0 %v3778, 64
      %v3790 = vpop.permute.xlu0 %3789
      %v3792 = vmul.f32 %v3787, %v3790
      %3794 = vrot.lane.b32.xlu0 %v3792, 64
      %v3795 = vpop.permute.xlu0 %3794
      %v3797 = vadd.f32 %v3706, %v3795
      %v3798 = vtanh.pop %v3797
      %v3799 = vsub.f32 1.0, %v3787
      %3801 = vrot.lane.b32.xlu0 %v3798, 96
      %v3802 = vpop.permute.xlu0 %3801
      %v3804 = vmul.f32 %v3799, %v3802
      %v3805 = vmul.f32 %v3787, %v2951
      %v3806 = vadd.f32 %v3804, %v3805
      %v3808 = vsel %vm812, %v3633, 0
      %3810 = vmatprep.subr.mxu0 0.0
      %3811 = vmatpush1.msra.mxu0 %v2551
      %3812 = vmatprep.subr.mxu0 0.0
      %3813 = vmatpush1.msra.mxu0 %v2552
      %3814 = vmatprep.subr.mxu0 0.0
      %3815 = vmatpush1.msra.mxu0 %v2553
      %3816 = vmatprep.subr.mxu0 0.0
      %3817 = vmatpush1.msra.mxu0 %v2554
      %3818 = vmatprep.subr.mxu0 0.0
      %3819 = vmatpush1.msra.mxu0 0.0
      %3820 = vmatprep.subr.mxu0 0.0
      %3821 = vmatpush1.msra.mxu0 0.0
      %3822 = vmatprep.subr.mxu0 0.0
      %3823 = vmatpush1.msra.mxu0 0.0
      %3824 = vmatprep.subr.mxu0 0.0
      %3825 = vmatpush1.msra.mxu0 0.0
      %3826 = vmatprep.subr.mxu0 0.0
      %3827 = vmatpush1.msra.mxu0 0.0
      %3828 = vmatprep.subr.mxu0 0.0
      %3829 = vmatpush1.msra.mxu0 0.0
      %3830 = vmatprep.subr.mxu0 0.0
      %3831 = vmatpush1.msra.mxu0 0.0
      %3832 = vmatprep.subr.mxu0 0.0
      %3833 = vmatpush1.msra.mxu0 0.0
      %3834 = vmatprep.subr.mxu0 0.0
      %3835 = vmatpush1.msra.mxu0 0.0
      %3836 = vmatprep.subr.mxu0 0.0
      %3837 = vmatpush1.msra.mxu0 0.0
      %3838 = vmatprep.subr.mxu0 0.0
      %3839 = vmatpush1.msra.mxu0 0.0
      %3840 = vmatprep.subr.mxu0 0.0
      %3841 = vmatpush1.msra.mxu0 0.0
      %3842 = vmatprep.subr.mxu0 0.0
      %3843 = vmatpush1.msra.mxu0 0.0
      %3844 = vmatprep.subr.mxu0 0.0
      %3845 = vmatpush1.msra.mxu0 0.0
      %3846 = vmatprep.subr.mxu0 0.0
      %3847 = vmatpush1.msra.mxu0 0.0
      %3848 = vmatprep.subr.mxu0 0.0
      %3849 = vmatpush1.msra.mxu0 0.0
      %3850 = vmatprep.subr.mxu0 0.0
      %3851 = vmatpush1.msra.mxu0 0.0
      %3852 = vmatprep.subr.mxu0 0.0
      %3853 = vmatpush1.msra.mxu0 0.0
      %3854 = vmatprep.subr.mxu0 0.0
      %3855 = vmatpush1.msra.mxu0 0.0
      %3856 = vmatprep.subr.mxu0 0.0
      %3857 = vmatpush1.msra.mxu0 0.0
      %3858 = vmatprep.subr.mxu0 0.0
      %3859 = vmatpush1.msra.mxu0 0.0
      %3860 = vmatprep.subr.mxu0 0.0
      %3861 = vmatpush1.msra.mxu0 0.0
      %3862 = vmatprep.subr.mxu0 0.0
      %3863 = vmatpush1.msra.mxu0 0.0
      %3864 = vmatprep.subr.mxu0 0.0
      %3865 = vmatpush1.msra.mxu0 0.0
      %3866 = vmatprep.subr.mxu0 0.0
      %3867 = vmatpush1.msra.mxu0 0.0
      %3868 = vmatprep.subr.mxu0 0.0
      %3869 = vmatpush1.msra.mxu0 0.0
      %3870 = vmatprep.subr.mxu0 0.0
      %3871 = vmatpush1.msra.mxu0 0.0
      %3872 = vmatprep.subr.mxu0 0.0
      %3873 = vmatpush1.msra.mxu0 0.0
      %3874 = vmatprep.mubr.f32.mxu0 0.0
      %3875 = vmatmul.mubr.f32.gmra.mrb[0].mxu0 %v3808
      %v3876 = vpop.f32.mrb[0].mxu0
      %v3877 = vadd.f32 %v1884, %v3876
      %v3878 = vpop.f32.mrb[0].mxu0
      %3879 = vdwg.mxu0
      %v3880 = vsel %vm812, %v3183, 0
      %3882 = vmatprep.subr.mxu0 0.0
      %3883 = vmatpush1.msra.mxu0 %v2555
      %3884 = vmatprep.subr.mxu0 0.0
      %3885 = vmatpush1.msra.mxu0 %v2556
      %3886 = vmatprep.subr.mxu0 0.0
      %3887 = vmatpush1.msra.mxu0 %v2557
      %3888 = vmatprep.subr.mxu0 0.0
      %3889 = vmatpush1.msra.mxu0 %v2558
      %3890 = vmatprep.subr.mxu0 0.0
      %3891 = vmatpush1.msra.mxu0 0.0
      %3892 = vmatprep.subr.mxu0 0.0
      %3893 = vmatpush1.msra.mxu0 0.0
      %3894 = vmatprep.subr.mxu0 0.0
      %3895 = vmatpush1.msra.mxu0 0.0
      %3896 = vmatprep.subr.mxu0 0.0
      %3897 = vmatpush1.msra.mxu0 0.0
      %3898 = vmatprep.subr.mxu0 0.0
      %3899 = vmatpush1.msra.mxu0 0.0
      %3900 = vmatprep.subr.mxu0 0.0
      %3901 = vmatpush1.msra.mxu0 0.0
      %3902 = vmatprep.subr.mxu0 0.0
      %3903 = vmatpush1.msra.mxu0 0.0
      %3904 = vmatprep.subr.mxu0 0.0
      %3905 = vmatpush1.msra.mxu0 0.0
      %3906 = vmatprep.subr.mxu0 0.0
      %3907 = vmatpush1.msra.mxu0 0.0
      %3908 = vmatprep.subr.mxu0 0.0
      %3909 = vmatpush1.msra.mxu0 0.0
      %3910 = vmatprep.subr.mxu0 0.0
      %3911 = vmatpush1.msra.mxu0 0.0
      %3912 = vmatprep.subr.mxu0 0.0
      %3913 = vmatpush1.msra.mxu0 0.0
      %3914 = vmatprep.subr.mxu0 0.0
      %3915 = vmatpush1.msra.mxu0 0.0
      %3916 = vmatprep.subr.mxu0 0.0
      %3917 = vmatpush1.msra.mxu0 0.0
      %3918 = vmatprep.subr.mxu0 0.0
      %3919 = vmatpush1.msra.mxu0 0.0
      %3920 = vmatprep.subr.mxu0 0.0
      %3921 = vmatpush1.msra.mxu0 0.0
      %3922 = vmatprep.subr.mxu0 0.0
      %3923 = vmatpush1.msra.mxu0 0.0
      %3924 = vmatprep.subr.mxu0 0.0
      %3925 = vmatpush1.msra.mxu0 0.0
      %3926 = vmatprep.subr.mxu0 0.0
      %3927 = vmatpush1.msra.mxu0 0.0
      %3928 = vmatprep.subr.mxu0 0.0
      %3929 = vmatpush1.msra.mxu0 0.0
      %3930 = vmatprep.subr.mxu0 0.0
      %3931 = vmatpush1.msra.mxu0 0.0
      %3932 = vmatprep.subr.mxu0 0.0
      %3933 = vmatpush1.msra.mxu0 0.0
      %3934 = vmatprep.subr.mxu0 0.0
      %3935 = vmatpush1.msra.mxu0 0.0
      %3936 = vmatprep.subr.mxu0 0.0
      %3937 = vmatpush1.msra.mxu0 0.0
      %3938 = vmatprep.subr.mxu0 0.0
      %3939 = vmatpush1.msra.mxu0 0.0
      %3940 = vmatprep.subr.mxu0 0.0
      %3941 = vmatpush1.msra.mxu0 0.0
      %3942 = vmatprep.subr.mxu0 0.0
      %3943 = vmatpush1.msra.mxu0 0.0
      %3944 = vmatprep.subr.mxu0 0.0
      %3945 = vmatpush1.msra.mxu0 0.0
      %3946 = vmatprep.mubr.f32.mxu0 0.0
      %3947 = vmatmul.mubr.f32.gmra.mrb[0].mxu0 %v3880
      %v3948 = vpop.f32.mrb[0].mxu0
      %v3949 = vadd.f32 %v1885, %v3948
      %v3950 = vpop.f32.mrb[0].mxu0
      %3951 = vdwg.mxu0
      %v3952 = vadd.f32 %v3877, %v3949
      %v3953 = vxor.u32 %v3952, 2147483648
      %v3954 = vmul.f32 %v3953, 1.442695
      %v3955 = vpow.pop %v3954
      %v3956 = vadd.f32 %v3955, 1.0
      %v3957 = vrcp.pop %v3956
      %v3958 = vmul.f32 1.0, %v3957
      %3960 = vrot.lane.b32.xlu0 %v3949, 64
      %v3961 = vpop.permute.xlu0 %3960
      %v3963 = vmul.f32 %v3958, %v3961
      %3965 = vrot.lane.b32.xlu0 %v3963, 64
      %v3966 = vpop.permute.xlu0 %3965
      %v3968 = vadd.f32 %v3877, %v3966
      %v3969 = vtanh.pop %v3968
      %v3970 = vsub.f32 1.0, %v3958
      %3972 = vrot.lane.b32.xlu0 %v3969, 96
      %v3973 = vpop.permute.xlu0 %3972
      %v3975 = vmul.f32 %v3970, %v3973
      %v3976 = vmul.f32 %v3958, %v3149
      %v3977 = vadd.f32 %v3975, %v3976
      %3979 = vrot.lane.b32.xlu0 %v3806, 96
      %v3980 = vpop.permute.xlu0 %3979
      %v3982 = vsel %vm1886, %v3980, 0.0
      %3983 = vadd.xlane.f32.xlu0 %v3982
      %v3984 = vpop.xlane.xlu0 %3983
      %v3985 = vmul.f32 %v3984, %v1063
      %v3986 = vsub.f32 %v3806, %v3985
      %v3987 = vmul.f32 %v3986, %v3986
      %3989 = vrot.lane.b32.xlu0 %v3987, 96
      %v3990 = vpop.permute.xlu0 %3989
      %v3992 = vsel %vm1886, %v3990, 0.0
      %3993 = vadd.xlane.f32.xlu0 %v3992
      %v3994 = vpop.xlane.xlu0 %3993
      %v3995 = vmul.f32 %v3994, %v1063
      %v3996 = vadd.f32 %v3995, 1e-05
      %v3997 = vrsqrt.pop %v3996
      %v3998 = vmul.f32 %v3986, %v3997
      %v3999 = vmul.f32 %v3998, %v2765
      %v4000 = vadd.f32 %v3999, %v2774
      %4002 = vrot.lane.b32.xlu0 %v4000, 96
      %v4003 = vpop.permute.xlu0 %4002
      %v4004 = vsel %vm812, %v4003, 0
      %4006 = vmatprep.subr.mxu0 0.0
      %4007 = vmatpush1.msra.mxu0 %v2777
      %4008 = vmatprep.subr.mxu0 0.0
      %4009 = vmatpush1.msra.mxu0 %v2778
      %4010 = vmatprep.subr.mxu0 0.0
      %4011 = vmatpush1.msra.mxu0 %v2779
      %4012 = vmatprep.subr.mxu0 0.0
      %4013 = vmatpush1.msra.mxu0 %v2780
      %4014 = vmatprep.subr.mxu0 0.0
      %4015 = vmatpush1.msra.mxu0 0.0
      %4016 = vmatprep.subr.mxu0 0.0
      %4017 = vmatpush1.msra.mxu0 0.0
      %4018 = vmatprep.subr.mxu0 0.0
      %4019 = vmatpush1.msra.mxu0 0.0
      %4020 = vmatprep.subr.mxu0 0.0
      %4021 = vmatpush1.msra.mxu0 0.0
      %4022 = vmatprep.subr.mxu0 0.0
      %4023 = vmatpush1.msra.mxu0 0.0
      %4024 = vmatprep.subr.mxu0 0.0
      %4025 = vmatpush1.msra.mxu0 0.0
      %4026 = vmatprep.subr.mxu0 0.0
      %4027 = vmatpush1.msra.mxu0 0.0
      %4028 = vmatprep.subr.mxu0 0.0
      %4029 = vmatpush1.msra.mxu0 0.0
      %4030 = vmatprep.subr.mxu0 0.0
      %4031 = vmatpush1.msra.mxu0 0.0
      %4032 = vmatprep.subr.mxu0 0.0
      %4033 = vmatpush1.msra.mxu0 0.0
      %4034 = vmatprep.subr.mxu0 0.0
      %4035 = vmatpush1.msra.mxu0 0.0
      %4036 = vmatprep.subr.mxu0 0.0
      %4037 = vmatpush1.msra.mxu0 0.0
      %4038 = vmatprep.subr.mxu0 0.0
      %4039 = vmatpush1.msra.mxu0 0.0
      %4040 = vmatprep.subr.mxu0 0.0
      %4041 = vmatpush1.msra.mxu0 0.0
      %4042 = vmatprep.subr.mxu0 0.0
      %4043 = vmatpush1.msra.mxu0 0.0
      %4044 = vmatprep.subr.mxu0 0.0
      %4045 = vmatpush1.msra.mxu0 0.0
      %4046 = vmatprep.subr.mxu0 0.0
      %4047 = vmatpush1.msra.mxu0 0.0
      %4048 = vmatprep.subr.mxu0 0.0
      %4049 = vmatpush1.msra.mxu0 0.0
      %4050 = vmatprep.subr.mxu0 0.0
      %4051 = vmatpush1.msra.mxu0 0.0
      %4052 = vmatprep.subr.mxu0 0.0
      %4053 = vmatpush1.msra.mxu0 0.0
      %4054 = vmatprep.subr.mxu0 0.0
      %4055 = vmatpush1.msra.mxu0 0.0
      %4056 = vmatprep.subr.mxu0 0.0
      %4057 = vmatpush1.msra.mxu0 0.0
      %4058 = vmatprep.subr.mxu0 0.0
      %4059 = vmatpush1.msra.mxu0 0.0
      %4060 = vmatprep.subr.mxu0 0.0
      %4061 = vmatpush1.msra.mxu0 0.0
      %4062 = vmatprep.subr.mxu0 0.0
      %4063 = vmatpush1.msra.mxu0 0.0
      %4064 = vmatprep.subr.mxu0 0.0
      %4065 = vmatpush1.msra.mxu0 0.0
      %4066 = vmatprep.subr.mxu0 0.0
      %4067 = vmatpush1.msra.mxu0 0.0
      %4068 = vmatprep.subr.mxu0 0.0
      %4069 = vmatpush1.msra.mxu0 0.0
      %4070 = vmatprep.mubr.f32.mxu0 0.0
      %4071 = vmatmul.mubr.f32.gmra.mrb[0].mxu0 %v4004
      %v4072 = vpop.f32.mrb[0].mxu0
      %v4073 = vadd.f32 %v2784, %v4072
      %v4074 = vpop.f32.mrb[0].mxu0
      %4075 = vdwg.mxu0
      %v4076 = vmax.f32 %v4073, 0.0
      %v4078 = vsel %vm812, %v4076, 0
      %4080 = vmatprep.subr.mxu0 0.0
      %4081 = vmatpush1.msra.mxu0 %v2861
      %4082 = vmatprep.subr.mxu0 0.0
      %4083 = vmatpush1.msra.mxu0 %v2862
      %4084 = vmatprep.subr.mxu0 0.0
      %4085 = vmatpush1.msra.mxu0 %v2863
      %4086 = vmatprep.subr.mxu0 0.0
      %4087 = vmatpush1.msra.mxu0 %v2864
      %4088 = vmatprep.subr.mxu0 0.0
      %4089 = vmatpush1.msra.mxu0 0.0
      %4090 = vmatprep.subr.mxu0 0.0
      %4091 = vmatpush1.msra.mxu0 0.0
      %4092 = vmatprep.subr.mxu0 0.0
      %4093 = vmatpush1.msra.mxu0 0.0
      %4094 = vmatprep.subr.mxu0 0.0
      %4095 = vmatpush1.msra.mxu0 0.0
      %4096 = vmatprep.subr.mxu0 0.0
      %4097 = vmatpush1.msra.mxu0 0.0
      %4098 = vmatprep.subr.mxu0 0.0
      %4099 = vmatpush1.msra.mxu0 0.0
      %4100 = vmatprep.subr.mxu0 0.0
      %4101 = vmatpush1.msra.mxu0 0.0
      %4102 = vmatprep.subr.mxu0 0.0
      %4103 = vmatpush1.msra.mxu0 0.0
      %4104 = vmatprep.subr.mxu0 0.0
      %4105 = vmatpush1.msra.mxu0 0.0
      %4106 = vmatprep.subr.mxu0 0.0
      %4107 = vmatpush1.msra.mxu0 0.0
      %4108 = vmatprep.subr.mxu0 0.0
      %4109 = vmatpush1.msra.mxu0 0.0
      %4110 = vmatprep.subr.mxu0 0.0
      %4111 = vmatpush1.msra.mxu0 0.0
      %4112 = vmatprep.subr.mxu0 0.0
      %4113 = vmatpush1.msra.mxu0 0.0
      %4114 = vmatprep.subr.mxu0 0.0
      %4115 = vmatpush1.msra.mxu0 0.0
      %4116 = vmatprep.subr.mxu0 0.0
      %4117 = vmatpush1.msra.mxu0 0.0
      %4118 = vmatprep.subr.mxu0 0.0
      %4119 = vmatpush1.msra.mxu0 0.0
      %4120 = vmatprep.subr.mxu0 0.0
      %4121 = vmatpush1.msra.mxu0 0.0
      %4122 = vmatprep.subr.mxu0 0.0
      %4123 = vmatpush1.msra.mxu0 0.0
      %4124 = vmatprep.subr.mxu0 0.0
      %4125 = vmatpush1.msra.mxu0 0.0
      %4126 = vmatprep.subr.mxu0 0.0
      %4127 = vmatpush1.msra.mxu0 0.0
      %4128 = vmatprep.subr.mxu0 0.0
      %4129 = vmatpush1.msra.mxu0 0.0
      %4130 = vmatprep.subr.mxu0 0.0
      %4131 = vmatpush1.msra.mxu0 0.0
      %4132 = vmatprep.subr.mxu0 0.0
      %4133 = vmatpush1.msra.mxu0 0.0
      %4134 = vmatprep.subr.mxu0 0.0
      %4135 = vmatpush1.msra.mxu0 0.0
      %4136 = vmatprep.subr.mxu0 0.0
      %4137 = vmatpush1.msra.mxu0 0.0
      %4138 = vmatprep.subr.mxu0 0.0
      %4139 = vmatpush1.msra.mxu0 0.0
      %4140 = vmatprep.subr.mxu0 0.0
      %4141 = vmatpush1.msra.mxu0 0.0
      %4142 = vmatprep.subr.mxu0 0.0
      %4143 = vmatpush1.msra.mxu0 0.0
      %4144 = vmatprep.mubr.f32.mxu0 0.0
      %4145 = vmatmul.mubr.f32.gmra.mrb[0].mxu0 %v4078
      %v4146 = vpop.f32.mrb[0].mxu0
      %v4147 = vadd.f32 0.0, %v4146
      %v4148 = vpop.f32.mrb[0].mxu0
      %4149 = vdwg.mxu0
      %4151 = vrot.lane.b32.xlu0 %v4147, 32
      %v4152 = vpop.permute.xlu0 %4151
      %v4154 = vadd.f32 %v3806, %v4152
      %v4155 = vadd.f32 %v4154, %v2949
      %4157 = vrot.lane.b32.xlu0 %v3977, 96
      %v4158 = vpop.permute.xlu0 %4157
      %v4160 = vsel %vm1910, %v4158, 0.0
      %4161 = vadd.xlane.f32.xlu0 %v4160
      %v4162 = vpop.xlane.xlu0 %4161
      %v4163 = vmul.f32 %v4162, %v1063
      %v4164 = vsub.f32 %v3977, %v4163
      %v4165 = vmul.f32 %v4164, %v4164
      %4167 = vrot.lane.b32.xlu0 %v4165, 96
      %v4168 = vpop.permute.xlu0 %4167
      %v4170 = vsel %vm1910, %v4168, 0.0
      %4171 = vadd.xlane.f32.xlu0 %v4170
      %v4172 = vpop.xlane.xlu0 %4171
      %v4173 = vmul.f32 %v4172, %v1063
      %v4174 = vadd.f32 %v4173, 1e-05
      %v4175 = vrsqrt.pop %v4174
      %v4176 = vmul.f32 %v4164, %v4175
      %v4177 = vmul.f32 %v4176, %v2975
      %v4178 = vadd.f32 %v4177, %v2980
      %4180 = vrot.lane.b32.xlu0 %v4178, 96
      %v4181 = vpop.permute.xlu0 %4180
      %v4182 = vsel %vm812, %v4181, 0
      %4184 = vmatprep.subr.mxu0 0.0
      %4185 = vmatpush1.msra.mxu0 %v2983
      %4186 = vmatprep.subr.mxu0 0.0
      %4187 = vmatpush1.msra.mxu0 %v2984
      %4188 = vmatprep.subr.mxu0 0.0
      %4189 = vmatpush1.msra.mxu0 %v2985
      %4190 = vmatprep.subr.mxu0 0.0
      %4191 = vmatpush1.msra.mxu0 %v2986
      %4192 = vmatprep.subr.mxu0 0.0
      %4193 = vmatpush1.msra.mxu0 0.0
      %4194 = vmatprep.subr.mxu0 0.0
      %4195 = vmatpush1.msra.mxu0 0.0
      %4196 = vmatprep.subr.mxu0 0.0
      %4197 = vmatpush1.msra.mxu0 0.0
      %4198 = vmatprep.subr.mxu0 0.0
      %4199 = vmatpush1.msra.mxu0 0.0
      %4200 = vmatprep.subr.mxu0 0.0
      %4201 = vmatpush1.msra.mxu0 0.0
      %4202 = vmatprep.subr.mxu0 0.0
      %4203 = vmatpush1.msra.mxu0 0.0
      %4204 = vmatprep.subr.mxu0 0.0
      %4205 = vmatpush1.msra.mxu0 0.0
      %4206 = vmatprep.subr.mxu0 0.0
      %4207 = vmatpush1.msra.mxu0 0.0
      %4208 = vmatprep.subr.mxu0 0.0
      %4209 = vmatpush1.msra.mxu0 0.0
      %4210 = vmatprep.subr.mxu0 0.0
      %4211 = vmatpush1.msra.mxu0 0.0
      %4212 = vmatprep.subr.mxu0 0.0
      %4213 = vmatpush1.msra.mxu0 0.0
      %4214 = vmatprep.subr.mxu0 0.0
      %4215 = vmatpush1.msra.mxu0 0.0
      %4216 = vmatprep.subr.mxu0 0.0
      %4217 = vmatpush1.msra.mxu0 0.0
      %4218 = vmatprep.subr.mxu0 0.0
      %4219 = vmatpush1.msra.mxu0 0.0
      %4220 = vmatprep.subr.mxu0 0.0
      %4221 = vmatpush1.msra.mxu0 0.0
      %4222 = vmatprep.subr.mxu0 0.0
      %4223 = vmatpush1.msra.mxu0 0.0
      %4224 = vmatprep.subr.mxu0 0.0
      %4225 = vmatpush1.msra.mxu0 0.0
      %4226 = vmatprep.subr.mxu0 0.0
      %4227 = vmatpush1.msra.mxu0 0.0
      %4228 = vmatprep.subr.mxu0 0.0
      %4229 = vmatpush1.msra.mxu0 0.0
      %4230 = vmatprep.subr.mxu0 0.0
      %4231 = vmatpush1.msra.mxu0 0.0
      %4232 = vmatprep.subr.mxu0 0.0
      %4233 = vmatpush1.msra.mxu0 0.0
      %4234 = vmatprep.subr.mxu0 0.0
      %4235 = vmatpush1.msra.mxu0 0.0
      %4236 = vmatprep.subr.mxu0 0.0
      %4237 = vmatpush1.msra.mxu0 0.0
      %4238 = vmatprep.subr.mxu0 0.0
      %4239 = vmatpush1.msra.mxu0 0.0
      %4240 = vmatprep.subr.mxu0 0.0
      %4241 = vmatpush1.msra.mxu0 0.0
      %4242 = vmatprep.subr.mxu0 0.0
      %4243 = vmatpush1.msra.mxu0 0.0
      %4244 = vmatprep.subr.mxu0 0.0
      %4245 = vmatpush1.msra.mxu0 0.0
      %4246 = vmatprep.subr.mxu0 0.0
      %4247 = vmatpush1.msra.mxu0 0.0
      %4248 = vmatprep.mubr.f32.mxu0 0.0
      %4249 = vmatmul.mubr.f32.gmra.mrb[0].mxu0 %v4182
      %v4250 = vpop.f32.mrb[0].mxu0
      %v4251 = vadd.f32 %v1872, %v4250
      %v4252 = vpop.f32.mrb[0].mxu0
      %4253 = vdwg.mxu0
      %v4254 = vmax.f32 %v4251, 0.0
      %v4256 = vsel %vm812, %v4254, 0
      %4258 = vmatprep.subr.mxu0 0.0
      %4259 = vmatpush1.msra.mxu0 %v3063
      %4260 = vmatprep.subr.mxu0 0.0
      %4261 = vmatpush1.msra.mxu0 %v3064
      %4262 = vmatprep.subr.mxu0 0.0
      %4263 = vmatpush1.msra.mxu0 %v3065
      %4264 = vmatprep.subr.mxu0 0.0
      %4265 = vmatpush1.msra.mxu0 %v3066
      %4266 = vmatprep.subr.mxu0 0.0
      %4267 = vmatpush1.msra.mxu0 0.0
      %4268 = vmatprep.subr.mxu0 0.0
      %4269 = vmatpush1.msra.mxu0 0.0
      %4270 = vmatprep.subr.mxu0 0.0
      %4271 = vmatpush1.msra.mxu0 0.0
      %4272 = vmatprep.subr.mxu0 0.0
      %4273 = vmatpush1.msra.mxu0 0.0
      %4274 = vmatprep.subr.mxu0 0.0
      %4275 = vmatpush1.msra.mxu0 0.0
      %4276 = vmatprep.subr.mxu0 0.0
      %4277 = vmatpush1.msra.mxu0 0.0
      %4278 = vmatprep.subr.mxu0 0.0
      %4279 = vmatpush1.msra.mxu0 0.0
      %4280 = vmatprep.subr.mxu0 0.0
      %4281 = vmatpush1.msra.mxu0 0.0
      %4282 = vmatprep.subr.mxu0 0.0
      %4283 = vmatpush1.msra.mxu0 0.0
      %4284 = vmatprep.subr.mxu0 0.0
      %4285 = vmatpush1.msra.mxu0 0.0
      %4286 = vmatprep.subr.mxu0 0.0
      %4287 = vmatpush1.msra.mxu0 0.0
      %4288 = vmatprep.subr.mxu0 0.0
      %4289 = vmatpush1.msra.mxu0 0.0
      %4290 = vmatprep.subr.mxu0 0.0
      %4291 = vmatpush1.msra.mxu0 0.0
      %4292 = vmatprep.subr.mxu0 0.0
      %4293 = vmatpush1.msra.mxu0 0.0
      %4294 = vmatprep.subr.mxu0 0.0
      %4295 = vmatpush1.msra.mxu0 0.0
      %4296 = vmatprep.subr.mxu0 0.0
      %4297 = vmatpush1.msra.mxu0 0.0
      %4298 = vmatprep.subr.mxu0 0.0
      %4299 = vmatpush1.msra.mxu0 0.0
      %4300 = vmatprep.subr.mxu0 0.0
      %4301 = vmatpush1.msra.mxu0 0.0
      %4302 = vmatprep.subr.mxu0 0.0
      %4303 = vmatpush1.msra.mxu0 0.0
      %4304 = vmatprep.subr.mxu0 0.0
      %4305 = vmatpush1.msra.mxu0 0.0
      %4306 = vmatprep.subr.mxu0 0.0
      %4307 = vmatpush1.msra.mxu0 0.0
      %4308 = vmatprep.subr.mxu0 0.0
      %4309 = vmatpush1.msra.mxu0 0.0
      %4310 = vmatprep.subr.mxu0 0.0
      %4311 = vmatpush1.msra.mxu0 0.0
      %4312 = vmatprep.subr.mxu0 0.0
      %4313 = vmatpush1.msra.mxu0 0.0
      %4314 = vmatprep.subr.mxu0 0.0
      %4315 = vmatpush1.msra.mxu0 0.0
      %4316 = vmatprep.subr.mxu0 0.0
      %4317 = vmatpush1.msra.mxu0 0.0
      %4318 = vmatprep.subr.mxu0 0.0
      %4319 = vmatpush1.msra.mxu0 0.0
      %4320 = vmatprep.subr.mxu0 0.0
      %4321 = vmatpush1.msra.mxu0 0.0
      %4322 = vmatprep.mubr.f32.mxu0 0.0
      %4323 = vmatmul.mubr.f32.gmra.mrb[0].mxu0 %v4256
      %v4324 = vpop.f32.mrb[0].mxu0
      %v4325 = vadd.f32 0.0, %v4324
      %v4326 = vpop.f32.mrb[0].mxu0
      %4327 = vdwg.mxu0
      %4329 = vrot.lane.b32.xlu0 %v4325, 32
      %v4330 = vpop.permute.xlu0 %4329
      %v4332 = vadd.f32 %v3977, %v4330
      %v4333 = vadd.f32 %v4332, %v3147
      %4335 = vrot.lane.b32.xlu0 %v4155, 96
      %v4336 = vpop.permute.xlu0 %4335
      %v4338 = vsel %vm1886, %v4336, 0.0
      %4339 = vadd.xlane.f32.xlu0 %v4338
      %v4340 = vpop.xlane.xlu0 %4339
      %v4341 = vmul.f32 %v4340, %v1063
      %v4342 = vsub.f32 %v4155, %v4341
      %v4343 = vmul.f32 %v4342, %v4342
      %4345 = vrot.lane.b32.xlu0 %v4343, 96
      %v4346 = vpop.permute.xlu0 %4345
      %v4348 = vsel %vm1886, %v4346, 0.0
      %4349 = vadd.xlane.f32.xlu0 %v4348
      %v4350 = vpop.xlane.xlu0 %4349
      %v4351 = vmul.f32 %v4350, %v1063
      %v4352 = vadd.f32 %v4351, 1e-05
      %v4353 = vrsqrt.pop %v4352
      %v4354 = vmul.f32 %v4342, %v4353
      %v4355 = vmul.f32 %v4354, %v3173
      %v4356 = vadd.f32 %v4355, %v3178
      %4358 = vrot.lane.b32.xlu0 %v4333, 96
      %v4359 = vpop.permute.xlu0 %4358
      %v4361 = vsel %vm1910, %v4359, 0.0
      %4362 = vadd.xlane.f32.xlu0 %v4361
      %v4363 = vpop.xlane.xlu0 %4362
      %v4364 = vmul.f32 %v4363, %v1063
      %v4365 = vsub.f32 %v4333, %v4364
      %v4366 = vmul.f32 %v4365, %v4365
      %4368 = vrot.lane.b32.xlu0 %v4366, 96
      %v4369 = vpop.permute.xlu0 %4368
      %v4371 = vsel %vm1910, %v4369, 0.0
      %4372 = vadd.xlane.f32.xlu0 %v4371
      %v4373 = vpop.xlane.xlu0 %4372
      %v4374 = vmul.f32 %v4373, %v1063
      %v4375 = vadd.f32 %v4374, 1e-05
      %v4376 = vrsqrt.pop %v4375
      %v4377 = vmul.f32 %v4365, %v4376
      %v4378 = vmul.f32 %v4377, %v3204
      %v4379 = vadd.f32 %v4378, %v3209
      %4381 = vrot.lane.b32.xlu0 %v4356, 96
      %v4382 = vpop.permute.xlu0 %4381
      %v4383 = vsel %vm812, %v4382, 0
      %4385 = vmatprep.subr.mxu0 0.0
      %4386 = vmatpush1.msra.mxu0 %v1926
      %4387 = vmatprep.subr.mxu0 0.0
      %4388 = vmatpush1.msra.mxu0 %v1927
      %4389 = vmatprep.subr.mxu0 0.0
      %4390 = vmatpush1.msra.mxu0 %v1928
      %4391 = vmatprep.subr.mxu0 0.0
      %4392 = vmatpush1.msra.mxu0 %v1929
      %4393 = vmatprep.subr.mxu0 0.0
      %4394 = vmatpush1.msra.mxu0 0.0
      %4395 = vmatprep.subr.mxu0 0.0
      %4396 = vmatpush1.msra.mxu0 0.0
      %4397 = vmatprep.subr.mxu0 0.0
      %4398 = vmatpush1.msra.mxu0 0.0
      %4399 = vmatprep.subr.mxu0 0.0
      %4400 = vmatpush1.msra.mxu0 0.0
      %4401 = vmatprep.subr.mxu0 0.0
      %4402 = vmatpush1.msra.mxu0 0.0
      %4403 = vmatprep.subr.mxu0 0.0
      %4404 = vmatpush1.msra.mxu0 0.0
      %4405 = vmatprep.subr.mxu0 0.0
      %4406 = vmatpush1.msra.mxu0 0.0
      %4407 = vmatprep.subr.mxu0 0.0
      %4408 = vmatpush1.msra.mxu0 0.0
      %4409 = vmatprep.subr.mxu0 0.0
      %4410 = vmatpush1.msra.mxu0 0.0
      %4411 = vmatprep.subr.mxu0 0.0
      %4412 = vmatpush1.msra.mxu0 0.0
      %4413 = vmatprep.subr.mxu0 0.0
      %4414 = vmatpush1.msra.mxu0 0.0
      %4415 = vmatprep.subr.mxu0 0.0
      %4416 = vmatpush1.msra.mxu0 0.0
      %4417 = vmatprep.subr.mxu0 0.0
      %4418 = vmatpush1.msra.mxu0 0.0
      %4419 = vmatprep.subr.mxu0 0.0
      %4420 = vmatpush1.msra.mxu0 0.0
      %4421 = vmatprep.subr.mxu0 0.0
      %4422 = vmatpush1.msra.mxu0 0.0
      %4423 = vmatprep.subr.mxu0 0.0
      %4424 = vmatpush1.msra.mxu0 0.0
      %4425 = vmatprep.subr.mxu0 0.0
      %4426 = vmatpush1.msra.mxu0 0.0
      %4427 = vmatprep.subr.mxu0 0.0
      %4428 = vmatpush1.msra.mxu0 0.0
      %4429 = vmatprep.subr.mxu0 0.0
      %4430 = vmatpush1.msra.mxu0 0.0
      %4431 = vmatprep.subr.mxu0 0.0
      %4432 = vmatpush1.msra.mxu0 0.0
      %4433 = vmatprep.subr.mxu0 0.0
      %4434 = vmatpush1.msra.mxu0 0.0
      %4435 = vmatprep.subr.mxu0 0.0
      %4436 = vmatpush1.msra.mxu0 0.0
      %4437 = vmatprep.subr.mxu0 0.0
      %4438 = vmatpush1.msra.mxu0 0.0
      %4439 = vmatprep.subr.mxu0 0.0
      %4440 = vmatpush1.msra.mxu0 0.0
      %4441 = vmatprep.subr.mxu0 0.0
      %4442 = vmatpush1.msra.mxu0 0.0
      %4443 = vmatprep.subr.mxu0 0.0
      %4444 = vmatpush1.msra.mxu0 0.0
      %4445 = vmatprep.subr.mxu0 0.0
      %4446 = vmatpush1.msra.mxu0 0.0
      %4447 = vmatprep.subr.mxu0 0.0
      %4448 = vmatpush1.msra.mxu0 0.0
      %4449 = vmatprep.mubr.f32.mxu0 0.0
      %4450 = vmatmul.mubr.f32.gmra.mrb[0].mxu0 %v4383
      %v4451 = vpop.f32.mrb[0].mxu0
      %v4452 = vadd.f32 %v1933, %v4451
      %v4453 = vpop.f32.mrb[0].mxu0
      %4454 = vdwg.mxu0
      %4456 = vrot.lane.b32.xlu0 %v4379, 96
      %v4457 = vpop.permute.xlu0 %4456
      %v4458 = vsel %vm812, %v4457, 0
      %4460 = vmatprep.subr.mxu0 0.0
      %4461 = vmatpush1.msra.mxu0 %v2007
      %4462 = vmatprep.subr.mxu0 0.0
      %4463 = vmatpush1.msra.mxu0 %v2008
      %4464 = vmatprep.subr.mxu0 0.0
      %4465 = vmatpush1.msra.mxu0 %v2009
      %4466 = vmatprep.subr.mxu0 0.0
      %4467 = vmatpush1.msra.mxu0 %v2010
      %4468 = vmatprep.subr.mxu0 0.0
      %4469 = vmatpush1.msra.mxu0 0.0
      %4470 = vmatprep.subr.mxu0 0.0
      %4471 = vmatpush1.msra.mxu0 0.0
      %4472 = vmatprep.subr.mxu0 0.0
      %4473 = vmatpush1.msra.mxu0 0.0
      %4474 = vmatprep.subr.mxu0 0.0
      %4475 = vmatpush1.msra.mxu0 0.0
      %4476 = vmatprep.subr.mxu0 0.0
      %4477 = vmatpush1.msra.mxu0 0.0
      %4478 = vmatprep.subr.mxu0 0.0
      %4479 = vmatpush1.msra.mxu0 0.0
      %4480 = vmatprep.subr.mxu0 0.0
      %4481 = vmatpush1.msra.mxu0 0.0
      %4482 = vmatprep.subr.mxu0 0.0
      %4483 = vmatpush1.msra.mxu0 0.0
      %4484 = vmatprep.subr.mxu0 0.0
      %4485 = vmatpush1.msra.mxu0 0.0
      %4486 = vmatprep.subr.mxu0 0.0
      %4487 = vmatpush1.msra.mxu0 0.0
      %4488 = vmatprep.subr.mxu0 0.0
      %4489 = vmatpush1.msra.mxu0 0.0
      %4490 = vmatprep.subr.mxu0 0.0
      %4491 = vmatpush1.msra.mxu0 0.0
      %4492 = vmatprep.subr.mxu0 0.0
      %4493 = vmatpush1.msra.mxu0 0.0
      %4494 = vmatprep.subr.mxu0 0.0
      %4495 = vmatpush1.msra.mxu0 0.0
      %4496 = vmatprep.subr.mxu0 0.0
      %4497 = vmatpush1.msra.mxu0 0.0
      %4498 = vmatprep.subr.mxu0 0.0
      %4499 = vmatpush1.msra.mxu0 0.0
      %4500 = vmatprep.subr.mxu0 0.0
      %4501 = vmatpush1.msra.mxu0 0.0
      %4502 = vmatprep.subr.mxu0 0.0
      %4503 = vmatpush1.msra.mxu0 0.0
      %4504 = vmatprep.subr.mxu0 0.0
      %4505 = vmatpush1.msra.mxu0 0.0
      %4506 = vmatprep.subr.mxu0 0.0
      %4507 = vmatpush1.msra.mxu0 0.0
      %4508 = vmatprep.subr.mxu0 0.0
      %4509 = vmatpush1.msra.mxu0 0.0
      %4510 = vmatprep.subr.mxu0 0.0
      %4511 = vmatpush1.msra.mxu0 0.0
      %4512 = vmatprep.subr.mxu0 0.0
      %4513 = vmatpush1.msra.mxu0 0.0
      %4514 = vmatprep.subr.mxu0 0.0
      %4515 = vmatpush1.msra.mxu0 0.0
      %4516 = vmatprep.subr.mxu0 0.0
      %4517 = vmatpush1.msra.mxu0 0.0
      %4518 = vmatprep.subr.mxu0 0.0
      %4519 = vmatpush1.msra.mxu0 0.0
      %4520 = vmatprep.subr.mxu0 0.0
      %4521 = vmatpush1.msra.mxu0 0.0
      %4522 = vmatprep.subr.mxu0 0.0
      %4523 = vmatpush1.msra.mxu0 0.0
      %4524 = vmatprep.mubr.f32.mxu0 0.0
      %4525 = vmatmul.mubr.f32.gmra.mrb[0].mxu0 %v4458
      %v4526 = vpop.f32.mrb[0].mxu0
      %v4527 = vadd.f32 %v1869, %v4526
      %v4528 = vpop.f32.mrb[0].mxu0
      %4529 = vdwg.mxu0
      %v4531 = vrot.slane %v4452, 7
      %v4533 = vsel %vm2087, %v4527, %v4531
      %v4535 = vsel %vm812, %v4533, 0
      %4537 = vmatprep.subr.mxu0 %v1783
      %4538 = vmatpush1.msra.mxu0 %v1782
      %4539 = vmatprep.subr.mxu0 %v1785
      %4540 = vmatpush1.msra.mxu0 %v1784
      %4541 = vmatprep.subr.mxu0 %v1787
      %4542 = vmatpush1.msra.mxu0 %v1786
      %4543 = vmatprep.subr.mxu0 %v1789
      %4544 = vmatpush1.msra.mxu0 %v1788
      %4545 = vmatprep.subr.mxu0 0.0
      %4546 = vmatpush1.msra.mxu0 0.0
      %4547 = vmatprep.subr.mxu0 0.0
      %4548 = vmatpush1.msra.mxu0 0.0
      %4549 = vmatprep.subr.mxu0 0.0
      %4550 = vmatpush1.msra.mxu0 0.0
      %4551 = vmatprep.subr.mxu0 0.0
      %4552 = vmatpush1.msra.mxu0 0.0
      %4553 = vmatprep.subr.mxu0 0.0
      %4554 = vmatpush1.msra.mxu0 0.0
      %4555 = vmatprep.subr.mxu0 0.0
      %4556 = vmatpush1.msra.mxu0 0.0
      %4557 = vmatprep.subr.mxu0 0.0
      %4558 = vmatpush1.msra.mxu0 0.0
      %4559 = vmatprep.subr.mxu0 0.0
      %4560 = vmatpush1.msra.mxu0 0.0
      %4561 = vmatprep.subr.mxu0 0.0
      %4562 = vmatpush1.msra.mxu0 0.0
      %4563 = vmatprep.subr.mxu0 0.0
      %4564 = vmatpush1.msra.mxu0 0.0
      %4565 = vmatprep.subr.mxu0 0.0
      %4566 = vmatpush1.msra.mxu0 0.0
      %4567 = vmatprep.subr.mxu0 0.0
      %4568 = vmatpush1.msra.mxu0 0.0
      %4569 = vmatprep.subr.mxu0 0.0
      %4570 = vmatpush1.msra.mxu0 0.0
      %4571 = vmatprep.subr.mxu0 0.0
      %4572 = vmatpush1.msra.mxu0 0.0
      %4573 = vmatprep.subr.mxu0 0.0
      %4574 = vmatpush1.msra.mxu0 0.0
      %4575 = vmatprep.subr.mxu0 0.0
      %4576 = vmatpush1.msra.mxu0 0.0
      %4577 = vmatprep.subr.mxu0 0.0
      %4578 = vmatpush1.msra.mxu0 0.0
      %4579 = vmatprep.subr.mxu0 0.0
      %4580 = vmatpush1.msra.mxu0 0.0
      %4581 = vmatprep.subr.mxu0 0.0
      %4582 = vmatpush1.msra.mxu0 0.0
      %4583 = vmatprep.subr.mxu0 0.0
      %4584 = vmatpush1.msra.mxu0 0.0
      %4585 = vmatprep.subr.mxu0 0.0
      %4586 = vmatpush1.msra.mxu0 0.0
      %4587 = vmatprep.subr.mxu0 0.0
      %4588 = vmatpush1.msra.mxu0 0.0
      %4589 = vmatprep.subr.mxu0 0.0
      %4590 = vmatpush1.msra.mxu0 0.0
      %4591 = vmatprep.subr.mxu0 0.0
      %4592 = vmatpush1.msra.mxu0 0.0
      %4593 = vmatprep.subr.mxu0 0.0
      %4594 = vmatpush1.msra.mxu0 0.0
      %4595 = vmatprep.subr.mxu0 0.0
      %4596 = vmatpush1.msra.mxu0 0.0
      %4597 = vmatprep.subr.mxu0 0.0
      %4598 = vmatpush1.msra.mxu0 0.0
      %4599 = vmatprep.subr.mxu0 0.0
      %4600 = vmatpush1.msra.mxu0 0.0
      %4601 = vmatprep.mubr.f32.mxu0 0.0
      %4602 = vmatmul.mubr.f32.gmra.mrb[0].mxu0 %v4535
      %v4603 = vpop.f32.mrb[0].mxu0
      %v4604 = vadd.f32 0.0, %v4603
      %v4605 = vpop.f32.mrb[0].mxu0
      %v4606 = vadd.f32 0.0, %v4605
      %4607 = vdwg.mxu0
      %v4608 = vmul.f32 %v4604, 0.17677669
      %v4609 = vmul.f32 %v4606, 0.17677669
      %v4610 = vsel %vm2165, %v4608, -inf
      %v4611 = vrot.slane %v4610, 4
      %v4612 = vmax.f32 %v4610, %v4611
      %v4613 = vrot.slane %v4612, 2
      %v4614 = vmax.f32 %v4612, %v4613
      %v4615 = vrot.slane %v4614, 1
      %v4616 = vmax.f32 %v4614, %v4615
      %v4617 = vsel %vm2165, %v4609, -inf
      %v4618 = vrot.slane %v4617, 4
      %v4619 = vmax.f32 %v4617, %v4618
      %v4620 = vrot.slane %v4619, 2
      %v4621 = vmax.f32 %v4619, %v4620
      %v4622 = vrot.slane %v4621, 1
      %v4623 = vmax.f32 %v4621, %v4622
      %v4624 = vsub.f32 %v4608, %v4616
      %v4625 = vsub.f32 %v4609, %v4623
      %v4626 = vmul.f32 %v4624, 1.442695
      %v4627 = vpow.pop %v4626
      %v4628 = vmul.f32 %v4625, 1.442695
      %v4629 = vpow.pop %v4628
      %v4630 = vsel %vm2165, %v4627, 0.0
      %v4631 = vrot.slane %v4630, 4
      %v4632 = vadd.f32 %v4630, %v4631
      %v4633 = vrot.slane %v4632, 2
      %v4634 = vadd.f32 %v4632, %v4633
      %v4635 = vrot.slane %v4634, 1
      %v4636 = vadd.f32 %v4634, %v4635
      %v4637 = vsel %vm2165, %v4629, 0.0
      %v4638 = vrot.slane %v4637, 4
      %v4639 = vadd.f32 %v4637, %v4638
      %v4640 = vrot.slane %v4639, 2
      %v4641 = vadd.f32 %v4639, %v4640
      %v4642 = vrot.slane %v4641, 1
      %v4643 = vadd.f32 %v4641, %v4642
      %v4644 = vrcp.pop %v4636
      %v4645 = vrcp.pop %v4643
      %v4646 = vmul.f32 %v4627, %v4644
      %v4647 = vmul.f32 %v4629, %v4645
      %v4648 = vadd.f32 %v4646, 1e-08
      %v4649 = vadd.f32 %v4647, 1e-08
      %v4650 = vsel %vm2165, %v4648, 0.0
      %v4651 = vsel %vm2165, %v4649, 0.0
      %v4652 = vadd.f32 %v4650, %v4651
      %4653 = vadd.xlane.f32.xlu0 %v4652
      %v4654 = vpop.xlane.xlu0 %4653
      %v4655 = vrcp.pop %v4654
      %v4656 = vmul.f32 %v4648, %v4655
      %v4657 = vmul.f32 %v4649, %v4655
      %v4660 = vrot.slane %v4656, 1
      %v4661 = vrot.slane %v4657, 1
      %4664 = vmatprep.subr.mxu0 %v1816
      %4665 = vmatpush1.xpose.msra.mxu0 %v1815
      %4666 = vmatprep.subr.mxu0 %v1818
      %4667 = vmatpush1.xpose.msra.mxu0 %v1817
      %4668 = vmatprep.subr.mxu0 %v1820
      %4669 = vmatpush1.xpose.msra.mxu0 %v1819
      %4670 = vmatprep.subr.mxu0 %v1822
      %4671 = vmatpush1.xpose.msra.mxu0 %v1821
      %4672 = vmatprep.subr.mxu0 0.0
      %4673 = vmatpush1.xpose.msra.mxu0 0.0
      %4674 = vmatprep.subr.mxu0 0.0
      %4675 = vmatpush1.xpose.msra.mxu0 0.0
      %4676 = vmatprep.subr.mxu0 0.0
      %4677 = vmatpush1.xpose.msra.mxu0 0.0
      %4678 = vmatprep.subr.mxu0 0.0
      %4679 = vmatpush1.xpose.msra.mxu0 0.0
      %4680 = vmatprep.subr.mxu0 0.0
      %4681 = vmatpush1.xpose.msra.mxu0 0.0
      %4682 = vmatprep.subr.mxu0 0.0
      %4683 = vmatpush1.xpose.msra.mxu0 0.0
      %4684 = vmatprep.subr.mxu0 0.0
      %4685 = vmatpush1.xpose.msra.mxu0 0.0
      %4686 = vmatprep.subr.mxu0 0.0
      %4687 = vmatpush1.xpose.msra.mxu0 0.0
      %4688 = vmatprep.subr.mxu0 0.0
      %4689 = vmatpush1.xpose.msra.mxu0 0.0
      %4690 = vmatprep.subr.mxu0 0.0
      %4691 = vmatpush1.xpose.msra.mxu0 0.0
      %4692 = vmatprep.subr.mxu0 0.0
      %4693 = vmatpush1.xpose.msra.mxu0 0.0
      %4694 = vmatprep.subr.mxu0 0.0
      %4695 = vmatpush1.xpose.msra.mxu0 0.0
      %4696 = vmatprep.subr.mxu0 0.0
      %4697 = vmatpush1.xpose.msra.mxu0 0.0
      %4698 = vmatprep.subr.mxu0 0.0
      %4699 = vmatpush1.xpose.msra.mxu0 0.0
      %4700 = vmatprep.subr.mxu0 0.0
      %4701 = vmatpush1.xpose.msra.mxu0 0.0
      %4702 = vmatprep.subr.mxu0 0.0
      %4703 = vmatpush1.xpose.msra.mxu0 0.0
      %4704 = vmatprep.subr.mxu0 0.0
      %4705 = vmatpush1.xpose.msra.mxu0 0.0
      %4706 = vmatprep.subr.mxu0 0.0
      %4707 = vmatpush1.xpose.msra.mxu0 0.0
      %4708 = vmatprep.subr.mxu0 0.0
      %4709 = vmatpush1.xpose.msra.mxu0 0.0
      %4710 = vmatprep.subr.mxu0 0.0
      %4711 = vmatpush1.xpose.msra.mxu0 0.0
      %4712 = vmatprep.subr.mxu0 0.0
      %4713 = vmatpush1.xpose.msra.mxu0 0.0
      %4714 = vmatprep.subr.mxu0 0.0
      %4715 = vmatpush1.xpose.msra.mxu0 0.0
      %4716 = vmatprep.subr.mxu0 0.0
      %4717 = vmatpush1.xpose.msra.mxu0 0.0
      %4718 = vmatprep.subr.mxu0 0.0
      %4719 = vmatpush1.xpose.msra.mxu0 0.0
      %4720 = vmatprep.subr.mxu0 0.0
      %4721 = vmatpush1.xpose.msra.mxu0 0.0
      %4722 = vmatprep.subr.mxu0 0.0
      %4723 = vmatpush1.xpose.msra.mxu0 0.0
      %4724 = vmatprep.subr.mxu0 0.0
      %4725 = vmatpush1.xpose.msra.mxu0 0.0
      %4726 = vmatprep.subr.mxu0 0.0
      %4727 = vmatpush1.xpose.msra.mxu0 0.0
      %4728 = vmatprep.mubr.f32.mxu0 %v4661
      %4729 = vmatmul.mubr.f32.gmra.mrb[0].mxu0 %v4660
      %v4730 = vpop.f32.mrb[0].mxu0
      %v4731 = vadd.f32 0.0, %v4730
      %v4732 = vpop.f32.mrb[0].mxu0
      %4733 = vdwg.mxu0
      %4734 = vmatprep.subr.mxu0 %v1849
      %4735 = vmatpush1.xpose.msra.mxu0 %v1848
      %4736 = vmatprep.subr.mxu0 %v1851
      %4737 = vmatpush1.xpose.msra.mxu0 %v1850
      %4738 = vmatprep.subr.mxu0 %v1853
      %4739 = vmatpush1.xpose.msra.mxu0 %v1852
      %4740 = vmatprep.subr.mxu0 %v1855
      %4741 = vmatpush1.xpose.msra.mxu0 %v1854
      %4742 = vmatprep.subr.mxu0 0.0
      %4743 = vmatpush1.xpose.msra.mxu0 0.0
      %4744 = vmatprep.subr.mxu0 0.0
      %4745 = vmatpush1.xpose.msra.mxu0 0.0
      %4746 = vmatprep.subr.mxu0 0.0
      %4747 = vmatpush1.xpose.msra.mxu0 0.0
      %4748 = vmatprep.subr.mxu0 0.0
      %4749 = vmatpush1.xpose.msra.mxu0 0.0
      %4750 = vmatprep.subr.mxu0 0.0
      %4751 = vmatpush1.xpose.msra.mxu0 0.0
      %4752 = vmatprep.subr.mxu0 0.0
      %4753 = vmatpush1.xpose.msra.mxu0 0.0
      %4754 = vmatprep.subr.mxu0 0.0
      %4755 = vmatpush1.xpose.msra.mxu0 0.0
      %4756 = vmatprep.subr.mxu0 0.0
      %4757 = vmatpush1.xpose.msra.mxu0 0.0
      %4758 = vmatprep.subr.mxu0 0.0
      %4759 = vmatpush1.xpose.msra.mxu0 0.0
      %4760 = vmatprep.subr.mxu0 0.0
      %4761 = vmatpush1.xpose.msra.mxu0 0.0
      %4762 = vmatprep.subr.mxu0 0.0
      %4763 = vmatpush1.xpose.msra.mxu0 0.0
      %4764 = vmatprep.subr.mxu0 0.0
      %4765 = vmatpush1.xpose.msra.mxu0 0.0
      %4766 = vmatprep.subr.mxu0 0.0
      %4767 = vmatpush1.xpose.msra.mxu0 0.0
      %4768 = vmatprep.subr.mxu0 0.0
      %4769 = vmatpush1.xpose.msra.mxu0 0.0
      %4770 = vmatprep.subr.mxu0 0.0
      %4771 = vmatpush1.xpose.msra.mxu0 0.0
      %4772 = vmatprep.subr.mxu0 0.0
      %4773 = vmatpush1.xpose.msra.mxu0 0.0
      %4774 = vmatprep.subr.mxu0 0.0
      %4775 = vmatpush1.xpose.msra.mxu0 0.0
      %4776 = vmatprep.subr.mxu0 0.0
      %4777 = vmatpush1.xpose.msra.mxu0 0.0
      %4778 = vmatprep.subr.mxu0 0.0
      %4779 = vmatpush1.xpose.msra.mxu0 0.0
      %4780 = vmatprep.subr.mxu0 0.0
      %4781 = vmatpush1.xpose.msra.mxu0 0.0
      %4782 = vmatprep.subr.mxu0 0.0
      %4783 = vmatpush1.xpose.msra.mxu0 0.0
      %4784 = vmatprep.subr.mxu0 0.0
      %4785 = vmatpush1.xpose.msra.mxu0 0.0
      %4786 = vmatprep.subr.mxu0 0.0
      %4787 = vmatpush1.xpose.msra.mxu0 0.0
      %4788 = vmatprep.subr.mxu0 0.0
      %4789 = vmatpush1.xpose.msra.mxu0 0.0
      %4790 = vmatprep.subr.mxu0 0.0
      %4791 = vmatpush1.xpose.msra.mxu0 0.0
      %4792 = vmatprep.subr.mxu0 0.0
      %4793 = vmatpush1.xpose.msra.mxu0 0.0
      %4794 = vmatprep.subr.mxu0 0.0
      %4795 = vmatpush1.xpose.msra.mxu0 0.0
      %4796 = vmatprep.subr.mxu0 0.0
      %4797 = vmatpush1.xpose.msra.mxu0 0.0
      %4798 = vmatprep.mubr.f32.mxu0 %v4657
      %4799 = vmatmul.mubr.f32.gmra.mrb[0].mxu0 %v4656
      %v4800 = vpop.f32.mrb[0].mxu0
      %v4801 = vadd.f32 0.0, %v4800
      %v4802 = vpop.f32.mrb[0].mxu0
      %4803 = vdwg.mxu0
      %v4805 = vsel %vm812, %v4731, 0
      %4807 = vmatprep.subr.mxu0 0.0
      %4808 = vmatpush1.msra.mxu0 %v2360
      %4809 = vmatprep.subr.mxu0 0.0
      %4810 = vmatpush1.msra.mxu0 %v2361
      %4811 = vmatprep.subr.mxu0 0.0
      %4812 = vmatpush1.msra.mxu0 %v2362
      %4813 = vmatprep.subr.mxu0 0.0
      %4814 = vmatpush1.msra.mxu0 %v2363
      %4815 = vmatprep.subr.mxu0 0.0
      %4816 = vmatpush1.msra.mxu0 0.0
      %4817 = vmatprep.subr.mxu0 0.0
      %4818 = vmatpush1.msra.mxu0 0.0
      %4819 = vmatprep.subr.mxu0 0.0
      %4820 = vmatpush1.msra.mxu0 0.0
      %4821 = vmatprep.subr.mxu0 0.0
      %4822 = vmatpush1.msra.mxu0 0.0
      %4823 = vmatprep.subr.mxu0 0.0
      %4824 = vmatpush1.msra.mxu0 0.0
      %4825 = vmatprep.subr.mxu0 0.0
      %4826 = vmatpush1.msra.mxu0 0.0
      %4827 = vmatprep.subr.mxu0 0.0
      %4828 = vmatpush1.msra.mxu0 0.0
      %4829 = vmatprep.subr.mxu0 0.0
      %4830 = vmatpush1.msra.mxu0 0.0
      %4831 = vmatprep.subr.mxu0 0.0
      %4832 = vmatpush1.msra.mxu0 0.0
      %4833 = vmatprep.subr.mxu0 0.0
      %4834 = vmatpush1.msra.mxu0 0.0
      %4835 = vmatprep.subr.mxu0 0.0
      %4836 = vmatpush1.msra.mxu0 0.0
      %4837 = vmatprep.subr.mxu0 0.0
      %4838 = vmatpush1.msra.mxu0 0.0
      %4839 = vmatprep.subr.mxu0 0.0
      %4840 = vmatpush1.msra.mxu0 0.0
      %4841 = vmatprep.subr.mxu0 0.0
      %4842 = vmatpush1.msra.mxu0 0.0
      %4843 = vmatprep.subr.mxu0 0.0
      %4844 = vmatpush1.msra.mxu0 0.0
      %4845 = vmatprep.subr.mxu0 0.0
      %4846 = vmatpush1.msra.mxu0 0.0
      %4847 = vmatprep.subr.mxu0 0.0
      %4848 = vmatpush1.msra.mxu0 0.0
      %4849 = vmatprep.subr.mxu0 0.0
      %4850 = vmatpush1.msra.mxu0 0.0
      %4851 = vmatprep.subr.mxu0 0.0
      %4852 = vmatpush1.msra.mxu0 0.0
      %4853 = vmatprep.subr.mxu0 0.0
      %4854 = vmatpush1.msra.mxu0 0.0
      %4855 = vmatprep.subr.mxu0 0.0
      %4856 = vmatpush1.msra.mxu0 0.0
      %4857 = vmatprep.subr.mxu0 0.0
      %4858 = vmatpush1.msra.mxu0 0.0
      %4859 = vmatprep.subr.mxu0 0.0
      %4860 = vmatpush1.msra.mxu0 0.0
      %4861 = vmatprep.subr.mxu0 0.0
      %4862 = vmatpush1.msra.mxu0 0.0
      %4863 = vmatprep.subr.mxu0 0.0
      %4864 = vmatpush1.msra.mxu0 0.0
      %4865 = vmatprep.subr.mxu0 0.0
      %4866 = vmatpush1.msra.mxu0 0.0
      %4867 = vmatprep.subr.mxu0 0.0
      %4868 = vmatpush1.msra.mxu0 0.0
      %4869 = vmatprep.subr.mxu0 0.0
      %4870 = vmatpush1.msra.mxu0 0.0
      %4871 = vmatprep.mubr.f32.mxu0 0.0
      %4872 = vmatmul.mubr.f32.gmra.mrb[0].mxu0 %v4805
      %v4873 = vpop.f32.mrb[0].mxu0
      %v4874 = vadd.f32 %v2371, %v4873
      %v4875 = vpop.f32.mrb[0].mxu0
      %4876 = vdwg.mxu0
      %v4877 = vsel %vm812, %v4336, 0
      %4879 = vmatprep.subr.mxu0 0.0
      %4880 = vmatpush1.msra.mxu0 %v2364
      %4881 = vmatprep.subr.mxu0 0.0
      %4882 = vmatpush1.msra.mxu0 %v2365
      %4883 = vmatprep.subr.mxu0 0.0
      %4884 = vmatpush1.msra.mxu0 %v2366
      %4885 = vmatprep.subr.mxu0 0.0
      %4886 = vmatpush1.msra.mxu0 %v2367
      %4887 = vmatprep.subr.mxu0 0.0
      %4888 = vmatpush1.msra.mxu0 0.0
      %4889 = vmatprep.subr.mxu0 0.0
      %4890 = vmatpush1.msra.mxu0 0.0
      %4891 = vmatprep.subr.mxu0 0.0
      %4892 = vmatpush1.msra.mxu0 0.0
      %4893 = vmatprep.subr.mxu0 0.0
      %4894 = vmatpush1.msra.mxu0 0.0
      %4895 = vmatprep.subr.mxu0 0.0
      %4896 = vmatpush1.msra.mxu0 0.0
      %4897 = vmatprep.subr.mxu0 0.0
      %4898 = vmatpush1.msra.mxu0 0.0
      %4899 = vmatprep.subr.mxu0 0.0
      %4900 = vmatpush1.msra.mxu0 0.0
      %4901 = vmatprep.subr.mxu0 0.0
      %4902 = vmatpush1.msra.mxu0 0.0
      %4903 = vmatprep.subr.mxu0 0.0
      %4904 = vmatpush1.msra.mxu0 0.0
      %4905 = vmatprep.subr.mxu0 0.0
      %4906 = vmatpush1.msra.mxu0 0.0
      %4907 = vmatprep.subr.mxu0 0.0
      %4908 = vmatpush1.msra.mxu0 0.0
      %4909 = vmatprep.subr.mxu0 0.0
      %4910 = vmatpush1.msra.mxu0 0.0
      %4911 = vmatprep.subr.mxu0 0.0
      %4912 = vmatpush1.msra.mxu0 0.0
      %4913 = vmatprep.subr.mxu0 0.0
      %4914 = vmatpush1.msra.mxu0 0.0
      %4915 = vmatprep.subr.mxu0 0.0
      %4916 = vmatpush1.msra.mxu0 0.0
      %4917 = vmatprep.subr.mxu0 0.0
      %4918 = vmatpush1.msra.mxu0 0.0
      %4919 = vmatprep.subr.mxu0 0.0
      %4920 = vmatpush1.msra.mxu0 0.0
      %4921 = vmatprep.subr.mxu0 0.0
      %4922 = vmatpush1.msra.mxu0 0.0
      %4923 = vmatprep.subr.mxu0 0.0
      %4924 = vmatpush1.msra.mxu0 0.0
      %4925 = vmatprep.subr.mxu0 0.0
      %4926 = vmatpush1.msra.mxu0 0.0
      %4927 = vmatprep.subr.mxu0 0.0
      %4928 = vmatpush1.msra.mxu0 0.0
      %4929 = vmatprep.subr.mxu0 0.0
      %4930 = vmatpush1.msra.mxu0 0.0
      %4931 = vmatprep.subr.mxu0 0.0
      %4932 = vmatpush1.msra.mxu0 0.0
      %4933 = vmatprep.subr.mxu0 0.0
      %4934 = vmatpush1.msra.mxu0 0.0
      %4935 = vmatprep.subr.mxu0 0.0
      %4936 = vmatpush1.msra.mxu0 0.0
      %4937 = vmatprep.subr.mxu0 0.0
      %4938 = vmatpush1.msra.mxu0 0.0
      %4939 = vmatprep.subr.mxu0 0.0
      %4940 = vmatpush1.msra.mxu0 0.0
      %4941 = vmatprep.subr.mxu0 0.0
      %4942 = vmatpush1.msra.mxu0 0.0
      %4943 = vmatprep.mubr.f32.mxu0 0.0
      %4944 = vmatmul.mubr.f32.gmra.mrb[0].mxu0 %v4877
      %v4945 = vpop.f32.mrb[0].mxu0
      %v4946 = vadd.f32 %v2448, %v4945
      %v4947 = vpop.f32.mrb[0].mxu0
      %4948 = vdwg.mxu0
      %v4949 = vadd.f32 %v4874, %v4946
      %v4950 = vxor.u32 %v4949, 2147483648
      %v4951 = vmul.f32 %v4950, 1.442695
      %v4952 = vpow.pop %v4951
      %v4953 = vadd.f32 %v4952, 1.0
      %v4954 = vrcp.pop %v4953
      %v4955 = vmul.f32 1.0, %v4954
      %4957 = vrot.lane.b32.xlu0 %v4946, 64
      %v4958 = vpop.permute.xlu0 %4957
      %v4960 = vmul.f32 %v4955, %v4958
      %4962 = vrot.lane.b32.xlu0 %v4960, 64
      %v4963 = vpop.permute.xlu0 %4962
      %v4965 = vadd.f32 %v4874, %v4963
      %v4966 = vtanh.pop %v4965
      %v4967 = vsub.f32 1.0, %v4955
      %4969 = vrot.lane.b32.xlu0 %v4966, 96
      %v4970 = vpop.permute.xlu0 %4969
      %v4972 = vmul.f32 %v4967, %v4970
      %v4973 = vmul.f32 %v4955, %v4155
      %v4974 = vadd.f32 %v4972, %v4973
      %v4976 = vsel %vm812, %v4801, 0
      %4978 = vmatprep.subr.mxu0 0.0
      %4979 = vmatpush1.msra.mxu0 %v2551
      %4980 = vmatprep.subr.mxu0 0.0
      %4981 = vmatpush1.msra.mxu0 %v2552
      %4982 = vmatprep.subr.mxu0 0.0
      %4983 = vmatpush1.msra.mxu0 %v2553
      %4984 = vmatprep.subr.mxu0 0.0
      %4985 = vmatpush1.msra.mxu0 %v2554
      %4986 = vmatprep.subr.mxu0 0.0
      %4987 = vmatpush1.msra.mxu0 0.0
      %4988 = vmatprep.subr.mxu0 0.0
      %4989 = vmatpush1.msra.mxu0 0.0
      %4990 = vmatprep.subr.mxu0 0.0
      %4991 = vmatpush1.msra.mxu0 0.0
      %4992 = vmatprep.subr.mxu0 0.0
      %4993 = vmatpush1.msra.mxu0 0.0
      %4994 = vmatprep.subr.mxu0 0.0
      %4995 = vmatpush1.msra.mxu0 0.0
      %4996 = vmatprep.subr.mxu0 0.0
      %4997 = vmatpush1.msra.mxu0 0.0
      %4998 = vmatprep.subr.mxu0 0.0
      %4999 = vmatpush1.msra.mxu0 0.0
      %5000 = vmatprep.subr.mxu0 0.0
      %5001 = vmatpush1.msra.mxu0 0.0
      %5002 = vmatprep.subr.mxu0 0.0
      %5003 = vmatpush1.msra.mxu0 0.0
      %5004 = vmatprep.subr.mxu0 0.0
      %5005 = vmatpush1.msra.mxu0 0.0
      %5006 = vmatprep.subr.mxu0 0.0
      %5007 = vmatpush1.msra.mxu0 0.0
      %5008 = vmatprep.subr.mxu0 0.0
      %5009 = vmatpush1.msra.mxu0 0.0
      %5010 = vmatprep.subr.mxu0 0.0
      %5011 = vmatpush1.msra.mxu0 0.0
      %5012 = vmatprep.subr.mxu0 0.0
      %5013 = vmatpush1.msra.mxu0 0.0
      %5014 = vmatprep.subr.mxu0 0.0
      %5015 = vmatpush1.msra.mxu0 0.0
      %5016 = vmatprep.subr.mxu0 0.0
      %5017 = vmatpush1.msra.mxu0 0.0
      %5018 = vmatprep.subr.mxu0 0.0
      %5019 = vmatpush1.msra.mxu0 0.0
      %5020 = vmatprep.subr.mxu0 0.0
      %5021 = vmatpush1.msra.mxu0 0.0
      %5022 = vmatprep.subr.mxu0 0.0
      %5023 = vmatpush1.msra.mxu0 0.0
      %5024 = vmatprep.subr.mxu0 0.0
      %5025 = vmatpush1.msra.mxu0 0.0
      %5026 = vmatprep.subr.mxu0 0.0
      %5027 = vmatpush1.msra.mxu0 0.0
      %5028 = vmatprep.subr.mxu0 0.0
      %5029 = vmatpush1.msra.mxu0 0.0
      %5030 = vmatprep.subr.mxu0 0.0
      %5031 = vmatpush1.msra.mxu0 0.0
      %5032 = vmatprep.subr.mxu0 0.0
      %5033 = vmatpush1.msra.mxu0 0.0
      %5034 = vmatprep.subr.mxu0 0.0
      %5035 = vmatpush1.msra.mxu0 0.0
      %5036 = vmatprep.subr.mxu0 0.0
      %5037 = vmatpush1.msra.mxu0 0.0
      %5038 = vmatprep.subr.mxu0 0.0
      %5039 = vmatpush1.msra.mxu0 0.0
      %5040 = vmatprep.subr.mxu0 0.0
      %5041 = vmatpush1.msra.mxu0 0.0
      %5042 = vmatprep.mubr.f32.mxu0 0.0
      %5043 = vmatmul.mubr.f32.gmra.mrb[0].mxu0 %v4976
      %v5044 = vpop.f32.mrb[0].mxu0
      %v5045 = vadd.f32 %v1884, %v5044
      %v5046 = vpop.f32.mrb[0].mxu0
      %5047 = vdwg.mxu0
      %v5048 = vsel %vm812, %v4359, 0
      %5050 = vmatprep.subr.mxu0 0.0
      %5051 = vmatpush1.msra.mxu0 %v2555
      %5052 = vmatprep.subr.mxu0 0.0
      %5053 = vmatpush1.msra.mxu0 %v2556
      %5054 = vmatprep.subr.mxu0 0.0
      %5055 = vmatpush1.msra.mxu0 %v2557
      %5056 = vmatprep.subr.mxu0 0.0
      %5057 = vmatpush1.msra.mxu0 %v2558
      %5058 = vmatprep.subr.mxu0 0.0
      %5059 = vmatpush1.msra.mxu0 0.0
      %5060 = vmatprep.subr.mxu0 0.0
      %5061 = vmatpush1.msra.mxu0 0.0
      %5062 = vmatprep.subr.mxu0 0.0
      %5063 = vmatpush1.msra.mxu0 0.0
      %5064 = vmatprep.subr.mxu0 0.0
      %5065 = vmatpush1.msra.mxu0 0.0
      %5066 = vmatprep.subr.mxu0 0.0
      %5067 = vmatpush1.msra.mxu0 0.0
      %5068 = vmatprep.subr.mxu0 0.0
      %5069 = vmatpush1.msra.mxu0 0.0
      %5070 = vmatprep.subr.mxu0 0.0
      %5071 = vmatpush1.msra.mxu0 0.0
      %5072 = vmatprep.subr.mxu0 0.0
      %5073 = vmatpush1.msra.mxu0 0.0
      %5074 = vmatprep.subr.mxu0 0.0
      %5075 = vmatpush1.msra.mxu0 0.0
      %5076 = vmatprep.subr.mxu0 0.0
      %5077 = vmatpush1.msra.mxu0 0.0
      %5078 = vmatprep.subr.mxu0 0.0
      %5079 = vmatpush1.msra.mxu0 0.0
      %5080 = vmatprep.subr.mxu0 0.0
      %5081 = vmatpush1.msra.mxu0 0.0
      %5082 = vmatprep.subr.mxu0 0.0
      %5083 = vmatpush1.msra.mxu0 0.0
      %5084 = vmatprep.subr.mxu0 0.0
      %5085 = vmatpush1.msra.mxu0 0.0
      %5086 = vmatprep.subr.mxu0 0.0
      %5087 = vmatpush1.msra.mxu0 0.0
      %5088 = vmatprep.subr.mxu0 0.0
      %5089 = vmatpush1.msra.mxu0 0.0
      %5090 = vmatprep.subr.mxu0 0.0
      %5091 = vmatpush1.msra.mxu0 0.0
      %5092 = vmatprep.subr.mxu0 0.0
      %5093 = vmatpush1.msra.mxu0 0.0
      %5094 = vmatprep.subr.mxu0 0.0
      %5095 = vmatpush1.msra.mxu0 0.0
      %5096 = vmatprep.subr.mxu0 0.0
      %5097 = vmatpush1.msra.mxu0 0.0
      %5098 = vmatprep.subr.mxu0 0.0
      %5099 = vmatpush1.msra.mxu0 0.0
      %5100 = vmatprep.subr.mxu0 0.0
      %5101 = vmatpush1.msra.mxu0 0.0
      %5102 = vmatprep.subr.mxu0 0.0
      %5103 = vmatpush1.msra.mxu0 0.0
      %5104 = vmatprep.subr.mxu0 0.0
      %5105 = vmatpush1.msra.mxu0 0.0
      %5106 = vmatprep.subr.mxu0 0.0
      %5107 = vmatpush1.msra.mxu0 0.0
      %5108 = vmatprep.subr.mxu0 0.0
      %5109 = vmatpush1.msra.mxu0 0.0
      %5110 = vmatprep.subr.mxu0 0.0
      %5111 = vmatpush1.msra.mxu0 0.0
      %5112 = vmatprep.subr.mxu0 0.0
      %5113 = vmatpush1.msra.mxu0 0.0
      %5114 = vmatprep.mubr.f32.mxu0 0.0
      %5115 = vmatmul.mubr.f32.gmra.mrb[0].mxu0 %v5048
      %v5116 = vpop.f32.mrb[0].mxu0
      %v5117 = vadd.f32 %v1885, %v5116
      %v5118 = vpop.f32.mrb[0].mxu0
      %5119 = vdwg.mxu0
      %v5120 = vadd.f32 %v5045, %v5117
      %v5121 = vxor.u32 %v5120, 2147483648
      %v5122 = vmul.f32 %v5121, 1.442695
      %v5123 = vpow.pop %v5122
      %v5124 = vadd.f32 %v5123, 1.0
      %v5125 = vrcp.pop %v5124
      %v5126 = vmul.f32 1.0, %v5125
      %5128 = vrot.lane.b32.xlu0 %v5117, 64
      %v5129 = vpop.permute.xlu0 %5128
      %v5131 = vmul.f32 %v5126, %v5129
      %5133 = vrot.lane.b32.xlu0 %v5131, 64
      %v5134 = vpop.permute.xlu0 %5133
      %v5136 = vadd.f32 %v5045, %v5134
      %v5137 = vtanh.pop %v5136
      %v5138 = vsub.f32 1.0, %v5126
      %5140 = vrot.lane.b32.xlu0 %v5137, 96
      %v5141 = vpop.permute.xlu0 %5140
      %v5143 = vmul.f32 %v5138, %v5141
      %v5144 = vmul.f32 %v5126, %v4333
      %v5145 = vadd.f32 %v5143, %v5144
      %5147 = vrot.lane.b32.xlu0 %v4974, 96
      %v5148 = vpop.permute.xlu0 %5147
      %v5150 = vsel %vm1886, %v5148, 0.0
      %5151 = vadd.xlane.f32.xlu0 %v5150
      %v5152 = vpop.xlane.xlu0 %5151
      %v5153 = vmul.f32 %v5152, %v1063
      %v5154 = vsub.f32 %v4974, %v5153
      %v5155 = vmul.f32 %v5154, %v5154
      %5157 = vrot.lane.b32.xlu0 %v5155, 96
      %v5158 = vpop.permute.xlu0 %5157
      %v5160 = vsel %vm1886, %v5158, 0.0
      %5161 = vadd.xlane.f32.xlu0 %v5160
      %v5162 = vpop.xlane.xlu0 %5161
      %v5163 = vmul.f32 %v5162, %v1063
      %v5164 = vadd.f32 %v5163, 1e-05
      %v5165 = vrsqrt.pop %v5164
      %v5166 = vmul.f32 %v5154, %v5165
      %v5167 = vmul.f32 %v5166, %v2765
      %v5168 = vadd.f32 %v5167, %v2774
      %5170 = vrot.lane.b32.xlu0 %v5168, 96
      %v5171 = vpop.permute.xlu0 %5170
      %v5172 = vsel %vm812, %v5171, 0
      %5174 = vmatprep.subr.mxu0 0.0
      %5175 = vmatpush1.msra.mxu0 %v2777
      %5176 = vmatprep.subr.mxu0 0.0
      %5177 = vmatpush1.msra.mxu0 %v2778
      %5178 = vmatprep.subr.mxu0 0.0
      %5179 = vmatpush1.msra.mxu0 %v2779
      %5180 = vmatprep.subr.mxu0 0.0
      %5181 = vmatpush1.msra.mxu0 %v2780
      %5182 = vmatprep.subr.mxu0 0.0
      %5183 = vmatpush1.msra.mxu0 0.0
      %5184 = vmatprep.subr.mxu0 0.0
      %5185 = vmatpush1.msra.mxu0 0.0
      %5186 = vmatprep.subr.mxu0 0.0
      %5187 = vmatpush1.msra.mxu0 0.0
      %5188 = vmatprep.subr.mxu0 0.0
      %5189 = vmatpush1.msra.mxu0 0.0
      %5190 = vmatprep.subr.mxu0 0.0
      %5191 = vmatpush1.msra.mxu0 0.0
      %5192 = vmatprep.subr.mxu0 0.0
      %5193 = vmatpush1.msra.mxu0 0.0
      %5194 = vmatprep.subr.mxu0 0.0
      %5195 = vmatpush1.msra.mxu0 0.0
      %5196 = vmatprep.subr.mxu0 0.0
      %5197 = vmatpush1.msra.mxu0 0.0
      %5198 = vmatprep.subr.mxu0 0.0
      %5199 = vmatpush1.msra.mxu0 0.0
      %5200 = vmatprep.subr.mxu0 0.0
      %5201 = vmatpush1.msra.mxu0 0.0
      %5202 = vmatprep.subr.mxu0 0.0
      %5203 = vmatpush1.msra.mxu0 0.0
      %5204 = vmatprep.subr.mxu0 0.0
      %5205 = vmatpush1.msra.mxu0 0.0
      %5206 = vmatprep.subr.mxu0 0.0
      %5207 = vmatpush1.msra.mxu0 0.0
      %5208 = vmatprep.subr.mxu0 0.0
      %5209 = vmatpush1.msra.mxu0 0.0
      %5210 = vmatprep.subr.mxu0 0.0
      %5211 = vmatpush1.msra.mxu0 0.0
      %5212 = vmatprep.subr.mxu0 0.0
      %5213 = vmatpush1.msra.mxu0 0.0
      %5214 = vmatprep.subr.mxu0 0.0
      %5215 = vmatpush1.msra.mxu0 0.0
      %5216 = vmatprep.subr.mxu0 0.0
      %5217 = vmatpush1.msra.mxu0 0.0
      %5218 = vmatprep.subr.mxu0 0.0
      %5219 = vmatpush1.msra.mxu0 0.0
      %5220 = vmatprep.subr.mxu0 0.0
      %5221 = vmatpush1.msra.mxu0 0.0
      %5222 = vmatprep.subr.mxu0 0.0
      %5223 = vmatpush1.msra.mxu0 0.0
      %5224 = vmatprep.subr.mxu0 0.0
      %5225 = vmatpush1.msra.mxu0 0.0
      %5226 = vmatprep.subr.mxu0 0.0
      %5227 = vmatpush1.msra.mxu0 0.0
      %5228 = vmatprep.subr.mxu0 0.0
      %5229 = vmatpush1.msra.mxu0 0.0
      %5230 = vmatprep.subr.mxu0 0.0
      %5231 = vmatpush1.msra.mxu0 0.0
      %5232 = vmatprep.subr.mxu0 0.0
      %5233 = vmatpush1.msra.mxu0 0.0
      %5234 = vmatprep.subr.mxu0 0.0
      %5235 = vmatpush1.msra.mxu0 0.0
      %5236 = vmatprep.subr.mxu0 0.0
      %5237 = vmatpush1.msra.mxu0 0.0
      %5238 = vmatprep.mubr.f32.mxu0 0.0
      %5239 = vmatmul.mubr.f32.gmra.mrb[0].mxu0 %v5172
      %v5240 = vpop.f32.mrb[0].mxu0
      %v5241 = vadd.f32 %v2784, %v5240
      %v5242 = vpop.f32.mrb[0].mxu0
      %5243 = vdwg.mxu0
      %v5244 = vmax.f32 %v5241, 0.0
      %v5246 = vsel %vm812, %v5244, 0
      %5248 = vmatprep.subr.mxu0 0.0
      %5249 = vmatpush1.msra.mxu0 %v2861
      %5250 = vmatprep.subr.mxu0 0.0
      %5251 = vmatpush1.msra.mxu0 %v2862
      %5252 = vmatprep.subr.mxu0 0.0
      %5253 = vmatpush1.msra.mxu0 %v2863
      %5254 = vmatprep.subr.mxu0 0.0
      %5255 = vmatpush1.msra.mxu0 %v2864
      %5256 = vmatprep.subr.mxu0 0.0
      %5257 = vmatpush1.msra.mxu0 0.0
      %5258 = vmatprep.subr.mxu0 0.0
      %5259 = vmatpush1.msra.mxu0 0.0
      %5260 = vmatprep.subr.mxu0 0.0
      %5261 = vmatpush1.msra.mxu0 0.0
      %5262 = vmatprep.subr.mxu0 0.0
      %5263 = vmatpush1.msra.mxu0 0.0
      %5264 = vmatprep.subr.mxu0 0.0
      %5265 = vmatpush1.msra.mxu0 0.0
      %5266 = vmatprep.subr.mxu0 0.0
      %5267 = vmatpush1.msra.mxu0 0.0
      %5268 = vmatprep.subr.mxu0 0.0
      %5269 = vmatpush1.msra.mxu0 0.0
      %5270 = vmatprep.subr.mxu0 0.0
      %5271 = vmatpush1.msra.mxu0 0.0
      %5272 = vmatprep.subr.mxu0 0.0
      %5273 = vmatpush1.msra.mxu0 0.0
      %5274 = vmatprep.subr.mxu0 0.0
      %5275 = vmatpush1.msra.mxu0 0.0
      %5276 = vmatprep.subr.mxu0 0.0
      %5277 = vmatpush1.msra.mxu0 0.0
      %5278 = vmatprep.subr.mxu0 0.0
      %5279 = vmatpush1.msra.mxu0 0.0
      %5280 = vmatprep.subr.mxu0 0.0
      %5281 = vmatpush1.msra.mxu0 0.0
      %5282 = vmatprep.subr.mxu0 0.0
      %5283 = vmatpush1.msra.mxu0 0.0
      %5284 = vmatprep.subr.mxu0 0.0
      %5285 = vmatpush1.msra.mxu0 0.0
      %5286 = vmatprep.subr.mxu0 0.0
      %5287 = vmatpush1.msra.mxu0 0.0
      %5288 = vmatprep.subr.mxu0 0.0
      %5289 = vmatpush1.msra.mxu0 0.0
      %5290 = vmatprep.subr.mxu0 0.0
      %5291 = vmatpush1.msra.mxu0 0.0
      %5292 = vmatprep.subr.mxu0 0.0
      %5293 = vmatpush1.msra.mxu0 0.0
      %5294 = vmatprep.subr.mxu0 0.0
      %5295 = vmatpush1.msra.mxu0 0.0
      %5296 = vmatprep.subr.mxu0 0.0
      %5297 = vmatpush1.msra.mxu0 0.0
      %5298 = vmatprep.subr.mxu0 0.0
      %5299 = vmatpush1.msra.mxu0 0.0
      %5300 = vmatprep.subr.mxu0 0.0
      %5301 = vmatpush1.msra.mxu0 0.0
      %5302 = vmatprep.subr.mxu0 0.0
      %5303 = vmatpush1.msra.mxu0 0.0
      %5304 = vmatprep.subr.mxu0 0.0
      %5305 = vmatpush1.msra.mxu0 0.0
      %5306 = vmatprep.subr.mxu0 0.0
      %5307 = vmatpush1.msra.mxu0 0.0
      %5308 = vmatprep.subr.mxu0 0.0
      %5309 = vmatpush1.msra.mxu0 0.0
      %5310 = vmatprep.subr.mxu0 0.0
      %5311 = vmatpush1.msra.mxu0 0.0
      %5312 = vmatprep.mubr.f32.mxu0 0.0
      %5313 = vmatmul.mubr.f32.gmra.mrb[0].mxu0 %v5246
      %v5314 = vpop.f32.mrb[0].mxu0
      %v5315 = vadd.f32 0.0, %v5314
      %v5316 = vpop.f32.mrb[0].mxu0
      %5317 = vdwg.mxu0
      %5319 = vrot.lane.b32.xlu0 %v5315, 32
      %v5320 = vpop.permute.xlu0 %5319
      %v5322 = vadd.f32 %v4974, %v5320
      %v5323 = vadd.f32 %v5322, %v2949
      %5325 = vrot.lane.b32.xlu0 %v5145, 96
      %v5326 = vpop.permute.xlu0 %5325
      %v5328 = vsel %vm1910, %v5326, 0.0
      %5329 = vadd.xlane.f32.xlu0 %v5328
      %v5330 = vpop.xlane.xlu0 %5329
      %v5331 = vmul.f32 %v5330, %v1063
      %v5332 = vsub.f32 %v5145, %v5331
      %v5333 = vmul.f32 %v5332, %v5332
      %5335 = vrot.lane.b32.xlu0 %v5333, 96
      %v5336 = vpop.permute.xlu0 %5335
      %v5338 = vsel %vm1910, %v5336, 0.0
      %5339 = vadd.xlane.f32.xlu0 %v5338
      %v5340 = vpop.xlane.xlu0 %5339
      %v5341 = vmul.f32 %v5340, %v1063
      %v5342 = vadd.f32 %v5341, 1e-05
      %v5343 = vrsqrt.pop %v5342
      %v5344 = vmul.f32 %v5332, %v5343
      %v5345 = vmul.f32 %v5344, %v2975
      %v5346 = vadd.f32 %v5345, %v2980
      %5348 = vrot.lane.b32.xlu0 %v5346, 96
      %v5349 = vpop.permute.xlu0 %5348
      %v5350 = vsel %vm812, %v5349, 0
      %5352 = vmatprep.subr.mxu0 0.0
      %5353 = vmatpush1.msra.mxu0 %v2983
      %5354 = vmatprep.subr.mxu0 0.0
      %5355 = vmatpush1.msra.mxu0 %v2984
      %5356 = vmatprep.subr.mxu0 0.0
      %5357 = vmatpush1.msra.mxu0 %v2985
      %5358 = vmatprep.subr.mxu0 0.0
      %5359 = vmatpush1.msra.mxu0 %v2986
      %5360 = vmatprep.subr.mxu0 0.0
      %5361 = vmatpush1.msra.mxu0 0.0
      %5362 = vmatprep.subr.mxu0 0.0
      %5363 = vmatpush1.msra.mxu0 0.0
      %5364 = vmatprep.subr.mxu0 0.0
      %5365 = vmatpush1.msra.mxu0 0.0
      %5366 = vmatprep.subr.mxu0 0.0
      %5367 = vmatpush1.msra.mxu0 0.0
      %5368 = vmatprep.subr.mxu0 0.0
      %5369 = vmatpush1.msra.mxu0 0.0
      %5370 = vmatprep.subr.mxu0 0.0
      %5371 = vmatpush1.msra.mxu0 0.0
      %5372 = vmatprep.subr.mxu0 0.0
      %5373 = vmatpush1.msra.mxu0 0.0
      %5374 = vmatprep.subr.mxu0 0.0
      %5375 = vmatpush1.msra.mxu0 0.0
      %5376 = vmatprep.subr.mxu0 0.0
      %5377 = vmatpush1.msra.mxu0 0.0
      %5378 = vmatprep.subr.mxu0 0.0
      %5379 = vmatpush1.msra.mxu0 0.0
      %5380 = vmatprep.subr.mxu0 0.0
      %5381 = vmatpush1.msra.mxu0 0.0
      %5382 = vmatprep.subr.mxu0 0.0
      %5383 = vmatpush1.msra.mxu0 0.0
      %5384 = vmatprep.subr.mxu0 0.0
      %5385 = vmatpush1.msra.mxu0 0.0
      %5386 = vmatprep.subr.mxu0 0.0
      %5387 = vmatpush1.msra.mxu0 0.0
      %5388 = vmatprep.subr.mxu0 0.0
      %5389 = vmatpush1.msra.mxu0 0.0
      %5390 = vmatprep.subr.mxu0 0.0
      %5391 = vmatpush1.msra.mxu0 0.0
      %5392 = vmatprep.subr.mxu0 0.0
      %5393 = vmatpush1.msra.mxu0 0.0
      %5394 = vmatprep.subr.mxu0 0.0
      %5395 = vmatpush1.msra.mxu0 0.0
      %5396 = vmatprep.subr.mxu0 0.0
      %5397 = vmatpush1.msra.mxu0 0.0
      %5398 = vmatprep.subr.mxu0 0.0
      %5399 = vmatpush1.msra.mxu0 0.0
      %5400 = vmatprep.subr.mxu0 0.0
      %5401 = vmatpush1.msra.mxu0 0.0
      %5402 = vmatprep.subr.mxu0 0.0
      %5403 = vmatpush1.msra.mxu0 0.0
      %5404 = vmatprep.subr.mxu0 0.0
      %5405 = vmatpush1.msra.mxu0 0.0
      %5406 = vmatprep.subr.mxu0 0.0
      %5407 = vmatpush1.msra.mxu0 0.0
      %5408 = vmatprep.subr.mxu0 0.0
      %5409 = vmatpush1.msra.mxu0 0.0
      %5410 = vmatprep.subr.mxu0 0.0
      %5411 = vmatpush1.msra.mxu0 0.0
      %5412 = vmatprep.subr.mxu0 0.0
      %5413 = vmatpush1.msra.mxu0 0.0
      %5414 = vmatprep.subr.mxu0 0.0
      %5415 = vmatpush1.msra.mxu0 0.0
      %5416 = vmatprep.mubr.f32.mxu0 0.0
      %5417 = vmatmul.mubr.f32.gmra.mrb[0].mxu0 %v5350
      %v5418 = vpop.f32.mrb[0].mxu0
      %v5419 = vadd.f32 %v1872, %v5418
      %v5420 = vpop.f32.mrb[0].mxu0
      %5421 = vdwg.mxu0
      %v5422 = vmax.f32 %v5419, 0.0
      %v5424 = vsel %vm812, %v5422, 0
      %5426 = vmatprep.subr.mxu0 0.0
      %5427 = vmatpush1.msra.mxu0 %v3063
      %5428 = vmatprep.subr.mxu0 0.0
      %5429 = vmatpush1.msra.mxu0 %v3064
      %5430 = vmatprep.subr.mxu0 0.0
      %5431 = vmatpush1.msra.mxu0 %v3065
      %5432 = vmatprep.subr.mxu0 0.0
      %5433 = vmatpush1.msra.mxu0 %v3066
      %5434 = vmatprep.subr.mxu0 0.0
      %5435 = vmatpush1.msra.mxu0 0.0
      %5436 = vmatprep.subr.mxu0 0.0
      %5437 = vmatpush1.msra.mxu0 0.0
      %5438 = vmatprep.subr.mxu0 0.0
      %5439 = vmatpush1.msra.mxu0 0.0
      %5440 = vmatprep.subr.mxu0 0.0
      %5441 = vmatpush1.msra.mxu0 0.0
      %5442 = vmatprep.subr.mxu0 0.0
      %5443 = vmatpush1.msra.mxu0 0.0
      %5444 = vmatprep.subr.mxu0 0.0
      %5445 = vmatpush1.msra.mxu0 0.0
      %5446 = vmatprep.subr.mxu0 0.0
      %5447 = vmatpush1.msra.mxu0 0.0
      %5448 = vmatprep.subr.mxu0 0.0
      %5449 = vmatpush1.msra.mxu0 0.0
      %5450 = vmatprep.subr.mxu0 0.0
      %5451 = vmatpush1.msra.mxu0 0.0
      %5452 = vmatprep.subr.mxu0 0.0
      %5453 = vmatpush1.msra.mxu0 0.0
      %5454 = vmatprep.subr.mxu0 0.0
      %5455 = vmatpush1.msra.mxu0 0.0
      %5456 = vmatprep.subr.mxu0 0.0
      %5457 = vmatpush1.msra.mxu0 0.0
      %5458 = vmatprep.subr.mxu0 0.0
      %5459 = vmatpush1.msra.mxu0 0.0
      %5460 = vmatprep.subr.mxu0 0.0
      %5461 = vmatpush1.msra.mxu0 0.0
      %5462 = vmatprep.subr.mxu0 0.0
      %5463 = vmatpush1.msra.mxu0 0.0
      %5464 = vmatprep.subr.mxu0 0.0
      %5465 = vmatpush1.msra.mxu0 0.0
      %5466 = vmatprep.subr.mxu0 0.0
      %5467 = vmatpush1.msra.mxu0 0.0
      %5468 = vmatprep.subr.mxu0 0.0
      %5469 = vmatpush1.msra.mxu0 0.0
      %5470 = vmatprep.subr.mxu0 0.0
      %5471 = vmatpush1.msra.mxu0 0.0
      %5472 = vmatprep.subr.mxu0 0.0
      %5473 = vmatpush1.msra.mxu0 0.0
      %5474 = vmatprep.subr.mxu0 0.0
      %5475 = vmatpush1.msra.mxu0 0.0
      %5476 = vmatprep.subr.mxu0 0.0
      %5477 = vmatpush1.msra.mxu0 0.0
      %5478 = vmatprep.subr.mxu0 0.0
      %5479 = vmatpush1.msra.mxu0 0.0
      %5480 = vmatprep.subr.mxu0 0.0
      %5481 = vmatpush1.msra.mxu0 0.0
      %5482 = vmatprep.subr.mxu0 0.0
      %5483 = vmatpush1.msra.mxu0 0.0
      %5484 = vmatprep.subr.mxu0 0.0
      %5485 = vmatpush1.msra.mxu0 0.0
      %5486 = vmatprep.subr.mxu0 0.0
      %5487 = vmatpush1.msra.mxu0 0.0
      %5488 = vmatprep.subr.mxu0 0.0
      %5489 = vmatpush1.msra.mxu0 0.0
      %5490 = vmatprep.mubr.f32.mxu0 0.0
      %5491 = vmatmul.mubr.f32.gmra.mrb[0].mxu0 %v5424
      %v5492 = vpop.f32.mrb[0].mxu0
      %v5493 = vadd.f32 0.0, %v5492
      %v5494 = vpop.f32.mrb[0].mxu0
      %5495 = vdwg.mxu0
      %5497 = vrot.lane.b32.xlu0 %v5493, 32
      %v5498 = vpop.permute.xlu0 %5497
      %v5500 = vadd.f32 %v5145, %v5498
      %v5501 = vadd.f32 %v5500, %v3147
      %5503 = vrot.lane.b32.xlu0 %v5323, 96
      %v5504 = vpop.permute.xlu0 %5503
      %5506 = vst.msk [vmem:[#allocation2] sm:$0xf] %vm1886, %v5504
      %5508 = vrot.lane.b32.xlu0 %v5501, 96
      %v5509 = vpop.permute.xlu0 %5508
      %5511 = vst.msk [vmem:[#allocation3] sm:$0x1] %vm1910, %v5509
      %5512 = vst.msk [vmem:[%s632] sm:$0xf] %vm1886, %v5504
      %5513 = vst.msk [vmem:[%s639] sm:$0x1] %vm1910, %v5509
      %p5514 = scmp.lt.s32.totalorder %s32, 1
      %s5515 = scalar_select %p5514, %s32, 1
      %p5516 = scmp.lt.s32.totalorder %s33, 1
      %s5517 = scalar_select %p5516, %s33, 1
      %s5518 = smul.addr %s5515, 2
      %s5519 = sadd.s32 %s5517, %s5518
      %s5520 = smul.addr %s5519, 4
      %s5521 = scalar_lea.vmem %s15, %s5520
      %p5522 = scmp.lt.s32.totalorder %s32, 1
      %s5523 = scalar_select %p5522, %s32, 1
      %p5524 = scmp.lt.s32.totalorder %s33, 1
      %s5525 = scalar_select %p5524, %s33, 1
      %s5526 = smul.addr %s5523, 2
      %s5527 = sadd.s32 %s5525, %s5526
      %s5528 = scalar_lea.vmem %s16, %s5527
      // Predicated region
      $region85: #{forward.3} parent=79 // pred_check
        %p5529 = pneg %p399
      $region86: #{forward.3} parent=79 // pred_check_branch
        %5531 = sbr.rel (%p5529) target = $region88
      $region87: #{forward.3} parent=79 // pred_region
        _
      $region88: #{forward.3} parent=79 // pred_fallthru
        _
      // Predicated region
      $region89: #{forward.3} parent=79 // pred_check
        %p5532 = pneg %p427
      $region90: #{forward.3} parent=79 // pred_check_branch
        %5534 = sbr.rel (%p5532) target = $region92
      $region91: #{forward.3} parent=79 // pred_region
        _
      $region92: #{forward.3} parent=79 // pred_fallthru
        _
    $region80: #{forward.3} parent=5 // pred_fallthru
      _
    %p5535 = scmp.le.s32.totalorder 2, %s23
    // Predicated region
    $region93: #{forward.3} parent=5 // pred_check
      %p5536 = pneg %p5535
    $region94: #{forward.3} parent=5 // pred_check_branch
      %5538 = sbr.rel (%p5536) target = $region96
    $region95: #{forward.3} parent=5 // pred_region
      %s5539 = ssub.s32 %s23, 2
      // Predicated region
      $region97: #{forward.3} parent=95 // pred_check
        %p5540 = pneg %p405
      $region98: #{forward.3} parent=95 // pred_check_branch
        %5542 = sbr.rel (%p5540) target = $region100
      $region99: #{forward.3} parent=95 // pred_region
        %p5543 = scmp.lt.s32.totalorder %s34, 1
        %s5544 = scalar_select %p5543, %s34, 1
        %p5545 = scmp.lt.s32.totalorder %s35, 1
        %s5546 = scalar_select %p5545, %s35, 1
        %s5547 = smul.addr %s5544, 2
        %s5548 = sadd.s32 %s5546, %s5547
        %s5549 = smul.addr %s5548, 4
        %s5550 = scalar_lea.vmem %s15, %s5549
      $region100: #{forward.3} parent=95 // pred_fallthru
        _
      // Predicated region
      $region101: #{forward.3} parent=95 // pred_check
        %p5551 = pneg %p433
      $region102: #{forward.3} parent=95 // pred_check_branch
        %5553 = sbr.rel (%p5551) target = $region104
      $region103: #{forward.3} parent=95 // pred_region
        %p5554 = scmp.lt.s32.totalorder %s34, 1
        %s5555 = scalar_select %p5554, %s34, 1
        %p5556 = scmp.lt.s32.totalorder %s35, 1
        %s5557 = scalar_select %p5556, %s35, 1
        %s5558 = smul.addr %s5555, 2
        %s5559 = sadd.s32 %s5557, %s5558
        %s5560 = scalar_lea.vmem %s16, %s5559
      $region104: #{forward.3} parent=95 // pred_fallthru
        _
    $region96: #{forward.3} parent=5 // pred_fallthru
      _
  $region6: #{forward.3} parent=0 // loop_footer
    %s27 = sadd.s32 1, %s23
  $region7: #{forward.3} parent=0 // loop_footer_branch
    %22 = sbr.rel target = $region3
  $region8: #{forward.3} parent=0 // loop_exit
    _

</llo_original>
